<compile_context>
chip_gen: v6e
topology: v6e:2x2x1
jax: 0.10.0
libtpu: 0.0.40
codegen_flags: <defaults>
</compile_context>

<pallas_src>
import math

import jax
import jax.numpy as jnp
from jax.experimental import pallas as pl
from jax.experimental.pallas import tpu as pltpu

# ----------------------- configuration (small shapes) -----------------------
BATCH     = 2
CONV_DIM  = 4          # Conv1d in_channels
CONV_LEN  = 32         # conv sequence length L; attention seq_len = L // 8
EMBED_DIM = 64         # conv3 out_channels == attention embed_dim
NUM_HEADS = 4
FF_DIM    = 32
SEQ_LEN   = CONV_LEN // 8
BN_EPS    = 1e-5
LN_EPS    = 1e-5

N_STAGE_ARGS = 5       # wcat, bias, mask_prev, mask_next, pool_sel
N_BLOCK_ARGS = 14      # wq,bq, wkv,bkv, wo,bo, g1,t1, wf1,bf1, wf2,bf2, g2,t2


# ============================ in-kernel helpers =============================
def _layer_norm(x, g, b):
    mu = jnp.mean(x, axis=-1, keepdims=True)
    var = jnp.mean(jnp.square(x - mu), axis=-1, keepdims=True)
    return (x - mu) * jax.lax.rsqrt(var + LN_EPS) * g + b


def _conv_stage(x, w_ref, t_ref, mp_ref, mn_ref, sel_ref):
    """Conv1d(k=3,pad=1)+BN(eval)+ReLU+MaxPool(2,2) on a stacked (R, Cin) slab.

    Shifts are built with zero-row concat (non-negative offsets only); the
    per-sample padding boundaries are enforced by the precomputed (R,1) masks.
    """
    r, c = x.shape
    zrow = jnp.zeros((1, c), jnp.float32)
    xp = jnp.concatenate([zrow, x[:r - 1, :]], axis=0) * mp_ref[...]   # x[l-1]
    xn = jnp.concatenate([x[1:, :], zrow], axis=0) * mn_ref[...]       # x[l+1]
    xcat = jnp.concatenate([xp, x, xn], axis=-1)                       # (R, 3C)
    y = jnp.dot(xcat, w_ref[...], preferred_element_type=jnp.float32) + t_ref[...]
    y = jnp.maximum(y, 0.0)                                            # ReLU
    # MaxPool1d(2,2): m[l] = max(y[l], y[l+1]); compact even rows with sel.
    ynext = jnp.concatenate([y[1:, :], jnp.zeros((1, y.shape[1]), jnp.float32)],
                            axis=0)
    m = jnp.maximum(y, ynext)
    return jnp.dot(sel_ref[...], m, preferred_element_type=jnp.float32)


def _attn_block(xq, xkv, p, bias):
    """Post-norm MHA + FFN block on a batch-stacked (B*S, E) slab."""
    (wq_ref, bq_ref, wkv_ref, bkv_ref, wo_ref, bo_ref,
     g1_ref, t1_ref, wf1_ref, bf1_ref, wf2_ref, bf2_ref,
     g2_ref, t2_ref) = p
    e = EMBED_DIM
    dh = e // NUM_HEADS
    scale = 1.0 / math.sqrt(dh)

    # 1/sqrt(dh) is folded into Q once (one (R,E) multiply) instead of scaling
    # every per-head score tile.
    q = (jnp.dot(xq, wq_ref[...], preferred_element_type=jnp.float32)
         + bq_ref[...]) * scale
    kv = jnp.dot(xkv, wkv_ref[...], preferred_element_type=jnp.float32) + bkv_ref[...]
    k = kv[:, :e]
    v = kv[:, e:]

    heads = []
    for h in range(NUM_HEADS):                       # static head loop
        qh = q[:, h * dh:(h + 1) * dh]
        kh = k[:, h * dh:(h + 1) * dh]
        vh = v[:, h * dh:(h + 1) * dh]
        s = jax.lax.dot_general(qh, kh, (((1,), (1,)), ((), ())),
                                preferred_element_type=jnp.float32)
        s = s + bias                                 # block-diag per-sample mask
        s = s - jnp.max(s, axis=-1, keepdims=True)
        p_exp = jnp.exp(s)
        # reciprocal on the EUP slot instead of a VALU divide
        inv = pl.reciprocal(jnp.sum(p_exp, axis=-1, keepdims=True), approx=True)
        p_attn = p_exp * inv
        heads.append(jnp.dot(p_attn, vh, preferred_element_type=jnp.float32))
    attn = jnp.concatenate(heads, axis=-1)
    attn = jnp.dot(attn, wo_ref[...], preferred_element_type=jnp.float32) + bo_ref[...]

    y = _layer_norm(xq + attn, g1_ref[...], t1_ref[...])
    f = jnp.maximum(
        jnp.dot(y, wf1_ref[...], preferred_element_type=jnp.float32) + bf1_ref[...],
        0.0)
    f = jnp.dot(f, wf2_ref[...], preferred_element_type=jnp.float32) + bf2_ref[...]
    return _layer_norm(y + f, g2_ref[...], t2_ref[...])


# =============================== fused kernel ===============================
def fused_forward_kernel(*refs):
    out_ref = refs[-1]
    ins = refs[:-1]
    x_ref, bias_ref = ins[0], ins[1]
    conv_refs = ins[2:2 + 3 * N_STAGE_ARGS]
    base = 2 + 3 * N_STAGE_ARGS
    blocks = [ins[base + i * N_BLOCK_ARGS: base + (i + 1) * N_BLOCK_ARGS]
              for i in range(4)]

    # shared conv stack on both inputs at once: (2*B*L, Cin) -> (2*B*S, 64)
    h = x_ref[...].astype(jnp.float32)
    for st in range(3):
        h = _conv_stage(h, *conv_refs[st * N_STAGE_ARGS:(st + 1) * N_STAGE_ARGS])

    bias = bias_ref[...]
    rows1 = BATCH * SEQ_LEN
    o1 = h[:rows1]                                   # input1 branch (B*S, 64)
    o2 = h[rows1:]                                   # input2 branch (B*S, 64)

    s1 = _attn_block(o1, o1, blocks[0], bias)        # self attention 1
    s2 = _attn_block(o2, o2, blocks[1], bias)        # self attention 2
    c1 = _attn_block(s1, s2, blocks[2], bias)        # cross attention 1
    c2 = _attn_block(s2, s1, blocks[3], bias)        # cross attention 2

    # lane-dense packed output: (B*S, 128)
    out_ref[...] = jnp.concatenate([c1, c2], axis=-1).astype(out_ref.dtype)


# ================================ wrapper ===================================
@jax.jit
def cl_attention_conv_forward(params, input1, input2):
    B, L, Cin = input1.shape
    ns = 2 * B                                       # stacked samples
    seq = L // 8
    rows_out = B * seq

    x = jnp.concatenate([input1, input2], axis=0).reshape(ns * L, Cin)
    x = x.astype(jnp.float32)

    # host-side constants: boundary masks + pooling row-compaction matrices
    conv_args = []
    lc = L
    for wcat, t in params["conv"]:
        r = ns * lc
        ridx = jnp.arange(r)
        mp = (ridx % lc != 0).astype(jnp.float32)[:, None]          # (R,1)
        mn = (ridx % lc != lc - 1).astype(jnp.float32)[:, None]     # (R,1)
        sel = (2 * jnp.arange(r // 2)[:, None] == ridx[None, :]).astype(jnp.float32)
        conv_args += [wcat, t, mp, mn, sel]
        lc //= 2

    # block-diagonal additive softmax bias (per-sample attention)
    sidx = jnp.arange(rows_out) // seq
    attn_bias = jnp.where(sidx[:, None] == sidx[None, :], 0.0, -1e9)
    attn_bias = attn_bias.astype(jnp.float32)

    flat = [x, attn_bias] + conv_args
    for blk in params["attn"]:
        flat += list(blk)

    def full_spec(a):
        return pl.BlockSpec(a.shape, lambda i: (0,) * a.ndim)

    out = pl.pallas_call(
        fused_forward_kernel,
        out_shape=jax.ShapeDtypeStruct((rows_out, 2 * EMBED_DIM), jnp.float32),
        grid=(1,),
        in_specs=[full_spec(a) for a in flat],
        out_specs=pl.BlockSpec((rows_out, 2 * EMBED_DIM), lambda i: (0, 0)),
        compiler_params=pltpu.CompilerParams(
            dimension_semantics=("arbitrary",)),
    )(*flat)

    c1 = out[:, :EMBED_DIM].reshape(B, seq, EMBED_DIM)
    c2 = out[:, EMBED_DIM:].reshape(B, seq, EMBED_DIM)
    return c1, c2


# ============================ parameter setup ===============================
def init_params(key):
    kconv, kattn = jax.random.split(key)

    conv = []
    cin = CONV_DIM
    for kc, cout in zip(jax.random.split(kconv, 3), (16, 32, 64)):
        kw, kb, kg, kbe = jax.random.split(kc, 4)
        w = jax.random.uniform(kw, (cout, cin, 3), jnp.float32,
                               -1.0, 1.0) / math.sqrt(cin * 3)
        b = jax.random.uniform(kb, (cout,), jnp.float32, -0.1, 0.1)
        gamma = jax.random.uniform(kg, (cout,), jnp.float32, 0.8, 1.2)
        beta = 0.1 * jax.random.normal(kbe, (cout,), jnp.float32)
        running_mean = jnp.zeros((cout,), jnp.float32)
        running_var = jnp.ones((cout,), jnp.float32)
        # fold conv bias + BatchNorm(eval) into weights / per-channel bias
        s = gamma / jnp.sqrt(running_var + BN_EPS)
        t = beta + s * (b - running_mean)
        wcat = jnp.concatenate([w[:, :, k].T for k in range(3)], axis=0)  # (3Cin, Cout)
        wcat = wcat * s[None, :]
        conv.append((wcat, t.reshape(1, cout)))
        cin = cout

    def lin(k, fin, fout):
        lim = math.sqrt(6.0 / (fin + fout))           # xavier_uniform
        wgt = jax.random.uniform(k, (fin, fout), jnp.float32, -lim, lim)
        bias = jnp.full((1, fout), 0.01, jnp.float32)  # bias.fill_(0.01)
        return wgt, bias

    blocks = []
    for kb in jax.random.split(kattn, 4):
        ks = jax.random.split(kb, 6)
        wq, bq = lin(ks[0], EMBED_DIM, EMBED_DIM)
        wk, bk = lin(ks[1], EMBED_DIM, EMBED_DIM)
        wv, bv = lin(ks[2], EMBED_DIM, EMBED_DIM)
        wkv = jnp.concatenate([wk, wv], axis=1)        # fused K/V projection
        bkv = jnp.concatenate([bk, bv], axis=1)
        wo, bo = lin(ks[3], EMBED_DIM, EMBED_DIM)
        wf1, bf1 = lin(ks[4], EMBED_DIM, FF_DIM)
        wf2, bf2 = lin(ks[5], FF_DIM, EMBED_DIM)
        g1 = jnp.ones((1, EMBED_DIM), jnp.float32)
        t1 = jnp.zeros((1, EMBED_DIM), jnp.float32)
        g2 = jnp.ones((1, EMBED_DIM), jnp.float32)
        t2 = jnp.zeros((1, EMBED_DIM), jnp.float32)
        blocks.append([wq, bq, wkv, bkv, wo, bo,
                       g1, t1, wf1, bf1, wf2, bf2, g2, t2])

    return {"conv": conv, "attn": blocks}


# ===================== pure-JAX reference (per sample) ======================
def _ref_layer_norm(x, g, b):
    mu = jnp.mean(x, axis=-1, keepdims=True)
    var = jnp.mean(jnp.square(x - mu), axis=-1, keepdims=True)
    return (x - mu) * jax.lax.rsqrt(var + LN_EPS) * g + b


def _ref_conv_once(x, conv_params):            # (L, Cin) -> (L//8, 64)
    h = x
    for wcat, t in conv_params:
        c = h.shape[1]
        z = jnp.zeros((1, c), jnp.float32)
        xp = jnp.concatenate([z, h[:-1]], axis=0)
        xn = jnp.concatenate([h[1:], z], axis=0)
        y = jnp.concatenate([xp, h, xn], axis=-1) @ wcat + t
        y = jnp.maximum(y, 0.0)
        h = jnp.maximum(y[0::2], y[1::2])
    return h


def _ref_attn_block(xq, xkv, p):               # per-sample (S, E)
    (wq, bq, wkv, bkv, wo, bo, g1, t1, wf1, bf1, wf2, bf2, g2, t2) = p
    e = EMBED_DIM
    dh = e // NUM_HEADS
    q = xq @ wq + bq
    kv = xkv @ wkv + bkv
    k, v = kv[:, :e], kv[:, e:]
    outs = []
    for h in range(NUM_HEADS):
        qh = q[:, h * dh:(h + 1) * dh]
        kh = k[:, h * dh:(h + 1) * dh]
        vh = v[:, h * dh:(h + 1) * dh]
        a = jax.nn.softmax(qh @ kh.T / math.sqrt(dh), axis=-1)
        outs.append(a @ vh)
    attn = jnp.concatenate(outs, axis=-1) @ wo + bo
    y = _ref_layer_norm(xq + attn, g1, t1)
    f = jnp.maximum(y @ wf1 + bf1, 0.0) @ wf2 + bf2
    return _ref_layer_norm(y + f, g2, t2)


def reference_forward(params, input1, input2):
    bsz = input1.shape[0]
    o1 = jnp.stack([_ref_conv_once(input1[b], params["conv"]) for b in range(bsz)])
    o2 = jnp.stack([_ref_conv_once(input2[b], params["conv"]) for b in range(bsz)])

    def blk(xq, xkv, p):
        return jnp.stack([_ref_attn_block(xq[b], xkv[b], p) for b in range(bsz)])

    s1 = blk(o1, o1, params["attn"][0])
    s2 = blk(o2, o2, params["attn"][1])
    c1 = blk(s1, s2, params["attn"][2])
    c2 = blk(s2, s1, params["attn"][3])
    return c1, c2


# ================================== main ====================================
if __name__ == "__main__":
    key = jax.random.PRNGKey(0)
    kp, k1, k2 = jax.random.split(key, 3)
    params = init_params(kp)
    input1 = jax.random.normal(k1, (BATCH, CONV_LEN, CONV_DIM), jnp.float32)
    input2 = jax.random.normal(k2, (BATCH, CONV_LEN, CONV_DIM), jnp.float32)

    c1, c2 = cl_attention_conv_forward(params, input1, input2)
    jax.block_until_ready((c1, c2))

    assert c1.shape == (BATCH, SEQ_LEN, EMBED_DIM)
    assert c2.shape == (BATCH, SEQ_LEN, EMBED_DIM)
    assert bool(jnp.all(jnp.isfinite(c1))) and bool(jnp.all(jnp.isfinite(c2)))

    # cross-check the fused/folded kernel against an unfused per-sample reference
    with jax.default_matmul_precision("highest"):
        r1, r2 = reference_forward(params, input1, input2)
    assert bool(jnp.allclose(c1, r1, atol=2e-2, rtol=2e-2))
    assert bool(jnp.allclose(c2, r2, atol=2e-2, rtol=2e-2))

    print("KERNEL_OK")
</pallas_src>

<mosaic_0001>
module attributes {stable_mosaic.version = 11 : i64} {
  func.func @fused_forward_kernel(%arg0: i32, %arg1: memref<128x4xf32, #tpu.memory_space<vmem>>, %arg2: memref<8x8xf32, #tpu.memory_space<vmem>>, %arg3: memref<12x16xf32, #tpu.memory_space<vmem>>, %arg4: memref<1x16xf32, #tpu.memory_space<vmem>>, %arg5: memref<128x1xf32, #tpu.memory_space<vmem>>, %arg6: memref<128x1xf32, #tpu.memory_space<vmem>>, %arg7: memref<64x128xf32, #tpu.memory_space<vmem>>, %arg8: memref<48x32xf32, #tpu.memory_space<vmem>>, %arg9: memref<1x32xf32, #tpu.memory_space<vmem>>, %arg10: memref<64x1xf32, #tpu.memory_space<vmem>>, %arg11: memref<64x1xf32, #tpu.memory_space<vmem>>, %arg12: memref<32x64xf32, #tpu.memory_space<vmem>>, %arg13: memref<96x64xf32, #tpu.memory_space<vmem>>, %arg14: memref<1x64xf32, #tpu.memory_space<vmem>>, %arg15: memref<32x1xf32, #tpu.memory_space<vmem>>, %arg16: memref<32x1xf32, #tpu.memory_space<vmem>>, %arg17: memref<16x32xf32, #tpu.memory_space<vmem>>, %arg18: memref<64x64xf32, #tpu.memory_space<vmem>>, %arg19: memref<1x64xf32, #tpu.memory_space<vmem>>, %arg20: memref<64x128xf32, #tpu.memory_space<vmem>>, %arg21: memref<1x128xf32, #tpu.memory_space<vmem>>, %arg22: memref<64x64xf32, #tpu.memory_space<vmem>>, %arg23: memref<1x64xf32, #tpu.memory_space<vmem>>, %arg24: memref<1x64xf32, #tpu.memory_space<vmem>>, %arg25: memref<1x64xf32, #tpu.memory_space<vmem>>, %arg26: memref<64x32xf32, #tpu.memory_space<vmem>>, %arg27: memref<1x32xf32, #tpu.memory_space<vmem>>, %arg28: memref<32x64xf32, #tpu.memory_space<vmem>>, %arg29: memref<1x64xf32, #tpu.memory_space<vmem>>, %arg30: memref<1x64xf32, #tpu.memory_space<vmem>>, %arg31: memref<1x64xf32, #tpu.memory_space<vmem>>, %arg32: memref<64x64xf32, #tpu.memory_space<vmem>>, %arg33: memref<1x64xf32, #tpu.memory_space<vmem>>, %arg34: memref<64x128xf32, #tpu.memory_space<vmem>>, %arg35: memref<1x128xf32, #tpu.memory_space<vmem>>, %arg36: memref<64x64xf32, #tpu.memory_space<vmem>>, %arg37: memref<1x64xf32, #tpu.memory_space<vmem>>, %arg38: memref<1x64xf32, #tpu.memory_space<vmem>>, %arg39: memref<1x64xf32, #tpu.memory_space<vmem>>, %arg40: memref<64x32xf32, #tpu.memory_space<vmem>>, %arg41: memref<1x32xf32, #tpu.memory_space<vmem>>, %arg42: memref<32x64xf32, #tpu.memory_space<vmem>>, %arg43: memref<1x64xf32, #tpu.memory_space<vmem>>, %arg44: memref<1x64xf32, #tpu.memory_space<vmem>>, %arg45: memref<1x64xf32, #tpu.memory_space<vmem>>, %arg46: memref<64x64xf32, #tpu.memory_space<vmem>>, %arg47: memref<1x64xf32, #tpu.memory_space<vmem>>, %arg48: memref<64x128xf32, #tpu.memory_space<vmem>>, %arg49: memref<1x128xf32, #tpu.memory_space<vmem>>, %arg50: memref<64x64xf32, #tpu.memory_space<vmem>>, %arg51: memref<1x64xf32, #tpu.memory_space<vmem>>, %arg52: memref<1x64xf32, #tpu.memory_space<vmem>>, %arg53: memref<1x64xf32, #tpu.memory_space<vmem>>, %arg54: memref<64x32xf32, #tpu.memory_space<vmem>>, %arg55: memref<1x32xf32, #tpu.memory_space<vmem>>, %arg56: memref<32x64xf32, #tpu.memory_space<vmem>>, %arg57: memref<1x64xf32, #tpu.memory_space<vmem>>, %arg58: memref<1x64xf32, #tpu.memory_space<vmem>>, %arg59: memref<1x64xf32, #tpu.memory_space<vmem>>, %arg60: memref<64x64xf32, #tpu.memory_space<vmem>>, %arg61: memref<1x64xf32, #tpu.memory_space<vmem>>, %arg62: memref<64x128xf32, #tpu.memory_space<vmem>>, %arg63: memref<1x128xf32, #tpu.memory_space<vmem>>, %arg64: memref<64x64xf32, #tpu.memory_space<vmem>>, %arg65: memref<1x64xf32, #tpu.memory_space<vmem>>, %arg66: memref<1x64xf32, #tpu.memory_space<vmem>>, %arg67: memref<1x64xf32, #tpu.memory_space<vmem>>, %arg68: memref<64x32xf32, #tpu.memory_space<vmem>>, %arg69: memref<1x32xf32, #tpu.memory_space<vmem>>, %arg70: memref<32x64xf32, #tpu.memory_space<vmem>>, %arg71: memref<1x64xf32, #tpu.memory_space<vmem>>, %arg72: memref<1x64xf32, #tpu.memory_space<vmem>>, %arg73: memref<1x64xf32, #tpu.memory_space<vmem>>, %arg74: memref<8x128xf32, #tpu.memory_space<vmem>>) attributes {dimension_semantics = [#tpu.dimension_semantics<arbitrary>], iteration_bounds = array<i64: 1>, scalar_prefetch = 0 : i64, scratch_operands = 0 : i64, tpu.core_type = #tpu.core_type<tc>, window_params = [{pipeline_mode = #tpu.pipeline_mode<synchronous>, transform_indices = @transform_0, window_bounds = array<i64: 128, 4>}, {pipeline_mode = #tpu.pipeline_mode<synchronous>, transform_indices = @transform_1, window_bounds = array<i64: 8, 8>}, {pipeline_mode = #tpu.pipeline_mode<synchronous>, transform_indices = @transform_2, window_bounds = array<i64: 12, 16>}, {pipeline_mode = #tpu.pipeline_mode<synchronous>, transform_indices = @transform_3, window_bounds = array<i64: 1, 16>}, {pipeline_mode = #tpu.pipeline_mode<synchronous>, transform_indices = @transform_4, window_bounds = array<i64: 128, 1>}, {pipeline_mode = #tpu.pipeline_mode<synchronous>, transform_indices = @transform_5, window_bounds = array<i64: 128, 1>}, {pipeline_mode = #tpu.pipeline_mode<synchronous>, transform_indices = @transform_6, window_bounds = array<i64: 64, 128>}, {pipeline_mode = #tpu.pipeline_mode<synchronous>, transform_indices = @transform_7, window_bounds = array<i64: 48, 32>}, {pipeline_mode = #tpu.pipeline_mode<synchronous>, transform_indices = @transform_8, window_bounds = array<i64: 1, 32>}, {pipeline_mode = #tpu.pipeline_mode<synchronous>, transform_indices = @transform_9, window_bounds = array<i64: 64, 1>}, {pipeline_mode = #tpu.pipeline_mode<synchronous>, transform_indices = @transform_10, window_bounds = array<i64: 64, 1>}, {pipeline_mode = #tpu.pipeline_mode<synchronous>, transform_indices = @transform_11, window_bounds = array<i64: 32, 64>}, {pipeline_mode = #tpu.pipeline_mode<synchronous>, transform_indices = @transform_12, window_bounds = array<i64: 96, 64>}, {pipeline_mode = #tpu.pipeline_mode<synchronous>, transform_indices = @transform_13, window_bounds = array<i64: 1, 64>}, {pipeline_mode = #tpu.pipeline_mode<synchronous>, transform_indices = @transform_14, window_bounds = array<i64: 32, 1>}, {pipeline_mode = #tpu.pipeline_mode<synchronous>, transform_indices = @transform_15, window_bounds = array<i64: 32, 1>}, {pipeline_mode = #tpu.pipeline_mode<synchronous>, transform_indices = @transform_16, window_bounds = array<i64: 16, 32>}, {pipeline_mode = #tpu.pipeline_mode<synchronous>, transform_indices = @transform_17, window_bounds = array<i64: 64, 64>}, {pipeline_mode = #tpu.pipeline_mode<synchronous>, transform_indices = @transform_18, window_bounds = array<i64: 1, 64>}, {pipeline_mode = #tpu.pipeline_mode<synchronous>, transform_indices = @transform_19, window_bounds = array<i64: 64, 128>}, {pipeline_mode = #tpu.pipeline_mode<synchronous>, transform_indices = @transform_20, window_bounds = array<i64: 1, 128>}, {pipeline_mode = #tpu.pipeline_mode<synchronous>, transform_indices = @transform_21, window_bounds = array<i64: 64, 64>}, {pipeline_mode = #tpu.pipeline_mode<synchronous>, transform_indices = @transform_22, window_bounds = array<i64: 1, 64>}, {pipeline_mode = #tpu.pipeline_mode<synchronous>, transform_indices = @transform_23, window_bounds = array<i64: 1, 64>}, {pipeline_mode = #tpu.pipeline_mode<synchronous>, transform_indices = @transform_24, window_bounds = array<i64: 1, 64>}, {pipeline_mode = #tpu.pipeline_mode<synchronous>, transform_indices = @transform_25, window_bounds = array<i64: 64, 32>}, {pipeline_mode = #tpu.pipeline_mode<synchronous>, transform_indices = @transform_26, window_bounds = array<i64: 1, 32>}, {pipeline_mode = #tpu.pipeline_mode<synchronous>, transform_indices = @transform_27, window_bounds = array<i64: 32, 64>}, {pipeline_mode = #tpu.pipeline_mode<synchronous>, transform_indices = @transform_28, window_bounds = array<i64: 1, 64>}, {pipeline_mode = #tpu.pipeline_mode<synchronous>, transform_indices = @transform_29, window_bounds = array<i64: 1, 64>}, {pipeline_mode = #tpu.pipeline_mode<synchronous>, transform_indices = @transform_30, window_bounds = array<i64: 1, 64>}, {pipeline_mode = #tpu.pipeline_mode<synchronous>, transform_indices = @transform_31, window_bounds = array<i64: 64, 64>}, {pipeline_mode = #tpu.pipeline_mode<synchronous>, transform_indices = @transform_32, window_bounds = array<i64: 1, 64>}, {pipeline_mode = #tpu.pipeline_mode<synchronous>, transform_indices = @transform_33, window_bounds = array<i64: 64, 128>}, {pipeline_mode = #tpu.pipeline_mode<synchronous>, transform_indices = @transform_34, window_bounds = array<i64: 1, 128>}, {pipeline_mode = #tpu.pipeline_mode<synchronous>, transform_indices = @transform_35, window_bounds = array<i64: 64, 64>}, {pipeline_mode = #tpu.pipeline_mode<synchronous>, transform_indices = @transform_36, window_bounds = array<i64: 1, 64>}, {pipeline_mode = #tpu.pipeline_mode<synchronous>, transform_indices = @transform_37, window_bounds = array<i64: 1, 64>}, {pipeline_mode = #tpu.pipeline_mode<synchronous>, transform_indices = @transform_38, window_bounds = array<i64: 1, 64>}, {pipeline_mode = #tpu.pipeline_mode<synchronous>, transform_indices = @transform_39, window_bounds = array<i64: 64, 32>}, {pipeline_mode = #tpu.pipeline_mode<synchronous>, transform_indices = @transform_40, window_bounds = array<i64: 1, 32>}, {pipeline_mode = #tpu.pipeline_mode<synchronous>, transform_indices = @transform_41, window_bounds = array<i64: 32, 64>}, {pipeline_mode = #tpu.pipeline_mode<synchronous>, transform_indices = @transform_42, window_bounds = array<i64: 1, 64>}, {pipeline_mode = #tpu.pipeline_mode<synchronous>, transform_indices = @transform_43, window_bounds = array<i64: 1, 64>}, {pipeline_mode = #tpu.pipeline_mode<synchronous>, transform_indices = @transform_44, window_bounds = array<i64: 1, 64>}, {pipeline_mode = #tpu.pipeline_mode<synchronous>, transform_indices = @transform_45, window_bounds = array<i64: 64, 64>}, {pipeline_mode = #tpu.pipeline_mode<synchronous>, transform_indices = @transform_46, window_bounds = array<i64: 1, 64>}, {pipeline_mode = #tpu.pipeline_mode<synchronous>, transform_indices = @transform_47, window_bounds = array<i64: 64, 128>}, {pipeline_mode = #tpu.pipeline_mode<synchronous>, transform_indices = @transform_48, window_bounds = array<i64: 1, 128>}, {pipeline_mode = #tpu.pipeline_mode<synchronous>, transform_indices = @transform_49, window_bounds = array<i64: 64, 64>}, {pipeline_mode = #tpu.pipeline_mode<synchronous>, transform_indices = @transform_50, window_bounds = array<i64: 1, 64>}, {pipeline_mode = #tpu.pipeline_mode<synchronous>, transform_indices = @transform_51, window_bounds = array<i64: 1, 64>}, {pipeline_mode = #tpu.pipeline_mode<synchronous>, transform_indices = @transform_52, window_bounds = array<i64: 1, 64>}, {pipeline_mode = #tpu.pipeline_mode<synchronous>, transform_indices = @transform_53, window_bounds = array<i64: 64, 32>}, {pipeline_mode = #tpu.pipeline_mode<synchronous>, transform_indices = @transform_54, window_bounds = array<i64: 1, 32>}, {pipeline_mode = #tpu.pipeline_mode<synchronous>, transform_indices = @transform_55, window_bounds = array<i64: 32, 64>}, {pipeline_mode = #tpu.pipeline_mode<synchronous>, transform_indices = @transform_56, window_bounds = array<i64: 1, 64>}, {pipeline_mode = #tpu.pipeline_mode<synchronous>, transform_indices = @transform_57, window_bounds = array<i64: 1, 64>}, {pipeline_mode = #tpu.pipeline_mode<synchronous>, transform_indices = @transform_58, window_bounds = array<i64: 1, 64>}, {pipeline_mode = #tpu.pipeline_mode<synchronous>, transform_indices = @transform_59, window_bounds = array<i64: 64, 64>}, {pipeline_mode = #tpu.pipeline_mode<synchronous>, transform_indices = @transform_60, window_bounds = array<i64: 1, 64>}, {pipeline_mode = #tpu.pipeline_mode<synchronous>, transform_indices = @transform_61, window_bounds = array<i64: 64, 128>}, {pipeline_mode = #tpu.pipeline_mode<synchronous>, transform_indices = @transform_62, window_bounds = array<i64: 1, 128>}, {pipeline_mode = #tpu.pipeline_mode<synchronous>, transform_indices = @transform_63, window_bounds = array<i64: 64, 64>}, {pipeline_mode = #tpu.pipeline_mode<synchronous>, transform_indices = @transform_64, window_bounds = array<i64: 1, 64>}, {pipeline_mode = #tpu.pipeline_mode<synchronous>, transform_indices = @transform_65, window_bounds = array<i64: 1, 64>}, {pipeline_mode = #tpu.pipeline_mode<synchronous>, transform_indices = @transform_66, window_bounds = array<i64: 1, 64>}, {pipeline_mode = #tpu.pipeline_mode<synchronous>, transform_indices = @transform_67, window_bounds = array<i64: 64, 32>}, {pipeline_mode = #tpu.pipeline_mode<synchronous>, transform_indices = @transform_68, window_bounds = array<i64: 1, 32>}, {pipeline_mode = #tpu.pipeline_mode<synchronous>, transform_indices = @transform_69, window_bounds = array<i64: 32, 64>}, {pipeline_mode = #tpu.pipeline_mode<synchronous>, transform_indices = @transform_70, window_bounds = array<i64: 1, 64>}, {pipeline_mode = #tpu.pipeline_mode<synchronous>, transform_indices = @transform_71, window_bounds = array<i64: 1, 64>}, {pipeline_mode = #tpu.pipeline_mode<synchronous>, transform_indices = @transform_72, window_bounds = array<i64: 1, 64>}, {pipeline_mode = #tpu.pipeline_mode<synchronous>, transform_indices = @transform_73, window_bounds = array<i64: 8, 128>}]} {
    %c0 = arith.constant 0 : index
    %c0_0 = arith.constant 0 : index
    %0 = vector.load %arg1[%c0, %c0_0] : memref<128x4xf32, #tpu.memory_space<vmem>>, vector<128x4xf32>
    %cst = arith.constant 0.000000e+00 : f32
    %1 = vector.broadcast %cst : f32 to vector<1x4xf32>
    %2 = vector.extract_strided_slice %0 {offsets = [0, 0], sizes = [127, 4], strides = [1, 1]} : vector<128x4xf32> to vector<127x4xf32>
    %3 = tpu.concatenate %1, %2 in 0 : vector<1x4xf32>, vector<127x4xf32> -> vector<128x4xf32>
    %c0_1 = arith.constant 0 : index
    %c0_2 = arith.constant 0 : index
    %4 = vector.load %arg5[%c0_1, %c0_2] : memref<128x1xf32, #tpu.memory_space<vmem>>, vector<128x1xf32>
    %5 = vector.broadcast %4 : vector<128x1xf32> to vector<128x4xf32>
    %6 = arith.mulf %3, %5 : vector<128x4xf32>
    %7 = vector.extract_strided_slice %0 {offsets = [1, 0], sizes = [127, 4], strides = [1, 1]} : vector<128x4xf32> to vector<127x4xf32>
    %8 = tpu.concatenate %7, %1 in 0 : vector<127x4xf32>, vector<1x4xf32> -> vector<128x4xf32>
    %c0_3 = arith.constant 0 : index
    %c0_4 = arith.constant 0 : index
    %9 = vector.load %arg6[%c0_3, %c0_4] : memref<128x1xf32, #tpu.memory_space<vmem>>, vector<128x1xf32>
    %10 = vector.broadcast %9 : vector<128x1xf32> to vector<128x4xf32>
    %11 = arith.mulf %8, %10 : vector<128x4xf32>
    %12 = tpu.concatenate %6, %0, %11 in 1 : vector<128x4xf32>, vector<128x4xf32>, vector<128x4xf32> -> vector<128x12xf32>
    %c0_5 = arith.constant 0 : index
    %c0_6 = arith.constant 0 : index
    %13 = vector.load %arg3[%c0_5, %c0_6] : memref<12x16xf32, #tpu.memory_space<vmem>>, vector<12x16xf32>
    %cst_7 = arith.constant dense<0.000000e+00> : vector<128x16xf32>
    %14 = tpu.matmul %12, %13, %cst_7 {dimension_numbers = #tpu.dot_dimension_numbers<[1], [0], [0], [1], [0, 0, 1, 1], [], []>} : vector<128x12xf32>, vector<12x16xf32>, vector<128x16xf32> -> vector<128x16xf32>
    %c0_8 = arith.constant 0 : index
    %c0_9 = arith.constant 0 : index
    %15 = vector.load %arg4[%c0_8, %c0_9] : memref<1x16xf32, #tpu.memory_space<vmem>>, vector<1x16xf32>
    %16 = vector.broadcast %15 : vector<1x16xf32> to vector<128x16xf32>
    %17 = arith.addf %14, %16 : vector<128x16xf32>
    %cst_10 = arith.constant 0.000000e+00 : f32
    %18 = vector.broadcast %cst_10 : f32 to vector<128x16xf32>
    %19 = arith.maximumf %17, %18 : vector<128x16xf32>
    %20 = vector.extract_strided_slice %19 {offsets = [1, 0], sizes = [127, 16], strides = [1, 1]} : vector<128x16xf32> to vector<127x16xf32>
    %cst_11 = arith.constant 0.000000e+00 : f32
    %21 = vector.broadcast %cst_11 : f32 to vector<1x16xf32>
    %22 = tpu.concatenate %20, %21 in 0 : vector<127x16xf32>, vector<1x16xf32> -> vector<128x16xf32>
    %23 = arith.maximumf %19, %22 : vector<128x16xf32>
    %c0_12 = arith.constant 0 : index
    %c0_13 = arith.constant 0 : index
    %24 = vector.load %arg7[%c0_12, %c0_13] : memref<64x128xf32, #tpu.memory_space<vmem>>, vector<64x128xf32>
    %cst_14 = arith.constant dense<0.000000e+00> : vector<64x16xf32>
    %25 = tpu.matmul %24, %23, %cst_14 {dimension_numbers = #tpu.dot_dimension_numbers<[1], [0], [0], [1], [0, 0, 1, 1], [], []>} : vector<64x128xf32>, vector<128x16xf32>, vector<64x16xf32> -> vector<64x16xf32>
    %cst_15 = arith.constant 0.000000e+00 : f32
    %26 = vector.broadcast %cst_15 : f32 to vector<1x16xf32>
    %27 = vector.extract_strided_slice %25 {offsets = [0, 0], sizes = [63, 16], strides = [1, 1]} : vector<64x16xf32> to vector<63x16xf32>
    %28 = tpu.concatenate %26, %27 in 0 : vector<1x16xf32>, vector<63x16xf32> -> vector<64x16xf32>
    %c0_16 = arith.constant 0 : index
    %c0_17 = arith.constant 0 : index
    %29 = vector.load %arg10[%c0_16, %c0_17] : memref<64x1xf32, #tpu.memory_space<vmem>>, vector<64x1xf32>
    %30 = vector.broadcast %29 : vector<64x1xf32> to vector<64x16xf32>
    %31 = arith.mulf %28, %30 : vector<64x16xf32>
    %32 = vector.extract_strided_slice %25 {offsets = [1, 0], sizes = [63, 16], strides = [1, 1]} : vector<64x16xf32> to vector<63x16xf32>
    %33 = tpu.concatenate %32, %26 in 0 : vector<63x16xf32>, vector<1x16xf32> -> vector<64x16xf32>
    %c0_18 = arith.constant 0 : index
    %c0_19 = arith.constant 0 : index
    %34 = vector.load %arg11[%c0_18, %c0_19] : memref<64x1xf32, #tpu.memory_space<vmem>>, vector<64x1xf32>
    %35 = vector.broadcast %34 : vector<64x1xf32> to vector<64x16xf32>
    %36 = arith.mulf %33, %35 : vector<64x16xf32>
    %37 = tpu.concatenate %31, %25, %36 in 1 : vector<64x16xf32>, vector<64x16xf32>, vector<64x16xf32> -> vector<64x48xf32>
    %c0_20 = arith.constant 0 : index
    %c0_21 = arith.constant 0 : index
    %38 = vector.load %arg8[%c0_20, %c0_21] : memref<48x32xf32, #tpu.memory_space<vmem>>, vector<48x32xf32>
    %cst_22 = arith.constant dense<0.000000e+00> : vector<64x32xf32>
    %39 = tpu.matmul %37, %38, %cst_22 {dimension_numbers = #tpu.dot_dimension_numbers<[1], [0], [0], [1], [0, 0, 1, 1], [], []>} : vector<64x48xf32>, vector<48x32xf32>, vector<64x32xf32> -> vector<64x32xf32>
    %c0_23 = arith.constant 0 : index
    %c0_24 = arith.constant 0 : index
    %40 = vector.load %arg9[%c0_23, %c0_24] : memref<1x32xf32, #tpu.memory_space<vmem>>, vector<1x32xf32>
    %41 = vector.broadcast %40 : vector<1x32xf32> to vector<64x32xf32>
    %42 = arith.addf %39, %41 : vector<64x32xf32>
    %cst_25 = arith.constant 0.000000e+00 : f32
    %43 = vector.broadcast %cst_25 : f32 to vector<64x32xf32>
    %44 = arith.maximumf %42, %43 : vector<64x32xf32>
    %45 = vector.extract_strided_slice %44 {offsets = [1, 0], sizes = [63, 32], strides = [1, 1]} : vector<64x32xf32> to vector<63x32xf32>
    %cst_26 = arith.constant 0.000000e+00 : f32
    %46 = vector.broadcast %cst_26 : f32 to vector<1x32xf32>
    %47 = tpu.concatenate %45, %46 in 0 : vector<63x32xf32>, vector<1x32xf32> -> vector<64x32xf32>
    %48 = arith.maximumf %44, %47 : vector<64x32xf32>
    %c0_27 = arith.constant 0 : index
    %c0_28 = arith.constant 0 : index
    %49 = vector.load %arg12[%c0_27, %c0_28] : memref<32x64xf32, #tpu.memory_space<vmem>>, vector<32x64xf32>
    %cst_29 = arith.constant dense<0.000000e+00> : vector<32x32xf32>
    %50 = tpu.matmul %49, %48, %cst_29 {dimension_numbers = #tpu.dot_dimension_numbers<[1], [0], [0], [1], [0, 0, 1, 1], [], []>} : vector<32x64xf32>, vector<64x32xf32>, vector<32x32xf32> -> vector<32x32xf32>
    %cst_30 = arith.constant 0.000000e+00 : f32
    %51 = vector.broadcast %cst_30 : f32 to vector<1x32xf32>
    %52 = vector.extract_strided_slice %50 {offsets = [0, 0], sizes = [31, 32], strides = [1, 1]} : vector<32x32xf32> to vector<31x32xf32>
    %53 = tpu.concatenate %51, %52 in 0 : vector<1x32xf32>, vector<31x32xf32> -> vector<32x32xf32>
    %c0_31 = arith.constant 0 : index
    %c0_32 = arith.constant 0 : index
    %54 = vector.load %arg15[%c0_31, %c0_32] : memref<32x1xf32, #tpu.memory_space<vmem>>, vector<32x1xf32>
    %55 = vector.broadcast %54 : vector<32x1xf32> to vector<32x32xf32>
    %56 = arith.mulf %53, %55 : vector<32x32xf32>
    %57 = vector.extract_strided_slice %50 {offsets = [1, 0], sizes = [31, 32], strides = [1, 1]} : vector<32x32xf32> to vector<31x32xf32>
    %58 = tpu.concatenate %57, %51 in 0 : vector<31x32xf32>, vector<1x32xf32> -> vector<32x32xf32>
    %c0_33 = arith.constant 0 : index
    %c0_34 = arith.constant 0 : index
    %59 = vector.load %arg16[%c0_33, %c0_34] : memref<32x1xf32, #tpu.memory_space<vmem>>, vector<32x1xf32>
    %60 = vector.broadcast %59 : vector<32x1xf32> to vector<32x32xf32>
    %61 = arith.mulf %58, %60 : vector<32x32xf32>
    %62 = tpu.concatenate %56, %50, %61 in 1 : vector<32x32xf32>, vector<32x32xf32>, vector<32x32xf32> -> vector<32x96xf32>
    %c0_35 = arith.constant 0 : index
    %c0_36 = arith.constant 0 : index
    %63 = vector.load %arg13[%c0_35, %c0_36] : memref<96x64xf32, #tpu.memory_space<vmem>>, vector<96x64xf32>
    %cst_37 = arith.constant dense<0.000000e+00> : vector<32x64xf32>
    %64 = tpu.matmul %62, %63, %cst_37 {dimension_numbers = #tpu.dot_dimension_numbers<[1], [0], [0], [1], [0, 0, 1, 1], [], []>} : vector<32x96xf32>, vector<96x64xf32>, vector<32x64xf32> -> vector<32x64xf32>
    %c0_38 = arith.constant 0 : index
    %c0_39 = arith.constant 0 : index
    %65 = vector.load %arg14[%c0_38, %c0_39] : memref<1x64xf32, #tpu.memory_space<vmem>>, vector<1x64xf32>
    %66 = vector.broadcast %65 : vector<1x64xf32> to vector<32x64xf32>
    %67 = arith.addf %64, %66 : vector<32x64xf32>
    %cst_40 = arith.constant 0.000000e+00 : f32
    %68 = vector.broadcast %cst_40 : f32 to vector<32x64xf32>
    %69 = arith.maximumf %67, %68 : vector<32x64xf32>
    %70 = vector.extract_strided_slice %69 {offsets = [1, 0], sizes = [31, 64], strides = [1, 1]} : vector<32x64xf32> to vector<31x64xf32>
    %cst_41 = arith.constant 0.000000e+00 : f32
    %71 = vector.broadcast %cst_41 : f32 to vector<1x64xf32>
    %72 = tpu.concatenate %70, %71 in 0 : vector<31x64xf32>, vector<1x64xf32> -> vector<32x64xf32>
    %73 = arith.maximumf %69, %72 : vector<32x64xf32>
    %c0_42 = arith.constant 0 : index
    %c0_43 = arith.constant 0 : index
    %74 = vector.load %arg17[%c0_42, %c0_43] : memref<16x32xf32, #tpu.memory_space<vmem>>, vector<16x32xf32>
    %cst_44 = arith.constant dense<0.000000e+00> : vector<16x64xf32>
    %75 = tpu.matmul %74, %73, %cst_44 {dimension_numbers = #tpu.dot_dimension_numbers<[1], [0], [0], [1], [0, 0, 1, 1], [], []>} : vector<16x32xf32>, vector<32x64xf32>, vector<16x64xf32> -> vector<16x64xf32>
    %c0_45 = arith.constant 0 : index
    %c0_46 = arith.constant 0 : index
    %76 = vector.load %arg2[%c0_45, %c0_46] : memref<8x8xf32, #tpu.memory_space<vmem>>, vector<8x8xf32>
    %77 = vector.extract_strided_slice %75 {offsets = [0, 0], sizes = [8, 64], strides = [1, 1]} : vector<16x64xf32> to vector<8x64xf32>
    %78 = vector.extract_strided_slice %75 {offsets = [8, 0], sizes = [8, 64], strides = [1, 1]} : vector<16x64xf32> to vector<8x64xf32>
    %c0_47 = arith.constant 0 : index
    %c0_48 = arith.constant 0 : index
    %79 = vector.load %arg18[%c0_47, %c0_48] : memref<64x64xf32, #tpu.memory_space<vmem>>, vector<64x64xf32>
    %cst_49 = arith.constant dense<0.000000e+00> : vector<8x64xf32>
    %80 = tpu.matmul %77, %79, %cst_49 {dimension_numbers = #tpu.dot_dimension_numbers<[1], [0], [0], [1], [0, 0, 1, 1], [], []>} : vector<8x64xf32>, vector<64x64xf32>, vector<8x64xf32> -> vector<8x64xf32>
    %c0_50 = arith.constant 0 : index
    %c0_51 = arith.constant 0 : index
    %81 = vector.load %arg19[%c0_50, %c0_51] : memref<1x64xf32, #tpu.memory_space<vmem>>, vector<1x64xf32>
    %82 = vector.broadcast %81 : vector<1x64xf32> to vector<8x64xf32>
    %83 = arith.addf %80, %82 : vector<8x64xf32>
    %cst_52 = arith.constant 2.500000e-01 : f32
    %84 = vector.broadcast %cst_52 : f32 to vector<8x64xf32>
    %85 = arith.mulf %83, %84 : vector<8x64xf32>
    %c0_53 = arith.constant 0 : index
    %c0_54 = arith.constant 0 : index
    %86 = vector.load %arg20[%c0_53, %c0_54] : memref<64x128xf32, #tpu.memory_space<vmem>>, vector<64x128xf32>
    %cst_55 = arith.constant dense<0.000000e+00> : vector<8x128xf32>
    %87 = tpu.matmul %77, %86, %cst_55 {dimension_numbers = #tpu.dot_dimension_numbers<[1], [0], [0], [1], [0, 0, 1, 1], [], []>} : vector<8x64xf32>, vector<64x128xf32>, vector<8x128xf32> -> vector<8x128xf32>
    %c0_56 = arith.constant 0 : index
    %c0_57 = arith.constant 0 : index
    %88 = vector.load %arg21[%c0_56, %c0_57] : memref<1x128xf32, #tpu.memory_space<vmem>>, vector<1x128xf32>
    %89 = vector.broadcast %88 : vector<1x128xf32> to vector<8x128xf32>
    %90 = arith.addf %87, %89 : vector<8x128xf32>
    %91 = vector.extract_strided_slice %90 {offsets = [0, 0], sizes = [8, 64], strides = [1, 1]} : vector<8x128xf32> to vector<8x64xf32>
    %92 = vector.extract_strided_slice %90 {offsets = [0, 64], sizes = [8, 64], strides = [1, 1]} : vector<8x128xf32> to vector<8x64xf32>
    %93 = vector.extract_strided_slice %85 {offsets = [0, 0], sizes = [8, 16], strides = [1, 1]} : vector<8x64xf32> to vector<8x16xf32>
    %94 = vector.extract_strided_slice %91 {offsets = [0, 0], sizes = [8, 16], strides = [1, 1]} : vector<8x64xf32> to vector<8x16xf32>
    %95 = vector.extract_strided_slice %92 {offsets = [0, 0], sizes = [8, 16], strides = [1, 1]} : vector<8x64xf32> to vector<8x16xf32>
    %cst_58 = arith.constant dense<0.000000e+00> : vector<8x8xf32>
    %96 = tpu.matmul %93, %94, %cst_58 {dimension_numbers = #tpu.dot_dimension_numbers<[1], [1], [0], [0], [0, 0, 1, 0], [], []>} : vector<8x16xf32>, vector<8x16xf32>, vector<8x8xf32> -> vector<8x8xf32>
    %97 = arith.addf %96, %76 : vector<8x8xf32>
    %cst_59 = arith.constant dense<0xFF800000> : vector<8xf32>
    %98 = vector.multi_reduction <maximumf>, %97, %cst_59 [1] : vector<8x8xf32> to vector<8xf32>
    %99 = vector.shape_cast %98 : vector<8xf32> to vector<8x1xf32>
    %100 = vector.broadcast %99 : vector<8x1xf32> to vector<8x8xf32>
    %101 = arith.subf %97, %100 : vector<8x8xf32>
    %102 = math.exp %101 : vector<8x8xf32>
    %cst_60 = arith.constant dense<0.000000e+00> : vector<8xf32>
    %103 = vector.multi_reduction <add>, %102, %cst_60 [1] : vector<8x8xf32> to vector<8xf32>
    %104 = vector.shape_cast %103 : vector<8xf32> to vector<8x1xf32>
    %105 = tpu.reciprocal %104 {approx = true} : vector<8x1xf32> -> vector<8x1xf32>
    %106 = vector.broadcast %105 : vector<8x1xf32> to vector<8x8xf32>
    %107 = arith.mulf %102, %106 : vector<8x8xf32>
    %cst_61 = arith.constant dense<0.000000e+00> : vector<8x16xf32>
    %108 = tpu.matmul %107, %95, %cst_61 {dimension_numbers = #tpu.dot_dimension_numbers<[1], [0], [0], [1], [0, 0, 1, 1], [], []>} : vector<8x8xf32>, vector<8x16xf32>, vector<8x16xf32> -> vector<8x16xf32>
    %109 = vector.extract_strided_slice %85 {offsets = [0, 16], sizes = [8, 16], strides = [1, 1]} : vector<8x64xf32> to vector<8x16xf32>
    %110 = vector.extract_strided_slice %91 {offsets = [0, 16], sizes = [8, 16], strides = [1, 1]} : vector<8x64xf32> to vector<8x16xf32>
    %111 = vector.extract_strided_slice %92 {offsets = [0, 16], sizes = [8, 16], strides = [1, 1]} : vector<8x64xf32> to vector<8x16xf32>
    %cst_62 = arith.constant dense<0.000000e+00> : vector<8x8xf32>
    %112 = tpu.matmul %109, %110, %cst_62 {dimension_numbers = #tpu.dot_dimension_numbers<[1], [1], [0], [0], [0, 0, 1, 0], [], []>} : vector<8x16xf32>, vector<8x16xf32>, vector<8x8xf32> -> vector<8x8xf32>
    %113 = arith.addf %112, %76 : vector<8x8xf32>
    %cst_63 = arith.constant dense<0xFF800000> : vector<8xf32>
    %114 = vector.multi_reduction <maximumf>, %113, %cst_63 [1] : vector<8x8xf32> to vector<8xf32>
    %115 = vector.shape_cast %114 : vector<8xf32> to vector<8x1xf32>
    %116 = vector.broadcast %115 : vector<8x1xf32> to vector<8x8xf32>
    %117 = arith.subf %113, %116 : vector<8x8xf32>
    %118 = math.exp %117 : vector<8x8xf32>
    %cst_64 = arith.constant dense<0.000000e+00> : vector<8xf32>
    %119 = vector.multi_reduction <add>, %118, %cst_64 [1] : vector<8x8xf32> to vector<8xf32>
    %120 = vector.shape_cast %119 : vector<8xf32> to vector<8x1xf32>
    %121 = tpu.reciprocal %120 {approx = true} : vector<8x1xf32> -> vector<8x1xf32>
    %122 = vector.broadcast %121 : vector<8x1xf32> to vector<8x8xf32>
    %123 = arith.mulf %118, %122 : vector<8x8xf32>
    %cst_65 = arith.constant dense<0.000000e+00> : vector<8x16xf32>
    %124 = tpu.matmul %123, %111, %cst_65 {dimension_numbers = #tpu.dot_dimension_numbers<[1], [0], [0], [1], [0, 0, 1, 1], [], []>} : vector<8x8xf32>, vector<8x16xf32>, vector<8x16xf32> -> vector<8x16xf32>
    %125 = vector.extract_strided_slice %85 {offsets = [0, 32], sizes = [8, 16], strides = [1, 1]} : vector<8x64xf32> to vector<8x16xf32>
    %126 = vector.extract_strided_slice %91 {offsets = [0, 32], sizes = [8, 16], strides = [1, 1]} : vector<8x64xf32> to vector<8x16xf32>
    %127 = vector.extract_strided_slice %92 {offsets = [0, 32], sizes = [8, 16], strides = [1, 1]} : vector<8x64xf32> to vector<8x16xf32>
    %cst_66 = arith.constant dense<0.000000e+00> : vector<8x8xf32>
    %128 = tpu.matmul %125, %126, %cst_66 {dimension_numbers = #tpu.dot_dimension_numbers<[1], [1], [0], [0], [0, 0, 1, 0], [], []>} : vector<8x16xf32>, vector<8x16xf32>, vector<8x8xf32> -> vector<8x8xf32>
    %129 = arith.addf %128, %76 : vector<8x8xf32>
    %cst_67 = arith.constant dense<0xFF800000> : vector<8xf32>
    %130 = vector.multi_reduction <maximumf>, %129, %cst_67 [1] : vector<8x8xf32> to vector<8xf32>
    %131 = vector.shape_cast %130 : vector<8xf32> to vector<8x1xf32>
    %132 = vector.broadcast %131 : vector<8x1xf32> to vector<8x8xf32>
    %133 = arith.subf %129, %132 : vector<8x8xf32>
    %134 = math.exp %133 : vector<8x8xf32>
    %cst_68 = arith.constant dense<0.000000e+00> : vector<8xf32>
    %135 = vector.multi_reduction <add>, %134, %cst_68 [1] : vector<8x8xf32> to vector<8xf32>
    %136 = vector.shape_cast %135 : vector<8xf32> to vector<8x1xf32>
    %137 = tpu.reciprocal %136 {approx = true} : vector<8x1xf32> -> vector<8x1xf32>
    %138 = vector.broadcast %137 : vector<8x1xf32> to vector<8x8xf32>
    %139 = arith.mulf %134, %138 : vector<8x8xf32>
    %cst_69 = arith.constant dense<0.000000e+00> : vector<8x16xf32>
    %140 = tpu.matmul %139, %127, %cst_69 {dimension_numbers = #tpu.dot_dimension_numbers<[1], [0], [0], [1], [0, 0, 1, 1], [], []>} : vector<8x8xf32>, vector<8x16xf32>, vector<8x16xf32> -> vector<8x16xf32>
    %141 = vector.extract_strided_slice %85 {offsets = [0, 48], sizes = [8, 16], strides = [1, 1]} : vector<8x64xf32> to vector<8x16xf32>
    %142 = vector.extract_strided_slice %91 {offsets = [0, 48], sizes = [8, 16], strides = [1, 1]} : vector<8x64xf32> to vector<8x16xf32>
    %143 = vector.extract_strided_slice %92 {offsets = [0, 48], sizes = [8, 16], strides = [1, 1]} : vector<8x64xf32> to vector<8x16xf32>
    %cst_70 = arith.constant dense<0.000000e+00> : vector<8x8xf32>
    %144 = tpu.matmul %141, %142, %cst_70 {dimension_numbers = #tpu.dot_dimension_numbers<[1], [1], [0], [0], [0, 0, 1, 0], [], []>} : vector<8x16xf32>, vector<8x16xf32>, vector<8x8xf32> -> vector<8x8xf32>
    %145 = arith.addf %144, %76 : vector<8x8xf32>
    %cst_71 = arith.constant dense<0xFF800000> : vector<8xf32>
    %146 = vector.multi_reduction <maximumf>, %145, %cst_71 [1] : vector<8x8xf32> to vector<8xf32>
    %147 = vector.shape_cast %146 : vector<8xf32> to vector<8x1xf32>
    %148 = vector.broadcast %147 : vector<8x1xf32> to vector<8x8xf32>
    %149 = arith.subf %145, %148 : vector<8x8xf32>
    %150 = math.exp %149 : vector<8x8xf32>
    %cst_72 = arith.constant dense<0.000000e+00> : vector<8xf32>
    %151 = vector.multi_reduction <add>, %150, %cst_72 [1] : vector<8x8xf32> to vector<8xf32>
    %152 = vector.shape_cast %151 : vector<8xf32> to vector<8x1xf32>
    %153 = tpu.reciprocal %152 {approx = true} : vector<8x1xf32> -> vector<8x1xf32>
    %154 = vector.broadcast %153 : vector<8x1xf32> to vector<8x8xf32>
    %155 = arith.mulf %150, %154 : vector<8x8xf32>
    %cst_73 = arith.constant dense<0.000000e+00> : vector<8x16xf32>
    %156 = tpu.matmul %155, %143, %cst_73 {dimension_numbers = #tpu.dot_dimension_numbers<[1], [0], [0], [1], [0, 0, 1, 1], [], []>} : vector<8x8xf32>, vector<8x16xf32>, vector<8x16xf32> -> vector<8x16xf32>
    %157 = tpu.concatenate %108, %124, %140, %156 in 1 : vector<8x16xf32>, vector<8x16xf32>, vector<8x16xf32>, vector<8x16xf32> -> vector<8x64xf32>
    %c0_74 = arith.constant 0 : index
    %c0_75 = arith.constant 0 : index
    %158 = vector.load %arg22[%c0_74, %c0_75] : memref<64x64xf32, #tpu.memory_space<vmem>>, vector<64x64xf32>
    %cst_76 = arith.constant dense<0.000000e+00> : vector<8x64xf32>
    %159 = tpu.matmul %157, %158, %cst_76 {dimension_numbers = #tpu.dot_dimension_numbers<[1], [0], [0], [1], [0, 0, 1, 1], [], []>} : vector<8x64xf32>, vector<64x64xf32>, vector<8x64xf32> -> vector<8x64xf32>
    %c0_77 = arith.constant 0 : index
    %c0_78 = arith.constant 0 : index
    %160 = vector.load %arg23[%c0_77, %c0_78] : memref<1x64xf32, #tpu.memory_space<vmem>>, vector<1x64xf32>
    %161 = vector.broadcast %160 : vector<1x64xf32> to vector<8x64xf32>
    %162 = arith.addf %159, %161 : vector<8x64xf32>
    %163 = arith.addf %77, %162 : vector<8x64xf32>
    %c0_79 = arith.constant 0 : index
    %c0_80 = arith.constant 0 : index
    %164 = vector.load %arg24[%c0_79, %c0_80] : memref<1x64xf32, #tpu.memory_space<vmem>>, vector<1x64xf32>
    %c0_81 = arith.constant 0 : index
    %c0_82 = arith.constant 0 : index
    %165 = vector.load %arg25[%c0_81, %c0_82] : memref<1x64xf32, #tpu.memory_space<vmem>>, vector<1x64xf32>
    %cst_83 = arith.constant dense<0.000000e+00> : vector<8xf32>
    %166 = vector.multi_reduction <add>, %163, %cst_83 [1] : vector<8x64xf32> to vector<8xf32>
    %167 = vector.shape_cast %166 : vector<8xf32> to vector<8x1xf32>
    %cst_84 = arith.constant 6.400000e+01 : f32
    %168 = vector.broadcast %cst_84 : f32 to vector<8x1xf32>
    %169 = arith.divf %167, %168 : vector<8x1xf32>
    %170 = vector.broadcast %169 : vector<8x1xf32> to vector<8x64xf32>
    %171 = arith.subf %163, %170 : vector<8x64xf32>
    %172 = arith.mulf %171, %171 : vector<8x64xf32>
    %cst_85 = arith.constant dense<0.000000e+00> : vector<8xf32>
    %173 = vector.multi_reduction <add>, %172, %cst_85 [1] : vector<8x64xf32> to vector<8xf32>
    %174 = vector.shape_cast %173 : vector<8xf32> to vector<8x1xf32>
    %cst_86 = arith.constant 6.400000e+01 : f32
    %175 = vector.broadcast %cst_86 : f32 to vector<8x1xf32>
    %176 = arith.divf %174, %175 : vector<8x1xf32>
    %177 = vector.broadcast %169 : vector<8x1xf32> to vector<8x64xf32>
    %178 = arith.subf %163, %177 : vector<8x64xf32>
    %cst_87 = arith.constant 9.99999974E-6 : f32
    %179 = vector.broadcast %cst_87 : f32 to vector<8x1xf32>
    %180 = arith.addf %176, %179 : vector<8x1xf32>
    %181 = math.rsqrt %180 : vector<8x1xf32>
    %182 = vector.broadcast %181 : vector<8x1xf32> to vector<8x64xf32>
    %183 = arith.mulf %178, %182 : vector<8x64xf32>
    %184 = vector.broadcast %164 : vector<1x64xf32> to vector<8x64xf32>
    %185 = arith.mulf %183, %184 : vector<8x64xf32>
    %186 = vector.broadcast %165 : vector<1x64xf32> to vector<8x64xf32>
    %187 = arith.addf %185, %186 : vector<8x64xf32>
    %c0_88 = arith.constant 0 : index
    %c0_89 = arith.constant 0 : index
    %188 = vector.load %arg26[%c0_88, %c0_89] : memref<64x32xf32, #tpu.memory_space<vmem>>, vector<64x32xf32>
    %cst_90 = arith.constant dense<0.000000e+00> : vector<8x32xf32>
    %189 = tpu.matmul %187, %188, %cst_90 {dimension_numbers = #tpu.dot_dimension_numbers<[1], [0], [0], [1], [0, 0, 1, 1], [], []>} : vector<8x64xf32>, vector<64x32xf32>, vector<8x32xf32> -> vector<8x32xf32>
    %c0_91 = arith.constant 0 : index
    %c0_92 = arith.constant 0 : index
    %190 = vector.load %arg27[%c0_91, %c0_92] : memref<1x32xf32, #tpu.memory_space<vmem>>, vector<1x32xf32>
    %191 = vector.broadcast %190 : vector<1x32xf32> to vector<8x32xf32>
    %192 = arith.addf %189, %191 : vector<8x32xf32>
    %cst_93 = arith.constant 0.000000e+00 : f32
    %193 = vector.broadcast %cst_93 : f32 to vector<8x32xf32>
    %194 = arith.maximumf %192, %193 : vector<8x32xf32>
    %c0_94 = arith.constant 0 : index
    %c0_95 = arith.constant 0 : index
    %195 = vector.load %arg28[%c0_94, %c0_95] : memref<32x64xf32, #tpu.memory_space<vmem>>, vector<32x64xf32>
    %cst_96 = arith.constant dense<0.000000e+00> : vector<8x64xf32>
    %196 = tpu.matmul %194, %195, %cst_96 {dimension_numbers = #tpu.dot_dimension_numbers<[1], [0], [0], [1], [0, 0, 1, 1], [], []>} : vector<8x32xf32>, vector<32x64xf32>, vector<8x64xf32> -> vector<8x64xf32>
    %c0_97 = arith.constant 0 : index
    %c0_98 = arith.constant 0 : index
    %197 = vector.load %arg29[%c0_97, %c0_98] : memref<1x64xf32, #tpu.memory_space<vmem>>, vector<1x64xf32>
    %198 = vector.broadcast %197 : vector<1x64xf32> to vector<8x64xf32>
    %199 = arith.addf %196, %198 : vector<8x64xf32>
    %200 = arith.addf %187, %199 : vector<8x64xf32>
    %c0_99 = arith.constant 0 : index
    %c0_100 = arith.constant 0 : index
    %201 = vector.load %arg30[%c0_99, %c0_100] : memref<1x64xf32, #tpu.memory_space<vmem>>, vector<1x64xf32>
    %c0_101 = arith.constant 0 : index
    %c0_102 = arith.constant 0 : index
    %202 = vector.load %arg31[%c0_101, %c0_102] : memref<1x64xf32, #tpu.memory_space<vmem>>, vector<1x64xf32>
    %cst_103 = arith.constant dense<0.000000e+00> : vector<8xf32>
    %203 = vector.multi_reduction <add>, %200, %cst_103 [1] : vector<8x64xf32> to vector<8xf32>
    %204 = vector.shape_cast %203 : vector<8xf32> to vector<8x1xf32>
    %cst_104 = arith.constant 6.400000e+01 : f32
    %205 = vector.broadcast %cst_104 : f32 to vector<8x1xf32>
    %206 = arith.divf %204, %205 : vector<8x1xf32>
    %207 = vector.broadcast %206 : vector<8x1xf32> to vector<8x64xf32>
    %208 = arith.subf %200, %207 : vector<8x64xf32>
    %209 = arith.mulf %208, %208 : vector<8x64xf32>
    %cst_105 = arith.constant dense<0.000000e+00> : vector<8xf32>
    %210 = vector.multi_reduction <add>, %209, %cst_105 [1] : vector<8x64xf32> to vector<8xf32>
    %211 = vector.shape_cast %210 : vector<8xf32> to vector<8x1xf32>
    %cst_106 = arith.constant 6.400000e+01 : f32
    %212 = vector.broadcast %cst_106 : f32 to vector<8x1xf32>
    %213 = arith.divf %211, %212 : vector<8x1xf32>
    %214 = vector.broadcast %206 : vector<8x1xf32> to vector<8x64xf32>
    %215 = arith.subf %200, %214 : vector<8x64xf32>
    %cst_107 = arith.constant 9.99999974E-6 : f32
    %216 = vector.broadcast %cst_107 : f32 to vector<8x1xf32>
    %217 = arith.addf %213, %216 : vector<8x1xf32>
    %218 = math.rsqrt %217 : vector<8x1xf32>
    %219 = vector.broadcast %218 : vector<8x1xf32> to vector<8x64xf32>
    %220 = arith.mulf %215, %219 : vector<8x64xf32>
    %221 = vector.broadcast %201 : vector<1x64xf32> to vector<8x64xf32>
    %222 = arith.mulf %220, %221 : vector<8x64xf32>
    %223 = vector.broadcast %202 : vector<1x64xf32> to vector<8x64xf32>
    %224 = arith.addf %222, %223 : vector<8x64xf32>
    %c0_108 = arith.constant 0 : index
    %c0_109 = arith.constant 0 : index
    %225 = vector.load %arg32[%c0_108, %c0_109] : memref<64x64xf32, #tpu.memory_space<vmem>>, vector<64x64xf32>
    %cst_110 = arith.constant dense<0.000000e+00> : vector<8x64xf32>
    %226 = tpu.matmul %78, %225, %cst_110 {dimension_numbers = #tpu.dot_dimension_numbers<[1], [0], [0], [1], [0, 0, 1, 1], [], []>} : vector<8x64xf32>, vector<64x64xf32>, vector<8x64xf32> -> vector<8x64xf32>
    %c0_111 = arith.constant 0 : index
    %c0_112 = arith.constant 0 : index
    %227 = vector.load %arg33[%c0_111, %c0_112] : memref<1x64xf32, #tpu.memory_space<vmem>>, vector<1x64xf32>
    %228 = vector.broadcast %227 : vector<1x64xf32> to vector<8x64xf32>
    %229 = arith.addf %226, %228 : vector<8x64xf32>
    %cst_113 = arith.constant 2.500000e-01 : f32
    %230 = vector.broadcast %cst_113 : f32 to vector<8x64xf32>
    %231 = arith.mulf %229, %230 : vector<8x64xf32>
    %c0_114 = arith.constant 0 : index
    %c0_115 = arith.constant 0 : index
    %232 = vector.load %arg34[%c0_114, %c0_115] : memref<64x128xf32, #tpu.memory_space<vmem>>, vector<64x128xf32>
    %cst_116 = arith.constant dense<0.000000e+00> : vector<8x128xf32>
    %233 = tpu.matmul %78, %232, %cst_116 {dimension_numbers = #tpu.dot_dimension_numbers<[1], [0], [0], [1], [0, 0, 1, 1], [], []>} : vector<8x64xf32>, vector<64x128xf32>, vector<8x128xf32> -> vector<8x128xf32>
    %c0_117 = arith.constant 0 : index
    %c0_118 = arith.constant 0 : index
    %234 = vector.load %arg35[%c0_117, %c0_118] : memref<1x128xf32, #tpu.memory_space<vmem>>, vector<1x128xf32>
    %235 = vector.broadcast %234 : vector<1x128xf32> to vector<8x128xf32>
    %236 = arith.addf %233, %235 : vector<8x128xf32>
    %237 = vector.extract_strided_slice %236 {offsets = [0, 0], sizes = [8, 64], strides = [1, 1]} : vector<8x128xf32> to vector<8x64xf32>
    %238 = vector.extract_strided_slice %236 {offsets = [0, 64], sizes = [8, 64], strides = [1, 1]} : vector<8x128xf32> to vector<8x64xf32>
    %239 = vector.extract_strided_slice %231 {offsets = [0, 0], sizes = [8, 16], strides = [1, 1]} : vector<8x64xf32> to vector<8x16xf32>
    %240 = vector.extract_strided_slice %237 {offsets = [0, 0], sizes = [8, 16], strides = [1, 1]} : vector<8x64xf32> to vector<8x16xf32>
    %241 = vector.extract_strided_slice %238 {offsets = [0, 0], sizes = [8, 16], strides = [1, 1]} : vector<8x64xf32> to vector<8x16xf32>
    %cst_119 = arith.constant dense<0.000000e+00> : vector<8x8xf32>
    %242 = tpu.matmul %239, %240, %cst_119 {dimension_numbers = #tpu.dot_dimension_numbers<[1], [1], [0], [0], [0, 0, 1, 0], [], []>} : vector<8x16xf32>, vector<8x16xf32>, vector<8x8xf32> -> vector<8x8xf32>
    %243 = arith.addf %242, %76 : vector<8x8xf32>
    %cst_120 = arith.constant dense<0xFF800000> : vector<8xf32>
    %244 = vector.multi_reduction <maximumf>, %243, %cst_120 [1] : vector<8x8xf32> to vector<8xf32>
    %245 = vector.shape_cast %244 : vector<8xf32> to vector<8x1xf32>
    %246 = vector.broadcast %245 : vector<8x1xf32> to vector<8x8xf32>
    %247 = arith.subf %243, %246 : vector<8x8xf32>
    %248 = math.exp %247 : vector<8x8xf32>
    %cst_121 = arith.constant dense<0.000000e+00> : vector<8xf32>
    %249 = vector.multi_reduction <add>, %248, %cst_121 [1] : vector<8x8xf32> to vector<8xf32>
    %250 = vector.shape_cast %249 : vector<8xf32> to vector<8x1xf32>
    %251 = tpu.reciprocal %250 {approx = true} : vector<8x1xf32> -> vector<8x1xf32>
    %252 = vector.broadcast %251 : vector<8x1xf32> to vector<8x8xf32>
    %253 = arith.mulf %248, %252 : vector<8x8xf32>
    %cst_122 = arith.constant dense<0.000000e+00> : vector<8x16xf32>
    %254 = tpu.matmul %253, %241, %cst_122 {dimension_numbers = #tpu.dot_dimension_numbers<[1], [0], [0], [1], [0, 0, 1, 1], [], []>} : vector<8x8xf32>, vector<8x16xf32>, vector<8x16xf32> -> vector<8x16xf32>
    %255 = vector.extract_strided_slice %231 {offsets = [0, 16], sizes = [8, 16], strides = [1, 1]} : vector<8x64xf32> to vector<8x16xf32>
    %256 = vector.extract_strided_slice %237 {offsets = [0, 16], sizes = [8, 16], strides = [1, 1]} : vector<8x64xf32> to vector<8x16xf32>
    %257 = vector.extract_strided_slice %238 {offsets = [0, 16], sizes = [8, 16], strides = [1, 1]} : vector<8x64xf32> to vector<8x16xf32>
    %cst_123 = arith.constant dense<0.000000e+00> : vector<8x8xf32>
    %258 = tpu.matmul %255, %256, %cst_123 {dimension_numbers = #tpu.dot_dimension_numbers<[1], [1], [0], [0], [0, 0, 1, 0], [], []>} : vector<8x16xf32>, vector<8x16xf32>, vector<8x8xf32> -> vector<8x8xf32>
    %259 = arith.addf %258, %76 : vector<8x8xf32>
    %cst_124 = arith.constant dense<0xFF800000> : vector<8xf32>
    %260 = vector.multi_reduction <maximumf>, %259, %cst_124 [1] : vector<8x8xf32> to vector<8xf32>
    %261 = vector.shape_cast %260 : vector<8xf32> to vector<8x1xf32>
    %262 = vector.broadcast %261 : vector<8x1xf32> to vector<8x8xf32>
    %263 = arith.subf %259, %262 : vector<8x8xf32>
    %264 = math.exp %263 : vector<8x8xf32>
    %cst_125 = arith.constant dense<0.000000e+00> : vector<8xf32>
    %265 = vector.multi_reduction <add>, %264, %cst_125 [1] : vector<8x8xf32> to vector<8xf32>
    %266 = vector.shape_cast %265 : vector<8xf32> to vector<8x1xf32>
    %267 = tpu.reciprocal %266 {approx = true} : vector<8x1xf32> -> vector<8x1xf32>
    %268 = vector.broadcast %267 : vector<8x1xf32> to vector<8x8xf32>
    %269 = arith.mulf %264, %268 : vector<8x8xf32>
    %cst_126 = arith.constant dense<0.000000e+00> : vector<8x16xf32>
    %270 = tpu.matmul %269, %257, %cst_126 {dimension_numbers = #tpu.dot_dimension_numbers<[1], [0], [0], [1], [0, 0, 1, 1], [], []>} : vector<8x8xf32>, vector<8x16xf32>, vector<8x16xf32> -> vector<8x16xf32>
    %271 = vector.extract_strided_slice %231 {offsets = [0, 32], sizes = [8, 16], strides = [1, 1]} : vector<8x64xf32> to vector<8x16xf32>
    %272 = vector.extract_strided_slice %237 {offsets = [0, 32], sizes = [8, 16], strides = [1, 1]} : vector<8x64xf32> to vector<8x16xf32>
    %273 = vector.extract_strided_slice %238 {offsets = [0, 32], sizes = [8, 16], strides = [1, 1]} : vector<8x64xf32> to vector<8x16xf32>
    %cst_127 = arith.constant dense<0.000000e+00> : vector<8x8xf32>
    %274 = tpu.matmul %271, %272, %cst_127 {dimension_numbers = #tpu.dot_dimension_numbers<[1], [1], [0], [0], [0, 0, 1, 0], [], []>} : vector<8x16xf32>, vector<8x16xf32>, vector<8x8xf32> -> vector<8x8xf32>
    %275 = arith.addf %274, %76 : vector<8x8xf32>
    %cst_128 = arith.constant dense<0xFF800000> : vector<8xf32>
    %276 = vector.multi_reduction <maximumf>, %275, %cst_128 [1] : vector<8x8xf32> to vector<8xf32>
    %277 = vector.shape_cast %276 : vector<8xf32> to vector<8x1xf32>
    %278 = vector.broadcast %277 : vector<8x1xf32> to vector<8x8xf32>
    %279 = arith.subf %275, %278 : vector<8x8xf32>
    %280 = math.exp %279 : vector<8x8xf32>
    %cst_129 = arith.constant dense<0.000000e+00> : vector<8xf32>
    %281 = vector.multi_reduction <add>, %280, %cst_129 [1] : vector<8x8xf32> to vector<8xf32>
    %282 = vector.shape_cast %281 : vector<8xf32> to vector<8x1xf32>
    %283 = tpu.reciprocal %282 {approx = true} : vector<8x1xf32> -> vector<8x1xf32>
    %284 = vector.broadcast %283 : vector<8x1xf32> to vector<8x8xf32>
    %285 = arith.mulf %280, %284 : vector<8x8xf32>
    %cst_130 = arith.constant dense<0.000000e+00> : vector<8x16xf32>
    %286 = tpu.matmul %285, %273, %cst_130 {dimension_numbers = #tpu.dot_dimension_numbers<[1], [0], [0], [1], [0, 0, 1, 1], [], []>} : vector<8x8xf32>, vector<8x16xf32>, vector<8x16xf32> -> vector<8x16xf32>
    %287 = vector.extract_strided_slice %231 {offsets = [0, 48], sizes = [8, 16], strides = [1, 1]} : vector<8x64xf32> to vector<8x16xf32>
    %288 = vector.extract_strided_slice %237 {offsets = [0, 48], sizes = [8, 16], strides = [1, 1]} : vector<8x64xf32> to vector<8x16xf32>
    %289 = vector.extract_strided_slice %238 {offsets = [0, 48], sizes = [8, 16], strides = [1, 1]} : vector<8x64xf32> to vector<8x16xf32>
    %cst_131 = arith.constant dense<0.000000e+00> : vector<8x8xf32>
    %290 = tpu.matmul %287, %288, %cst_131 {dimension_numbers = #tpu.dot_dimension_numbers<[1], [1], [0], [0], [0, 0, 1, 0], [], []>} : vector<8x16xf32>, vector<8x16xf32>, vector<8x8xf32> -> vector<8x8xf32>
    %291 = arith.addf %290, %76 : vector<8x8xf32>
    %cst_132 = arith.constant dense<0xFF800000> : vector<8xf32>
    %292 = vector.multi_reduction <maximumf>, %291, %cst_132 [1] : vector<8x8xf32> to vector<8xf32>
    %293 = vector.shape_cast %292 : vector<8xf32> to vector<8x1xf32>
    %294 = vector.broadcast %293 : vector<8x1xf32> to vector<8x8xf32>
    %295 = arith.subf %291, %294 : vector<8x8xf32>
    %296 = math.exp %295 : vector<8x8xf32>
    %cst_133 = arith.constant dense<0.000000e+00> : vector<8xf32>
    %297 = vector.multi_reduction <add>, %296, %cst_133 [1] : vector<8x8xf32> to vector<8xf32>
    %298 = vector.shape_cast %297 : vector<8xf32> to vector<8x1xf32>
    %299 = tpu.reciprocal %298 {approx = true} : vector<8x1xf32> -> vector<8x1xf32>
    %300 = vector.broadcast %299 : vector<8x1xf32> to vector<8x8xf32>
    %301 = arith.mulf %296, %300 : vector<8x8xf32>
    %cst_134 = arith.constant dense<0.000000e+00> : vector<8x16xf32>
    %302 = tpu.matmul %301, %289, %cst_134 {dimension_numbers = #tpu.dot_dimension_numbers<[1], [0], [0], [1], [0, 0, 1, 1], [], []>} : vector<8x8xf32>, vector<8x16xf32>, vector<8x16xf32> -> vector<8x16xf32>
    %303 = tpu.concatenate %254, %270, %286, %302 in 1 : vector<8x16xf32>, vector<8x16xf32>, vector<8x16xf32>, vector<8x16xf32> -> vector<8x64xf32>
    %c0_135 = arith.constant 0 : index
    %c0_136 = arith.constant 0 : index
    %304 = vector.load %arg36[%c0_135, %c0_136] : memref<64x64xf32, #tpu.memory_space<vmem>>, vector<64x64xf32>
    %cst_137 = arith.constant dense<0.000000e+00> : vector<8x64xf32>
    %305 = tpu.matmul %303, %304, %cst_137 {dimension_numbers = #tpu.dot_dimension_numbers<[1], [0], [0], [1], [0, 0, 1, 1], [], []>} : vector<8x64xf32>, vector<64x64xf32>, vector<8x64xf32> -> vector<8x64xf32>
    %c0_138 = arith.constant 0 : index
    %c0_139 = arith.constant 0 : index
    %306 = vector.load %arg37[%c0_138, %c0_139] : memref<1x64xf32, #tpu.memory_space<vmem>>, vector<1x64xf32>
    %307 = vector.broadcast %306 : vector<1x64xf32> to vector<8x64xf32>
    %308 = arith.addf %305, %307 : vector<8x64xf32>
    %309 = arith.addf %78, %308 : vector<8x64xf32>
    %c0_140 = arith.constant 0 : index
    %c0_141 = arith.constant 0 : index
    %310 = vector.load %arg38[%c0_140, %c0_141] : memref<1x64xf32, #tpu.memory_space<vmem>>, vector<1x64xf32>
    %c0_142 = arith.constant 0 : index
    %c0_143 = arith.constant 0 : index
    %311 = vector.load %arg39[%c0_142, %c0_143] : memref<1x64xf32, #tpu.memory_space<vmem>>, vector<1x64xf32>
    %cst_144 = arith.constant dense<0.000000e+00> : vector<8xf32>
    %312 = vector.multi_reduction <add>, %309, %cst_144 [1] : vector<8x64xf32> to vector<8xf32>
    %313 = vector.shape_cast %312 : vector<8xf32> to vector<8x1xf32>
    %cst_145 = arith.constant 6.400000e+01 : f32
    %314 = vector.broadcast %cst_145 : f32 to vector<8x1xf32>
    %315 = arith.divf %313, %314 : vector<8x1xf32>
    %316 = vector.broadcast %315 : vector<8x1xf32> to vector<8x64xf32>
    %317 = arith.subf %309, %316 : vector<8x64xf32>
    %318 = arith.mulf %317, %317 : vector<8x64xf32>
    %cst_146 = arith.constant dense<0.000000e+00> : vector<8xf32>
    %319 = vector.multi_reduction <add>, %318, %cst_146 [1] : vector<8x64xf32> to vector<8xf32>
    %320 = vector.shape_cast %319 : vector<8xf32> to vector<8x1xf32>
    %cst_147 = arith.constant 6.400000e+01 : f32
    %321 = vector.broadcast %cst_147 : f32 to vector<8x1xf32>
    %322 = arith.divf %320, %321 : vector<8x1xf32>
    %323 = vector.broadcast %315 : vector<8x1xf32> to vector<8x64xf32>
    %324 = arith.subf %309, %323 : vector<8x64xf32>
    %cst_148 = arith.constant 9.99999974E-6 : f32
    %325 = vector.broadcast %cst_148 : f32 to vector<8x1xf32>
    %326 = arith.addf %322, %325 : vector<8x1xf32>
    %327 = math.rsqrt %326 : vector<8x1xf32>
    %328 = vector.broadcast %327 : vector<8x1xf32> to vector<8x64xf32>
    %329 = arith.mulf %324, %328 : vector<8x64xf32>
    %330 = vector.broadcast %310 : vector<1x64xf32> to vector<8x64xf32>
    %331 = arith.mulf %329, %330 : vector<8x64xf32>
    %332 = vector.broadcast %311 : vector<1x64xf32> to vector<8x64xf32>
    %333 = arith.addf %331, %332 : vector<8x64xf32>
    %c0_149 = arith.constant 0 : index
    %c0_150 = arith.constant 0 : index
    %334 = vector.load %arg40[%c0_149, %c0_150] : memref<64x32xf32, #tpu.memory_space<vmem>>, vector<64x32xf32>
    %cst_151 = arith.constant dense<0.000000e+00> : vector<8x32xf32>
    %335 = tpu.matmul %333, %334, %cst_151 {dimension_numbers = #tpu.dot_dimension_numbers<[1], [0], [0], [1], [0, 0, 1, 1], [], []>} : vector<8x64xf32>, vector<64x32xf32>, vector<8x32xf32> -> vector<8x32xf32>
    %c0_152 = arith.constant 0 : index
    %c0_153 = arith.constant 0 : index
    %336 = vector.load %arg41[%c0_152, %c0_153] : memref<1x32xf32, #tpu.memory_space<vmem>>, vector<1x32xf32>
    %337 = vector.broadcast %336 : vector<1x32xf32> to vector<8x32xf32>
    %338 = arith.addf %335, %337 : vector<8x32xf32>
    %cst_154 = arith.constant 0.000000e+00 : f32
    %339 = vector.broadcast %cst_154 : f32 to vector<8x32xf32>
    %340 = arith.maximumf %338, %339 : vector<8x32xf32>
    %c0_155 = arith.constant 0 : index
    %c0_156 = arith.constant 0 : index
    %341 = vector.load %arg42[%c0_155, %c0_156] : memref<32x64xf32, #tpu.memory_space<vmem>>, vector<32x64xf32>
    %cst_157 = arith.constant dense<0.000000e+00> : vector<8x64xf32>
    %342 = tpu.matmul %340, %341, %cst_157 {dimension_numbers = #tpu.dot_dimension_numbers<[1], [0], [0], [1], [0, 0, 1, 1], [], []>} : vector<8x32xf32>, vector<32x64xf32>, vector<8x64xf32> -> vector<8x64xf32>
    %c0_158 = arith.constant 0 : index
    %c0_159 = arith.constant 0 : index
    %343 = vector.load %arg43[%c0_158, %c0_159] : memref<1x64xf32, #tpu.memory_space<vmem>>, vector<1x64xf32>
    %344 = vector.broadcast %343 : vector<1x64xf32> to vector<8x64xf32>
    %345 = arith.addf %342, %344 : vector<8x64xf32>
    %346 = arith.addf %333, %345 : vector<8x64xf32>
    %c0_160 = arith.constant 0 : index
    %c0_161 = arith.constant 0 : index
    %347 = vector.load %arg44[%c0_160, %c0_161] : memref<1x64xf32, #tpu.memory_space<vmem>>, vector<1x64xf32>
    %c0_162 = arith.constant 0 : index
    %c0_163 = arith.constant 0 : index
    %348 = vector.load %arg45[%c0_162, %c0_163] : memref<1x64xf32, #tpu.memory_space<vmem>>, vector<1x64xf32>
    %cst_164 = arith.constant dense<0.000000e+00> : vector<8xf32>
    %349 = vector.multi_reduction <add>, %346, %cst_164 [1] : vector<8x64xf32> to vector<8xf32>
    %350 = vector.shape_cast %349 : vector<8xf32> to vector<8x1xf32>
    %cst_165 = arith.constant 6.400000e+01 : f32
    %351 = vector.broadcast %cst_165 : f32 to vector<8x1xf32>
    %352 = arith.divf %350, %351 : vector<8x1xf32>
    %353 = vector.broadcast %352 : vector<8x1xf32> to vector<8x64xf32>
    %354 = arith.subf %346, %353 : vector<8x64xf32>
    %355 = arith.mulf %354, %354 : vector<8x64xf32>
    %cst_166 = arith.constant dense<0.000000e+00> : vector<8xf32>
    %356 = vector.multi_reduction <add>, %355, %cst_166 [1] : vector<8x64xf32> to vector<8xf32>
    %357 = vector.shape_cast %356 : vector<8xf32> to vector<8x1xf32>
    %cst_167 = arith.constant 6.400000e+01 : f32
    %358 = vector.broadcast %cst_167 : f32 to vector<8x1xf32>
    %359 = arith.divf %357, %358 : vector<8x1xf32>
    %360 = vector.broadcast %352 : vector<8x1xf32> to vector<8x64xf32>
    %361 = arith.subf %346, %360 : vector<8x64xf32>
    %cst_168 = arith.constant 9.99999974E-6 : f32
    %362 = vector.broadcast %cst_168 : f32 to vector<8x1xf32>
    %363 = arith.addf %359, %362 : vector<8x1xf32>
    %364 = math.rsqrt %363 : vector<8x1xf32>
    %365 = vector.broadcast %364 : vector<8x1xf32> to vector<8x64xf32>
    %366 = arith.mulf %361, %365 : vector<8x64xf32>
    %367 = vector.broadcast %347 : vector<1x64xf32> to vector<8x64xf32>
    %368 = arith.mulf %366, %367 : vector<8x64xf32>
    %369 = vector.broadcast %348 : vector<1x64xf32> to vector<8x64xf32>
    %370 = arith.addf %368, %369 : vector<8x64xf32>
    %c0_169 = arith.constant 0 : index
    %c0_170 = arith.constant 0 : index
    %371 = vector.load %arg46[%c0_169, %c0_170] : memref<64x64xf32, #tpu.memory_space<vmem>>, vector<64x64xf32>
    %cst_171 = arith.constant dense<0.000000e+00> : vector<8x64xf32>
    %372 = tpu.matmul %224, %371, %cst_171 {dimension_numbers = #tpu.dot_dimension_numbers<[1], [0], [0], [1], [0, 0, 1, 1], [], []>} : vector<8x64xf32>, vector<64x64xf32>, vector<8x64xf32> -> vector<8x64xf32>
    %c0_172 = arith.constant 0 : index
    %c0_173 = arith.constant 0 : index
    %373 = vector.load %arg47[%c0_172, %c0_173] : memref<1x64xf32, #tpu.memory_space<vmem>>, vector<1x64xf32>
    %374 = vector.broadcast %373 : vector<1x64xf32> to vector<8x64xf32>
    %375 = arith.addf %372, %374 : vector<8x64xf32>
    %cst_174 = arith.constant 2.500000e-01 : f32
    %376 = vector.broadcast %cst_174 : f32 to vector<8x64xf32>
    %377 = arith.mulf %375, %376 : vector<8x64xf32>
    %c0_175 = arith.constant 0 : index
    %c0_176 = arith.constant 0 : index
    %378 = vector.load %arg48[%c0_175, %c0_176] : memref<64x128xf32, #tpu.memory_space<vmem>>, vector<64x128xf32>
    %cst_177 = arith.constant dense<0.000000e+00> : vector<8x128xf32>
    %379 = tpu.matmul %370, %378, %cst_177 {dimension_numbers = #tpu.dot_dimension_numbers<[1], [0], [0], [1], [0, 0, 1, 1], [], []>} : vector<8x64xf32>, vector<64x128xf32>, vector<8x128xf32> -> vector<8x128xf32>
    %c0_178 = arith.constant 0 : index
    %c0_179 = arith.constant 0 : index
    %380 = vector.load %arg49[%c0_178, %c0_179] : memref<1x128xf32, #tpu.memory_space<vmem>>, vector<1x128xf32>
    %381 = vector.broadcast %380 : vector<1x128xf32> to vector<8x128xf32>
    %382 = arith.addf %379, %381 : vector<8x128xf32>
    %383 = vector.extract_strided_slice %382 {offsets = [0, 0], sizes = [8, 64], strides = [1, 1]} : vector<8x128xf32> to vector<8x64xf32>
    %384 = vector.extract_strided_slice %382 {offsets = [0, 64], sizes = [8, 64], strides = [1, 1]} : vector<8x128xf32> to vector<8x64xf32>
    %385 = vector.extract_strided_slice %377 {offsets = [0, 0], sizes = [8, 16], strides = [1, 1]} : vector<8x64xf32> to vector<8x16xf32>
    %386 = vector.extract_strided_slice %383 {offsets = [0, 0], sizes = [8, 16], strides = [1, 1]} : vector<8x64xf32> to vector<8x16xf32>
    %387 = vector.extract_strided_slice %384 {offsets = [0, 0], sizes = [8, 16], strides = [1, 1]} : vector<8x64xf32> to vector<8x16xf32>
    %cst_180 = arith.constant dense<0.000000e+00> : vector<8x8xf32>
    %388 = tpu.matmul %385, %386, %cst_180 {dimension_numbers = #tpu.dot_dimension_numbers<[1], [1], [0], [0], [0, 0, 1, 0], [], []>} : vector<8x16xf32>, vector<8x16xf32>, vector<8x8xf32> -> vector<8x8xf32>
    %389 = arith.addf %388, %76 : vector<8x8xf32>
    %cst_181 = arith.constant dense<0xFF800000> : vector<8xf32>
    %390 = vector.multi_reduction <maximumf>, %389, %cst_181 [1] : vector<8x8xf32> to vector<8xf32>
    %391 = vector.shape_cast %390 : vector<8xf32> to vector<8x1xf32>
    %392 = vector.broadcast %391 : vector<8x1xf32> to vector<8x8xf32>
    %393 = arith.subf %389, %392 : vector<8x8xf32>
    %394 = math.exp %393 : vector<8x8xf32>
    %cst_182 = arith.constant dense<0.000000e+00> : vector<8xf32>
    %395 = vector.multi_reduction <add>, %394, %cst_182 [1] : vector<8x8xf32> to vector<8xf32>
    %396 = vector.shape_cast %395 : vector<8xf32> to vector<8x1xf32>
    %397 = tpu.reciprocal %396 {approx = true} : vector<8x1xf32> -> vector<8x1xf32>
    %398 = vector.broadcast %397 : vector<8x1xf32> to vector<8x8xf32>
    %399 = arith.mulf %394, %398 : vector<8x8xf32>
    %cst_183 = arith.constant dense<0.000000e+00> : vector<8x16xf32>
    %400 = tpu.matmul %399, %387, %cst_183 {dimension_numbers = #tpu.dot_dimension_numbers<[1], [0], [0], [1], [0, 0, 1, 1], [], []>} : vector<8x8xf32>, vector<8x16xf32>, vector<8x16xf32> -> vector<8x16xf32>
    %401 = vector.extract_strided_slice %377 {offsets = [0, 16], sizes = [8, 16], strides = [1, 1]} : vector<8x64xf32> to vector<8x16xf32>
    %402 = vector.extract_strided_slice %383 {offsets = [0, 16], sizes = [8, 16], strides = [1, 1]} : vector<8x64xf32> to vector<8x16xf32>
    %403 = vector.extract_strided_slice %384 {offsets = [0, 16], sizes = [8, 16], strides = [1, 1]} : vector<8x64xf32> to vector<8x16xf32>
    %cst_184 = arith.constant dense<0.000000e+00> : vector<8x8xf32>
    %404 = tpu.matmul %401, %402, %cst_184 {dimension_numbers = #tpu.dot_dimension_numbers<[1], [1], [0], [0], [0, 0, 1, 0], [], []>} : vector<8x16xf32>, vector<8x16xf32>, vector<8x8xf32> -> vector<8x8xf32>
    %405 = arith.addf %404, %76 : vector<8x8xf32>
    %cst_185 = arith.constant dense<0xFF800000> : vector<8xf32>
    %406 = vector.multi_reduction <maximumf>, %405, %cst_185 [1] : vector<8x8xf32> to vector<8xf32>
    %407 = vector.shape_cast %406 : vector<8xf32> to vector<8x1xf32>
    %408 = vector.broadcast %407 : vector<8x1xf32> to vector<8x8xf32>
    %409 = arith.subf %405, %408 : vector<8x8xf32>
    %410 = math.exp %409 : vector<8x8xf32>
    %cst_186 = arith.constant dense<0.000000e+00> : vector<8xf32>
    %411 = vector.multi_reduction <add>, %410, %cst_186 [1] : vector<8x8xf32> to vector<8xf32>
    %412 = vector.shape_cast %411 : vector<8xf32> to vector<8x1xf32>
    %413 = tpu.reciprocal %412 {approx = true} : vector<8x1xf32> -> vector<8x1xf32>
    %414 = vector.broadcast %413 : vector<8x1xf32> to vector<8x8xf32>
    %415 = arith.mulf %410, %414 : vector<8x8xf32>
    %cst_187 = arith.constant dense<0.000000e+00> : vector<8x16xf32>
    %416 = tpu.matmul %415, %403, %cst_187 {dimension_numbers = #tpu.dot_dimension_numbers<[1], [0], [0], [1], [0, 0, 1, 1], [], []>} : vector<8x8xf32>, vector<8x16xf32>, vector<8x16xf32> -> vector<8x16xf32>
    %417 = vector.extract_strided_slice %377 {offsets = [0, 32], sizes = [8, 16], strides = [1, 1]} : vector<8x64xf32> to vector<8x16xf32>
    %418 = vector.extract_strided_slice %383 {offsets = [0, 32], sizes = [8, 16], strides = [1, 1]} : vector<8x64xf32> to vector<8x16xf32>
    %419 = vector.extract_strided_slice %384 {offsets = [0, 32], sizes = [8, 16], strides = [1, 1]} : vector<8x64xf32> to vector<8x16xf32>
    %cst_188 = arith.constant dense<0.000000e+00> : vector<8x8xf32>
    %420 = tpu.matmul %417, %418, %cst_188 {dimension_numbers = #tpu.dot_dimension_numbers<[1], [1], [0], [0], [0, 0, 1, 0], [], []>} : vector<8x16xf32>, vector<8x16xf32>, vector<8x8xf32> -> vector<8x8xf32>
    %421 = arith.addf %420, %76 : vector<8x8xf32>
    %cst_189 = arith.constant dense<0xFF800000> : vector<8xf32>
    %422 = vector.multi_reduction <maximumf>, %421, %cst_189 [1] : vector<8x8xf32> to vector<8xf32>
    %423 = vector.shape_cast %422 : vector<8xf32> to vector<8x1xf32>
    %424 = vector.broadcast %423 : vector<8x1xf32> to vector<8x8xf32>
    %425 = arith.subf %421, %424 : vector<8x8xf32>
    %426 = math.exp %425 : vector<8x8xf32>
    %cst_190 = arith.constant dense<0.000000e+00> : vector<8xf32>
    %427 = vector.multi_reduction <add>, %426, %cst_190 [1] : vector<8x8xf32> to vector<8xf32>
    %428 = vector.shape_cast %427 : vector<8xf32> to vector<8x1xf32>
    %429 = tpu.reciprocal %428 {approx = true} : vector<8x1xf32> -> vector<8x1xf32>
    %430 = vector.broadcast %429 : vector<8x1xf32> to vector<8x8xf32>
    %431 = arith.mulf %426, %430 : vector<8x8xf32>
    %cst_191 = arith.constant dense<0.000000e+00> : vector<8x16xf32>
    %432 = tpu.matmul %431, %419, %cst_191 {dimension_numbers = #tpu.dot_dimension_numbers<[1], [0], [0], [1], [0, 0, 1, 1], [], []>} : vector<8x8xf32>, vector<8x16xf32>, vector<8x16xf32> -> vector<8x16xf32>
    %433 = vector.extract_strided_slice %377 {offsets = [0, 48], sizes = [8, 16], strides = [1, 1]} : vector<8x64xf32> to vector<8x16xf32>
    %434 = vector.extract_strided_slice %383 {offsets = [0, 48], sizes = [8, 16], strides = [1, 1]} : vector<8x64xf32> to vector<8x16xf32>
    %435 = vector.extract_strided_slice %384 {offsets = [0, 48], sizes = [8, 16], strides = [1, 1]} : vector<8x64xf32> to vector<8x16xf32>
    %cst_192 = arith.constant dense<0.000000e+00> : vector<8x8xf32>
    %436 = tpu.matmul %433, %434, %cst_192 {dimension_numbers = #tpu.dot_dimension_numbers<[1], [1], [0], [0], [0, 0, 1, 0], [], []>} : vector<8x16xf32>, vector<8x16xf32>, vector<8x8xf32> -> vector<8x8xf32>
    %437 = arith.addf %436, %76 : vector<8x8xf32>
    %cst_193 = arith.constant dense<0xFF800000> : vector<8xf32>
    %438 = vector.multi_reduction <maximumf>, %437, %cst_193 [1] : vector<8x8xf32> to vector<8xf32>
    %439 = vector.shape_cast %438 : vector<8xf32> to vector<8x1xf32>
    %440 = vector.broadcast %439 : vector<8x1xf32> to vector<8x8xf32>
    %441 = arith.subf %437, %440 : vector<8x8xf32>
    %442 = math.exp %441 : vector<8x8xf32>
    %cst_194 = arith.constant dense<0.000000e+00> : vector<8xf32>
    %443 = vector.multi_reduction <add>, %442, %cst_194 [1] : vector<8x8xf32> to vector<8xf32>
    %444 = vector.shape_cast %443 : vector<8xf32> to vector<8x1xf32>
    %445 = tpu.reciprocal %444 {approx = true} : vector<8x1xf32> -> vector<8x1xf32>
    %446 = vector.broadcast %445 : vector<8x1xf32> to vector<8x8xf32>
    %447 = arith.mulf %442, %446 : vector<8x8xf32>
    %cst_195 = arith.constant dense<0.000000e+00> : vector<8x16xf32>
    %448 = tpu.matmul %447, %435, %cst_195 {dimension_numbers = #tpu.dot_dimension_numbers<[1], [0], [0], [1], [0, 0, 1, 1], [], []>} : vector<8x8xf32>, vector<8x16xf32>, vector<8x16xf32> -> vector<8x16xf32>
    %449 = tpu.concatenate %400, %416, %432, %448 in 1 : vector<8x16xf32>, vector<8x16xf32>, vector<8x16xf32>, vector<8x16xf32> -> vector<8x64xf32>
    %c0_196 = arith.constant 0 : index
    %c0_197 = arith.constant 0 : index
    %450 = vector.load %arg50[%c0_196, %c0_197] : memref<64x64xf32, #tpu.memory_space<vmem>>, vector<64x64xf32>
    %cst_198 = arith.constant dense<0.000000e+00> : vector<8x64xf32>
    %451 = tpu.matmul %449, %450, %cst_198 {dimension_numbers = #tpu.dot_dimension_numbers<[1], [0], [0], [1], [0, 0, 1, 1], [], []>} : vector<8x64xf32>, vector<64x64xf32>, vector<8x64xf32> -> vector<8x64xf32>
    %c0_199 = arith.constant 0 : index
    %c0_200 = arith.constant 0 : index
    %452 = vector.load %arg51[%c0_199, %c0_200] : memref<1x64xf32, #tpu.memory_space<vmem>>, vector<1x64xf32>
    %453 = vector.broadcast %452 : vector<1x64xf32> to vector<8x64xf32>
    %454 = arith.addf %451, %453 : vector<8x64xf32>
    %455 = arith.addf %224, %454 : vector<8x64xf32>
    %c0_201 = arith.constant 0 : index
    %c0_202 = arith.constant 0 : index
    %456 = vector.load %arg52[%c0_201, %c0_202] : memref<1x64xf32, #tpu.memory_space<vmem>>, vector<1x64xf32>
    %c0_203 = arith.constant 0 : index
    %c0_204 = arith.constant 0 : index
    %457 = vector.load %arg53[%c0_203, %c0_204] : memref<1x64xf32, #tpu.memory_space<vmem>>, vector<1x64xf32>
    %cst_205 = arith.constant dense<0.000000e+00> : vector<8xf32>
    %458 = vector.multi_reduction <add>, %455, %cst_205 [1] : vector<8x64xf32> to vector<8xf32>
    %459 = vector.shape_cast %458 : vector<8xf32> to vector<8x1xf32>
    %cst_206 = arith.constant 6.400000e+01 : f32
    %460 = vector.broadcast %cst_206 : f32 to vector<8x1xf32>
    %461 = arith.divf %459, %460 : vector<8x1xf32>
    %462 = vector.broadcast %461 : vector<8x1xf32> to vector<8x64xf32>
    %463 = arith.subf %455, %462 : vector<8x64xf32>
    %464 = arith.mulf %463, %463 : vector<8x64xf32>
    %cst_207 = arith.constant dense<0.000000e+00> : vector<8xf32>
    %465 = vector.multi_reduction <add>, %464, %cst_207 [1] : vector<8x64xf32> to vector<8xf32>
    %466 = vector.shape_cast %465 : vector<8xf32> to vector<8x1xf32>
    %cst_208 = arith.constant 6.400000e+01 : f32
    %467 = vector.broadcast %cst_208 : f32 to vector<8x1xf32>
    %468 = arith.divf %466, %467 : vector<8x1xf32>
    %469 = vector.broadcast %461 : vector<8x1xf32> to vector<8x64xf32>
    %470 = arith.subf %455, %469 : vector<8x64xf32>
    %cst_209 = arith.constant 9.99999974E-6 : f32
    %471 = vector.broadcast %cst_209 : f32 to vector<8x1xf32>
    %472 = arith.addf %468, %471 : vector<8x1xf32>
    %473 = math.rsqrt %472 : vector<8x1xf32>
    %474 = vector.broadcast %473 : vector<8x1xf32> to vector<8x64xf32>
    %475 = arith.mulf %470, %474 : vector<8x64xf32>
    %476 = vector.broadcast %456 : vector<1x64xf32> to vector<8x64xf32>
    %477 = arith.mulf %475, %476 : vector<8x64xf32>
    %478 = vector.broadcast %457 : vector<1x64xf32> to vector<8x64xf32>
    %479 = arith.addf %477, %478 : vector<8x64xf32>
    %c0_210 = arith.constant 0 : index
    %c0_211 = arith.constant 0 : index
    %480 = vector.load %arg54[%c0_210, %c0_211] : memref<64x32xf32, #tpu.memory_space<vmem>>, vector<64x32xf32>
    %cst_212 = arith.constant dense<0.000000e+00> : vector<8x32xf32>
    %481 = tpu.matmul %479, %480, %cst_212 {dimension_numbers = #tpu.dot_dimension_numbers<[1], [0], [0], [1], [0, 0, 1, 1], [], []>} : vector<8x64xf32>, vector<64x32xf32>, vector<8x32xf32> -> vector<8x32xf32>
    %c0_213 = arith.constant 0 : index
    %c0_214 = arith.constant 0 : index
    %482 = vector.load %arg55[%c0_213, %c0_214] : memref<1x32xf32, #tpu.memory_space<vmem>>, vector<1x32xf32>
    %483 = vector.broadcast %482 : vector<1x32xf32> to vector<8x32xf32>
    %484 = arith.addf %481, %483 : vector<8x32xf32>
    %cst_215 = arith.constant 0.000000e+00 : f32
    %485 = vector.broadcast %cst_215 : f32 to vector<8x32xf32>
    %486 = arith.maximumf %484, %485 : vector<8x32xf32>
    %c0_216 = arith.constant 0 : index
    %c0_217 = arith.constant 0 : index
    %487 = vector.load %arg56[%c0_216, %c0_217] : memref<32x64xf32, #tpu.memory_space<vmem>>, vector<32x64xf32>
    %cst_218 = arith.constant dense<0.000000e+00> : vector<8x64xf32>
    %488 = tpu.matmul %486, %487, %cst_218 {dimension_numbers = #tpu.dot_dimension_numbers<[1], [0], [0], [1], [0, 0, 1, 1], [], []>} : vector<8x32xf32>, vector<32x64xf32>, vector<8x64xf32> -> vector<8x64xf32>
    %c0_219 = arith.constant 0 : index
    %c0_220 = arith.constant 0 : index
    %489 = vector.load %arg57[%c0_219, %c0_220] : memref<1x64xf32, #tpu.memory_space<vmem>>, vector<1x64xf32>
    %490 = vector.broadcast %489 : vector<1x64xf32> to vector<8x64xf32>
    %491 = arith.addf %488, %490 : vector<8x64xf32>
    %492 = arith.addf %479, %491 : vector<8x64xf32>
    %c0_221 = arith.constant 0 : index
    %c0_222 = arith.constant 0 : index
    %493 = vector.load %arg58[%c0_221, %c0_222] : memref<1x64xf32, #tpu.memory_space<vmem>>, vector<1x64xf32>
    %c0_223 = arith.constant 0 : index
    %c0_224 = arith.constant 0 : index
    %494 = vector.load %arg59[%c0_223, %c0_224] : memref<1x64xf32, #tpu.memory_space<vmem>>, vector<1x64xf32>
    %cst_225 = arith.constant dense<0.000000e+00> : vector<8xf32>
    %495 = vector.multi_reduction <add>, %492, %cst_225 [1] : vector<8x64xf32> to vector<8xf32>
    %496 = vector.shape_cast %495 : vector<8xf32> to vector<8x1xf32>
    %cst_226 = arith.constant 6.400000e+01 : f32
    %497 = vector.broadcast %cst_226 : f32 to vector<8x1xf32>
    %498 = arith.divf %496, %497 : vector<8x1xf32>
    %499 = vector.broadcast %498 : vector<8x1xf32> to vector<8x64xf32>
    %500 = arith.subf %492, %499 : vector<8x64xf32>
    %501 = arith.mulf %500, %500 : vector<8x64xf32>
    %cst_227 = arith.constant dense<0.000000e+00> : vector<8xf32>
    %502 = vector.multi_reduction <add>, %501, %cst_227 [1] : vector<8x64xf32> to vector<8xf32>
    %503 = vector.shape_cast %502 : vector<8xf32> to vector<8x1xf32>
    %cst_228 = arith.constant 6.400000e+01 : f32
    %504 = vector.broadcast %cst_228 : f32 to vector<8x1xf32>
    %505 = arith.divf %503, %504 : vector<8x1xf32>
    %506 = vector.broadcast %498 : vector<8x1xf32> to vector<8x64xf32>
    %507 = arith.subf %492, %506 : vector<8x64xf32>
    %cst_229 = arith.constant 9.99999974E-6 : f32
    %508 = vector.broadcast %cst_229 : f32 to vector<8x1xf32>
    %509 = arith.addf %505, %508 : vector<8x1xf32>
    %510 = math.rsqrt %509 : vector<8x1xf32>
    %511 = vector.broadcast %510 : vector<8x1xf32> to vector<8x64xf32>
    %512 = arith.mulf %507, %511 : vector<8x64xf32>
    %513 = vector.broadcast %493 : vector<1x64xf32> to vector<8x64xf32>
    %514 = arith.mulf %512, %513 : vector<8x64xf32>
    %515 = vector.broadcast %494 : vector<1x64xf32> to vector<8x64xf32>
    %516 = arith.addf %514, %515 : vector<8x64xf32>
    %c0_230 = arith.constant 0 : index
    %c0_231 = arith.constant 0 : index
    %517 = vector.load %arg60[%c0_230, %c0_231] : memref<64x64xf32, #tpu.memory_space<vmem>>, vector<64x64xf32>
    %cst_232 = arith.constant dense<0.000000e+00> : vector<8x64xf32>
    %518 = tpu.matmul %370, %517, %cst_232 {dimension_numbers = #tpu.dot_dimension_numbers<[1], [0], [0], [1], [0, 0, 1, 1], [], []>} : vector<8x64xf32>, vector<64x64xf32>, vector<8x64xf32> -> vector<8x64xf32>
    %c0_233 = arith.constant 0 : index
    %c0_234 = arith.constant 0 : index
    %519 = vector.load %arg61[%c0_233, %c0_234] : memref<1x64xf32, #tpu.memory_space<vmem>>, vector<1x64xf32>
    %520 = vector.broadcast %519 : vector<1x64xf32> to vector<8x64xf32>
    %521 = arith.addf %518, %520 : vector<8x64xf32>
    %cst_235 = arith.constant 2.500000e-01 : f32
    %522 = vector.broadcast %cst_235 : f32 to vector<8x64xf32>
    %523 = arith.mulf %521, %522 : vector<8x64xf32>
    %c0_236 = arith.constant 0 : index
    %c0_237 = arith.constant 0 : index
    %524 = vector.load %arg62[%c0_236, %c0_237] : memref<64x128xf32, #tpu.memory_space<vmem>>, vector<64x128xf32>
    %cst_238 = arith.constant dense<0.000000e+00> : vector<8x128xf32>
    %525 = tpu.matmul %224, %524, %cst_238 {dimension_numbers = #tpu.dot_dimension_numbers<[1], [0], [0], [1], [0, 0, 1, 1], [], []>} : vector<8x64xf32>, vector<64x128xf32>, vector<8x128xf32> -> vector<8x128xf32>
    %c0_239 = arith.constant 0 : index
    %c0_240 = arith.constant 0 : index
    %526 = vector.load %arg63[%c0_239, %c0_240] : memref<1x128xf32, #tpu.memory_space<vmem>>, vector<1x128xf32>
    %527 = vector.broadcast %526 : vector<1x128xf32> to vector<8x128xf32>
    %528 = arith.addf %525, %527 : vector<8x128xf32>
    %529 = vector.extract_strided_slice %528 {offsets = [0, 0], sizes = [8, 64], strides = [1, 1]} : vector<8x128xf32> to vector<8x64xf32>
    %530 = vector.extract_strided_slice %528 {offsets = [0, 64], sizes = [8, 64], strides = [1, 1]} : vector<8x128xf32> to vector<8x64xf32>
    %531 = vector.extract_strided_slice %523 {offsets = [0, 0], sizes = [8, 16], strides = [1, 1]} : vector<8x64xf32> to vector<8x16xf32>
    %532 = vector.extract_strided_slice %529 {offsets = [0, 0], sizes = [8, 16], strides = [1, 1]} : vector<8x64xf32> to vector<8x16xf32>
    %533 = vector.extract_strided_slice %530 {offsets = [0, 0], sizes = [8, 16], strides = [1, 1]} : vector<8x64xf32> to vector<8x16xf32>
    %cst_241 = arith.constant dense<0.000000e+00> : vector<8x8xf32>
    %534 = tpu.matmul %531, %532, %cst_241 {dimension_numbers = #tpu.dot_dimension_numbers<[1], [1], [0], [0], [0, 0, 1, 0], [], []>} : vector<8x16xf32>, vector<8x16xf32>, vector<8x8xf32> -> vector<8x8xf32>
    %535 = arith.addf %534, %76 : vector<8x8xf32>
    %cst_242 = arith.constant dense<0xFF800000> : vector<8xf32>
    %536 = vector.multi_reduction <maximumf>, %535, %cst_242 [1] : vector<8x8xf32> to vector<8xf32>
    %537 = vector.shape_cast %536 : vector<8xf32> to vector<8x1xf32>
    %538 = vector.broadcast %537 : vector<8x1xf32> to vector<8x8xf32>
    %539 = arith.subf %535, %538 : vector<8x8xf32>
    %540 = math.exp %539 : vector<8x8xf32>
    %cst_243 = arith.constant dense<0.000000e+00> : vector<8xf32>
    %541 = vector.multi_reduction <add>, %540, %cst_243 [1] : vector<8x8xf32> to vector<8xf32>
    %542 = vector.shape_cast %541 : vector<8xf32> to vector<8x1xf32>
    %543 = tpu.reciprocal %542 {approx = true} : vector<8x1xf32> -> vector<8x1xf32>
    %544 = vector.broadcast %543 : vector<8x1xf32> to vector<8x8xf32>
    %545 = arith.mulf %540, %544 : vector<8x8xf32>
    %cst_244 = arith.constant dense<0.000000e+00> : vector<8x16xf32>
    %546 = tpu.matmul %545, %533, %cst_244 {dimension_numbers = #tpu.dot_dimension_numbers<[1], [0], [0], [1], [0, 0, 1, 1], [], []>} : vector<8x8xf32>, vector<8x16xf32>, vector<8x16xf32> -> vector<8x16xf32>
    %547 = vector.extract_strided_slice %523 {offsets = [0, 16], sizes = [8, 16], strides = [1, 1]} : vector<8x64xf32> to vector<8x16xf32>
    %548 = vector.extract_strided_slice %529 {offsets = [0, 16], sizes = [8, 16], strides = [1, 1]} : vector<8x64xf32> to vector<8x16xf32>
    %549 = vector.extract_strided_slice %530 {offsets = [0, 16], sizes = [8, 16], strides = [1, 1]} : vector<8x64xf32> to vector<8x16xf32>
    %cst_245 = arith.constant dense<0.000000e+00> : vector<8x8xf32>
    %550 = tpu.matmul %547, %548, %cst_245 {dimension_numbers = #tpu.dot_dimension_numbers<[1], [1], [0], [0], [0, 0, 1, 0], [], []>} : vector<8x16xf32>, vector<8x16xf32>, vector<8x8xf32> -> vector<8x8xf32>
    %551 = arith.addf %550, %76 : vector<8x8xf32>
    %cst_246 = arith.constant dense<0xFF800000> : vector<8xf32>
    %552 = vector.multi_reduction <maximumf>, %551, %cst_246 [1] : vector<8x8xf32> to vector<8xf32>
    %553 = vector.shape_cast %552 : vector<8xf32> to vector<8x1xf32>
    %554 = vector.broadcast %553 : vector<8x1xf32> to vector<8x8xf32>
    %555 = arith.subf %551, %554 : vector<8x8xf32>
    %556 = math.exp %555 : vector<8x8xf32>
    %cst_247 = arith.constant dense<0.000000e+00> : vector<8xf32>
    %557 = vector.multi_reduction <add>, %556, %cst_247 [1] : vector<8x8xf32> to vector<8xf32>
    %558 = vector.shape_cast %557 : vector<8xf32> to vector<8x1xf32>
    %559 = tpu.reciprocal %558 {approx = true} : vector<8x1xf32> -> vector<8x1xf32>
    %560 = vector.broadcast %559 : vector<8x1xf32> to vector<8x8xf32>
    %561 = arith.mulf %556, %560 : vector<8x8xf32>
    %cst_248 = arith.constant dense<0.000000e+00> : vector<8x16xf32>
    %562 = tpu.matmul %561, %549, %cst_248 {dimension_numbers = #tpu.dot_dimension_numbers<[1], [0], [0], [1], [0, 0, 1, 1], [], []>} : vector<8x8xf32>, vector<8x16xf32>, vector<8x16xf32> -> vector<8x16xf32>
    %563 = vector.extract_strided_slice %523 {offsets = [0, 32], sizes = [8, 16], strides = [1, 1]} : vector<8x64xf32> to vector<8x16xf32>
    %564 = vector.extract_strided_slice %529 {offsets = [0, 32], sizes = [8, 16], strides = [1, 1]} : vector<8x64xf32> to vector<8x16xf32>
    %565 = vector.extract_strided_slice %530 {offsets = [0, 32], sizes = [8, 16], strides = [1, 1]} : vector<8x64xf32> to vector<8x16xf32>
    %cst_249 = arith.constant dense<0.000000e+00> : vector<8x8xf32>
    %566 = tpu.matmul %563, %564, %cst_249 {dimension_numbers = #tpu.dot_dimension_numbers<[1], [1], [0], [0], [0, 0, 1, 0], [], []>} : vector<8x16xf32>, vector<8x16xf32>, vector<8x8xf32> -> vector<8x8xf32>
    %567 = arith.addf %566, %76 : vector<8x8xf32>
    %cst_250 = arith.constant dense<0xFF800000> : vector<8xf32>
    %568 = vector.multi_reduction <maximumf>, %567, %cst_250 [1] : vector<8x8xf32> to vector<8xf32>
    %569 = vector.shape_cast %568 : vector<8xf32> to vector<8x1xf32>
    %570 = vector.broadcast %569 : vector<8x1xf32> to vector<8x8xf32>
    %571 = arith.subf %567, %570 : vector<8x8xf32>
    %572 = math.exp %571 : vector<8x8xf32>
    %cst_251 = arith.constant dense<0.000000e+00> : vector<8xf32>
    %573 = vector.multi_reduction <add>, %572, %cst_251 [1] : vector<8x8xf32> to vector<8xf32>
    %574 = vector.shape_cast %573 : vector<8xf32> to vector<8x1xf32>
    %575 = tpu.reciprocal %574 {approx = true} : vector<8x1xf32> -> vector<8x1xf32>
    %576 = vector.broadcast %575 : vector<8x1xf32> to vector<8x8xf32>
    %577 = arith.mulf %572, %576 : vector<8x8xf32>
    %cst_252 = arith.constant dense<0.000000e+00> : vector<8x16xf32>
    %578 = tpu.matmul %577, %565, %cst_252 {dimension_numbers = #tpu.dot_dimension_numbers<[1], [0], [0], [1], [0, 0, 1, 1], [], []>} : vector<8x8xf32>, vector<8x16xf32>, vector<8x16xf32> -> vector<8x16xf32>
    %579 = vector.extract_strided_slice %523 {offsets = [0, 48], sizes = [8, 16], strides = [1, 1]} : vector<8x64xf32> to vector<8x16xf32>
    %580 = vector.extract_strided_slice %529 {offsets = [0, 48], sizes = [8, 16], strides = [1, 1]} : vector<8x64xf32> to vector<8x16xf32>
    %581 = vector.extract_strided_slice %530 {offsets = [0, 48], sizes = [8, 16], strides = [1, 1]} : vector<8x64xf32> to vector<8x16xf32>
    %cst_253 = arith.constant dense<0.000000e+00> : vector<8x8xf32>
    %582 = tpu.matmul %579, %580, %cst_253 {dimension_numbers = #tpu.dot_dimension_numbers<[1], [1], [0], [0], [0, 0, 1, 0], [], []>} : vector<8x16xf32>, vector<8x16xf32>, vector<8x8xf32> -> vector<8x8xf32>
    %583 = arith.addf %582, %76 : vector<8x8xf32>
    %cst_254 = arith.constant dense<0xFF800000> : vector<8xf32>
    %584 = vector.multi_reduction <maximumf>, %583, %cst_254 [1] : vector<8x8xf32> to vector<8xf32>
    %585 = vector.shape_cast %584 : vector<8xf32> to vector<8x1xf32>
    %586 = vector.broadcast %585 : vector<8x1xf32> to vector<8x8xf32>
    %587 = arith.subf %583, %586 : vector<8x8xf32>
    %588 = math.exp %587 : vector<8x8xf32>
    %cst_255 = arith.constant dense<0.000000e+00> : vector<8xf32>
    %589 = vector.multi_reduction <add>, %588, %cst_255 [1] : vector<8x8xf32> to vector<8xf32>
    %590 = vector.shape_cast %589 : vector<8xf32> to vector<8x1xf32>
    %591 = tpu.reciprocal %590 {approx = true} : vector<8x1xf32> -> vector<8x1xf32>
    %592 = vector.broadcast %591 : vector<8x1xf32> to vector<8x8xf32>
    %593 = arith.mulf %588, %592 : vector<8x8xf32>
    %cst_256 = arith.constant dense<0.000000e+00> : vector<8x16xf32>
    %594 = tpu.matmul %593, %581, %cst_256 {dimension_numbers = #tpu.dot_dimension_numbers<[1], [0], [0], [1], [0, 0, 1, 1], [], []>} : vector<8x8xf32>, vector<8x16xf32>, vector<8x16xf32> -> vector<8x16xf32>
    %595 = tpu.concatenate %546, %562, %578, %594 in 1 : vector<8x16xf32>, vector<8x16xf32>, vector<8x16xf32>, vector<8x16xf32> -> vector<8x64xf32>
    %c0_257 = arith.constant 0 : index
    %c0_258 = arith.constant 0 : index
    %596 = vector.load %arg64[%c0_257, %c0_258] : memref<64x64xf32, #tpu.memory_space<vmem>>, vector<64x64xf32>
    %cst_259 = arith.constant dense<0.000000e+00> : vector<8x64xf32>
    %597 = tpu.matmul %595, %596, %cst_259 {dimension_numbers = #tpu.dot_dimension_numbers<[1], [0], [0], [1], [0, 0, 1, 1], [], []>} : vector<8x64xf32>, vector<64x64xf32>, vector<8x64xf32> -> vector<8x64xf32>
    %c0_260 = arith.constant 0 : index
    %c0_261 = arith.constant 0 : index
    %598 = vector.load %arg65[%c0_260, %c0_261] : memref<1x64xf32, #tpu.memory_space<vmem>>, vector<1x64xf32>
    %599 = vector.broadcast %598 : vector<1x64xf32> to vector<8x64xf32>
    %600 = arith.addf %597, %599 : vector<8x64xf32>
    %601 = arith.addf %370, %600 : vector<8x64xf32>
    %c0_262 = arith.constant 0 : index
    %c0_263 = arith.constant 0 : index
    %602 = vector.load %arg66[%c0_262, %c0_263] : memref<1x64xf32, #tpu.memory_space<vmem>>, vector<1x64xf32>
    %c0_264 = arith.constant 0 : index
    %c0_265 = arith.constant 0 : index
    %603 = vector.load %arg67[%c0_264, %c0_265] : memref<1x64xf32, #tpu.memory_space<vmem>>, vector<1x64xf32>
    %cst_266 = arith.constant dense<0.000000e+00> : vector<8xf32>
    %604 = vector.multi_reduction <add>, %601, %cst_266 [1] : vector<8x64xf32> to vector<8xf32>
    %605 = vector.shape_cast %604 : vector<8xf32> to vector<8x1xf32>
    %cst_267 = arith.constant 6.400000e+01 : f32
    %606 = vector.broadcast %cst_267 : f32 to vector<8x1xf32>
    %607 = arith.divf %605, %606 : vector<8x1xf32>
    %608 = vector.broadcast %607 : vector<8x1xf32> to vector<8x64xf32>
    %609 = arith.subf %601, %608 : vector<8x64xf32>
    %610 = arith.mulf %609, %609 : vector<8x64xf32>
    %cst_268 = arith.constant dense<0.000000e+00> : vector<8xf32>
    %611 = vector.multi_reduction <add>, %610, %cst_268 [1] : vector<8x64xf32> to vector<8xf32>
    %612 = vector.shape_cast %611 : vector<8xf32> to vector<8x1xf32>
    %cst_269 = arith.constant 6.400000e+01 : f32
    %613 = vector.broadcast %cst_269 : f32 to vector<8x1xf32>
    %614 = arith.divf %612, %613 : vector<8x1xf32>
    %615 = vector.broadcast %607 : vector<8x1xf32> to vector<8x64xf32>
    %616 = arith.subf %601, %615 : vector<8x64xf32>
    %cst_270 = arith.constant 9.99999974E-6 : f32
    %617 = vector.broadcast %cst_270 : f32 to vector<8x1xf32>
    %618 = arith.addf %614, %617 : vector<8x1xf32>
    %619 = math.rsqrt %618 : vector<8x1xf32>
    %620 = vector.broadcast %619 : vector<8x1xf32> to vector<8x64xf32>
    %621 = arith.mulf %616, %620 : vector<8x64xf32>
    %622 = vector.broadcast %602 : vector<1x64xf32> to vector<8x64xf32>
    %623 = arith.mulf %621, %622 : vector<8x64xf32>
    %624 = vector.broadcast %603 : vector<1x64xf32> to vector<8x64xf32>
    %625 = arith.addf %623, %624 : vector<8x64xf32>
    %c0_271 = arith.constant 0 : index
    %c0_272 = arith.constant 0 : index
    %626 = vector.load %arg68[%c0_271, %c0_272] : memref<64x32xf32, #tpu.memory_space<vmem>>, vector<64x32xf32>
    %cst_273 = arith.constant dense<0.000000e+00> : vector<8x32xf32>
    %627 = tpu.matmul %625, %626, %cst_273 {dimension_numbers = #tpu.dot_dimension_numbers<[1], [0], [0], [1], [0, 0, 1, 1], [], []>} : vector<8x64xf32>, vector<64x32xf32>, vector<8x32xf32> -> vector<8x32xf32>
    %c0_274 = arith.constant 0 : index
    %c0_275 = arith.constant 0 : index
    %628 = vector.load %arg69[%c0_274, %c0_275] : memref<1x32xf32, #tpu.memory_space<vmem>>, vector<1x32xf32>
    %629 = vector.broadcast %628 : vector<1x32xf32> to vector<8x32xf32>
    %630 = arith.addf %627, %629 : vector<8x32xf32>
    %cst_276 = arith.constant 0.000000e+00 : f32
    %631 = vector.broadcast %cst_276 : f32 to vector<8x32xf32>
    %632 = arith.maximumf %630, %631 : vector<8x32xf32>
    %c0_277 = arith.constant 0 : index
    %c0_278 = arith.constant 0 : index
    %633 = vector.load %arg70[%c0_277, %c0_278] : memref<32x64xf32, #tpu.memory_space<vmem>>, vector<32x64xf32>
    %cst_279 = arith.constant dense<0.000000e+00> : vector<8x64xf32>
    %634 = tpu.matmul %632, %633, %cst_279 {dimension_numbers = #tpu.dot_dimension_numbers<[1], [0], [0], [1], [0, 0, 1, 1], [], []>} : vector<8x32xf32>, vector<32x64xf32>, vector<8x64xf32> -> vector<8x64xf32>
    %c0_280 = arith.constant 0 : index
    %c0_281 = arith.constant 0 : index
    %635 = vector.load %arg71[%c0_280, %c0_281] : memref<1x64xf32, #tpu.memory_space<vmem>>, vector<1x64xf32>
    %636 = vector.broadcast %635 : vector<1x64xf32> to vector<8x64xf32>
    %637 = arith.addf %634, %636 : vector<8x64xf32>
    %638 = arith.addf %625, %637 : vector<8x64xf32>
    %c0_282 = arith.constant 0 : index
    %c0_283 = arith.constant 0 : index
    %639 = vector.load %arg72[%c0_282, %c0_283] : memref<1x64xf32, #tpu.memory_space<vmem>>, vector<1x64xf32>
    %c0_284 = arith.constant 0 : index
    %c0_285 = arith.constant 0 : index
    %640 = vector.load %arg73[%c0_284, %c0_285] : memref<1x64xf32, #tpu.memory_space<vmem>>, vector<1x64xf32>
    %cst_286 = arith.constant dense<0.000000e+00> : vector<8xf32>
    %641 = vector.multi_reduction <add>, %638, %cst_286 [1] : vector<8x64xf32> to vector<8xf32>
    %642 = vector.shape_cast %641 : vector<8xf32> to vector<8x1xf32>
    %cst_287 = arith.constant 6.400000e+01 : f32
    %643 = vector.broadcast %cst_287 : f32 to vector<8x1xf32>
    %644 = arith.divf %642, %643 : vector<8x1xf32>
    %645 = vector.broadcast %644 : vector<8x1xf32> to vector<8x64xf32>
    %646 = arith.subf %638, %645 : vector<8x64xf32>
    %647 = arith.mulf %646, %646 : vector<8x64xf32>
    %cst_288 = arith.constant dense<0.000000e+00> : vector<8xf32>
    %648 = vector.multi_reduction <add>, %647, %cst_288 [1] : vector<8x64xf32> to vector<8xf32>
    %649 = vector.shape_cast %648 : vector<8xf32> to vector<8x1xf32>
    %cst_289 = arith.constant 6.400000e+01 : f32
    %650 = vector.broadcast %cst_289 : f32 to vector<8x1xf32>
    %651 = arith.divf %649, %650 : vector<8x1xf32>
    %652 = vector.broadcast %644 : vector<8x1xf32> to vector<8x64xf32>
    %653 = arith.subf %638, %652 : vector<8x64xf32>
    %cst_290 = arith.constant 9.99999974E-6 : f32
    %654 = vector.broadcast %cst_290 : f32 to vector<8x1xf32>
    %655 = arith.addf %651, %654 : vector<8x1xf32>
    %656 = math.rsqrt %655 : vector<8x1xf32>
    %657 = vector.broadcast %656 : vector<8x1xf32> to vector<8x64xf32>
    %658 = arith.mulf %653, %657 : vector<8x64xf32>
    %659 = vector.broadcast %639 : vector<1x64xf32> to vector<8x64xf32>
    %660 = arith.mulf %658, %659 : vector<8x64xf32>
    %661 = vector.broadcast %640 : vector<1x64xf32> to vector<8x64xf32>
    %662 = arith.addf %660, %661 : vector<8x64xf32>
    %663 = tpu.concatenate %516, %662 in 1 : vector<8x64xf32>, vector<8x64xf32> -> vector<8x128xf32>
    %c0_291 = arith.constant 0 : index
    %c0_292 = arith.constant 0 : index
    %664 = vector.load %arg74[%c0_291, %c0_292] : memref<8x128xf32, #tpu.memory_space<vmem>>, vector<8x128xf32>
    tpu.vector_store %arg74[%c0_291, %c0_292], %663 {strides = array<i32>} : memref<8x128xf32, #tpu.memory_space<vmem>>, vector<8x128xf32>,
    return
  }
  func.func @transform_0(%arg0: i32) -> (i32, i32) {
    %c0_i32 = arith.constant 0 : i32
    %c0_i32_0 = arith.constant 0 : i32
    %c0_i32_1 = arith.constant 0 : i32
    return %c0_i32, %c0_i32_0 : i32, i32
  }
  func.func @transform_1(%arg0: i32) -> (i32, i32) {
    %c0_i32 = arith.constant 0 : i32
    %c0_i32_0 = arith.constant 0 : i32
    %c0_i32_1 = arith.constant 0 : i32
    return %c0_i32, %c0_i32_0 : i32, i32
  }
  func.func @transform_2(%arg0: i32) -> (i32, i32) {
    %c0_i32 = arith.constant 0 : i32
    %c0_i32_0 = arith.constant 0 : i32
    %c0_i32_1 = arith.constant 0 : i32
    return %c0_i32, %c0_i32_0 : i32, i32
  }
  func.func @transform_3(%arg0: i32) -> (i32, i32) {
    %c0_i32 = arith.constant 0 : i32
    %c0_i32_0 = arith.constant 0 : i32
    %c0_i32_1 = arith.constant 0 : i32
    return %c0_i32, %c0_i32_0 : i32, i32
  }
  func.func @transform_4(%arg0: i32) -> (i32, i32) {
    %c0_i32 = arith.constant 0 : i32
    %c0_i32_0 = arith.constant 0 : i32
    %c0_i32_1 = arith.constant 0 : i32
    return %c0_i32, %c0_i32_0 : i32, i32
  }
  func.func @transform_5(%arg0: i32) -> (i32, i32) {
    %c0_i32 = arith.constant 0 : i32
    %c0_i32_0 = arith.constant 0 : i32
    %c0_i32_1 = arith.constant 0 : i32
    return %c0_i32, %c0_i32_0 : i32, i32
  }
  func.func @transform_6(%arg0: i32) -> (i32, i32) {
    %c0_i32 = arith.constant 0 : i32
    %c0_i32_0 = arith.constant 0 : i32
    %c0_i32_1 = arith.constant 0 : i32
    return %c0_i32, %c0_i32_0 : i32, i32
  }
  func.func @transform_7(%arg0: i32) -> (i32, i32) {
    %c0_i32 = arith.constant 0 : i32
    %c0_i32_0 = arith.constant 0 : i32
    %c0_i32_1 = arith.constant 0 : i32
    return %c0_i32, %c0_i32_0 : i32, i32
  }
  func.func @transform_8(%arg0: i32) -> (i32, i32) {
    %c0_i32 = arith.constant 0 : i32
    %c0_i32_0 = arith.constant 0 : i32
    %c0_i32_1 = arith.constant 0 : i32
    return %c0_i32, %c0_i32_0 : i32, i32
  }
  func.func @transform_9(%arg0: i32) -> (i32, i32) {
    %c0_i32 = arith.constant 0 : i32
    %c0_i32_0 = arith.constant 0 : i32
    %c0_i32_1 = arith.constant 0 : i32
    return %c0_i32, %c0_i32_0 : i32, i32
  }
  func.func @transform_10(%arg0: i32) -> (i32, i32) {
    %c0_i32 = arith.constant 0 : i32
    %c0_i32_0 = arith.constant 0 : i32
    %c0_i32_1 = arith.constant 0 : i32
    return %c0_i32, %c0_i32_0 : i32, i32
  }
  func.func @transform_11(%arg0: i32) -> (i32, i32) {
    %c0_i32 = arith.constant 0 : i32
    %c0_i32_0 = arith.constant 0 : i32
    %c0_i32_1 = arith.constant 0 : i32
    return %c0_i32, %c0_i32_0 : i32, i32
  }
  func.func @transform_12(%arg0: i32) -> (i32, i32) {
    %c0_i32 = arith.constant 0 : i32
    %c0_i32_0 = arith.constant 0 : i32
    %c0_i32_1 = arith.constant 0 : i32
    return %c0_i32, %c0_i32_0 : i32, i32
  }
  func.func @transform_13(%arg0: i32) -> (i32, i32) {
    %c0_i32 = arith.constant 0 : i32
    %c0_i32_0 = arith.constant 0 : i32
    %c0_i32_1 = arith.constant 0 : i32
    return %c0_i32, %c0_i32_0 : i32, i32
  }
  func.func @transform_14(%arg0: i32) -> (i32, i32) {
    %c0_i32 = arith.constant 0 : i32
    %c0_i32_0 = arith.constant 0 : i32
    %c0_i32_1 = arith.constant 0 : i32
    return %c0_i32, %c0_i32_0 : i32, i32
  }
  func.func @transform_15(%arg0: i32) -> (i32, i32) {
    %c0_i32 = arith.constant 0 : i32
    %c0_i32_0 = arith.constant 0 : i32
    %c0_i32_1 = arith.constant 0 : i32
    return %c0_i32, %c0_i32_0 : i32, i32
  }
  func.func @transform_16(%arg0: i32) -> (i32, i32) {
    %c0_i32 = arith.constant 0 : i32
    %c0_i32_0 = arith.constant 0 : i32
    %c0_i32_1 = arith.constant 0 : i32
    return %c0_i32, %c0_i32_0 : i32, i32
  }
  func.func @transform_17(%arg0: i32) -> (i32, i32) {
    %c0_i32 = arith.constant 0 : i32
    %c0_i32_0 = arith.constant 0 : i32
    %c0_i32_1 = arith.constant 0 : i32
    return %c0_i32, %c0_i32_0 : i32, i32
  }
  func.func @transform_18(%arg0: i32) -> (i32, i32) {
    %c0_i32 = arith.constant 0 : i32
    %c0_i32_0 = arith.constant 0 : i32
    %c0_i32_1 = arith.constant 0 : i32
    return %c0_i32, %c0_i32_0 : i32, i32
  }
  func.func @transform_19(%arg0: i32) -> (i32, i32) {
    %c0_i32 = arith.constant 0 : i32
    %c0_i32_0 = arith.constant 0 : i32
    %c0_i32_1 = arith.constant 0 : i32
    return %c0_i32, %c0_i32_0 : i32, i32
  }
  func.func @transform_20(%arg0: i32) -> (i32, i32) {
    %c0_i32 = arith.constant 0 : i32
    %c0_i32_0 = arith.constant 0 : i32
    %c0_i32_1 = arith.constant 0 : i32
    return %c0_i32, %c0_i32_0 : i32, i32
  }
  func.func @transform_21(%arg0: i32) -> (i32, i32) {
    %c0_i32 = arith.constant 0 : i32
    %c0_i32_0 = arith.constant 0 : i32
    %c0_i32_1 = arith.constant 0 : i32
    return %c0_i32, %c0_i32_0 : i32, i32
  }
  func.func @transform_22(%arg0: i32) -> (i32, i32) {
    %c0_i32 = arith.constant 0 : i32
    %c0_i32_0 = arith.constant 0 : i32
    %c0_i32_1 = arith.constant 0 : i32
    return %c0_i32, %c0_i32_0 : i32, i32
  }
  func.func @transform_23(%arg0: i32) -> (i32, i32) {
    %c0_i32 = arith.constant 0 : i32
    %c0_i32_0 = arith.constant 0 : i32
    %c0_i32_1 = arith.constant 0 : i32
    return %c0_i32, %c0_i32_0 : i32, i32
  }
  func.func @transform_24(%arg0: i32) -> (i32, i32) {
    %c0_i32 = arith.constant 0 : i32
    %c0_i32_0 = arith.constant 0 : i32
    %c0_i32_1 = arith.constant 0 : i32
    return %c0_i32, %c0_i32_0 : i32, i32
  }
  func.func @transform_25(%arg0: i32) -> (i32, i32) {
    %c0_i32 = arith.constant 0 : i32
    %c0_i32_0 = arith.constant 0 : i32
    %c0_i32_1 = arith.constant 0 : i32
    return %c0_i32, %c0_i32_0 : i32, i32
  }
  func.func @transform_26(%arg0: i32) -> (i32, i32) {
    %c0_i32 = arith.constant 0 : i32
    %c0_i32_0 = arith.constant 0 : i32
    %c0_i32_1 = arith.constant 0 : i32
    return %c0_i32, %c0_i32_0 : i32, i32
  }
  func.func @transform_27(%arg0: i32) -> (i32, i32) {
    %c0_i32 = arith.constant 0 : i32
    %c0_i32_0 = arith.constant 0 : i32
    %c0_i32_1 = arith.constant 0 : i32
    return %c0_i32, %c0_i32_0 : i32, i32
  }
  func.func @transform_28(%arg0: i32) -> (i32, i32) {
    %c0_i32 = arith.constant 0 : i32
    %c0_i32_0 = arith.constant 0 : i32
    %c0_i32_1 = arith.constant 0 : i32
    return %c0_i32, %c0_i32_0 : i32, i32
  }
  func.func @transform_29(%arg0: i32) -> (i32, i32) {
    %c0_i32 = arith.constant 0 : i32
    %c0_i32_0 = arith.constant 0 : i32
    %c0_i32_1 = arith.constant 0 : i32
    return %c0_i32, %c0_i32_0 : i32, i32
  }
  func.func @transform_30(%arg0: i32) -> (i32, i32) {
    %c0_i32 = arith.constant 0 : i32
    %c0_i32_0 = arith.constant 0 : i32
    %c0_i32_1 = arith.constant 0 : i32
    return %c0_i32, %c0_i32_0 : i32, i32
  }
  func.func @transform_31(%arg0: i32) -> (i32, i32) {
    %c0_i32 = arith.constant 0 : i32
    %c0_i32_0 = arith.constant 0 : i32
    %c0_i32_1 = arith.constant 0 : i32
    return %c0_i32, %c0_i32_0 : i32, i32
  }
  func.func @transform_32(%arg0: i32) -> (i32, i32) {
    %c0_i32 = arith.constant 0 : i32
    %c0_i32_0 = arith.constant 0 : i32
    %c0_i32_1 = arith.constant 0 : i32
    return %c0_i32, %c0_i32_0 : i32, i32
  }
  func.func @transform_33(%arg0: i32) -> (i32, i32) {
    %c0_i32 = arith.constant 0 : i32
    %c0_i32_0 = arith.constant 0 : i32
    %c0_i32_1 = arith.constant 0 : i32
    return %c0_i32, %c0_i32_0 : i32, i32
  }
  func.func @transform_34(%arg0: i32) -> (i32, i32) {
    %c0_i32 = arith.constant 0 : i32
    %c0_i32_0 = arith.constant 0 : i32
    %c0_i32_1 = arith.constant 0 : i32
    return %c0_i32, %c0_i32_0 : i32, i32
  }
  func.func @transform_35(%arg0: i32) -> (i32, i32) {
    %c0_i32 = arith.constant 0 : i32
    %c0_i32_0 = arith.constant 0 : i32
    %c0_i32_1 = arith.constant 0 : i32
    return %c0_i32, %c0_i32_0 : i32, i32
  }
  func.func @transform_36(%arg0: i32) -> (i32, i32) {
    %c0_i32 = arith.constant 0 : i32
    %c0_i32_0 = arith.constant 0 : i32
    %c0_i32_1 = arith.constant 0 : i32
    return %c0_i32, %c0_i32_0 : i32, i32
  }
  func.func @transform_37(%arg0: i32) -> (i32, i32) {
    %c0_i32 = arith.constant 0 : i32
    %c0_i32_0 = arith.constant 0 : i32
    %c0_i32_1 = arith.constant 0 : i32
    return %c0_i32, %c0_i32_0 : i32, i32
  }
  func.func @transform_38(%arg0: i32) -> (i32, i32) {
    %c0_i32 = arith.constant 0 : i32
    %c0_i32_0 = arith.constant 0 : i32
    %c0_i32_1 = arith.constant 0 : i32
    return %c0_i32, %c0_i32_0 : i32, i32
  }
  func.func @transform_39(%arg0: i32) -> (i32, i32) {
    %c0_i32 = arith.constant 0 : i32
    %c0_i32_0 = arith.constant 0 : i32
    %c0_i32_1 = arith.constant 0 : i32
    return %c0_i32, %c0_i32_0 : i32, i32
  }
  func.func @transform_40(%arg0: i32) -> (i32, i32) {
    %c0_i32 = arith.constant 0 : i32
    %c0_i32_0 = arith.constant 0 : i32
    %c0_i32_1 = arith.constant 0 : i32
    return %c0_i32, %c0_i32_0 : i32, i32
  }
  func.func @transform_41(%arg0: i32) -> (i32, i32) {
    %c0_i32 = arith.constant 0 : i32
    %c0_i32_0 = arith.constant 0 : i32
    %c0_i32_1 = arith.constant 0 : i32
    return %c0_i32, %c0_i32_0 : i32, i32
  }
  func.func @transform_42(%arg0: i32) -> (i32, i32) {
    %c0_i32 = arith.constant 0 : i32
    %c0_i32_0 = arith.constant 0 : i32
    %c0_i32_1 = arith.constant 0 : i32
    return %c0_i32, %c0_i32_0 : i32, i32
  }
  func.func @transform_43(%arg0: i32) -> (i32, i32) {
    %c0_i32 = arith.constant 0 : i32
    %c0_i32_0 = arith.constant 0 : i32
    %c0_i32_1 = arith.constant 0 : i32
    return %c0_i32, %c0_i32_0 : i32, i32
  }
  func.func @transform_44(%arg0: i32) -> (i32, i32) {
    %c0_i32 = arith.constant 0 : i32
    %c0_i32_0 = arith.constant 0 : i32
    %c0_i32_1 = arith.constant 0 : i32
    return %c0_i32, %c0_i32_0 : i32, i32
  }
  func.func @transform_45(%arg0: i32) -> (i32, i32) {
    %c0_i32 = arith.constant 0 : i32
    %c0_i32_0 = arith.constant 0 : i32
    %c0_i32_1 = arith.constant 0 : i32
    return %c0_i32, %c0_i32_0 : i32, i32
  }
  func.func @transform_46(%arg0: i32) -> (i32, i32) {
    %c0_i32 = arith.constant 0 : i32
    %c0_i32_0 = arith.constant 0 : i32
    %c0_i32_1 = arith.constant 0 : i32
    return %c0_i32, %c0_i32_0 : i32, i32
  }
  func.func @transform_47(%arg0: i32) -> (i32, i32) {
    %c0_i32 = arith.constant 0 : i32
    %c0_i32_0 = arith.constant 0 : i32
    %c0_i32_1 = arith.constant 0 : i32
    return %c0_i32, %c0_i32_0 : i32, i32
  }
  func.func @transform_48(%arg0: i32) -> (i32, i32) {
    %c0_i32 = arith.constant 0 : i32
    %c0_i32_0 = arith.constant 0 : i32
    %c0_i32_1 = arith.constant 0 : i32
    return %c0_i32, %c0_i32_0 : i32, i32
  }
  func.func @transform_49(%arg0: i32) -> (i32, i32) {
    %c0_i32 = arith.constant 0 : i32
    %c0_i32_0 = arith.constant 0 : i32
    %c0_i32_1 = arith.constant 0 : i32
    return %c0_i32, %c0_i32_0 : i32, i32
  }
  func.func @transform_50(%arg0: i32) -> (i32, i32) {
    %c0_i32 = arith.constant 0 : i32
    %c0_i32_0 = arith.constant 0 : i32
    %c0_i32_1 = arith.constant 0 : i32
    return %c0_i32, %c0_i32_0 : i32, i32
  }
  func.func @transform_51(%arg0: i32) -> (i32, i32) {
    %c0_i32 = arith.constant 0 : i32
    %c0_i32_0 = arith.constant 0 : i32
    %c0_i32_1 = arith.constant 0 : i32
    return %c0_i32, %c0_i32_0 : i32, i32
  }
  func.func @transform_52(%arg0: i32) -> (i32, i32) {
    %c0_i32 = arith.constant 0 : i32
    %c0_i32_0 = arith.constant 0 : i32
    %c0_i32_1 = arith.constant 0 : i32
    return %c0_i32, %c0_i32_0 : i32, i32
  }
  func.func @transform_53(%arg0: i32) -> (i32, i32) {
    %c0_i32 = arith.constant 0 : i32
    %c0_i32_0 = arith.constant 0 : i32
    %c0_i32_1 = arith.constant 0 : i32
    return %c0_i32, %c0_i32_0 : i32, i32
  }
  func.func @transform_54(%arg0: i32) -> (i32, i32) {
    %c0_i32 = arith.constant 0 : i32
    %c0_i32_0 = arith.constant 0 : i32
    %c0_i32_1 = arith.constant 0 : i32
    return %c0_i32, %c0_i32_0 : i32, i32
  }
  func.func @transform_55(%arg0: i32) -> (i32, i32) {
    %c0_i32 = arith.constant 0 : i32
    %c0_i32_0 = arith.constant 0 : i32
    %c0_i32_1 = arith.constant 0 : i32
    return %c0_i32, %c0_i32_0 : i32, i32
  }
  func.func @transform_56(%arg0: i32) -> (i32, i32) {
    %c0_i32 = arith.constant 0 : i32
    %c0_i32_0 = arith.constant 0 : i32
    %c0_i32_1 = arith.constant 0 : i32
    return %c0_i32, %c0_i32_0 : i32, i32
  }
  func.func @transform_57(%arg0: i32) -> (i32, i32) {
    %c0_i32 = arith.constant 0 : i32
    %c0_i32_0 = arith.constant 0 : i32
    %c0_i32_1 = arith.constant 0 : i32
    return %c0_i32, %c0_i32_0 : i32, i32
  }
  func.func @transform_58(%arg0: i32) -> (i32, i32) {
    %c0_i32 = arith.constant 0 : i32
    %c0_i32_0 = arith.constant 0 : i32
    %c0_i32_1 = arith.constant 0 : i32
    return %c0_i32, %c0_i32_0 : i32, i32
  }
  func.func @transform_59(%arg0: i32) -> (i32, i32) {
    %c0_i32 = arith.constant 0 : i32
    %c0_i32_0 = arith.constant 0 : i32
    %c0_i32_1 = arith.constant 0 : i32
    return %c0_i32, %c0_i32_0 : i32, i32
  }
  func.func @transform_60(%arg0: i32) -> (i32, i32) {
    %c0_i32 = arith.constant 0 : i32
    %c0_i32_0 = arith.constant 0 : i32
    %c0_i32_1 = arith.constant 0 : i32
    return %c0_i32, %c0_i32_0 : i32, i32
  }
  func.func @transform_61(%arg0: i32) -> (i32, i32) {
    %c0_i32 = arith.constant 0 : i32
    %c0_i32_0 = arith.constant 0 : i32
    %c0_i32_1 = arith.constant 0 : i32
    return %c0_i32, %c0_i32_0 : i32, i32
  }
  func.func @transform_62(%arg0: i32) -> (i32, i32) {
    %c0_i32 = arith.constant 0 : i32
    %c0_i32_0 = arith.constant 0 : i32
    %c0_i32_1 = arith.constant 0 : i32
    return %c0_i32, %c0_i32_0 : i32, i32
  }
  func.func @transform_63(%arg0: i32) -> (i32, i32) {
    %c0_i32 = arith.constant 0 : i32
    %c0_i32_0 = arith.constant 0 : i32
    %c0_i32_1 = arith.constant 0 : i32
    return %c0_i32, %c0_i32_0 : i32, i32
  }
  func.func @transform_64(%arg0: i32) -> (i32, i32) {
    %c0_i32 = arith.constant 0 : i32
    %c0_i32_0 = arith.constant 0 : i32
    %c0_i32_1 = arith.constant 0 : i32
    return %c0_i32, %c0_i32_0 : i32, i32
  }
  func.func @transform_65(%arg0: i32) -> (i32, i32) {
    %c0_i32 = arith.constant 0 : i32
    %c0_i32_0 = arith.constant 0 : i32
    %c0_i32_1 = arith.constant 0 : i32
    return %c0_i32, %c0_i32_0 : i32, i32
  }
  func.func @transform_66(%arg0: i32) -> (i32, i32) {
    %c0_i32 = arith.constant 0 : i32
    %c0_i32_0 = arith.constant 0 : i32
    %c0_i32_1 = arith.constant 0 : i32
    return %c0_i32, %c0_i32_0 : i32, i32
  }
  func.func @transform_67(%arg0: i32) -> (i32, i32) {
    %c0_i32 = arith.constant 0 : i32
    %c0_i32_0 = arith.constant 0 : i32
    %c0_i32_1 = arith.constant 0 : i32
    return %c0_i32, %c0_i32_0 : i32, i32
  }
  func.func @transform_68(%arg0: i32) -> (i32, i32) {
    %c0_i32 = arith.constant 0 : i32
    %c0_i32_0 = arith.constant 0 : i32
    %c0_i32_1 = arith.constant 0 : i32
    return %c0_i32, %c0_i32_0 : i32, i32
  }
  func.func @transform_69(%arg0: i32) -> (i32, i32) {
    %c0_i32 = arith.constant 0 : i32
    %c0_i32_0 = arith.constant 0 : i32
    %c0_i32_1 = arith.constant 0 : i32
    return %c0_i32, %c0_i32_0 : i32, i32
  }
  func.func @transform_70(%arg0: i32) -> (i32, i32) {
    %c0_i32 = arith.constant 0 : i32
    %c0_i32_0 = arith.constant 0 : i32
    %c0_i32_1 = arith.constant 0 : i32
    return %c0_i32, %c0_i32_0 : i32, i32
  }
  func.func @transform_71(%arg0: i32) -> (i32, i32) {
    %c0_i32 = arith.constant 0 : i32
    %c0_i32_0 = arith.constant 0 : i32
    %c0_i32_1 = arith.constant 0 : i32
    return %c0_i32, %c0_i32_0 : i32, i32
  }
  func.func @transform_72(%arg0: i32) -> (i32, i32) {
    %c0_i32 = arith.constant 0 : i32
    %c0_i32_0 = arith.constant 0 : i32
    %c0_i32_1 = arith.constant 0 : i32
    return %c0_i32, %c0_i32_0 : i32, i32
  }
  func.func @transform_73(%arg0: i32) -> (i32, i32) {
    %c0_i32 = arith.constant 0 : i32
    %c0_i32_0 = arith.constant 0 : i32
    %c0_i32_1 = arith.constant 0 : i32
    return %c0_i32, %c0_i32_0 : i32, i32
  }
}

</mosaic_0001>

<llo_original>
// kernel: cl_attention_conv_forward.1
$region0: #{cl_attention_conv_forward.1}
  #allocation0 [shape = 'u32[]', space=smem, size = 0x4, offset = 0x4, fixed_abs, tag = 'smem constant byte address 0x4 - core index']
  #allocation1 [shape = 'u32[144,128]{1,0:T(1,128)}', space=vmem, size = 0x12000, scoped, tag = 'internal scratch']
  %s0 = inlined_call_operand.smem [shape: u32[74], index: -1, kind: input, shape index: {}]
  %s1 = sld [smem:[%s0]]
  %s2 = scalar_lea.smem %s0, 1
  %s3 = sld [smem:[%s2]]
  %s4 = scalar_lea.smem %s0, 2
  %s5 = sld [smem:[%s4]]
  %s6 = scalar_lea.smem %s0, 3
  %s7 = sld [smem:[%s6]]
  %s8 = scalar_lea.smem %s0, 4
  %s9 = sld [smem:[%s8]]
  %s10 = scalar_lea.smem %s0, 5
  %s11 = sld [smem:[%s10]]
  %s12 = scalar_lea.smem %s0, 6
  %s13 = sld [smem:[%s12]]
  %s14 = scalar_lea.smem %s0, 7
  %s15 = sld [smem:[%s14]]
  %s16 = scalar_lea.smem %s0, 8
  %s17 = sld [smem:[%s16]]
  %s18 = scalar_lea.smem %s0, 9
  %s19 = sld [smem:[%s18]]
  %s20 = scalar_lea.smem %s0, 10
  %s21 = sld [smem:[%s20]]
  %s22 = scalar_lea.smem %s0, 11
  %s23 = sld [smem:[%s22]]
  %s24 = scalar_lea.smem %s0, 12
  %s25 = sld [smem:[%s24]]
  %s26 = scalar_lea.smem %s0, 13
  %s27 = sld [smem:[%s26]]
  %s28 = scalar_lea.smem %s0, 14
  %s29 = sld [smem:[%s28]]
  %s30 = scalar_lea.smem %s0, 15
  %s31 = sld [smem:[%s30]]
  %s32 = scalar_lea.smem %s0, 16
  %s33 = sld [smem:[%s32]]
  %s34 = scalar_lea.smem %s0, 17
  %s35 = sld [smem:[%s34]]
  %s36 = scalar_lea.smem %s0, 18
  %s37 = sld [smem:[%s36]]
  %s38 = scalar_lea.smem %s0, 19
  %s39 = sld [smem:[%s38]]
  %s40 = scalar_lea.smem %s0, 20
  %s41 = sld [smem:[%s40]]
  %s42 = scalar_lea.smem %s0, 21
  %s43 = sld [smem:[%s42]]
  %s44 = scalar_lea.smem %s0, 22
  %s45 = sld [smem:[%s44]]
  %s46 = scalar_lea.smem %s0, 23
  %s47 = sld [smem:[%s46]]
  %s48 = scalar_lea.smem %s0, 24
  %s49 = sld [smem:[%s48]]
  %s50 = scalar_lea.smem %s0, 25
  %s51 = sld [smem:[%s50]]
  %s52 = scalar_lea.smem %s0, 26
  %s53 = sld [smem:[%s52]]
  %s54 = scalar_lea.smem %s0, 27
  %s55 = sld [smem:[%s54]]
  %s56 = scalar_lea.smem %s0, 28
  %s57 = sld [smem:[%s56]]
  %s58 = scalar_lea.smem %s0, 29
  %s59 = sld [smem:[%s58]]
  %s60 = scalar_lea.smem %s0, 30
  %s61 = sld [smem:[%s60]]
  %s62 = scalar_lea.smem %s0, 31
  %s63 = sld [smem:[%s62]]
  %s64 = scalar_lea.smem %s0, 32
  %s65 = sld [smem:[%s64]]
  %s66 = scalar_lea.smem %s0, 33
  %s67 = sld [smem:[%s66]]
  %s68 = scalar_lea.smem %s0, 34
  %s69 = sld [smem:[%s68]]
  %s70 = scalar_lea.smem %s0, 35
  %s71 = sld [smem:[%s70]]
  %s72 = scalar_lea.smem %s0, 36
  %s73 = sld [smem:[%s72]]
  %s74 = scalar_lea.smem %s0, 37
  %s75 = sld [smem:[%s74]]
  %s76 = scalar_lea.smem %s0, 38
  %s77 = sld [smem:[%s76]]
  %s78 = scalar_lea.smem %s0, 39
  %s79 = sld [smem:[%s78]]
  %s80 = scalar_lea.smem %s0, 40
  %s81 = sld [smem:[%s80]]
  %s82 = scalar_lea.smem %s0, 41
  %s83 = sld [smem:[%s82]]
  %s84 = scalar_lea.smem %s0, 42
  %s85 = sld [smem:[%s84]]
  %s86 = scalar_lea.smem %s0, 43
  %s87 = sld [smem:[%s86]]
  %s88 = scalar_lea.smem %s0, 44
  %s89 = sld [smem:[%s88]]
  %s90 = scalar_lea.smem %s0, 45
  %s91 = sld [smem:[%s90]]
  %s92 = scalar_lea.smem %s0, 46
  %s93 = sld [smem:[%s92]]
  %s94 = scalar_lea.smem %s0, 47
  %s95 = sld [smem:[%s94]]
  %s96 = scalar_lea.smem %s0, 48
  %s97 = sld [smem:[%s96]]
  %s98 = scalar_lea.smem %s0, 49
  %s99 = sld [smem:[%s98]]
  %s100 = scalar_lea.smem %s0, 50
  %s101 = sld [smem:[%s100]]
  %s102 = scalar_lea.smem %s0, 51
  %s103 = sld [smem:[%s102]]
  %s104 = scalar_lea.smem %s0, 52
  %s105 = sld [smem:[%s104]]
  %s106 = scalar_lea.smem %s0, 53
  %s107 = sld [smem:[%s106]]
  %s108 = scalar_lea.smem %s0, 54
  %s109 = sld [smem:[%s108]]
  %s110 = scalar_lea.smem %s0, 55
  %s111 = sld [smem:[%s110]]
  %s112 = scalar_lea.smem %s0, 56
  %s113 = sld [smem:[%s112]]
  %s114 = scalar_lea.smem %s0, 57
  %s115 = sld [smem:[%s114]]
  %s116 = scalar_lea.smem %s0, 58
  %s117 = sld [smem:[%s116]]
  %s118 = scalar_lea.smem %s0, 59
  %s119 = sld [smem:[%s118]]
  %s120 = scalar_lea.smem %s0, 60
  %s121 = sld [smem:[%s120]]
  %s122 = scalar_lea.smem %s0, 61
  %s123 = sld [smem:[%s122]]
  %s124 = scalar_lea.smem %s0, 62
  %s125 = sld [smem:[%s124]]
  %s126 = scalar_lea.smem %s0, 63
  %s127 = sld [smem:[%s126]]
  %s128 = scalar_lea.smem %s0, 64
  %s129 = sld [smem:[%s128]]
  %s130 = scalar_lea.smem %s0, 65
  %s131 = sld [smem:[%s130]]
  %s132 = scalar_lea.smem %s0, 66
  %s133 = sld [smem:[%s132]]
  %s134 = scalar_lea.smem %s0, 67
  %s135 = sld [smem:[%s134]]
  %s136 = scalar_lea.smem %s0, 68
  %s137 = sld [smem:[%s136]]
  %s138 = scalar_lea.smem %s0, 69
  %s139 = sld [smem:[%s138]]
  %s140 = scalar_lea.smem %s0, 70
  %s141 = sld [smem:[%s140]]
  %s142 = scalar_lea.smem %s0, 71
  %s143 = sld [smem:[%s142]]
  %s144 = scalar_lea.smem %s0, 72
  %s145 = sld [smem:[%s144]]
  %s146 = scalar_lea.smem %s0, 73
  %s147 = sld [smem:[%s146]]
  %s148 = sld [smem:[#allocation0]]
  $region386: #{cl_attention_conv_forward.1} parent=0
    _
  %s150 = ssub.s32 1, %s148
  %s151 = scalar_select 0, %s150, %s148
  $region1: #{cl_attention_conv_forward.1} parent=0
    #allocation2 [shape = 'u8[512]{0}', space=vmem, size = 0x400, scoped, tag = 'input window, operand 42, single buffered']
    #allocation3 [shape = 's32[1]{0}', space=sflag, size = 0x4, scoped, tag = 'scoped memory for cl_attention_conv_forward.1']
    #allocation4 [shape = 'u8[512]{0}', space=vmem, size = 0x400, scoped, tag = 'input window, operand 43, single buffered']
    #allocation5 [shape = 's32[1]{0}', space=sflag, size = 0x4, scoped, tag = 'scoped memory for cl_attention_conv_forward.1']
    #allocation6 [shape = 'u8[512]{0}', space=vmem, size = 0x400, scoped, tag = 'input window, operand 44, single buffered']
    #allocation7 [shape = 'u8[512]{0}', space=vmem, size = 0x400, scoped, tag = 'input window, operand 46, single buffered']
    #allocation8 [shape = 's32[1]{0}', space=sflag, size = 0x4, scoped, tag = 'scoped memory for cl_attention_conv_forward.1']
    #allocation9 [shape = 'u8[512]{0}', space=vmem, size = 0x400, scoped, tag = 'input window, operand 48, single buffered']
    #allocation10 [shape = 'u8[512]{0}', space=vmem, size = 0x400, scoped, tag = 'input window, operand 50, single buffered']
    #allocation11 [shape = 's32[1]{0}', space=sflag, size = 0x4, scoped, tag = 'scoped memory for cl_attention_conv_forward.1']
    #allocation12 [shape = 'u8[512]{0}', space=vmem, size = 0x400, scoped, tag = 'input window, operand 51, single buffered']
    #allocation13 [shape = 'u8[512]{0}', space=vmem, size = 0x400, scoped, tag = 'input window, operand 52, single buffered']
    #allocation14 [shape = 's32[1]{0}', space=sflag, size = 0x4, scoped, tag = 'scoped memory for cl_attention_conv_forward.1']
    #allocation15 [shape = 'u8[512]{0}', space=vmem, size = 0x400, scoped, tag = 'input window, operand 54, single buffered']
    #allocation16 [shape = 'u8[512]{0}', space=vmem, size = 0x400, scoped, tag = 'input window, operand 56, single buffered']
    #allocation17 [shape = 's32[1]{0}', space=sflag, size = 0x4, scoped, tag = 'scoped memory for cl_attention_conv_forward.1']
    #allocation18 [shape = 'u8[512]{0}', space=vmem, size = 0x400, scoped, tag = 'input window, operand 57, single buffered']
    #allocation19 [shape = 'u8[512]{0}', space=vmem, size = 0x400, scoped, tag = 'input window, operand 58, single buffered']
    #allocation20 [shape = 's32[1]{0}', space=sflag, size = 0x4, scoped, tag = 'scoped memory for cl_attention_conv_forward.1']
    #allocation21 [shape = 'u8[512]{0}', space=vmem, size = 0x400, scoped, tag = 'input window, operand 60, single buffered']
    #allocation22 [shape = 'u8[512]{0}', space=vmem, size = 0x400, scoped, tag = 'input window, operand 62, single buffered']
    #allocation23 [shape = 's32[1]{0}', space=sflag, size = 0x4, scoped, tag = 'scoped memory for cl_attention_conv_forward.1']
    #allocation24 [shape = 'u8[512]{0}', space=vmem, size = 0x400, scoped, tag = 'input window, operand 64, single buffered']
    #allocation25 [shape = 'u8[512]{0}', space=vmem, size = 0x400, scoped, tag = 'input window, operand 65, single buffered']
    #allocation26 [shape = 's32[1]{0}', space=sflag, size = 0x4, scoped, tag = 'scoped memory for cl_attention_conv_forward.1']
    #allocation27 [shape = 'u8[512]{0}', space=vmem, size = 0x400, scoped, tag = 'input window, operand 66, single buffered']
    #allocation28 [shape = 'u8[512]{0}', space=vmem, size = 0x400, scoped, tag = 'input window, operand 68, single buffered']
    #allocation29 [shape = 's32[1]{0}', space=sflag, size = 0x4, scoped, tag = 'scoped memory for cl_attention_conv_forward.1']
    #allocation30 [shape = 'u8[512]{0}', space=vmem, size = 0x400, scoped, tag = 'input window, operand 70, single buffered']
    #allocation31 [shape = 'u8[512]{0}', space=vmem, size = 0x400, scoped, tag = 'input window, operand 71, single buffered']
    #allocation32 [shape = 's32[1]{0}', space=sflag, size = 0x4, scoped, tag = 'scoped memory for cl_attention_conv_forward.1']
    #allocation33 [shape = 'u8[512]{0}', space=vmem, size = 0x400, scoped, tag = 'input window, operand 72, single buffered']
    %152 = vsyncpa [#allocation3], 0
    %153 = vsyncpa [#allocation5], 0
    %154 = vsyncpa [#allocation8], 0
    %155 = vsyncpa [#allocation11], 0
    %156 = vsyncpa [#allocation14], 0
    %157 = vsyncpa [#allocation17], 0
    %158 = vsyncpa [#allocation20], 0
    %159 = vsyncpa [#allocation23], 0
    %160 = vsyncpa [#allocation26], 0
    %161 = vsyncpa [#allocation29], 0
    %162 = vsyncpa [#allocation32], 0
    // Predicated region
    $region2: #{cl_attention_conv_forward.1} parent=1 // pred_check
      _
    $region3: #{cl_attention_conv_forward.1} parent=1 // pred_check_branch
      %164 = sbr.rel (0) target = $region5
    $region4: #{cl_attention_conv_forward.1} parent=1 // pred_region
      _
    $region5: #{cl_attention_conv_forward.1} parent=1 // pred_fallthru
      _
    // Predicated region
    $region6: #{cl_attention_conv_forward.1} parent=1 // pred_check
      _
    $region7: #{cl_attention_conv_forward.1} parent=1 // pred_check_branch
      %166 = sbr.rel (0) target = $region9
    $region8: #{cl_attention_conv_forward.1} parent=1 // pred_region
      _
    $region9: #{cl_attention_conv_forward.1} parent=1 // pred_fallthru
      _
    // Predicated region
    $region10: #{cl_attention_conv_forward.1} parent=1 // pred_check
      _
    $region11: #{cl_attention_conv_forward.1} parent=1 // pred_check_branch
      %168 = sbr.rel (0) target = $region13
    $region12: #{cl_attention_conv_forward.1} parent=1 // pred_region
      _
    $region13: #{cl_attention_conv_forward.1} parent=1 // pred_fallthru
      _
    // Predicated region
    $region14: #{cl_attention_conv_forward.1} parent=1 // pred_check
      _
    $region15: #{cl_attention_conv_forward.1} parent=1 // pred_check_branch
      %170 = sbr.rel (0) target = $region17
    $region16: #{cl_attention_conv_forward.1} parent=1 // pred_region
      _
    $region17: #{cl_attention_conv_forward.1} parent=1 // pred_fallthru
      _
    // Predicated region
    $region18: #{cl_attention_conv_forward.1} parent=1 // pred_check
      _
    $region19: #{cl_attention_conv_forward.1} parent=1 // pred_check_branch
      %172 = sbr.rel (0) target = $region21
    $region20: #{cl_attention_conv_forward.1} parent=1 // pred_region
      _
    $region21: #{cl_attention_conv_forward.1} parent=1 // pred_fallthru
      _
    // Predicated region
    $region22: #{cl_attention_conv_forward.1} parent=1 // pred_check
      _
    $region23: #{cl_attention_conv_forward.1} parent=1 // pred_check_branch
      %174 = sbr.rel (0) target = $region25
    $region24: #{cl_attention_conv_forward.1} parent=1 // pred_region
      _
    $region25: #{cl_attention_conv_forward.1} parent=1 // pred_fallthru
      _
    // Predicated region
    $region26: #{cl_attention_conv_forward.1} parent=1 // pred_check
      _
    $region27: #{cl_attention_conv_forward.1} parent=1 // pred_check_branch
      %176 = sbr.rel (0) target = $region29
    $region28: #{cl_attention_conv_forward.1} parent=1 // pred_region
      _
    $region29: #{cl_attention_conv_forward.1} parent=1 // pred_fallthru
      _
    // Predicated region
    $region30: #{cl_attention_conv_forward.1} parent=1 // pred_check
      _
    $region31: #{cl_attention_conv_forward.1} parent=1 // pred_check_branch
      %178 = sbr.rel (0) target = $region33
    $region32: #{cl_attention_conv_forward.1} parent=1 // pred_region
      _
    $region33: #{cl_attention_conv_forward.1} parent=1 // pred_fallthru
      _
    // Predicated region
    $region34: #{cl_attention_conv_forward.1} parent=1 // pred_check
      _
    $region35: #{cl_attention_conv_forward.1} parent=1 // pred_check_branch
      %180 = sbr.rel (0) target = $region37
    $region36: #{cl_attention_conv_forward.1} parent=1 // pred_region
      _
    $region37: #{cl_attention_conv_forward.1} parent=1 // pred_fallthru
      _
    // Predicated region
    $region38: #{cl_attention_conv_forward.1} parent=1 // pred_check
      _
    $region39: #{cl_attention_conv_forward.1} parent=1 // pred_check_branch
      %182 = sbr.rel (0) target = $region41
    $region40: #{cl_attention_conv_forward.1} parent=1 // pred_region
      _
    $region41: #{cl_attention_conv_forward.1} parent=1 // pred_fallthru
      _
    // Predicated region
    $region42: #{cl_attention_conv_forward.1} parent=1 // pred_check
      _
    $region43: #{cl_attention_conv_forward.1} parent=1 // pred_check_branch
      %184 = sbr.rel (0) target = $region45
    $region44: #{cl_attention_conv_forward.1} parent=1 // pred_region
      _
    $region45: #{cl_attention_conv_forward.1} parent=1 // pred_fallthru
      _
    // Predicated region
    $region46: #{cl_attention_conv_forward.1} parent=1 // pred_check
      _
    $region47: #{cl_attention_conv_forward.1} parent=1 // pred_check_branch
      %186 = sbr.rel (0) target = $region49
    $region48: #{cl_attention_conv_forward.1} parent=1 // pred_region
      _
    $region49: #{cl_attention_conv_forward.1} parent=1 // pred_fallthru
      _
    // Predicated region
    $region50: #{cl_attention_conv_forward.1} parent=1 // pred_check
      _
    $region51: #{cl_attention_conv_forward.1} parent=1 // pred_check_branch
      %188 = sbr.rel (0) target = $region53
    $region52: #{cl_attention_conv_forward.1} parent=1 // pred_region
      _
    $region53: #{cl_attention_conv_forward.1} parent=1 // pred_fallthru
      _
    // Predicated region
    $region54: #{cl_attention_conv_forward.1} parent=1 // pred_check
      _
    $region55: #{cl_attention_conv_forward.1} parent=1 // pred_check_branch
      %190 = sbr.rel (0) target = $region57
    $region56: #{cl_attention_conv_forward.1} parent=1 // pred_region
      _
    $region57: #{cl_attention_conv_forward.1} parent=1 // pred_fallthru
      _
    // Predicated region
    $region58: #{cl_attention_conv_forward.1} parent=1 // pred_check
      _
    $region59: #{cl_attention_conv_forward.1} parent=1 // pred_check_branch
      %192 = sbr.rel (0) target = $region61
    $region60: #{cl_attention_conv_forward.1} parent=1 // pred_region
      _
    $region61: #{cl_attention_conv_forward.1} parent=1 // pred_fallthru
      _
    // Predicated region
    $region62: #{cl_attention_conv_forward.1} parent=1 // pred_check
      _
    $region63: #{cl_attention_conv_forward.1} parent=1 // pred_check_branch
      %194 = sbr.rel (0) target = $region65
    $region64: #{cl_attention_conv_forward.1} parent=1 // pred_region
      _
    $region65: #{cl_attention_conv_forward.1} parent=1 // pred_fallthru
      _
    // Predicated region
    $region66: #{cl_attention_conv_forward.1} parent=1 // pred_check
      _
    $region67: #{cl_attention_conv_forward.1} parent=1 // pred_check_branch
      %196 = sbr.rel (0) target = $region69
    $region68: #{cl_attention_conv_forward.1} parent=1 // pred_region
      _
    $region69: #{cl_attention_conv_forward.1} parent=1 // pred_fallthru
      _
    // Predicated region
    $region70: #{cl_attention_conv_forward.1} parent=1 // pred_check
      _
    $region71: #{cl_attention_conv_forward.1} parent=1 // pred_check_branch
      %198 = sbr.rel (0) target = $region73
    $region72: #{cl_attention_conv_forward.1} parent=1 // pred_region
      _
    $region73: #{cl_attention_conv_forward.1} parent=1 // pred_fallthru
      _
    // Predicated region
    $region74: #{cl_attention_conv_forward.1} parent=1 // pred_check
      _
    $region75: #{cl_attention_conv_forward.1} parent=1 // pred_check_branch
      %200 = sbr.rel (0) target = $region77
    $region76: #{cl_attention_conv_forward.1} parent=1 // pred_region
      _
    $region77: #{cl_attention_conv_forward.1} parent=1 // pred_fallthru
      _
    // Predicated region
    $region78: #{cl_attention_conv_forward.1} parent=1 // pred_check
      _
    $region79: #{cl_attention_conv_forward.1} parent=1 // pred_check_branch
      %202 = sbr.rel (0) target = $region81
    $region80: #{cl_attention_conv_forward.1} parent=1 // pred_region
      _
    $region81: #{cl_attention_conv_forward.1} parent=1 // pred_fallthru
      _
    // Predicated region
    $region82: #{cl_attention_conv_forward.1} parent=1 // pred_check
      _
    $region83: #{cl_attention_conv_forward.1} parent=1 // pred_check_branch
      %204 = sbr.rel (0) target = $region85
    $region84: #{cl_attention_conv_forward.1} parent=1 // pred_region
      _
    $region85: #{cl_attention_conv_forward.1} parent=1 // pred_fallthru
      _
    // Predicated region
    $region86: #{cl_attention_conv_forward.1} parent=1 // pred_check
      _
    $region87: #{cl_attention_conv_forward.1} parent=1 // pred_check_branch
      %206 = sbr.rel (0) target = $region89
    $region88: #{cl_attention_conv_forward.1} parent=1 // pred_region
      _
    $region89: #{cl_attention_conv_forward.1} parent=1 // pred_fallthru
      _
    // Predicated region
    $region90: #{cl_attention_conv_forward.1} parent=1 // pred_check
      _
    $region91: #{cl_attention_conv_forward.1} parent=1 // pred_check_branch
      %208 = sbr.rel (0) target = $region93
    $region92: #{cl_attention_conv_forward.1} parent=1 // pred_region
      _
    $region93: #{cl_attention_conv_forward.1} parent=1 // pred_fallthru
      _
    // Predicated region
    $region94: #{cl_attention_conv_forward.1} parent=1 // pred_check
      _
    $region95: #{cl_attention_conv_forward.1} parent=1 // pred_check_branch
      %210 = sbr.rel (0) target = $region97
    $region96: #{cl_attention_conv_forward.1} parent=1 // pred_region
      _
    $region97: #{cl_attention_conv_forward.1} parent=1 // pred_fallthru
      _
    // Predicated region
    $region98: #{cl_attention_conv_forward.1} parent=1 // pred_check
      _
    $region99: #{cl_attention_conv_forward.1} parent=1 // pred_check_branch
      %212 = sbr.rel (0) target = $region101
    $region100: #{cl_attention_conv_forward.1} parent=1 // pred_region
      _
    $region101: #{cl_attention_conv_forward.1} parent=1 // pred_fallthru
      _
    // Predicated region
    $region102: #{cl_attention_conv_forward.1} parent=1 // pred_check
      _
    $region103: #{cl_attention_conv_forward.1} parent=1 // pred_check_branch
      %214 = sbr.rel (0) target = $region105
    $region104: #{cl_attention_conv_forward.1} parent=1 // pred_region
      _
    $region105: #{cl_attention_conv_forward.1} parent=1 // pred_fallthru
      _
    // Predicated region
    $region106: #{cl_attention_conv_forward.1} parent=1 // pred_check
      _
    $region107: #{cl_attention_conv_forward.1} parent=1 // pred_check_branch
      %216 = sbr.rel (0) target = $region109
    $region108: #{cl_attention_conv_forward.1} parent=1 // pred_region
      _
    $region109: #{cl_attention_conv_forward.1} parent=1 // pred_fallthru
      _
    // Predicated region
    $region110: #{cl_attention_conv_forward.1} parent=1 // pred_check
      _
    $region111: #{cl_attention_conv_forward.1} parent=1 // pred_check_branch
      %218 = sbr.rel (0) target = $region113
    $region112: #{cl_attention_conv_forward.1} parent=1 // pred_region
      _
    $region113: #{cl_attention_conv_forward.1} parent=1 // pred_fallthru
      _
    // Predicated region
    $region114: #{cl_attention_conv_forward.1} parent=1 // pred_check
      _
    $region115: #{cl_attention_conv_forward.1} parent=1 // pred_check_branch
      %220 = sbr.rel (0) target = $region117
    $region116: #{cl_attention_conv_forward.1} parent=1 // pred_region
      _
    $region117: #{cl_attention_conv_forward.1} parent=1 // pred_fallthru
      _
    // Predicated region
    $region118: #{cl_attention_conv_forward.1} parent=1 // pred_check
      _
    $region119: #{cl_attention_conv_forward.1} parent=1 // pred_check_branch
      %222 = sbr.rel (0) target = $region121
    $region120: #{cl_attention_conv_forward.1} parent=1 // pred_region
      _
    $region121: #{cl_attention_conv_forward.1} parent=1 // pred_fallthru
      _
    // Predicated region
    $region122: #{cl_attention_conv_forward.1} parent=1 // pred_check
      _
    $region123: #{cl_attention_conv_forward.1} parent=1 // pred_check_branch
      %224 = sbr.rel (0) target = $region125
    $region124: #{cl_attention_conv_forward.1} parent=1 // pred_region
      _
    $region125: #{cl_attention_conv_forward.1} parent=1 // pred_fallthru
      _
    // Predicated region
    $region126: #{cl_attention_conv_forward.1} parent=1 // pred_check
      _
    $region127: #{cl_attention_conv_forward.1} parent=1 // pred_check_branch
      %226 = sbr.rel (0) target = $region129
    $region128: #{cl_attention_conv_forward.1} parent=1 // pred_region
      _
    $region129: #{cl_attention_conv_forward.1} parent=1 // pred_fallthru
      _
    // Predicated region
    $region130: #{cl_attention_conv_forward.1} parent=1 // pred_check
      _
    $region131: #{cl_attention_conv_forward.1} parent=1 // pred_check_branch
      %228 = sbr.rel (0) target = $region133
    $region132: #{cl_attention_conv_forward.1} parent=1 // pred_region
      _
    $region133: #{cl_attention_conv_forward.1} parent=1 // pred_fallthru
      _
    // Predicated region
    $region134: #{cl_attention_conv_forward.1} parent=1 // pred_check
      _
    $region135: #{cl_attention_conv_forward.1} parent=1 // pred_check_branch
      %230 = sbr.rel (0) target = $region137
    $region136: #{cl_attention_conv_forward.1} parent=1 // pred_region
      _
    $region137: #{cl_attention_conv_forward.1} parent=1 // pred_fallthru
      _
    // Predicated region
    $region138: #{cl_attention_conv_forward.1} parent=1 // pred_check
      _
    $region139: #{cl_attention_conv_forward.1} parent=1 // pred_check_branch
      %232 = sbr.rel (0) target = $region141
    $region140: #{cl_attention_conv_forward.1} parent=1 // pred_region
      _
    $region141: #{cl_attention_conv_forward.1} parent=1 // pred_fallthru
      _
    // Predicated region
    $region142: #{cl_attention_conv_forward.1} parent=1 // pred_check
      _
    $region143: #{cl_attention_conv_forward.1} parent=1 // pred_check_branch
      %234 = sbr.rel (0) target = $region145
    $region144: #{cl_attention_conv_forward.1} parent=1 // pred_region
      _
    $region145: #{cl_attention_conv_forward.1} parent=1 // pred_fallthru
      _
    // Predicated region
    $region146: #{cl_attention_conv_forward.1} parent=1 // pred_check
      _
    $region147: #{cl_attention_conv_forward.1} parent=1 // pred_check_branch
      %236 = sbr.rel (0) target = $region149
    $region148: #{cl_attention_conv_forward.1} parent=1 // pred_region
      _
    $region149: #{cl_attention_conv_forward.1} parent=1 // pred_fallthru
      _
    // Predicated region
    $region150: #{cl_attention_conv_forward.1} parent=1 // pred_check
      _
    $region151: #{cl_attention_conv_forward.1} parent=1 // pred_check_branch
      %238 = sbr.rel (0) target = $region153
    $region152: #{cl_attention_conv_forward.1} parent=1 // pred_region
      _
    $region153: #{cl_attention_conv_forward.1} parent=1 // pred_fallthru
      _
    // Predicated region
    $region154: #{cl_attention_conv_forward.1} parent=1 // pred_check
      _
    $region155: #{cl_attention_conv_forward.1} parent=1 // pred_check_branch
      %240 = sbr.rel (0) target = $region157
    $region156: #{cl_attention_conv_forward.1} parent=1 // pred_region
      _
    $region157: #{cl_attention_conv_forward.1} parent=1 // pred_fallthru
      _
    // Predicated region
    $region158: #{cl_attention_conv_forward.1} parent=1 // pred_check
      _
    $region159: #{cl_attention_conv_forward.1} parent=1 // pred_check_branch
      %242 = sbr.rel (0) target = $region161
    $region160: #{cl_attention_conv_forward.1} parent=1 // pred_region
      _
    $region161: #{cl_attention_conv_forward.1} parent=1 // pred_fallthru
      _
    // Predicated region
    $region162: #{cl_attention_conv_forward.1} parent=1 // pred_check
      _
    $region163: #{cl_attention_conv_forward.1} parent=1 // pred_check_branch
      %244 = sbr.rel (0) target = $region165
    $region164: #{cl_attention_conv_forward.1} parent=1 // pred_region
      _
    $region165: #{cl_attention_conv_forward.1} parent=1 // pred_fallthru
      _
    // Predicated region
    $region166: #{cl_attention_conv_forward.1} parent=1 // pred_check
      _
    $region167: #{cl_attention_conv_forward.1} parent=1 // pred_check_branch
      %246 = sbr.rel (0) target = $region169
    $region168: #{cl_attention_conv_forward.1} parent=1 // pred_region
      _
    $region169: #{cl_attention_conv_forward.1} parent=1 // pred_fallthru
      _
    // Predicated region
    $region170: #{cl_attention_conv_forward.1} parent=1 // pred_check
      _
    $region171: #{cl_attention_conv_forward.1} parent=1 // pred_check_branch
      %248 = sbr.rel (0) target = $region173
    $region172: #{cl_attention_conv_forward.1} parent=1 // pred_region
      %s250 = ssub.s32 16, 16
      %251 = vsyncadd [#allocation3], %s250
      %s253 = sshll.u32 [#allocation2], 4
      %s254 = int_to_ptr.vmem [resolvable:$true] %s253
      %256 = dma.hbm_to_vmem [thread:$0]  %s85, 16, %s254, [#allocation3]
    $region173: #{cl_attention_conv_forward.1} parent=1 // pred_fallthru
      _
    // Predicated region
    $region174: #{cl_attention_conv_forward.1} parent=1 // pred_check
      _
    $region175: #{cl_attention_conv_forward.1} parent=1 // pred_check_branch
      %258 = sbr.rel (0) target = $region177
    $region176: #{cl_attention_conv_forward.1} parent=1 // pred_region
      %s260 = ssub.s32 16, 16
      %261 = vsyncadd [#allocation5], %s260
      %s263 = sshll.u32 [#allocation4], 4
      %s264 = int_to_ptr.vmem [resolvable:$true] %s263
      %266 = dma.hbm_to_vmem [thread:$0]  %s87, 16, %s264, [#allocation5]
    $region177: #{cl_attention_conv_forward.1} parent=1 // pred_fallthru
      _
    // Predicated region
    $region178: #{cl_attention_conv_forward.1} parent=1 // pred_check
      _
    $region179: #{cl_attention_conv_forward.1} parent=1 // pred_check_branch
      %268 = sbr.rel (0) target = $region181
    $region180: #{cl_attention_conv_forward.1} parent=1 // pred_region
      %s270 = ssub.s32 16, 16
      %271 = vsyncadd [#allocation5], %s270
      %s273 = sshll.u32 [#allocation6], 4
      %s274 = int_to_ptr.vmem [resolvable:$true] %s273
      %276 = dma.hbm_to_vmem [thread:$0]  %s89, 16, %s274, [#allocation5]
    $region181: #{cl_attention_conv_forward.1} parent=1 // pred_fallthru
      _
    // Predicated region
    $region182: #{cl_attention_conv_forward.1} parent=1 // pred_check
      _
    $region183: #{cl_attention_conv_forward.1} parent=1 // pred_check_branch
      %278 = sbr.rel (0) target = $region185
    $region184: #{cl_attention_conv_forward.1} parent=1 // pred_region
      _
    $region185: #{cl_attention_conv_forward.1} parent=1 // pred_fallthru
      _
    // Predicated region
    $region186: #{cl_attention_conv_forward.1} parent=1 // pred_check
      _
    $region187: #{cl_attention_conv_forward.1} parent=1 // pred_check_branch
      %280 = sbr.rel (0) target = $region189
    $region188: #{cl_attention_conv_forward.1} parent=1 // pred_region
      %s282 = ssub.s32 16, 16
      %283 = vsyncadd [#allocation8], %s282
      %s285 = sshll.u32 [#allocation7], 4
      %s286 = int_to_ptr.vmem [resolvable:$true] %s285
      %288 = dma.hbm_to_vmem [thread:$0]  %s93, 16, %s286, [#allocation8]
    $region189: #{cl_attention_conv_forward.1} parent=1 // pred_fallthru
      _
    // Predicated region
    $region190: #{cl_attention_conv_forward.1} parent=1 // pred_check
      _
    $region191: #{cl_attention_conv_forward.1} parent=1 // pred_check_branch
      %290 = sbr.rel (0) target = $region193
    $region192: #{cl_attention_conv_forward.1} parent=1 // pred_region
      _
    $region193: #{cl_attention_conv_forward.1} parent=1 // pred_fallthru
      _
    // Predicated region
    $region194: #{cl_attention_conv_forward.1} parent=1 // pred_check
      _
    $region195: #{cl_attention_conv_forward.1} parent=1 // pred_check_branch
      %292 = sbr.rel (0) target = $region197
    $region196: #{cl_attention_conv_forward.1} parent=1 // pred_region
      %s294 = ssub.s32 16, 16
      %295 = vsyncadd [#allocation8], %s294
      %s297 = sshll.u32 [#allocation9], 4
      %s298 = int_to_ptr.vmem [resolvable:$true] %s297
      %300 = dma.hbm_to_vmem [thread:$0]  %s97, 16, %s298, [#allocation8]
    $region197: #{cl_attention_conv_forward.1} parent=1 // pred_fallthru
      _
    // Predicated region
    $region198: #{cl_attention_conv_forward.1} parent=1 // pred_check
      _
    $region199: #{cl_attention_conv_forward.1} parent=1 // pred_check_branch
      %302 = sbr.rel (0) target = $region201
    $region200: #{cl_attention_conv_forward.1} parent=1 // pred_region
      _
    $region201: #{cl_attention_conv_forward.1} parent=1 // pred_fallthru
      _
    // Predicated region
    $region202: #{cl_attention_conv_forward.1} parent=1 // pred_check
      _
    $region203: #{cl_attention_conv_forward.1} parent=1 // pred_check_branch
      %304 = sbr.rel (0) target = $region205
    $region204: #{cl_attention_conv_forward.1} parent=1 // pred_region
      %s306 = ssub.s32 16, 16
      %307 = vsyncadd [#allocation11], %s306
      %s309 = sshll.u32 [#allocation10], 4
      %s310 = int_to_ptr.vmem [resolvable:$true] %s309
      %312 = dma.hbm_to_vmem [thread:$0]  %s101, 16, %s310, [#allocation11]
    $region205: #{cl_attention_conv_forward.1} parent=1 // pred_fallthru
      _
    // Predicated region
    $region206: #{cl_attention_conv_forward.1} parent=1 // pred_check
      _
    $region207: #{cl_attention_conv_forward.1} parent=1 // pred_check_branch
      %314 = sbr.rel (0) target = $region209
    $region208: #{cl_attention_conv_forward.1} parent=1 // pred_region
      %s316 = ssub.s32 16, 16
      %317 = vsyncadd [#allocation11], %s316
      %s319 = sshll.u32 [#allocation12], 4
      %s320 = int_to_ptr.vmem [resolvable:$true] %s319
      %322 = dma.hbm_to_vmem [thread:$0]  %s103, 16, %s320, [#allocation11]
    $region209: #{cl_attention_conv_forward.1} parent=1 // pred_fallthru
      _
    // Predicated region
    $region210: #{cl_attention_conv_forward.1} parent=1 // pred_check
      _
    $region211: #{cl_attention_conv_forward.1} parent=1 // pred_check_branch
      %324 = sbr.rel (0) target = $region213
    $region212: #{cl_attention_conv_forward.1} parent=1 // pred_region
      %s326 = ssub.s32 16, 16
      %327 = vsyncadd [#allocation14], %s326
      %s329 = sshll.u32 [#allocation13], 4
      %s330 = int_to_ptr.vmem [resolvable:$true] %s329
      %332 = dma.hbm_to_vmem [thread:$0]  %s105, 16, %s330, [#allocation14]
    $region213: #{cl_attention_conv_forward.1} parent=1 // pred_fallthru
      _
    // Predicated region
    $region214: #{cl_attention_conv_forward.1} parent=1 // pred_check
      _
    $region215: #{cl_attention_conv_forward.1} parent=1 // pred_check_branch
      %334 = sbr.rel (0) target = $region217
    $region216: #{cl_attention_conv_forward.1} parent=1 // pred_region
      _
    $region217: #{cl_attention_conv_forward.1} parent=1 // pred_fallthru
      _
    // Predicated region
    $region218: #{cl_attention_conv_forward.1} parent=1 // pred_check
      _
    $region219: #{cl_attention_conv_forward.1} parent=1 // pred_check_branch
      %336 = sbr.rel (0) target = $region221
    $region220: #{cl_attention_conv_forward.1} parent=1 // pred_region
      %s338 = ssub.s32 16, 16
      %339 = vsyncadd [#allocation14], %s338
      %s341 = sshll.u32 [#allocation15], 4
      %s342 = int_to_ptr.vmem [resolvable:$true] %s341
      %344 = dma.hbm_to_vmem [thread:$0]  %s109, 16, %s342, [#allocation14]
    $region221: #{cl_attention_conv_forward.1} parent=1 // pred_fallthru
      _
    // Predicated region
    $region222: #{cl_attention_conv_forward.1} parent=1 // pred_check
      _
    $region223: #{cl_attention_conv_forward.1} parent=1 // pred_check_branch
      %346 = sbr.rel (0) target = $region225
    $region224: #{cl_attention_conv_forward.1} parent=1 // pred_region
      _
    $region225: #{cl_attention_conv_forward.1} parent=1 // pred_fallthru
      _
    // Predicated region
    $region226: #{cl_attention_conv_forward.1} parent=1 // pred_check
      _
    $region227: #{cl_attention_conv_forward.1} parent=1 // pred_check_branch
      %348 = sbr.rel (0) target = $region229
    $region228: #{cl_attention_conv_forward.1} parent=1 // pred_region
      %s350 = ssub.s32 16, 16
      %351 = vsyncadd [#allocation17], %s350
      %s353 = sshll.u32 [#allocation16], 4
      %s354 = int_to_ptr.vmem [resolvable:$true] %s353
      %356 = dma.hbm_to_vmem [thread:$0]  %s113, 16, %s354, [#allocation17]
    $region229: #{cl_attention_conv_forward.1} parent=1 // pred_fallthru
      _
    // Predicated region
    $region230: #{cl_attention_conv_forward.1} parent=1 // pred_check
      _
    $region231: #{cl_attention_conv_forward.1} parent=1 // pred_check_branch
      %358 = sbr.rel (0) target = $region233
    $region232: #{cl_attention_conv_forward.1} parent=1 // pred_region
      %s360 = ssub.s32 16, 16
      %361 = vsyncadd [#allocation17], %s360
      %s363 = sshll.u32 [#allocation18], 4
      %s364 = int_to_ptr.vmem [resolvable:$true] %s363
      %366 = dma.hbm_to_vmem [thread:$0]  %s115, 16, %s364, [#allocation17]
    $region233: #{cl_attention_conv_forward.1} parent=1 // pred_fallthru
      _
    // Predicated region
    $region234: #{cl_attention_conv_forward.1} parent=1 // pred_check
      _
    $region235: #{cl_attention_conv_forward.1} parent=1 // pred_check_branch
      %368 = sbr.rel (0) target = $region237
    $region236: #{cl_attention_conv_forward.1} parent=1 // pred_region
      %s370 = ssub.s32 16, 16
      %371 = vsyncadd [#allocation20], %s370
      %s373 = sshll.u32 [#allocation19], 4
      %s374 = int_to_ptr.vmem [resolvable:$true] %s373
      %376 = dma.hbm_to_vmem [thread:$0]  %s117, 16, %s374, [#allocation20]
    $region237: #{cl_attention_conv_forward.1} parent=1 // pred_fallthru
      _
    // Predicated region
    $region238: #{cl_attention_conv_forward.1} parent=1 // pred_check
      _
    $region239: #{cl_attention_conv_forward.1} parent=1 // pred_check_branch
      %378 = sbr.rel (0) target = $region241
    $region240: #{cl_attention_conv_forward.1} parent=1 // pred_region
      _
    $region241: #{cl_attention_conv_forward.1} parent=1 // pred_fallthru
      _
    // Predicated region
    $region242: #{cl_attention_conv_forward.1} parent=1 // pred_check
      _
    $region243: #{cl_attention_conv_forward.1} parent=1 // pred_check_branch
      %380 = sbr.rel (0) target = $region245
    $region244: #{cl_attention_conv_forward.1} parent=1 // pred_region
      %s382 = ssub.s32 16, 16
      %383 = vsyncadd [#allocation20], %s382
      %s385 = sshll.u32 [#allocation21], 4
      %s386 = int_to_ptr.vmem [resolvable:$true] %s385
      %388 = dma.hbm_to_vmem [thread:$0]  %s121, 16, %s386, [#allocation20]
    $region245: #{cl_attention_conv_forward.1} parent=1 // pred_fallthru
      _
    // Predicated region
    $region246: #{cl_attention_conv_forward.1} parent=1 // pred_check
      _
    $region247: #{cl_attention_conv_forward.1} parent=1 // pred_check_branch
      %390 = sbr.rel (0) target = $region249
    $region248: #{cl_attention_conv_forward.1} parent=1 // pred_region
      _
    $region249: #{cl_attention_conv_forward.1} parent=1 // pred_fallthru
      _
    // Predicated region
    $region250: #{cl_attention_conv_forward.1} parent=1 // pred_check
      _
    $region251: #{cl_attention_conv_forward.1} parent=1 // pred_check_branch
      %392 = sbr.rel (0) target = $region253
    $region252: #{cl_attention_conv_forward.1} parent=1 // pred_region
      %s394 = ssub.s32 16, 16
      %395 = vsyncadd [#allocation23], %s394
      %s397 = sshll.u32 [#allocation22], 4
      %s398 = int_to_ptr.vmem [resolvable:$true] %s397
      %400 = dma.hbm_to_vmem [thread:$0]  %s125, 16, %s398, [#allocation23]
    $region253: #{cl_attention_conv_forward.1} parent=1 // pred_fallthru
      _
    // Predicated region
    $region254: #{cl_attention_conv_forward.1} parent=1 // pred_check
      _
    $region255: #{cl_attention_conv_forward.1} parent=1 // pred_check_branch
      %402 = sbr.rel (0) target = $region257
    $region256: #{cl_attention_conv_forward.1} parent=1 // pred_region
      _
    $region257: #{cl_attention_conv_forward.1} parent=1 // pred_fallthru
      _
    // Predicated region
    $region258: #{cl_attention_conv_forward.1} parent=1 // pred_check
      _
    $region259: #{cl_attention_conv_forward.1} parent=1 // pred_check_branch
      %404 = sbr.rel (0) target = $region261
    $region260: #{cl_attention_conv_forward.1} parent=1 // pred_region
      %s406 = ssub.s32 16, 16
      %407 = vsyncadd [#allocation23], %s406
      %s409 = sshll.u32 [#allocation24], 4
      %s410 = int_to_ptr.vmem [resolvable:$true] %s409
      %412 = dma.hbm_to_vmem [thread:$0]  %s129, 16, %s410, [#allocation23]
    $region261: #{cl_attention_conv_forward.1} parent=1 // pred_fallthru
      _
    // Predicated region
    $region262: #{cl_attention_conv_forward.1} parent=1 // pred_check
      _
    $region263: #{cl_attention_conv_forward.1} parent=1 // pred_check_branch
      %414 = sbr.rel (0) target = $region265
    $region264: #{cl_attention_conv_forward.1} parent=1 // pred_region
      %s416 = ssub.s32 16, 16
      %417 = vsyncadd [#allocation26], %s416
      %s419 = sshll.u32 [#allocation25], 4
      %s420 = int_to_ptr.vmem [resolvable:$true] %s419
      %422 = dma.hbm_to_vmem [thread:$0]  %s131, 16, %s420, [#allocation26]
    $region265: #{cl_attention_conv_forward.1} parent=1 // pred_fallthru
      _
    // Predicated region
    $region266: #{cl_attention_conv_forward.1} parent=1 // pred_check
      _
    $region267: #{cl_attention_conv_forward.1} parent=1 // pred_check_branch
      %424 = sbr.rel (0) target = $region269
    $region268: #{cl_attention_conv_forward.1} parent=1 // pred_region
      %s426 = ssub.s32 16, 16
      %427 = vsyncadd [#allocation26], %s426
      %s429 = sshll.u32 [#allocation27], 4
      %s430 = int_to_ptr.vmem [resolvable:$true] %s429
      %432 = dma.hbm_to_vmem [thread:$0]  %s133, 16, %s430, [#allocation26]
    $region269: #{cl_attention_conv_forward.1} parent=1 // pred_fallthru
      _
    // Predicated region
    $region270: #{cl_attention_conv_forward.1} parent=1 // pred_check
      _
    $region271: #{cl_attention_conv_forward.1} parent=1 // pred_check_branch
      %434 = sbr.rel (0) target = $region273
    $region272: #{cl_attention_conv_forward.1} parent=1 // pred_region
      _
    $region273: #{cl_attention_conv_forward.1} parent=1 // pred_fallthru
      _
    // Predicated region
    $region274: #{cl_attention_conv_forward.1} parent=1 // pred_check
      _
    $region275: #{cl_attention_conv_forward.1} parent=1 // pred_check_branch
      %436 = sbr.rel (0) target = $region277
    $region276: #{cl_attention_conv_forward.1} parent=1 // pred_region
      %s438 = ssub.s32 16, 16
      %439 = vsyncadd [#allocation29], %s438
      %s441 = sshll.u32 [#allocation28], 4
      %s442 = int_to_ptr.vmem [resolvable:$true] %s441
      %444 = dma.hbm_to_vmem [thread:$0]  %s137, 16, %s442, [#allocation29]
    $region277: #{cl_attention_conv_forward.1} parent=1 // pred_fallthru
      _
    // Predicated region
    $region278: #{cl_attention_conv_forward.1} parent=1 // pred_check
      _
    $region279: #{cl_attention_conv_forward.1} parent=1 // pred_check_branch
      %446 = sbr.rel (0) target = $region281
    $region280: #{cl_attention_conv_forward.1} parent=1 // pred_region
      _
    $region281: #{cl_attention_conv_forward.1} parent=1 // pred_fallthru
      _
    // Predicated region
    $region282: #{cl_attention_conv_forward.1} parent=1 // pred_check
      _
    $region283: #{cl_attention_conv_forward.1} parent=1 // pred_check_branch
      %448 = sbr.rel (0) target = $region285
    $region284: #{cl_attention_conv_forward.1} parent=1 // pred_region
      %s450 = ssub.s32 16, 16
      %451 = vsyncadd [#allocation29], %s450
      %s453 = sshll.u32 [#allocation30], 4
      %s454 = int_to_ptr.vmem [resolvable:$true] %s453
      %456 = dma.hbm_to_vmem [thread:$0]  %s141, 16, %s454, [#allocation29]
    $region285: #{cl_attention_conv_forward.1} parent=1 // pred_fallthru
      _
    // Predicated region
    $region286: #{cl_attention_conv_forward.1} parent=1 // pred_check
      _
    $region287: #{cl_attention_conv_forward.1} parent=1 // pred_check_branch
      %458 = sbr.rel (0) target = $region289
    $region288: #{cl_attention_conv_forward.1} parent=1 // pred_region
      %s460 = ssub.s32 16, 16
      %461 = vsyncadd [#allocation32], %s460
      %s463 = sshll.u32 [#allocation31], 4
      %s464 = int_to_ptr.vmem [resolvable:$true] %s463
      %466 = dma.hbm_to_vmem [thread:$0]  %s143, 16, %s464, [#allocation32]
    $region289: #{cl_attention_conv_forward.1} parent=1 // pred_fallthru
      _
    // Predicated region
    $region290: #{cl_attention_conv_forward.1} parent=1 // pred_check
      _
    $region291: #{cl_attention_conv_forward.1} parent=1 // pred_check_branch
      %468 = sbr.rel (0) target = $region293
    $region292: #{cl_attention_conv_forward.1} parent=1 // pred_region
      %s470 = ssub.s32 16, 16
      %471 = vsyncadd [#allocation32], %s470
      %s473 = sshll.u32 [#allocation33], 4
      %s474 = int_to_ptr.vmem [resolvable:$true] %s473
      %476 = dma.hbm_to_vmem [thread:$0]  %s145, 16, %s474, [#allocation32]
    $region293: #{cl_attention_conv_forward.1} parent=1 // pred_fallthru
      _
    // Predicated region
    $region294: #{cl_attention_conv_forward.1} parent=1 // pred_check
      _
    $region295: #{cl_attention_conv_forward.1} parent=1 // pred_check_branch
      %478 = sbr.rel (0) target = $region297
    $region296: #{cl_attention_conv_forward.1} parent=1 // pred_region
      %479 = dma.done [#allocation3], 16
    $region297: #{cl_attention_conv_forward.1} parent=1 // pred_fallthru
      _
    // Predicated region
    $region298: #{cl_attention_conv_forward.1} parent=1 // pred_check
      _
    $region299: #{cl_attention_conv_forward.1} parent=1 // pred_check_branch
      %481 = sbr.rel (0) target = $region301
    $region300: #{cl_attention_conv_forward.1} parent=1 // pred_region
      %482 = dma.done [#allocation5], 16
    $region301: #{cl_attention_conv_forward.1} parent=1 // pred_fallthru
      _
    // Predicated region
    $region302: #{cl_attention_conv_forward.1} parent=1 // pred_check
      _
    $region303: #{cl_attention_conv_forward.1} parent=1 // pred_check_branch
      %484 = sbr.rel (0) target = $region305
    $region304: #{cl_attention_conv_forward.1} parent=1 // pred_region
      %485 = dma.done [#allocation5], 16
    $region305: #{cl_attention_conv_forward.1} parent=1 // pred_fallthru
      _
    // Predicated region
    $region306: #{cl_attention_conv_forward.1} parent=1 // pred_check
      _
    $region307: #{cl_attention_conv_forward.1} parent=1 // pred_check_branch
      %487 = sbr.rel (0) target = $region309
    $region308: #{cl_attention_conv_forward.1} parent=1 // pred_region
      %488 = dma.done [#allocation8], 16
    $region309: #{cl_attention_conv_forward.1} parent=1 // pred_fallthru
      _
    // Predicated region
    $region310: #{cl_attention_conv_forward.1} parent=1 // pred_check
      _
    $region311: #{cl_attention_conv_forward.1} parent=1 // pred_check_branch
      %490 = sbr.rel (0) target = $region313
    $region312: #{cl_attention_conv_forward.1} parent=1 // pred_region
      %491 = dma.done [#allocation8], 16
    $region313: #{cl_attention_conv_forward.1} parent=1 // pred_fallthru
      _
    // Predicated region
    $region314: #{cl_attention_conv_forward.1} parent=1 // pred_check
      _
    $region315: #{cl_attention_conv_forward.1} parent=1 // pred_check_branch
      %493 = sbr.rel (0) target = $region317
    $region316: #{cl_attention_conv_forward.1} parent=1 // pred_region
      %494 = dma.done [#allocation11], 16
    $region317: #{cl_attention_conv_forward.1} parent=1 // pred_fallthru
      _
    // Predicated region
    $region318: #{cl_attention_conv_forward.1} parent=1 // pred_check
      _
    $region319: #{cl_attention_conv_forward.1} parent=1 // pred_check_branch
      %496 = sbr.rel (0) target = $region321
    $region320: #{cl_attention_conv_forward.1} parent=1 // pred_region
      %497 = dma.done [#allocation11], 16
    $region321: #{cl_attention_conv_forward.1} parent=1 // pred_fallthru
      _
    // Predicated region
    $region322: #{cl_attention_conv_forward.1} parent=1 // pred_check
      _
    $region323: #{cl_attention_conv_forward.1} parent=1 // pred_check_branch
      %499 = sbr.rel (0) target = $region325
    $region324: #{cl_attention_conv_forward.1} parent=1 // pred_region
      %500 = dma.done [#allocation14], 16
    $region325: #{cl_attention_conv_forward.1} parent=1 // pred_fallthru
      _
    // Predicated region
    $region326: #{cl_attention_conv_forward.1} parent=1 // pred_check
      _
    $region327: #{cl_attention_conv_forward.1} parent=1 // pred_check_branch
      %502 = sbr.rel (0) target = $region329
    $region328: #{cl_attention_conv_forward.1} parent=1 // pred_region
      %503 = dma.done [#allocation14], 16
    $region329: #{cl_attention_conv_forward.1} parent=1 // pred_fallthru
      _
    // Predicated region
    $region330: #{cl_attention_conv_forward.1} parent=1 // pred_check
      _
    $region331: #{cl_attention_conv_forward.1} parent=1 // pred_check_branch
      %505 = sbr.rel (0) target = $region333
    $region332: #{cl_attention_conv_forward.1} parent=1 // pred_region
      %506 = dma.done [#allocation17], 16
    $region333: #{cl_attention_conv_forward.1} parent=1 // pred_fallthru
      _
    // Predicated region
    $region334: #{cl_attention_conv_forward.1} parent=1 // pred_check
      _
    $region335: #{cl_attention_conv_forward.1} parent=1 // pred_check_branch
      %508 = sbr.rel (0) target = $region337
    $region336: #{cl_attention_conv_forward.1} parent=1 // pred_region
      %509 = dma.done [#allocation17], 16
    $region337: #{cl_attention_conv_forward.1} parent=1 // pred_fallthru
      _
    // Predicated region
    $region338: #{cl_attention_conv_forward.1} parent=1 // pred_check
      _
    $region339: #{cl_attention_conv_forward.1} parent=1 // pred_check_branch
      %511 = sbr.rel (0) target = $region341
    $region340: #{cl_attention_conv_forward.1} parent=1 // pred_region
      %512 = dma.done [#allocation20], 16
    $region341: #{cl_attention_conv_forward.1} parent=1 // pred_fallthru
      _
    // Predicated region
    $region342: #{cl_attention_conv_forward.1} parent=1 // pred_check
      _
    $region343: #{cl_attention_conv_forward.1} parent=1 // pred_check_branch
      %514 = sbr.rel (0) target = $region345
    $region344: #{cl_attention_conv_forward.1} parent=1 // pred_region
      %515 = dma.done [#allocation20], 16
    $region345: #{cl_attention_conv_forward.1} parent=1 // pred_fallthru
      _
    // Predicated region
    $region346: #{cl_attention_conv_forward.1} parent=1 // pred_check
      _
    $region347: #{cl_attention_conv_forward.1} parent=1 // pred_check_branch
      %517 = sbr.rel (0) target = $region349
    $region348: #{cl_attention_conv_forward.1} parent=1 // pred_region
      %518 = dma.done [#allocation23], 16
    $region349: #{cl_attention_conv_forward.1} parent=1 // pred_fallthru
      _
    // Predicated region
    $region350: #{cl_attention_conv_forward.1} parent=1 // pred_check
      _
    $region351: #{cl_attention_conv_forward.1} parent=1 // pred_check_branch
      %520 = sbr.rel (0) target = $region353
    $region352: #{cl_attention_conv_forward.1} parent=1 // pred_region
      %521 = dma.done [#allocation23], 16
    $region353: #{cl_attention_conv_forward.1} parent=1 // pred_fallthru
      _
    // Predicated region
    $region354: #{cl_attention_conv_forward.1} parent=1 // pred_check
      _
    $region355: #{cl_attention_conv_forward.1} parent=1 // pred_check_branch
      %523 = sbr.rel (0) target = $region357
    $region356: #{cl_attention_conv_forward.1} parent=1 // pred_region
      %524 = dma.done [#allocation26], 16
    $region357: #{cl_attention_conv_forward.1} parent=1 // pred_fallthru
      _
    // Predicated region
    $region358: #{cl_attention_conv_forward.1} parent=1 // pred_check
      _
    $region359: #{cl_attention_conv_forward.1} parent=1 // pred_check_branch
      %526 = sbr.rel (0) target = $region361
    $region360: #{cl_attention_conv_forward.1} parent=1 // pred_region
      %527 = dma.done [#allocation26], 16
    $region361: #{cl_attention_conv_forward.1} parent=1 // pred_fallthru
      _
    // Predicated region
    $region362: #{cl_attention_conv_forward.1} parent=1 // pred_check
      _
    $region363: #{cl_attention_conv_forward.1} parent=1 // pred_check_branch
      %529 = sbr.rel (0) target = $region365
    $region364: #{cl_attention_conv_forward.1} parent=1 // pred_region
      %530 = dma.done [#allocation29], 16
    $region365: #{cl_attention_conv_forward.1} parent=1 // pred_fallthru
      _
    // Predicated region
    $region366: #{cl_attention_conv_forward.1} parent=1 // pred_check
      _
    $region367: #{cl_attention_conv_forward.1} parent=1 // pred_check_branch
      %532 = sbr.rel (0) target = $region369
    $region368: #{cl_attention_conv_forward.1} parent=1 // pred_region
      %533 = dma.done [#allocation29], 16
    $region369: #{cl_attention_conv_forward.1} parent=1 // pred_fallthru
      _
    // Predicated region
    $region370: #{cl_attention_conv_forward.1} parent=1 // pred_check
      _
    $region371: #{cl_attention_conv_forward.1} parent=1 // pred_check_branch
      %535 = sbr.rel (0) target = $region373
    $region372: #{cl_attention_conv_forward.1} parent=1 // pred_region
      %536 = dma.done [#allocation32], 16
    $region373: #{cl_attention_conv_forward.1} parent=1 // pred_fallthru
      _
    // Predicated region
    $region374: #{cl_attention_conv_forward.1} parent=1 // pred_check
      _
    $region375: #{cl_attention_conv_forward.1} parent=1 // pred_check_branch
      %538 = sbr.rel (0) target = $region377
    $region376: #{cl_attention_conv_forward.1} parent=1 // pred_region
      %539 = dma.done [#allocation32], 16
    $region377: #{cl_attention_conv_forward.1} parent=1 // pred_fallthru
      _
    %v540 = vld [vmem:[%s1] sm:$0xff]
    %v541 = vld [vmem:[%s1 + $0x8] sm:$0xff]
    %v542 = vld [vmem:[%s1 + $0x10] sm:$0xff]
    %v543 = vld [vmem:[%s1 + $0x18] sm:$0xff]
    %v544 = vld [vmem:[%s1 + $0x20] sm:$0xff]
    %v545 = vld [vmem:[%s1 + $0x28] sm:$0xff]
    %v546 = vld [vmem:[%s1 + $0x30] sm:$0xff]
    %v547 = vld [vmem:[%s1 + $0x38] sm:$0xff]
    %v548 = vld [vmem:[%s1 + $0x40] sm:$0xff]
    %v549 = vld [vmem:[%s1 + $0x48] sm:$0xff]
    %v550 = vld [vmem:[%s1 + $0x50] sm:$0xff]
    %v551 = vld [vmem:[%s1 + $0x58] sm:$0xff]
    %v552 = vld [vmem:[%s1 + $0x60] sm:$0xff]
    %v553 = vld [vmem:[%s1 + $0x68] sm:$0xff]
    %v554 = vld [vmem:[%s1 + $0x70] sm:$0xff]
    %v555 = vld [vmem:[%s1 + $0x78] sm:$0xff]
    %vm572 = vcmask 1040384
    %v573 = vrot.slane %v540, 7
    %v574 = vrot.slane %v541, 7
    %v575 = vsel %vm572, %v573, %v574
    %v576 = vrot.slane %v542, 7
    %v577 = vsel %vm572, %v574, %v576
    %v578 = vrot.slane %v543, 7
    %v579 = vsel %vm572, %v576, %v578
    %v580 = vrot.slane %v544, 7
    %v581 = vsel %vm572, %v578, %v580
    %v582 = vrot.slane %v545, 7
    %v583 = vsel %vm572, %v580, %v582
    %v584 = vrot.slane %v546, 7
    %v585 = vsel %vm572, %v582, %v584
    %v586 = vrot.slane %v547, 7
    %v587 = vsel %vm572, %v584, %v586
    %v588 = vrot.slane %v548, 7
    %v589 = vsel %vm572, %v586, %v588
    %v590 = vrot.slane %v549, 7
    %v591 = vsel %vm572, %v588, %v590
    %v592 = vrot.slane %v550, 7
    %v593 = vsel %vm572, %v590, %v592
    %v594 = vrot.slane %v551, 7
    %v595 = vsel %vm572, %v592, %v594
    %v596 = vrot.slane %v552, 7
    %v597 = vsel %vm572, %v594, %v596
    %v598 = vrot.slane %v553, 7
    %v599 = vsel %vm572, %v596, %v598
    %v600 = vrot.slane %v554, 7
    %v601 = vsel %vm572, %v598, %v600
    %v602 = vrot.slane %v555, 7
    %v603 = vsel %vm572, %v600, %v602
    %v620 = vsel %vm572, 0.0, %v573
    %v621 = vld [vmem:[%s9] sm:$0xff]
    %v622 = vld [vmem:[%s9 + $0x8] sm:$0xff]
    %v623 = vld [vmem:[%s9 + $0x10] sm:$0xff]
    %v624 = vld [vmem:[%s9 + $0x18] sm:$0xff]
    %v625 = vld [vmem:[%s9 + $0x20] sm:$0xff]
    %v626 = vld [vmem:[%s9 + $0x28] sm:$0xff]
    %v627 = vld [vmem:[%s9 + $0x30] sm:$0xff]
    %v628 = vld [vmem:[%s9 + $0x38] sm:$0xff]
    %v629 = vld [vmem:[%s9 + $0x40] sm:$0xff]
    %v630 = vld [vmem:[%s9 + $0x48] sm:$0xff]
    %v631 = vld [vmem:[%s9 + $0x50] sm:$0xff]
    %v632 = vld [vmem:[%s9 + $0x58] sm:$0xff]
    %v633 = vld [vmem:[%s9 + $0x60] sm:$0xff]
    %v634 = vld [vmem:[%s9 + $0x68] sm:$0xff]
    %v635 = vld [vmem:[%s9 + $0x70] sm:$0xff]
    %v636 = vld [vmem:[%s9 + $0x78] sm:$0xff]
    %638 = vset.pattern.permute.xlu0 0
    %639 = vperm.xlu0 %638, %v621
    %v640 = vpop.permute.xlu0 %639
    %643 = vset.pattern.permute.xlu0 0
    %644 = vperm.xlu0 %643, %v622
    %v645 = vpop.permute.xlu0 %644
    %648 = vset.pattern.permute.xlu0 0
    %649 = vperm.xlu0 %648, %v623
    %v650 = vpop.permute.xlu0 %649
    %653 = vset.pattern.permute.xlu0 0
    %654 = vperm.xlu0 %653, %v624
    %v655 = vpop.permute.xlu0 %654
    %658 = vset.pattern.permute.xlu0 0
    %659 = vperm.xlu0 %658, %v625
    %v660 = vpop.permute.xlu0 %659
    %663 = vset.pattern.permute.xlu0 0
    %664 = vperm.xlu0 %663, %v626
    %v665 = vpop.permute.xlu0 %664
    %668 = vset.pattern.permute.xlu0 0
    %669 = vperm.xlu0 %668, %v627
    %v670 = vpop.permute.xlu0 %669
    %673 = vset.pattern.permute.xlu0 0
    %674 = vperm.xlu0 %673, %v628
    %v675 = vpop.permute.xlu0 %674
    %678 = vset.pattern.permute.xlu0 0
    %679 = vperm.xlu0 %678, %v629
    %v680 = vpop.permute.xlu0 %679
    %683 = vset.pattern.permute.xlu0 0
    %684 = vperm.xlu0 %683, %v630
    %v685 = vpop.permute.xlu0 %684
    %688 = vset.pattern.permute.xlu0 0
    %689 = vperm.xlu0 %688, %v631
    %v690 = vpop.permute.xlu0 %689
    %693 = vset.pattern.permute.xlu0 0
    %694 = vperm.xlu0 %693, %v632
    %v695 = vpop.permute.xlu0 %694
    %698 = vset.pattern.permute.xlu0 0
    %699 = vperm.xlu0 %698, %v633
    %v700 = vpop.permute.xlu0 %699
    %703 = vset.pattern.permute.xlu0 0
    %704 = vperm.xlu0 %703, %v634
    %v705 = vpop.permute.xlu0 %704
    %708 = vset.pattern.permute.xlu0 0
    %709 = vperm.xlu0 %708, %v635
    %v710 = vpop.permute.xlu0 %709
    %713 = vset.pattern.permute.xlu0 0
    %714 = vperm.xlu0 %713, %v636
    %v715 = vpop.permute.xlu0 %714
    %v717 = vmul.f32 %v620, %v640
    %v718 = vmul.f32 %v575, %v645
    %v719 = vmul.f32 %v577, %v650
    %v720 = vmul.f32 %v579, %v655
    %v721 = vmul.f32 %v581, %v660
    %v722 = vmul.f32 %v583, %v665
    %v723 = vmul.f32 %v585, %v670
    %v724 = vmul.f32 %v587, %v675
    %v725 = vmul.f32 %v589, %v680
    %v726 = vmul.f32 %v591, %v685
    %v727 = vmul.f32 %v593, %v690
    %v728 = vmul.f32 %v595, %v695
    %v729 = vmul.f32 %v597, %v700
    %v730 = vmul.f32 %v599, %v705
    %v731 = vmul.f32 %v601, %v710
    %v732 = vmul.f32 %v603, %v715
    %vm733 = vcmask 1046528
    %v734 = vrot.slane %v540, 1
    %v735 = vrot.slane %v541, 1
    %v736 = vsel %vm733, %v734, %v735
    %v737 = vrot.slane %v542, 1
    %v738 = vsel %vm733, %v735, %v737
    %v739 = vrot.slane %v543, 1
    %v740 = vsel %vm733, %v737, %v739
    %v741 = vrot.slane %v544, 1
    %v742 = vsel %vm733, %v739, %v741
    %v743 = vrot.slane %v545, 1
    %v744 = vsel %vm733, %v741, %v743
    %v745 = vrot.slane %v546, 1
    %v746 = vsel %vm733, %v743, %v745
    %v747 = vrot.slane %v547, 1
    %v748 = vsel %vm733, %v745, %v747
    %v749 = vrot.slane %v548, 1
    %v750 = vsel %vm733, %v747, %v749
    %v751 = vrot.slane %v549, 1
    %v752 = vsel %vm733, %v749, %v751
    %v753 = vrot.slane %v550, 1
    %v754 = vsel %vm733, %v751, %v753
    %v755 = vrot.slane %v551, 1
    %v756 = vsel %vm733, %v753, %v755
    %v757 = vrot.slane %v552, 1
    %v758 = vsel %vm733, %v755, %v757
    %v759 = vrot.slane %v553, 1
    %v760 = vsel %vm733, %v757, %v759
    %v761 = vrot.slane %v554, 1
    %v762 = vsel %vm733, %v759, %v761
    %v763 = vrot.slane %v555, 1
    %v764 = vsel %vm733, %v761, %v763
    %v781 = vsel %vm733, %v763, 0.0
    %v782 = vld [vmem:[%s11] sm:$0xff]
    %v783 = vld [vmem:[%s11 + $0x8] sm:$0xff]
    %v784 = vld [vmem:[%s11 + $0x10] sm:$0xff]
    %v785 = vld [vmem:[%s11 + $0x18] sm:$0xff]
    %v786 = vld [vmem:[%s11 + $0x20] sm:$0xff]
    %v787 = vld [vmem:[%s11 + $0x28] sm:$0xff]
    %v788 = vld [vmem:[%s11 + $0x30] sm:$0xff]
    %v789 = vld [vmem:[%s11 + $0x38] sm:$0xff]
    %v790 = vld [vmem:[%s11 + $0x40] sm:$0xff]
    %v791 = vld [vmem:[%s11 + $0x48] sm:$0xff]
    %v792 = vld [vmem:[%s11 + $0x50] sm:$0xff]
    %v793 = vld [vmem:[%s11 + $0x58] sm:$0xff]
    %v794 = vld [vmem:[%s11 + $0x60] sm:$0xff]
    %v795 = vld [vmem:[%s11 + $0x68] sm:$0xff]
    %v796 = vld [vmem:[%s11 + $0x70] sm:$0xff]
    %v797 = vld [vmem:[%s11 + $0x78] sm:$0xff]
    %799 = vset.pattern.permute.xlu0 0
    %800 = vperm.xlu0 %799, %v782
    %v801 = vpop.permute.xlu0 %800
    %804 = vset.pattern.permute.xlu0 0
    %805 = vperm.xlu0 %804, %v783
    %v806 = vpop.permute.xlu0 %805
    %809 = vset.pattern.permute.xlu0 0
    %810 = vperm.xlu0 %809, %v784
    %v811 = vpop.permute.xlu0 %810
    %814 = vset.pattern.permute.xlu0 0
    %815 = vperm.xlu0 %814, %v785
    %v816 = vpop.permute.xlu0 %815
    %819 = vset.pattern.permute.xlu0 0
    %820 = vperm.xlu0 %819, %v786
    %v821 = vpop.permute.xlu0 %820
    %824 = vset.pattern.permute.xlu0 0
    %825 = vperm.xlu0 %824, %v787
    %v826 = vpop.permute.xlu0 %825
    %829 = vset.pattern.permute.xlu0 0
    %830 = vperm.xlu0 %829, %v788
    %v831 = vpop.permute.xlu0 %830
    %834 = vset.pattern.permute.xlu0 0
    %835 = vperm.xlu0 %834, %v789
    %v836 = vpop.permute.xlu0 %835
    %839 = vset.pattern.permute.xlu0 0
    %840 = vperm.xlu0 %839, %v790
    %v841 = vpop.permute.xlu0 %840
    %844 = vset.pattern.permute.xlu0 0
    %845 = vperm.xlu0 %844, %v791
    %v846 = vpop.permute.xlu0 %845
    %849 = vset.pattern.permute.xlu0 0
    %850 = vperm.xlu0 %849, %v792
    %v851 = vpop.permute.xlu0 %850
    %854 = vset.pattern.permute.xlu0 0
    %855 = vperm.xlu0 %854, %v793
    %v856 = vpop.permute.xlu0 %855
    %859 = vset.pattern.permute.xlu0 0
    %860 = vperm.xlu0 %859, %v794
    %v861 = vpop.permute.xlu0 %860
    %864 = vset.pattern.permute.xlu0 0
    %865 = vperm.xlu0 %864, %v795
    %v866 = vpop.permute.xlu0 %865
    %869 = vset.pattern.permute.xlu0 0
    %870 = vperm.xlu0 %869, %v796
    %v871 = vpop.permute.xlu0 %870
    %874 = vset.pattern.permute.xlu0 0
    %875 = vperm.xlu0 %874, %v797
    %v876 = vpop.permute.xlu0 %875
    %v878 = vmul.f32 %v736, %v801
    %v879 = vmul.f32 %v738, %v806
    %v880 = vmul.f32 %v740, %v811
    %v881 = vmul.f32 %v742, %v816
    %v882 = vmul.f32 %v744, %v821
    %v883 = vmul.f32 %v746, %v826
    %v884 = vmul.f32 %v748, %v831
    %v885 = vmul.f32 %v750, %v836
    %v886 = vmul.f32 %v752, %v841
    %v887 = vmul.f32 %v754, %v846
    %v888 = vmul.f32 %v756, %v851
    %v889 = vmul.f32 %v758, %v856
    %v890 = vmul.f32 %v760, %v861
    %v891 = vmul.f32 %v762, %v866
    %v892 = vmul.f32 %v764, %v871
    %v893 = vmul.f32 %v781, %v876
    %894 = vrot.lane.b32.xlu0 %v540, 4
    %v895 = vpop.permute.xlu0 %894
    %896 = vrot.lane.b32.xlu0 %v541, 4
    %v897 = vpop.permute.xlu0 %896
    %898 = vrot.lane.b32.xlu0 %v542, 4
    %v899 = vpop.permute.xlu0 %898
    %900 = vrot.lane.b32.xlu0 %v543, 4
    %v901 = vpop.permute.xlu0 %900
    %902 = vrot.lane.b32.xlu0 %v544, 4
    %v903 = vpop.permute.xlu0 %902
    %904 = vrot.lane.b32.xlu0 %v545, 4
    %v905 = vpop.permute.xlu0 %904
    %906 = vrot.lane.b32.xlu0 %v546, 4
    %v907 = vpop.permute.xlu0 %906
    %908 = vrot.lane.b32.xlu0 %v547, 4
    %v909 = vpop.permute.xlu0 %908
    %910 = vrot.lane.b32.xlu0 %v548, 4
    %v911 = vpop.permute.xlu0 %910
    %912 = vrot.lane.b32.xlu0 %v549, 4
    %v913 = vpop.permute.xlu0 %912
    %914 = vrot.lane.b32.xlu0 %v550, 4
    %v915 = vpop.permute.xlu0 %914
    %916 = vrot.lane.b32.xlu0 %v551, 4
    %v917 = vpop.permute.xlu0 %916
    %918 = vrot.lane.b32.xlu0 %v552, 4
    %v919 = vpop.permute.xlu0 %918
    %920 = vrot.lane.b32.xlu0 %v553, 4
    %v921 = vpop.permute.xlu0 %920
    %922 = vrot.lane.b32.xlu0 %v554, 4
    %v923 = vpop.permute.xlu0 %922
    %924 = vrot.lane.b32.xlu0 %v555, 4
    %v925 = vpop.permute.xlu0 %924
    %958 = vrot.lane.b32.xlu0 %v878, 8
    %v959 = vpop.permute.xlu0 %958
    %960 = vrot.lane.b32.xlu0 %v879, 8
    %v961 = vpop.permute.xlu0 %960
    %962 = vrot.lane.b32.xlu0 %v880, 8
    %v963 = vpop.permute.xlu0 %962
    %964 = vrot.lane.b32.xlu0 %v881, 8
    %v965 = vpop.permute.xlu0 %964
    %966 = vrot.lane.b32.xlu0 %v882, 8
    %v967 = vpop.permute.xlu0 %966
    %968 = vrot.lane.b32.xlu0 %v883, 8
    %v969 = vpop.permute.xlu0 %968
    %970 = vrot.lane.b32.xlu0 %v884, 8
    %v971 = vpop.permute.xlu0 %970
    %972 = vrot.lane.b32.xlu0 %v885, 8
    %v973 = vpop.permute.xlu0 %972
    %974 = vrot.lane.b32.xlu0 %v886, 8
    %v975 = vpop.permute.xlu0 %974
    %976 = vrot.lane.b32.xlu0 %v887, 8
    %v977 = vpop.permute.xlu0 %976
    %978 = vrot.lane.b32.xlu0 %v888, 8
    %v979 = vpop.permute.xlu0 %978
    %980 = vrot.lane.b32.xlu0 %v889, 8
    %v981 = vpop.permute.xlu0 %980
    %982 = vrot.lane.b32.xlu0 %v890, 8
    %v983 = vpop.permute.xlu0 %982
    %984 = vrot.lane.b32.xlu0 %v891, 8
    %v985 = vpop.permute.xlu0 %984
    %986 = vrot.lane.b32.xlu0 %v892, 8
    %v987 = vpop.permute.xlu0 %986
    %988 = vrot.lane.b32.xlu0 %v893, 8
    %v989 = vpop.permute.xlu0 %988
    %vm1006 = vcmask 31744
    %v1007 = vsel %vm1006, %v717, %v895
    %v1008 = vsel %vm1006, %v718, %v897
    %v1009 = vsel %vm1006, %v719, %v899
    %v1010 = vsel %vm1006, %v720, %v901
    %v1011 = vsel %vm1006, %v721, %v903
    %v1012 = vsel %vm1006, %v722, %v905
    %v1013 = vsel %vm1006, %v723, %v907
    %v1014 = vsel %vm1006, %v724, %v909
    %v1015 = vsel %vm1006, %v725, %v911
    %v1016 = vsel %vm1006, %v726, %v913
    %v1017 = vsel %vm1006, %v727, %v915
    %v1018 = vsel %vm1006, %v728, %v917
    %v1019 = vsel %vm1006, %v729, %v919
    %v1020 = vsel %vm1006, %v730, %v921
    %v1021 = vsel %vm1006, %v731, %v923
    %v1022 = vsel %vm1006, %v732, %v925
    %vm1023 = vcmask 64512
    %v1024 = vsel %vm1023, %v1007, %v959
    %v1025 = vsel %vm1023, %v1008, %v961
    %v1026 = vsel %vm1023, %v1009, %v963
    %v1027 = vsel %vm1023, %v1010, %v965
    %v1028 = vsel %vm1023, %v1011, %v967
    %v1029 = vsel %vm1023, %v1012, %v969
    %v1030 = vsel %vm1023, %v1013, %v971
    %v1031 = vsel %vm1023, %v1014, %v973
    %v1032 = vsel %vm1023, %v1015, %v975
    %v1033 = vsel %vm1023, %v1016, %v977
    %v1034 = vsel %vm1023, %v1017, %v979
    %v1035 = vsel %vm1023, %v1018, %v981
    %v1036 = vsel %vm1023, %v1019, %v983
    %v1037 = vsel %vm1023, %v1020, %v985
    %v1038 = vsel %vm1023, %v1021, %v987
    %v1039 = vsel %vm1023, %v1022, %v989
    %v1040 = vld [vmem:[%s5] sm:$0xff]
    %v1041 = vld [vmem:[%s5 + $0x8] sm:$0xf]
    %v1042 = vld [vmem:[%s7] sm:$0x1]
    %v1044 = vlaneseq
    %v1045 = vshrl.u32 %v1044, 7
    %v1046 = vsub.s32 0, %v1045
    %v1047 = vrot.slane %v1042, %v1046
    %vm1049 = vcmask 97280
    %v1051 = vsel %vm1049, %v1024, 0
    %v1054 = vsel %vm1049, %v1025, 0
    %v1057 = vsel %vm1049, %v1026, 0
    %v1060 = vsel %vm1049, %v1027, 0
    %v1063 = vsel %vm1049, %v1028, 0
    %v1066 = vsel %vm1049, %v1029, 0
    %v1069 = vsel %vm1049, %v1030, 0
    %v1072 = vsel %vm1049, %v1031, 0
    %v1075 = vsel %vm1049, %v1032, 0
    %v1078 = vsel %vm1049, %v1033, 0
    %v1081 = vsel %vm1049, %v1034, 0
    %v1084 = vsel %vm1049, %v1035, 0
    %v1087 = vsel %vm1049, %v1036, 0
    %v1090 = vsel %vm1049, %v1037, 0
    %v1093 = vsel %vm1049, %v1038, 0
    %v1096 = vsel %vm1049, %v1039, 0
    %vm1098 = vcmask 1043456
    %v1100 = vsel %vm1098, %v1041, 0
    %1102 = vmatprep.subr.mxu0 0.0
    %1103 = vmatpush1.msra.mxu0 0.0
    %1104 = vmatprep.subr.mxu0 0.0
    %1105 = vmatpush1.msra.mxu0 0.0
    %1106 = vmatprep.subr.mxu0 0.0
    %1107 = vmatpush1.msra.mxu0 0.0
    %1108 = vmatprep.subr.mxu0 0.0
    %1109 = vmatpush1.msra.mxu0 0.0
    %1110 = vmatprep.subr.mxu0 0.0
    %1111 = vmatpush1.msra.mxu0 0.0
    %1112 = vmatprep.subr.mxu0 0.0
    %1113 = vmatpush1.msra.mxu0 0.0
    %1114 = vmatprep.subr.mxu0 0.0
    %1115 = vmatpush1.msra.mxu0 0.0
    %1116 = vmatprep.subr.mxu0 0.0
    %1117 = vmatpush1.msra.mxu0 0.0
    %1118 = vmatprep.subr.mxu0 0.0
    %1119 = vmatpush1.msra.mxu0 0.0
    %1120 = vmatprep.subr.mxu0 0.0
    %1121 = vmatpush1.msra.mxu0 0.0
    %1122 = vmatprep.subr.mxu0 0.0
    %1123 = vmatpush1.msra.mxu0 0.0
    %1124 = vmatprep.subr.mxu0 0.0
    %1125 = vmatpush1.msra.mxu0 0.0
    %1126 = vmatprep.subr.mxu0 0.0
    %1127 = vmatpush1.msra.mxu0 0.0
    %1128 = vmatprep.subr.mxu0 0.0
    %1129 = vmatpush1.msra.mxu0 0.0
    %1130 = vmatprep.subr.mxu0 0.0
    %1131 = vmatpush1.msra.mxu0 %v1100
    %1132 = vmatprep.subr.mxu0 0.0
    %1133 = vmatpush1.msra.mxu0 %v1040
    %1134 = vmatprep.subr.mxu0 0.0
    %1135 = vmatpush2.msra.mxu0 0.0
    %1136 = vmatprep.subr.mxu0 0.0
    %1137 = vmatpush2.msra.mxu0 0.0
    %1138 = vmatprep.subr.mxu0 0.0
    %1139 = vmatpush2.msra.mxu0 0.0
    %1140 = vmatprep.subr.mxu0 0.0
    %1141 = vmatpush2.msra.mxu0 0.0
    %1142 = vmatprep.subr.mxu0 0.0
    %1143 = vmatpush2.msra.mxu0 0.0
    %1144 = vmatprep.subr.mxu0 0.0
    %1145 = vmatpush2.msra.mxu0 0.0
    %1146 = vmatprep.subr.mxu0 0.0
    %1147 = vmatpush2.msra.mxu0 0.0
    %1148 = vmatprep.subr.mxu0 0.0
    %1149 = vmatpush2.msra.mxu0 0.0
    %1150 = vmatprep.subr.mxu0 0.0
    %1151 = vmatpush2.msra.mxu0 0.0
    %1152 = vmatprep.subr.mxu0 0.0
    %1153 = vmatpush2.msra.mxu0 0.0
    %1154 = vmatprep.subr.mxu0 0.0
    %1155 = vmatpush2.msra.mxu0 0.0
    %1156 = vmatprep.subr.mxu0 0.0
    %1157 = vmatpush2.msra.mxu0 0.0
    %1158 = vmatprep.subr.mxu0 0.0
    %1159 = vmatpush2.msra.mxu0 0.0
    %1160 = vmatprep.subr.mxu0 0.0
    %1161 = vmatpush2.msra.mxu0 0.0
    %1162 = vmatprep.subr.mxu0 0.0
    %1163 = vmatpush2.msra.mxu0 0.0
    %1164 = vmatprep.subr.mxu0 0.0
    %1165 = vmatpush2.msra.mxu0 0.0
    %1166 = vmatprep.mubr.f32.mxu0 0.0
    %1167 = vmatmul.mubr.f32.gmra.mxu0 %v1051
    %v1168 = vpop.f32.mrf.mxu0
    %v1169 = vadd.f32 %v1047, %v1168
    %v1170 = vpop.f32.mrf.mxu0
    %1171 = vmatprep.mubr.f32.mxu0 0.0
    %1172 = vmatmul.mubr.f32.gmra.mxu0 %v1054
    %v1173 = vpop.f32.mrf.mxu0
    %v1174 = vadd.f32 %v1047, %v1173
    %v1175 = vpop.f32.mrf.mxu0
    %1176 = vmatprep.mubr.f32.mxu0 0.0
    %1177 = vmatmul.mubr.f32.gmra.mxu0 %v1057
    %v1178 = vpop.f32.mrf.mxu0
    %v1179 = vadd.f32 %v1047, %v1178
    %v1180 = vpop.f32.mrf.mxu0
    %1181 = vmatprep.mubr.f32.mxu0 0.0
    %1182 = vmatmul.mubr.f32.gmra.mxu0 %v1060
    %v1183 = vpop.f32.mrf.mxu0
    %v1184 = vadd.f32 %v1047, %v1183
    %v1185 = vpop.f32.mrf.mxu0
    %1186 = vmatprep.mubr.f32.mxu0 0.0
    %1187 = vmatmul.mubr.f32.gmra.mxu0 %v1063
    %v1188 = vpop.f32.mrf.mxu0
    %v1189 = vadd.f32 %v1047, %v1188
    %v1190 = vpop.f32.mrf.mxu0
    %1191 = vmatprep.mubr.f32.mxu0 0.0
    %1192 = vmatmul.mubr.f32.gmra.mxu0 %v1066
    %v1193 = vpop.f32.mrf.mxu0
    %v1194 = vadd.f32 %v1047, %v1193
    %v1195 = vpop.f32.mrf.mxu0
    %1196 = vmatprep.mubr.f32.mxu0 0.0
    %1197 = vmatmul.mubr.f32.gmra.mxu0 %v1069
    %v1198 = vpop.f32.mrf.mxu0
    %v1199 = vadd.f32 %v1047, %v1198
    %v1200 = vpop.f32.mrf.mxu0
    %1201 = vmatprep.mubr.f32.mxu0 0.0
    %1202 = vmatmul.mubr.f32.gmra.mxu0 %v1072
    %v1203 = vpop.f32.mrf.mxu0
    %v1204 = vadd.f32 %v1047, %v1203
    %v1205 = vpop.f32.mrf.mxu0
    %1206 = vmatprep.mubr.f32.mxu0 0.0
    %1207 = vmatmul.mubr.f32.gmra.mxu0 %v1075
    %v1208 = vpop.f32.mrf.mxu0
    %v1209 = vadd.f32 %v1047, %v1208
    %v1210 = vpop.f32.mrf.mxu0
    %1211 = vmatprep.mubr.f32.mxu0 0.0
    %1212 = vmatmul.mubr.f32.gmra.mxu0 %v1078
    %v1213 = vpop.f32.mrf.mxu0
    %v1214 = vadd.f32 %v1047, %v1213
    %v1215 = vpop.f32.mrf.mxu0
    %1216 = vmatprep.mubr.f32.mxu0 0.0
    %1217 = vmatmul.mubr.f32.gmra.mxu0 %v1081
    %v1218 = vpop.f32.mrf.mxu0
    %v1219 = vadd.f32 %v1047, %v1218
    %v1220 = vpop.f32.mrf.mxu0
    %1221 = vmatprep.mubr.f32.mxu0 0.0
    %1222 = vmatmul.mubr.f32.gmra.mxu0 %v1084
    %v1223 = vpop.f32.mrf.mxu0
    %v1224 = vadd.f32 %v1047, %v1223
    %v1225 = vpop.f32.mrf.mxu0
    %1226 = vmatprep.mubr.f32.mxu0 0.0
    %1227 = vmatmul.mubr.f32.gmra.mxu0 %v1087
    %v1228 = vpop.f32.mrf.mxu0
    %v1229 = vadd.f32 %v1047, %v1228
    %v1230 = vpop.f32.mrf.mxu0
    %1231 = vmatprep.mubr.f32.mxu0 0.0
    %1232 = vmatmul.mubr.f32.gmra.mxu0 %v1090
    %v1233 = vpop.f32.mrf.mxu0
    %v1234 = vadd.f32 %v1047, %v1233
    %v1235 = vpop.f32.mrf.mxu0
    %1236 = vmatprep.mubr.f32.mxu0 0.0
    %1237 = vmatmul.mubr.f32.gmra.mxu0 %v1093
    %v1238 = vpop.f32.mrf.mxu0
    %v1239 = vadd.f32 %v1047, %v1238
    %v1240 = vpop.f32.mrf.mxu0
    %1241 = vmatprep.mubr.f32.mxu0 0.0
    %1242 = vmatmul.mubr.f32.gmra.mxu0 %v1096
    %v1243 = vpop.f32.mrf.mxu0
    %v1244 = vadd.f32 %v1047, %v1243
    %v1245 = vpop.f32.mrf.mxu0
    %1246 = vdwg.mxu0
    %v1247 = vmax.f32 %v1169, 0.0
    %v1248 = vmax.f32 %v1174, 0.0
    %v1249 = vmax.f32 %v1179, 0.0
    %v1250 = vmax.f32 %v1184, 0.0
    %v1251 = vmax.f32 %v1189, 0.0
    %v1252 = vmax.f32 %v1194, 0.0
    %v1253 = vmax.f32 %v1199, 0.0
    %v1254 = vmax.f32 %v1204, 0.0
    %v1255 = vmax.f32 %v1209, 0.0
    %v1256 = vmax.f32 %v1214, 0.0
    %v1257 = vmax.f32 %v1219, 0.0
    %v1258 = vmax.f32 %v1224, 0.0
    %v1259 = vmax.f32 %v1229, 0.0
    %v1260 = vmax.f32 %v1234, 0.0
    %v1261 = vmax.f32 %v1239, 0.0
    %v1262 = vmax.f32 %v1244, 0.0
    %v1279 = vrot.slane %v1247, 1
    %v1280 = vrot.slane %v1248, 1
    %v1281 = vsel %vm733, %v1279, %v1280
    %v1282 = vrot.slane %v1249, 1
    %v1283 = vsel %vm733, %v1280, %v1282
    %v1284 = vrot.slane %v1250, 1
    %v1285 = vsel %vm733, %v1282, %v1284
    %v1286 = vrot.slane %v1251, 1
    %v1287 = vsel %vm733, %v1284, %v1286
    %v1288 = vrot.slane %v1252, 1
    %v1289 = vsel %vm733, %v1286, %v1288
    %v1290 = vrot.slane %v1253, 1
    %v1291 = vsel %vm733, %v1288, %v1290
    %v1292 = vrot.slane %v1254, 1
    %v1293 = vsel %vm733, %v1290, %v1292
    %v1294 = vrot.slane %v1255, 1
    %v1295 = vsel %vm733, %v1292, %v1294
    %v1296 = vrot.slane %v1256, 1
    %v1297 = vsel %vm733, %v1294, %v1296
    %v1298 = vrot.slane %v1257, 1
    %v1299 = vsel %vm733, %v1296, %v1298
    %v1300 = vrot.slane %v1258, 1
    %v1301 = vsel %vm733, %v1298, %v1300
    %v1302 = vrot.slane %v1259, 1
    %v1303 = vsel %vm733, %v1300, %v1302
    %v1304 = vrot.slane %v1260, 1
    %v1305 = vsel %vm733, %v1302, %v1304
    %v1306 = vrot.slane %v1261, 1
    %v1307 = vsel %vm733, %v1304, %v1306
    %v1308 = vrot.slane %v1262, 1
    %v1309 = vsel %vm733, %v1306, %v1308
    %v1326 = vsel %vm733, %v1308, 0.0
    %v1327 = vmax.f32 %v1247, %v1281
    %v1328 = vmax.f32 %v1248, %v1283
    %v1329 = vmax.f32 %v1249, %v1285
    %v1330 = vmax.f32 %v1250, %v1287
    %v1331 = vmax.f32 %v1251, %v1289
    %v1332 = vmax.f32 %v1252, %v1291
    %v1333 = vmax.f32 %v1253, %v1293
    %v1334 = vmax.f32 %v1254, %v1295
    %v1335 = vmax.f32 %v1255, %v1297
    %v1336 = vmax.f32 %v1256, %v1299
    %v1337 = vmax.f32 %v1257, %v1301
    %v1338 = vmax.f32 %v1258, %v1303
    %v1339 = vmax.f32 %v1259, %v1305
    %v1340 = vmax.f32 %v1260, %v1307
    %v1341 = vmax.f32 %v1261, %v1309
    %v1342 = vmax.f32 %v1262, %v1326
    %v1343 = vld [vmem:[%s13] sm:$0xff]
    %v1344 = vld [vmem:[%s13 + $0x8] sm:$0xff]
    %v1345 = vld [vmem:[%s13 + $0x10] sm:$0xff]
    %v1346 = vld [vmem:[%s13 + $0x18] sm:$0xff]
    %v1347 = vld [vmem:[%s13 + $0x20] sm:$0xff]
    %v1348 = vld [vmem:[%s13 + $0x28] sm:$0xff]
    %v1349 = vld [vmem:[%s13 + $0x30] sm:$0xff]
    %v1350 = vld [vmem:[%s13 + $0x38] sm:$0xff]
    %1351 = vmatprep.subr.mxu0 0.0
    %1352 = vmatpush1.msra.mxu0 %v1342
    %1353 = vmatprep.subr.mxu0 0.0
    %1354 = vmatpush1.msra.mxu0 %v1341
    %1355 = vmatprep.subr.mxu0 0.0
    %1356 = vmatpush1.msra.mxu0 %v1340
    %1357 = vmatprep.subr.mxu0 0.0
    %1358 = vmatpush1.msra.mxu0 %v1339
    %1359 = vmatprep.subr.mxu0 0.0
    %1360 = vmatpush1.msra.mxu0 %v1338
    %1361 = vmatprep.subr.mxu0 0.0
    %1362 = vmatpush1.msra.mxu0 %v1337
    %1363 = vmatprep.subr.mxu0 0.0
    %1364 = vmatpush1.msra.mxu0 %v1336
    %1365 = vmatprep.subr.mxu0 0.0
    %1366 = vmatpush1.msra.mxu0 %v1335
    %1367 = vmatprep.subr.mxu0 0.0
    %1368 = vmatpush1.msra.mxu0 %v1334
    %1369 = vmatprep.subr.mxu0 0.0
    %1370 = vmatpush1.msra.mxu0 %v1333
    %1371 = vmatprep.subr.mxu0 0.0
    %1372 = vmatpush1.msra.mxu0 %v1332
    %1373 = vmatprep.subr.mxu0 0.0
    %1374 = vmatpush1.msra.mxu0 %v1331
    %1375 = vmatprep.subr.mxu0 0.0
    %1376 = vmatpush1.msra.mxu0 %v1330
    %1377 = vmatprep.subr.mxu0 0.0
    %1378 = vmatpush1.msra.mxu0 %v1329
    %1379 = vmatprep.subr.mxu0 0.0
    %1380 = vmatpush1.msra.mxu0 %v1328
    %1381 = vmatprep.subr.mxu0 0.0
    %1382 = vmatpush1.msra.mxu0 %v1327
    %1383 = vmatprep.subr.mxu0 0.0
    %1384 = vmatpush2.msra.mxu0 0.0
    %1385 = vmatprep.subr.mxu0 0.0
    %1386 = vmatpush2.msra.mxu0 0.0
    %1387 = vmatprep.subr.mxu0 0.0
    %1388 = vmatpush2.msra.mxu0 0.0
    %1389 = vmatprep.subr.mxu0 0.0
    %1390 = vmatpush2.msra.mxu0 0.0
    %1391 = vmatprep.subr.mxu0 0.0
    %1392 = vmatpush2.msra.mxu0 0.0
    %1393 = vmatprep.subr.mxu0 0.0
    %1394 = vmatpush2.msra.mxu0 0.0
    %1395 = vmatprep.subr.mxu0 0.0
    %1396 = vmatpush2.msra.mxu0 0.0
    %1397 = vmatprep.subr.mxu0 0.0
    %1398 = vmatpush2.msra.mxu0 0.0
    %1399 = vmatprep.subr.mxu0 0.0
    %1400 = vmatpush2.msra.mxu0 0.0
    %1401 = vmatprep.subr.mxu0 0.0
    %1402 = vmatpush2.msra.mxu0 0.0
    %1403 = vmatprep.subr.mxu0 0.0
    %1404 = vmatpush2.msra.mxu0 0.0
    %1405 = vmatprep.subr.mxu0 0.0
    %1406 = vmatpush2.msra.mxu0 0.0
    %1407 = vmatprep.subr.mxu0 0.0
    %1408 = vmatpush2.msra.mxu0 0.0
    %1409 = vmatprep.subr.mxu0 0.0
    %1410 = vmatpush2.msra.mxu0 0.0
    %1411 = vmatprep.subr.mxu0 0.0
    %1412 = vmatpush2.msra.mxu0 0.0
    %1413 = vmatprep.subr.mxu0 0.0
    %1414 = vmatpush2.msra.mxu0 0.0
    %1415 = vmatprep.mubr.f32.mxu0 0.0
    %1416 = vmatmul.mubr.f32.gmra.mxu0 %v1343
    %v1417 = vpop.f32.mrf.mxu0
    %v1418 = vadd.f32 0.0, %v1417
    %v1419 = vpop.f32.mrf.mxu0
    %1420 = vmatprep.mubr.f32.mxu0 0.0
    %1421 = vmatmul.mubr.f32.gmra.mxu0 %v1344
    %v1422 = vpop.f32.mrf.mxu0
    %v1423 = vadd.f32 0.0, %v1422
    %v1424 = vpop.f32.mrf.mxu0
    %1425 = vmatprep.mubr.f32.mxu0 0.0
    %1426 = vmatmul.mubr.f32.gmra.mxu0 %v1345
    %v1427 = vpop.f32.mrf.mxu0
    %v1428 = vadd.f32 0.0, %v1427
    %v1429 = vpop.f32.mrf.mxu0
    %1430 = vmatprep.mubr.f32.mxu0 0.0
    %1431 = vmatmul.mubr.f32.gmra.mxu0 %v1346
    %v1432 = vpop.f32.mrf.mxu0
    %v1433 = vadd.f32 0.0, %v1432
    %v1434 = vpop.f32.mrf.mxu0
    %1435 = vmatprep.mubr.f32.mxu0 0.0
    %1436 = vmatmul.mubr.f32.gmra.mxu0 %v1347
    %v1437 = vpop.f32.mrf.mxu0
    %v1438 = vadd.f32 0.0, %v1437
    %v1439 = vpop.f32.mrf.mxu0
    %1440 = vmatprep.mubr.f32.mxu0 0.0
    %1441 = vmatmul.mubr.f32.gmra.mxu0 %v1348
    %v1442 = vpop.f32.mrf.mxu0
    %v1443 = vadd.f32 0.0, %v1442
    %v1444 = vpop.f32.mrf.mxu0
    %1445 = vmatprep.mubr.f32.mxu0 0.0
    %1446 = vmatmul.mubr.f32.gmra.mxu0 %v1349
    %v1447 = vpop.f32.mrf.mxu0
    %v1448 = vadd.f32 0.0, %v1447
    %v1449 = vpop.f32.mrf.mxu0
    %1450 = vmatprep.mubr.f32.mxu0 0.0
    %1451 = vmatmul.mubr.f32.gmra.mxu0 %v1350
    %v1452 = vpop.f32.mrf.mxu0
    %v1453 = vadd.f32 0.0, %v1452
    %v1454 = vpop.f32.mrf.mxu0
    %1455 = vdwg.mxu0
    %v1464 = vrot.slane %v1418, 7
    %v1465 = vrot.slane %v1423, 7
    %v1466 = vsel %vm572, %v1464, %v1465
    %v1467 = vrot.slane %v1428, 7
    %v1468 = vsel %vm572, %v1465, %v1467
    %v1469 = vrot.slane %v1433, 7
    %v1470 = vsel %vm572, %v1467, %v1469
    %v1471 = vrot.slane %v1438, 7
    %v1472 = vsel %vm572, %v1469, %v1471
    %v1473 = vrot.slane %v1443, 7
    %v1474 = vsel %vm572, %v1471, %v1473
    %v1475 = vrot.slane %v1448, 7
    %v1476 = vsel %vm572, %v1473, %v1475
    %v1477 = vrot.slane %v1453, 7
    %v1478 = vsel %vm572, %v1475, %v1477
    %v1487 = vsel %vm572, 0.0, %v1464
    %v1488 = vld [vmem:[%s19] sm:$0xff]
    %v1489 = vld [vmem:[%s19 + $0x8] sm:$0xff]
    %v1490 = vld [vmem:[%s19 + $0x10] sm:$0xff]
    %v1491 = vld [vmem:[%s19 + $0x18] sm:$0xff]
    %v1492 = vld [vmem:[%s19 + $0x20] sm:$0xff]
    %v1493 = vld [vmem:[%s19 + $0x28] sm:$0xff]
    %v1494 = vld [vmem:[%s19 + $0x30] sm:$0xff]
    %v1495 = vld [vmem:[%s19 + $0x38] sm:$0xff]
    %1497 = vset.pattern.permute.xlu0 0
    %1498 = vperm.xlu0 %1497, %v1488
    %v1499 = vpop.permute.xlu0 %1498
    %1502 = vset.pattern.permute.xlu0 0
    %1503 = vperm.xlu0 %1502, %v1489
    %v1504 = vpop.permute.xlu0 %1503
    %1507 = vset.pattern.permute.xlu0 0
    %1508 = vperm.xlu0 %1507, %v1490
    %v1509 = vpop.permute.xlu0 %1508
    %1512 = vset.pattern.permute.xlu0 0
    %1513 = vperm.xlu0 %1512, %v1491
    %v1514 = vpop.permute.xlu0 %1513
    %1517 = vset.pattern.permute.xlu0 0
    %1518 = vperm.xlu0 %1517, %v1492
    %v1519 = vpop.permute.xlu0 %1518
    %1522 = vset.pattern.permute.xlu0 0
    %1523 = vperm.xlu0 %1522, %v1493
    %v1524 = vpop.permute.xlu0 %1523
    %1527 = vset.pattern.permute.xlu0 0
    %1528 = vperm.xlu0 %1527, %v1494
    %v1529 = vpop.permute.xlu0 %1528
    %1532 = vset.pattern.permute.xlu0 0
    %1533 = vperm.xlu0 %1532, %v1495
    %v1534 = vpop.permute.xlu0 %1533
    %v1536 = vmul.f32 %v1487, %v1499
    %v1537 = vmul.f32 %v1466, %v1504
    %v1538 = vmul.f32 %v1468, %v1509
    %v1539 = vmul.f32 %v1470, %v1514
    %v1540 = vmul.f32 %v1472, %v1519
    %v1541 = vmul.f32 %v1474, %v1524
    %v1542 = vmul.f32 %v1476, %v1529
    %v1543 = vmul.f32 %v1478, %v1534
    %v1544 = vrot.slane %v1418, 1
    %v1545 = vrot.slane %v1423, 1
    %v1546 = vsel %vm733, %v1544, %v1545
    %v1547 = vrot.slane %v1428, 1
    %v1548 = vsel %vm733, %v1545, %v1547
    %v1549 = vrot.slane %v1433, 1
    %v1550 = vsel %vm733, %v1547, %v1549
    %v1551 = vrot.slane %v1438, 1
    %v1552 = vsel %vm733, %v1549, %v1551
    %v1553 = vrot.slane %v1443, 1
    %v1554 = vsel %vm733, %v1551, %v1553
    %v1555 = vrot.slane %v1448, 1
    %v1556 = vsel %vm733, %v1553, %v1555
    %v1557 = vrot.slane %v1453, 1
    %v1558 = vsel %vm733, %v1555, %v1557
    %v1567 = vsel %vm733, %v1557, 0.0
    %v1568 = vld [vmem:[%s21] sm:$0xff]
    %v1569 = vld [vmem:[%s21 + $0x8] sm:$0xff]
    %v1570 = vld [vmem:[%s21 + $0x10] sm:$0xff]
    %v1571 = vld [vmem:[%s21 + $0x18] sm:$0xff]
    %v1572 = vld [vmem:[%s21 + $0x20] sm:$0xff]
    %v1573 = vld [vmem:[%s21 + $0x28] sm:$0xff]
    %v1574 = vld [vmem:[%s21 + $0x30] sm:$0xff]
    %v1575 = vld [vmem:[%s21 + $0x38] sm:$0xff]
    %1577 = vset.pattern.permute.xlu0 0
    %1578 = vperm.xlu0 %1577, %v1568
    %v1579 = vpop.permute.xlu0 %1578
    %1582 = vset.pattern.permute.xlu0 0
    %1583 = vperm.xlu0 %1582, %v1569
    %v1584 = vpop.permute.xlu0 %1583
    %1587 = vset.pattern.permute.xlu0 0
    %1588 = vperm.xlu0 %1587, %v1570
    %v1589 = vpop.permute.xlu0 %1588
    %1592 = vset.pattern.permute.xlu0 0
    %1593 = vperm.xlu0 %1592, %v1571
    %v1594 = vpop.permute.xlu0 %1593
    %1597 = vset.pattern.permute.xlu0 0
    %1598 = vperm.xlu0 %1597, %v1572
    %v1599 = vpop.permute.xlu0 %1598
    %1602 = vset.pattern.permute.xlu0 0
    %1603 = vperm.xlu0 %1602, %v1573
    %v1604 = vpop.permute.xlu0 %1603
    %1607 = vset.pattern.permute.xlu0 0
    %1608 = vperm.xlu0 %1607, %v1574
    %v1609 = vpop.permute.xlu0 %1608
    %1612 = vset.pattern.permute.xlu0 0
    %1613 = vperm.xlu0 %1612, %v1575
    %v1614 = vpop.permute.xlu0 %1613
    %v1616 = vmul.f32 %v1546, %v1579
    %v1617 = vmul.f32 %v1548, %v1584
    %v1618 = vmul.f32 %v1550, %v1589
    %v1619 = vmul.f32 %v1552, %v1594
    %v1620 = vmul.f32 %v1554, %v1599
    %v1621 = vmul.f32 %v1556, %v1604
    %v1622 = vmul.f32 %v1558, %v1609
    %v1623 = vmul.f32 %v1567, %v1614
    %1624 = vrot.lane.b32.xlu0 %v1418, 16
    %v1625 = vpop.permute.xlu0 %1624
    %1626 = vrot.lane.b32.xlu0 %v1423, 16
    %v1627 = vpop.permute.xlu0 %1626
    %1628 = vrot.lane.b32.xlu0 %v1428, 16
    %v1629 = vpop.permute.xlu0 %1628
    %1630 = vrot.lane.b32.xlu0 %v1433, 16
    %v1631 = vpop.permute.xlu0 %1630
    %1632 = vrot.lane.b32.xlu0 %v1438, 16
    %v1633 = vpop.permute.xlu0 %1632
    %1634 = vrot.lane.b32.xlu0 %v1443, 16
    %v1635 = vpop.permute.xlu0 %1634
    %1636 = vrot.lane.b32.xlu0 %v1448, 16
    %v1637 = vpop.permute.xlu0 %1636
    %1638 = vrot.lane.b32.xlu0 %v1453, 16
    %v1639 = vpop.permute.xlu0 %1638
    %1656 = vrot.lane.b32.xlu0 %v1616, 32
    %v1657 = vpop.permute.xlu0 %1656
    %1658 = vrot.lane.b32.xlu0 %v1617, 32
    %v1659 = vpop.permute.xlu0 %1658
    %1660 = vrot.lane.b32.xlu0 %v1618, 32
    %v1661 = vpop.permute.xlu0 %1660
    %1662 = vrot.lane.b32.xlu0 %v1619, 32
    %v1663 = vpop.permute.xlu0 %1662
    %1664 = vrot.lane.b32.xlu0 %v1620, 32
    %v1665 = vpop.permute.xlu0 %1664
    %1666 = vrot.lane.b32.xlu0 %v1621, 32
    %v1667 = vpop.permute.xlu0 %1666
    %1668 = vrot.lane.b32.xlu0 %v1622, 32
    %v1669 = vpop.permute.xlu0 %1668
    %1670 = vrot.lane.b32.xlu0 %v1623, 32
    %v1671 = vpop.permute.xlu0 %1670
    %vm1680 = vcmask 130048
    %v1681 = vsel %vm1680, %v1536, %v1625
    %v1682 = vsel %vm1680, %v1537, %v1627
    %v1683 = vsel %vm1680, %v1538, %v1629
    %v1684 = vsel %vm1680, %v1539, %v1631
    %v1685 = vsel %vm1680, %v1540, %v1633
    %v1686 = vsel %vm1680, %v1541, %v1635
    %v1687 = vsel %vm1680, %v1542, %v1637
    %v1688 = vsel %vm1680, %v1543, %v1639
    %vm1689 = vcmask 261120
    %v1690 = vsel %vm1689, %v1681, %v1657
    %v1691 = vsel %vm1689, %v1682, %v1659
    %v1692 = vsel %vm1689, %v1683, %v1661
    %v1693 = vsel %vm1689, %v1684, %v1663
    %v1694 = vsel %vm1689, %v1685, %v1665
    %v1695 = vsel %vm1689, %v1686, %v1667
    %v1696 = vsel %vm1689, %v1687, %v1669
    %v1697 = vsel %vm1689, %v1688, %v1671
    %v1698 = vld [vmem:[%s15] sm:$0xff]
    %v1699 = vld [vmem:[%s15 + $0x8] sm:$0xff]
    %v1700 = vld [vmem:[%s15 + $0x10] sm:$0xff]
    %v1701 = vld [vmem:[%s15 + $0x18] sm:$0xff]
    %v1702 = vld [vmem:[%s15 + $0x20] sm:$0xff]
    %v1703 = vld [vmem:[%s15 + $0x28] sm:$0xff]
    %v1704 = vld [vmem:[%s17] sm:$0x1]
    %v1706 = vlaneseq
    %v1707 = vshrl.u32 %v1706, 7
    %v1708 = vsub.s32 0, %v1707
    %v1709 = vrot.slane %v1704, %v1708
    %vm1711 = vcmask 392192
    %v1713 = vsel %vm1711, %v1690, 0
    %v1716 = vsel %vm1711, %v1691, 0
    %v1719 = vsel %vm1711, %v1692, 0
    %v1722 = vsel %vm1711, %v1693, 0
    %v1725 = vsel %vm1711, %v1694, 0
    %v1728 = vsel %vm1711, %v1695, 0
    %v1731 = vsel %vm1711, %v1696, 0
    %v1734 = vsel %vm1711, %v1697, 0
    %1736 = vmatprep.subr.mxu0 0.0
    %1737 = vmatpush1.msra.mxu0 0.0
    %1738 = vmatprep.subr.mxu0 0.0
    %1739 = vmatpush1.msra.mxu0 0.0
    %1740 = vmatprep.subr.mxu0 0.0
    %1741 = vmatpush1.msra.mxu0 0.0
    %1742 = vmatprep.subr.mxu0 0.0
    %1743 = vmatpush1.msra.mxu0 0.0
    %1744 = vmatprep.subr.mxu0 0.0
    %1745 = vmatpush1.msra.mxu0 0.0
    %1746 = vmatprep.subr.mxu0 0.0
    %1747 = vmatpush1.msra.mxu0 0.0
    %1748 = vmatprep.subr.mxu0 0.0
    %1749 = vmatpush1.msra.mxu0 0.0
    %1750 = vmatprep.subr.mxu0 0.0
    %1751 = vmatpush1.msra.mxu0 0.0
    %1752 = vmatprep.subr.mxu0 0.0
    %1753 = vmatpush1.msra.mxu0 0.0
    %1754 = vmatprep.subr.mxu0 0.0
    %1755 = vmatpush1.msra.mxu0 0.0
    %1756 = vmatprep.subr.mxu0 0.0
    %1757 = vmatpush1.msra.mxu0 %v1703
    %1758 = vmatprep.subr.mxu0 0.0
    %1759 = vmatpush1.msra.mxu0 %v1702
    %1760 = vmatprep.subr.mxu0 0.0
    %1761 = vmatpush1.msra.mxu0 %v1701
    %1762 = vmatprep.subr.mxu0 0.0
    %1763 = vmatpush1.msra.mxu0 %v1700
    %1764 = vmatprep.subr.mxu0 0.0
    %1765 = vmatpush1.msra.mxu0 %v1699
    %1766 = vmatprep.subr.mxu0 0.0
    %1767 = vmatpush1.msra.mxu0 %v1698
    %1768 = vmatprep.subr.mxu0 0.0
    %1769 = vmatpush2.msra.mxu0 0.0
    %1770 = vmatprep.subr.mxu0 0.0
    %1771 = vmatpush2.msra.mxu0 0.0
    %1772 = vmatprep.subr.mxu0 0.0
    %1773 = vmatpush2.msra.mxu0 0.0
    %1774 = vmatprep.subr.mxu0 0.0
    %1775 = vmatpush2.msra.mxu0 0.0
    %1776 = vmatprep.subr.mxu0 0.0
    %1777 = vmatpush2.msra.mxu0 0.0
    %1778 = vmatprep.subr.mxu0 0.0
    %1779 = vmatpush2.msra.mxu0 0.0
    %1780 = vmatprep.subr.mxu0 0.0
    %1781 = vmatpush2.msra.mxu0 0.0
    %1782 = vmatprep.subr.mxu0 0.0
    %1783 = vmatpush2.msra.mxu0 0.0
    %1784 = vmatprep.subr.mxu0 0.0
    %1785 = vmatpush2.msra.mxu0 0.0
    %1786 = vmatprep.subr.mxu0 0.0
    %1787 = vmatpush2.msra.mxu0 0.0
    %1788 = vmatprep.subr.mxu0 0.0
    %1789 = vmatpush2.msra.mxu0 0.0
    %1790 = vmatprep.subr.mxu0 0.0
    %1791 = vmatpush2.msra.mxu0 0.0
    %1792 = vmatprep.subr.mxu0 0.0
    %1793 = vmatpush2.msra.mxu0 0.0
    %1794 = vmatprep.subr.mxu0 0.0
    %1795 = vmatpush2.msra.mxu0 0.0
    %1796 = vmatprep.subr.mxu0 0.0
    %1797 = vmatpush2.msra.mxu0 0.0
    %1798 = vmatprep.subr.mxu0 0.0
    %1799 = vmatpush2.msra.mxu0 0.0
    %1800 = vmatprep.mubr.f32.mxu0 0.0
    %1801 = vmatmul.mubr.f32.gmra.mxu0 %v1713
    %v1802 = vpop.f32.mrf.mxu0
    %v1803 = vadd.f32 %v1709, %v1802
    %v1804 = vpop.f32.mrf.mxu0
    %1805 = vmatprep.mubr.f32.mxu0 0.0
    %1806 = vmatmul.mubr.f32.gmra.mxu0 %v1716
    %v1807 = vpop.f32.mrf.mxu0
    %v1808 = vadd.f32 %v1709, %v1807
    %v1809 = vpop.f32.mrf.mxu0
    %1810 = vmatprep.mubr.f32.mxu0 0.0
    %1811 = vmatmul.mubr.f32.gmra.mxu0 %v1719
    %v1812 = vpop.f32.mrf.mxu0
    %v1813 = vadd.f32 %v1709, %v1812
    %v1814 = vpop.f32.mrf.mxu0
    %1815 = vmatprep.mubr.f32.mxu0 0.0
    %1816 = vmatmul.mubr.f32.gmra.mxu0 %v1722
    %v1817 = vpop.f32.mrf.mxu0
    %v1818 = vadd.f32 %v1709, %v1817
    %v1819 = vpop.f32.mrf.mxu0
    %1820 = vmatprep.mubr.f32.mxu0 0.0
    %1821 = vmatmul.mubr.f32.gmra.mxu0 %v1725
    %v1822 = vpop.f32.mrf.mxu0
    %v1823 = vadd.f32 %v1709, %v1822
    %v1824 = vpop.f32.mrf.mxu0
    %1825 = vmatprep.mubr.f32.mxu0 0.0
    %1826 = vmatmul.mubr.f32.gmra.mxu0 %v1728
    %v1827 = vpop.f32.mrf.mxu0
    %v1828 = vadd.f32 %v1709, %v1827
    %v1829 = vpop.f32.mrf.mxu0
    %1830 = vmatprep.mubr.f32.mxu0 0.0
    %1831 = vmatmul.mubr.f32.gmra.mxu0 %v1731
    %v1832 = vpop.f32.mrf.mxu0
    %v1833 = vadd.f32 %v1709, %v1832
    %v1834 = vpop.f32.mrf.mxu0
    %1835 = vmatprep.mubr.f32.mxu0 0.0
    %1836 = vmatmul.mubr.f32.gmra.mxu0 %v1734
    %v1837 = vpop.f32.mrf.mxu0
    %v1838 = vadd.f32 %v1709, %v1837
    %v1839 = vpop.f32.mrf.mxu0
    %1840 = vdwg.mxu0
    %v1841 = vmax.f32 %v1803, 0.0
    %v1842 = vmax.f32 %v1808, 0.0
    %v1843 = vmax.f32 %v1813, 0.0
    %v1844 = vmax.f32 %v1818, 0.0
    %v1845 = vmax.f32 %v1823, 0.0
    %v1846 = vmax.f32 %v1828, 0.0
    %v1847 = vmax.f32 %v1833, 0.0
    %v1848 = vmax.f32 %v1838, 0.0
    %v1857 = vrot.slane %v1841, 1
    %v1858 = vrot.slane %v1842, 1
    %v1859 = vsel %vm733, %v1857, %v1858
    %v1860 = vrot.slane %v1843, 1
    %v1861 = vsel %vm733, %v1858, %v1860
    %v1862 = vrot.slane %v1844, 1
    %v1863 = vsel %vm733, %v1860, %v1862
    %v1864 = vrot.slane %v1845, 1
    %v1865 = vsel %vm733, %v1862, %v1864
    %v1866 = vrot.slane %v1846, 1
    %v1867 = vsel %vm733, %v1864, %v1866
    %v1868 = vrot.slane %v1847, 1
    %v1869 = vsel %vm733, %v1866, %v1868
    %v1870 = vrot.slane %v1848, 1
    %v1871 = vsel %vm733, %v1868, %v1870
    %v1880 = vsel %vm733, %v1870, 0.0
    %v1881 = vmax.f32 %v1841, %v1859
    %v1882 = vmax.f32 %v1842, %v1861
    %v1883 = vmax.f32 %v1843, %v1863
    %v1884 = vmax.f32 %v1844, %v1865
    %v1885 = vmax.f32 %v1845, %v1867
    %v1886 = vmax.f32 %v1846, %v1869
    %v1887 = vmax.f32 %v1847, %v1871
    %v1888 = vmax.f32 %v1848, %v1880
    %v1889 = vld [vmem:[%s23] sm:$0xff]
    %v1890 = vld [vmem:[%s23 + $0x8] sm:$0xff]
    %v1891 = vld [vmem:[%s23 + $0x10] sm:$0xff]
    %v1892 = vld [vmem:[%s23 + $0x18] sm:$0xff]
    %vm1893 = vcmask 523264
    %v1895 = vsel %vm1893, %v1889, 0
    %v1898 = vsel %vm1893, %v1890, 0
    %v1901 = vsel %vm1893, %v1891, 0
    %v1904 = vsel %vm1893, %v1892, 0
    %1906 = vmatprep.subr.mxu0 0.0
    %1907 = vmatpush1.msra.mxu0 0.0
    %1908 = vmatprep.subr.mxu0 0.0
    %1909 = vmatpush1.msra.mxu0 0.0
    %1910 = vmatprep.subr.mxu0 0.0
    %1911 = vmatpush1.msra.mxu0 0.0
    %1912 = vmatprep.subr.mxu0 0.0
    %1913 = vmatpush1.msra.mxu0 0.0
    %1914 = vmatprep.subr.mxu0 0.0
    %1915 = vmatpush1.msra.mxu0 0.0
    %1916 = vmatprep.subr.mxu0 0.0
    %1917 = vmatpush1.msra.mxu0 0.0
    %1918 = vmatprep.subr.mxu0 0.0
    %1919 = vmatpush1.msra.mxu0 0.0
    %1920 = vmatprep.subr.mxu0 0.0
    %1921 = vmatpush1.msra.mxu0 0.0
    %1922 = vmatprep.subr.mxu0 0.0
    %1923 = vmatpush1.msra.mxu0 %v1888
    %1924 = vmatprep.subr.mxu0 0.0
    %1925 = vmatpush1.msra.mxu0 %v1887
    %1926 = vmatprep.subr.mxu0 0.0
    %1927 = vmatpush1.msra.mxu0 %v1886
    %1928 = vmatprep.subr.mxu0 0.0
    %1929 = vmatpush1.msra.mxu0 %v1885
    %1930 = vmatprep.subr.mxu0 0.0
    %1931 = vmatpush1.msra.mxu0 %v1884
    %1932 = vmatprep.subr.mxu0 0.0
    %1933 = vmatpush1.msra.mxu0 %v1883
    %1934 = vmatprep.subr.mxu0 0.0
    %1935 = vmatpush1.msra.mxu0 %v1882
    %1936 = vmatprep.subr.mxu0 0.0
    %1937 = vmatpush1.msra.mxu0 %v1881
    %1938 = vmatprep.subr.mxu0 0.0
    %1939 = vmatpush2.msra.mxu0 0.0
    %1940 = vmatprep.subr.mxu0 0.0
    %1941 = vmatpush2.msra.mxu0 0.0
    %1942 = vmatprep.subr.mxu0 0.0
    %1943 = vmatpush2.msra.mxu0 0.0
    %1944 = vmatprep.subr.mxu0 0.0
    %1945 = vmatpush2.msra.mxu0 0.0
    %1946 = vmatprep.subr.mxu0 0.0
    %1947 = vmatpush2.msra.mxu0 0.0
    %1948 = vmatprep.subr.mxu0 0.0
    %1949 = vmatpush2.msra.mxu0 0.0
    %1950 = vmatprep.subr.mxu0 0.0
    %1951 = vmatpush2.msra.mxu0 0.0
    %1952 = vmatprep.subr.mxu0 0.0
    %1953 = vmatpush2.msra.mxu0 0.0
    %1954 = vmatprep.subr.mxu0 0.0
    %1955 = vmatpush2.msra.mxu0 0.0
    %1956 = vmatprep.subr.mxu0 0.0
    %1957 = vmatpush2.msra.mxu0 0.0
    %1958 = vmatprep.subr.mxu0 0.0
    %1959 = vmatpush2.msra.mxu0 0.0
    %1960 = vmatprep.subr.mxu0 0.0
    %1961 = vmatpush2.msra.mxu0 0.0
    %1962 = vmatprep.subr.mxu0 0.0
    %1963 = vmatpush2.msra.mxu0 0.0
    %1964 = vmatprep.subr.mxu0 0.0
    %1965 = vmatpush2.msra.mxu0 0.0
    %1966 = vmatprep.subr.mxu0 0.0
    %1967 = vmatpush2.msra.mxu0 0.0
    %1968 = vmatprep.subr.mxu0 0.0
    %1969 = vmatpush2.msra.mxu0 0.0
    %1970 = vmatprep.mubr.f32.mxu0 0.0
    %1971 = vmatmul.mubr.f32.gmra.mxu0 %v1895
    %v1972 = vpop.f32.mrf.mxu0
    %v1973 = vadd.f32 0.0, %v1972
    %v1974 = vpop.f32.mrf.mxu0
    %1975 = vmatprep.mubr.f32.mxu0 0.0
    %1976 = vmatmul.mubr.f32.gmra.mxu0 %v1898
    %v1977 = vpop.f32.mrf.mxu0
    %v1978 = vadd.f32 0.0, %v1977
    %v1979 = vpop.f32.mrf.mxu0
    %1980 = vmatprep.mubr.f32.mxu0 0.0
    %1981 = vmatmul.mubr.f32.gmra.mxu0 %v1901
    %v1982 = vpop.f32.mrf.mxu0
    %v1983 = vadd.f32 0.0, %v1982
    %v1984 = vpop.f32.mrf.mxu0
    %1985 = vmatprep.mubr.f32.mxu0 0.0
    %1986 = vmatmul.mubr.f32.gmra.mxu0 %v1904
    %v1987 = vpop.f32.mrf.mxu0
    %v1988 = vadd.f32 0.0, %v1987
    %v1989 = vpop.f32.mrf.mxu0
    %1990 = vdwg.mxu0
    %v1995 = vrot.slane %v1973, 7
    %v1996 = vrot.slane %v1978, 7
    %v1997 = vsel %vm572, %v1995, %v1996
    %v1998 = vrot.slane %v1983, 7
    %v1999 = vsel %vm572, %v1996, %v1998
    %v2000 = vrot.slane %v1988, 7
    %v2001 = vsel %vm572, %v1998, %v2000
    %v2006 = vsel %vm572, 0.0, %v1995
    %v2007 = vld [vmem:[%s29] sm:$0xff]
    %v2008 = vld [vmem:[%s29 + $0x8] sm:$0xff]
    %v2009 = vld [vmem:[%s29 + $0x10] sm:$0xff]
    %v2010 = vld [vmem:[%s29 + $0x18] sm:$0xff]
    %2012 = vset.pattern.permute.xlu0 0
    %2013 = vperm.xlu0 %2012, %v2007
    %v2014 = vpop.permute.xlu0 %2013
    %2017 = vset.pattern.permute.xlu0 0
    %2018 = vperm.xlu0 %2017, %v2008
    %v2019 = vpop.permute.xlu0 %2018
    %2022 = vset.pattern.permute.xlu0 0
    %2023 = vperm.xlu0 %2022, %v2009
    %v2024 = vpop.permute.xlu0 %2023
    %2027 = vset.pattern.permute.xlu0 0
    %2028 = vperm.xlu0 %2027, %v2010
    %v2029 = vpop.permute.xlu0 %2028
    %v2031 = vmul.f32 %v2006, %v2014
    %v2032 = vmul.f32 %v1997, %v2019
    %v2033 = vmul.f32 %v1999, %v2024
    %v2034 = vmul.f32 %v2001, %v2029
    %v2035 = vrot.slane %v1973, 1
    %v2036 = vrot.slane %v1978, 1
    %v2037 = vsel %vm733, %v2035, %v2036
    %v2038 = vrot.slane %v1983, 1
    %v2039 = vsel %vm733, %v2036, %v2038
    %v2040 = vrot.slane %v1988, 1
    %v2041 = vsel %vm733, %v2038, %v2040
    %v2046 = vsel %vm733, %v2040, 0.0
    %v2047 = vld [vmem:[%s31] sm:$0xff]
    %v2048 = vld [vmem:[%s31 + $0x8] sm:$0xff]
    %v2049 = vld [vmem:[%s31 + $0x10] sm:$0xff]
    %v2050 = vld [vmem:[%s31 + $0x18] sm:$0xff]
    %2052 = vset.pattern.permute.xlu0 0
    %2053 = vperm.xlu0 %2052, %v2047
    %v2054 = vpop.permute.xlu0 %2053
    %2057 = vset.pattern.permute.xlu0 0
    %2058 = vperm.xlu0 %2057, %v2048
    %v2059 = vpop.permute.xlu0 %2058
    %2062 = vset.pattern.permute.xlu0 0
    %2063 = vperm.xlu0 %2062, %v2049
    %v2064 = vpop.permute.xlu0 %2063
    %2067 = vset.pattern.permute.xlu0 0
    %2068 = vperm.xlu0 %2067, %v2050
    %v2069 = vpop.permute.xlu0 %2068
    %v2071 = vmul.f32 %v2037, %v2054
    %v2072 = vmul.f32 %v2039, %v2059
    %v2073 = vmul.f32 %v2041, %v2064
    %v2074 = vmul.f32 %v2046, %v2069
    %2075 = vrot.lane.b32.xlu0 %v1973, 32
    %v2076 = vpop.permute.xlu0 %2075
    %2077 = vrot.lane.b32.xlu0 %v1978, 32
    %v2078 = vpop.permute.xlu0 %2077
    %2079 = vrot.lane.b32.xlu0 %v1983, 32
    %v2080 = vpop.permute.xlu0 %2079
    %2081 = vrot.lane.b32.xlu0 %v1988, 32
    %v2082 = vpop.permute.xlu0 %2081
    %2091 = vrot.lane.b32.xlu0 %v2071, 64
    %v2092 = vpop.permute.xlu0 %2091
    %2093 = vrot.lane.b32.xlu0 %v2072, 64
    %v2094 = vpop.permute.xlu0 %2093
    %2095 = vrot.lane.b32.xlu0 %v2073, 64
    %v2096 = vpop.permute.xlu0 %2095
    %2097 = vrot.lane.b32.xlu0 %v2074, 64
    %v2098 = vpop.permute.xlu0 %2097
    %v2103 = vsel %vm1689, %v2031, %v2076
    %v2104 = vsel %vm1689, %v2032, %v2078
    %v2105 = vsel %vm1689, %v2033, %v2080
    %v2106 = vsel %vm1689, %v2034, %v2082
    %v2107 = vsel %vm1893, %v2103, %v2092
    %v2108 = vsel %vm1893, %v2104, %v2094
    %v2109 = vsel %vm1893, %v2105, %v2096
    %v2110 = vsel %vm1893, %v2106, %v2098
    %v2111 = vld [vmem:[%s25] sm:$0xff]
    %v2112 = vld [vmem:[%s25 + $0x8] sm:$0xff]
    %v2113 = vld [vmem:[%s25 + $0x10] sm:$0xff]
    %v2114 = vld [vmem:[%s25 + $0x18] sm:$0xff]
    %v2115 = vld [vmem:[%s25 + $0x20] sm:$0xff]
    %v2116 = vld [vmem:[%s25 + $0x28] sm:$0xff]
    %v2117 = vld [vmem:[%s25 + $0x30] sm:$0xff]
    %v2118 = vld [vmem:[%s25 + $0x38] sm:$0xff]
    %v2119 = vld [vmem:[%s25 + $0x40] sm:$0xff]
    %v2120 = vld [vmem:[%s25 + $0x48] sm:$0xff]
    %v2121 = vld [vmem:[%s25 + $0x50] sm:$0xff]
    %v2122 = vld [vmem:[%s25 + $0x58] sm:$0xff]
    %v2123 = vld [vmem:[%s27] sm:$0x1]
    %v2125 = vlaneseq
    %v2126 = vshrl.u32 %v2125, 7
    %v2127 = vsub.s32 0, %v2126
    %v2128 = vrot.slane %v2123, %v2127
    %vm2130 = vcmask 785408
    %v2132 = vsel %vm2130, %v2107, 0
    %v2135 = vsel %vm2130, %v2108, 0
    %v2138 = vsel %vm2130, %v2109, 0
    %v2141 = vsel %vm2130, %v2110, 0
    %2143 = vmatprep.subr.mxu0 0.0
    %2144 = vmatpush1.msra.mxu0 0.0
    %2145 = vmatprep.subr.mxu0 0.0
    %2146 = vmatpush1.msra.mxu0 0.0
    %2147 = vmatprep.subr.mxu0 0.0
    %2148 = vmatpush1.msra.mxu0 0.0
    %2149 = vmatprep.subr.mxu0 0.0
    %2150 = vmatpush1.msra.mxu0 0.0
    %2151 = vmatprep.subr.mxu0 0.0
    %2152 = vmatpush1.msra.mxu0 %v2122
    %2153 = vmatprep.subr.mxu0 0.0
    %2154 = vmatpush1.msra.mxu0 %v2121
    %2155 = vmatprep.subr.mxu0 0.0
    %2156 = vmatpush1.msra.mxu0 %v2120
    %2157 = vmatprep.subr.mxu0 0.0
    %2158 = vmatpush1.msra.mxu0 %v2119
    %2159 = vmatprep.subr.mxu0 0.0
    %2160 = vmatpush1.msra.mxu0 %v2118
    %2161 = vmatprep.subr.mxu0 0.0
    %2162 = vmatpush1.msra.mxu0 %v2117
    %2163 = vmatprep.subr.mxu0 0.0
    %2164 = vmatpush1.msra.mxu0 %v2116
    %2165 = vmatprep.subr.mxu0 0.0
    %2166 = vmatpush1.msra.mxu0 %v2115
    %2167 = vmatprep.subr.mxu0 0.0
    %2168 = vmatpush1.msra.mxu0 %v2114
    %2169 = vmatprep.subr.mxu0 0.0
    %2170 = vmatpush1.msra.mxu0 %v2113
    %2171 = vmatprep.subr.mxu0 0.0
    %2172 = vmatpush1.msra.mxu0 %v2112
    %2173 = vmatprep.subr.mxu0 0.0
    %2174 = vmatpush1.msra.mxu0 %v2111
    %2175 = vmatprep.subr.mxu0 0.0
    %2176 = vmatpush2.msra.mxu0 0.0
    %2177 = vmatprep.subr.mxu0 0.0
    %2178 = vmatpush2.msra.mxu0 0.0
    %2179 = vmatprep.subr.mxu0 0.0
    %2180 = vmatpush2.msra.mxu0 0.0
    %2181 = vmatprep.subr.mxu0 0.0
    %2182 = vmatpush2.msra.mxu0 0.0
    %2183 = vmatprep.subr.mxu0 0.0
    %2184 = vmatpush2.msra.mxu0 0.0
    %2185 = vmatprep.subr.mxu0 0.0
    %2186 = vmatpush2.msra.mxu0 0.0
    %2187 = vmatprep.subr.mxu0 0.0
    %2188 = vmatpush2.msra.mxu0 0.0
    %2189 = vmatprep.subr.mxu0 0.0
    %2190 = vmatpush2.msra.mxu0 0.0
    %2191 = vmatprep.subr.mxu0 0.0
    %2192 = vmatpush2.msra.mxu0 0.0
    %2193 = vmatprep.subr.mxu0 0.0
    %2194 = vmatpush2.msra.mxu0 0.0
    %2195 = vmatprep.subr.mxu0 0.0
    %2196 = vmatpush2.msra.mxu0 0.0
    %2197 = vmatprep.subr.mxu0 0.0
    %2198 = vmatpush2.msra.mxu0 0.0
    %2199 = vmatprep.subr.mxu0 0.0
    %2200 = vmatpush2.msra.mxu0 0.0
    %2201 = vmatprep.subr.mxu0 0.0
    %2202 = vmatpush2.msra.mxu0 0.0
    %2203 = vmatprep.subr.mxu0 0.0
    %2204 = vmatpush2.msra.mxu0 0.0
    %2205 = vmatprep.subr.mxu0 0.0
    %2206 = vmatpush2.msra.mxu0 0.0
    %2207 = vmatprep.mubr.f32.mxu0 0.0
    %2208 = vmatmul.mubr.f32.gmra.mxu0 %v2132
    %v2209 = vpop.f32.mrf.mxu0
    %v2210 = vadd.f32 %v2128, %v2209
    %v2211 = vpop.f32.mrf.mxu0
    %2212 = vmatprep.mubr.f32.mxu0 0.0
    %2213 = vmatmul.mubr.f32.gmra.mxu0 %v2135
    %v2214 = vpop.f32.mrf.mxu0
    %v2215 = vadd.f32 %v2128, %v2214
    %v2216 = vpop.f32.mrf.mxu0
    %2217 = vmatprep.mubr.f32.mxu0 0.0
    %2218 = vmatmul.mubr.f32.gmra.mxu0 %v2138
    %v2219 = vpop.f32.mrf.mxu0
    %v2220 = vadd.f32 %v2128, %v2219
    %v2221 = vpop.f32.mrf.mxu0
    %2222 = vmatprep.mubr.f32.mxu0 0.0
    %2223 = vmatmul.mubr.f32.gmra.mxu0 %v2141
    %v2224 = vpop.f32.mrf.mxu0
    %v2225 = vadd.f32 %v2128, %v2224
    %v2226 = vpop.f32.mrf.mxu0
    %2227 = vdwg.mxu0
    %v2228 = vmax.f32 %v2210, 0.0
    %v2229 = vmax.f32 %v2215, 0.0
    %v2230 = vmax.f32 %v2220, 0.0
    %v2231 = vmax.f32 %v2225, 0.0
    %v2236 = vrot.slane %v2228, 1
    %v2237 = vrot.slane %v2229, 1
    %v2238 = vsel %vm733, %v2236, %v2237
    %v2239 = vrot.slane %v2230, 1
    %v2240 = vsel %vm733, %v2237, %v2239
    %v2241 = vrot.slane %v2231, 1
    %v2242 = vsel %vm733, %v2239, %v2241
    %v2247 = vsel %vm733, %v2241, 0.0
    %v2248 = vmax.f32 %v2228, %v2238
    %v2249 = vmax.f32 %v2229, %v2240
    %v2250 = vmax.f32 %v2230, %v2242
    %v2251 = vmax.f32 %v2231, %v2247
    %v2252 = vld [vmem:[%s33] sm:$0xff]
    %v2253 = vld [vmem:[%s33 + $0x8] sm:$0xff]
    %v2255 = vsel %vm1689, %v2252, 0
    %v2258 = vsel %vm1689, %v2253, 0
    %2260 = vmatprep.subr.mxu0 0.0
    %2261 = vmatpush1.msra.mxu0 0.0
    %2262 = vmatprep.subr.mxu0 0.0
    %2263 = vmatpush1.msra.mxu0 0.0
    %2264 = vmatprep.subr.mxu0 0.0
    %2265 = vmatpush1.msra.mxu0 0.0
    %2266 = vmatprep.subr.mxu0 0.0
    %2267 = vmatpush1.msra.mxu0 0.0
    %2268 = vmatprep.subr.mxu0 0.0
    %2269 = vmatpush1.msra.mxu0 0.0
    %2270 = vmatprep.subr.mxu0 0.0
    %2271 = vmatpush1.msra.mxu0 0.0
    %2272 = vmatprep.subr.mxu0 0.0
    %2273 = vmatpush1.msra.mxu0 0.0
    %2274 = vmatprep.subr.mxu0 0.0
    %2275 = vmatpush1.msra.mxu0 0.0
    %2276 = vmatprep.subr.mxu0 0.0
    %2277 = vmatpush1.msra.mxu0 0.0
    %2278 = vmatprep.subr.mxu0 0.0
    %2279 = vmatpush1.msra.mxu0 0.0
    %2280 = vmatprep.subr.mxu0 0.0
    %2281 = vmatpush1.msra.mxu0 0.0
    %2282 = vmatprep.subr.mxu0 0.0
    %2283 = vmatpush1.msra.mxu0 0.0
    %2284 = vmatprep.subr.mxu0 0.0
    %2285 = vmatpush1.msra.mxu0 %v2251
    %2286 = vmatprep.subr.mxu0 0.0
    %2287 = vmatpush1.msra.mxu0 %v2250
    %2288 = vmatprep.subr.mxu0 0.0
    %2289 = vmatpush1.msra.mxu0 %v2249
    %2290 = vmatprep.subr.mxu0 0.0
    %2291 = vmatpush1.msra.mxu0 %v2248
    %2292 = vmatprep.subr.mxu0 0.0
    %2293 = vmatpush2.msra.mxu0 0.0
    %2294 = vmatprep.subr.mxu0 0.0
    %2295 = vmatpush2.msra.mxu0 0.0
    %2296 = vmatprep.subr.mxu0 0.0
    %2297 = vmatpush2.msra.mxu0 0.0
    %2298 = vmatprep.subr.mxu0 0.0
    %2299 = vmatpush2.msra.mxu0 0.0
    %2300 = vmatprep.subr.mxu0 0.0
    %2301 = vmatpush2.msra.mxu0 0.0
    %2302 = vmatprep.subr.mxu0 0.0
    %2303 = vmatpush2.msra.mxu0 0.0
    %2304 = vmatprep.subr.mxu0 0.0
    %2305 = vmatpush2.msra.mxu0 0.0
    %2306 = vmatprep.subr.mxu0 0.0
    %2307 = vmatpush2.msra.mxu0 0.0
    %2308 = vmatprep.subr.mxu0 0.0
    %2309 = vmatpush2.msra.mxu0 0.0
    %2310 = vmatprep.subr.mxu0 0.0
    %2311 = vmatpush2.msra.mxu0 0.0
    %2312 = vmatprep.subr.mxu0 0.0
    %2313 = vmatpush2.msra.mxu0 0.0
    %2314 = vmatprep.subr.mxu0 0.0
    %2315 = vmatpush2.msra.mxu0 0.0
    %2316 = vmatprep.subr.mxu0 0.0
    %2317 = vmatpush2.msra.mxu0 0.0
    %2318 = vmatprep.subr.mxu0 0.0
    %2319 = vmatpush2.msra.mxu0 0.0
    %2320 = vmatprep.subr.mxu0 0.0
    %2321 = vmatpush2.msra.mxu0 0.0
    %2322 = vmatprep.subr.mxu0 0.0
    %2323 = vmatpush2.msra.mxu0 0.0
    %2324 = vmatprep.mubr.f32.mxu0 0.0
    %2325 = vmatmul.mubr.f32.gmra.mxu0 %v2255
    %v2326 = vpop.f32.mrf.mxu0
    %v2327 = vadd.f32 0.0, %v2326
    %v2328 = vpop.f32.mrf.mxu0
    %2329 = vmatprep.mubr.f32.mxu0 0.0
    %2330 = vmatmul.mubr.f32.gmra.mxu0 %v2258
    %v2331 = vpop.f32.mrf.mxu0
    %v2332 = vadd.f32 0.0, %v2331
    %v2333 = vpop.f32.mrf.mxu0
    %2334 = vdwg.mxu0
    %v2335 = vld [vmem:[%s3] sm:$0xff]
    %v2336 = vld [vmem:[%s35] sm:$0xff]
    %v2337 = vld [vmem:[%s35 + $0x8] sm:$0xff]
    %v2338 = vld [vmem:[%s35 + $0x10] sm:$0xff]
    %v2339 = vld [vmem:[%s35 + $0x18] sm:$0xff]
    %v2340 = vld [vmem:[%s35 + $0x20] sm:$0xff]
    %v2341 = vld [vmem:[%s35 + $0x28] sm:$0xff]
    %v2342 = vld [vmem:[%s35 + $0x30] sm:$0xff]
    %v2343 = vld [vmem:[%s35 + $0x38] sm:$0xff]
    %v2344 = vld [vmem:[%s37] sm:$0x1]
    %v2346 = vlaneseq
    %v2347 = vshrl.u32 %v2346, 7
    %v2348 = vsub.s32 0, %v2347
    %v2349 = vrot.slane %v2344, %v2348
    %v2352 = vsel %vm1893, %v2327, 0
    %2354 = vmatprep.subr.mxu0 0.0
    %2355 = vmatpush1.msra.mxu0 0.0
    %2356 = vmatprep.subr.mxu0 0.0
    %2357 = vmatpush1.msra.mxu0 0.0
    %2358 = vmatprep.subr.mxu0 0.0
    %2359 = vmatpush1.msra.mxu0 0.0
    %2360 = vmatprep.subr.mxu0 0.0
    %2361 = vmatpush1.msra.mxu0 0.0
    %2362 = vmatprep.subr.mxu0 0.0
    %2363 = vmatpush1.msra.mxu0 0.0
    %2364 = vmatprep.subr.mxu0 0.0
    %2365 = vmatpush1.msra.mxu0 0.0
    %2366 = vmatprep.subr.mxu0 0.0
    %2367 = vmatpush1.msra.mxu0 0.0
    %2368 = vmatprep.subr.mxu0 0.0
    %2369 = vmatpush1.msra.mxu0 0.0
    %2370 = vmatprep.subr.mxu0 0.0
    %2371 = vmatpush1.msra.mxu0 %v2343
    %2372 = vmatprep.subr.mxu0 0.0
    %2373 = vmatpush1.msra.mxu0 %v2342
    %2374 = vmatprep.subr.mxu0 0.0
    %2375 = vmatpush1.msra.mxu0 %v2341
    %2376 = vmatprep.subr.mxu0 0.0
    %2377 = vmatpush1.msra.mxu0 %v2340
    %2378 = vmatprep.subr.mxu0 0.0
    %2379 = vmatpush1.msra.mxu0 %v2339
    %2380 = vmatprep.subr.mxu0 0.0
    %2381 = vmatpush1.msra.mxu0 %v2338
    %2382 = vmatprep.subr.mxu0 0.0
    %2383 = vmatpush1.msra.mxu0 %v2337
    %2384 = vmatprep.subr.mxu0 0.0
    %2385 = vmatpush1.msra.mxu0 %v2336
    %2386 = vmatprep.subr.mxu0 0.0
    %2387 = vmatpush2.msra.mxu0 0.0
    %2388 = vmatprep.subr.mxu0 0.0
    %2389 = vmatpush2.msra.mxu0 0.0
    %2390 = vmatprep.subr.mxu0 0.0
    %2391 = vmatpush2.msra.mxu0 0.0
    %2392 = vmatprep.subr.mxu0 0.0
    %2393 = vmatpush2.msra.mxu0 0.0
    %2394 = vmatprep.subr.mxu0 0.0
    %2395 = vmatpush2.msra.mxu0 0.0
    %2396 = vmatprep.subr.mxu0 0.0
    %2397 = vmatpush2.msra.mxu0 0.0
    %2398 = vmatprep.subr.mxu0 0.0
    %2399 = vmatpush2.msra.mxu0 0.0
    %2400 = vmatprep.subr.mxu0 0.0
    %2401 = vmatpush2.msra.mxu0 0.0
    %2402 = vmatprep.subr.mxu0 0.0
    %2403 = vmatpush2.msra.mxu0 0.0
    %2404 = vmatprep.subr.mxu0 0.0
    %2405 = vmatpush2.msra.mxu0 0.0
    %2406 = vmatprep.subr.mxu0 0.0
    %2407 = vmatpush2.msra.mxu0 0.0
    %2408 = vmatprep.subr.mxu0 0.0
    %2409 = vmatpush2.msra.mxu0 0.0
    %2410 = vmatprep.subr.mxu0 0.0
    %2411 = vmatpush2.msra.mxu0 0.0
    %2412 = vmatprep.subr.mxu0 0.0
    %2413 = vmatpush2.msra.mxu0 0.0
    %2414 = vmatprep.subr.mxu0 0.0
    %2415 = vmatpush2.msra.mxu0 0.0
    %2416 = vmatprep.subr.mxu0 0.0
    %2417 = vmatpush2.msra.mxu0 0.0
    %2418 = vmatprep.mubr.f32.mxu0 0.0
    %2419 = vmatmul.mubr.f32.gmra.mxu0 %v2352
    %v2420 = vpop.f32.mrf.mxu0
    %v2421 = vadd.f32 %v2349, %v2420
    %v2422 = vpop.f32.mrf.mxu0
    %2423 = vdwg.mxu0
    %v2424 = vmul.f32 %v2421, 0.25
    %v2425 = vld [vmem:[%s39] sm:$0xff]
    %v2426 = vld [vmem:[%s39 + $0x8] sm:$0xff]
    %v2427 = vld [vmem:[%s39 + $0x10] sm:$0xff]
    %v2428 = vld [vmem:[%s39 + $0x18] sm:$0xff]
    %v2429 = vld [vmem:[%s39 + $0x20] sm:$0xff]
    %v2430 = vld [vmem:[%s39 + $0x28] sm:$0xff]
    %v2431 = vld [vmem:[%s39 + $0x30] sm:$0xff]
    %v2432 = vld [vmem:[%s39 + $0x38] sm:$0xff]
    %v2433 = vld [vmem:[%s41] sm:$0x1]
    %v2435 = vlaneseq
    %v2436 = vshrl.u32 %v2435, 7
    %v2437 = vsub.s32 0, %v2436
    %v2438 = vrot.slane %v2433, %v2437
    %2440 = vmatprep.subr.mxu0 0.0
    %2441 = vmatpush1.msra.mxu0 0.0
    %2442 = vmatprep.subr.mxu0 0.0
    %2443 = vmatpush1.msra.mxu0 0.0
    %2444 = vmatprep.subr.mxu0 0.0
    %2445 = vmatpush1.msra.mxu0 0.0
    %2446 = vmatprep.subr.mxu0 0.0
    %2447 = vmatpush1.msra.mxu0 0.0
    %2448 = vmatprep.subr.mxu0 0.0
    %2449 = vmatpush1.msra.mxu0 0.0
    %2450 = vmatprep.subr.mxu0 0.0
    %2451 = vmatpush1.msra.mxu0 0.0
    %2452 = vmatprep.subr.mxu0 0.0
    %2453 = vmatpush1.msra.mxu0 0.0
    %2454 = vmatprep.subr.mxu0 0.0
    %2455 = vmatpush1.msra.mxu0 0.0
    %2456 = vmatprep.subr.mxu0 0.0
    %2457 = vmatpush1.msra.mxu0 %v2432
    %2458 = vmatprep.subr.mxu0 0.0
    %2459 = vmatpush1.msra.mxu0 %v2431
    %2460 = vmatprep.subr.mxu0 0.0
    %2461 = vmatpush1.msra.mxu0 %v2430
    %2462 = vmatprep.subr.mxu0 0.0
    %2463 = vmatpush1.msra.mxu0 %v2429
    %2464 = vmatprep.subr.mxu0 0.0
    %2465 = vmatpush1.msra.mxu0 %v2428
    %2466 = vmatprep.subr.mxu0 0.0
    %2467 = vmatpush1.msra.mxu0 %v2427
    %2468 = vmatprep.subr.mxu0 0.0
    %2469 = vmatpush1.msra.mxu0 %v2426
    %2470 = vmatprep.subr.mxu0 0.0
    %2471 = vmatpush1.msra.mxu0 %v2425
    %2472 = vmatprep.subr.mxu0 0.0
    %2473 = vmatpush2.msra.mxu0 0.0
    %2474 = vmatprep.subr.mxu0 0.0
    %2475 = vmatpush2.msra.mxu0 0.0
    %2476 = vmatprep.subr.mxu0 0.0
    %2477 = vmatpush2.msra.mxu0 0.0
    %2478 = vmatprep.subr.mxu0 0.0
    %2479 = vmatpush2.msra.mxu0 0.0
    %2480 = vmatprep.subr.mxu0 0.0
    %2481 = vmatpush2.msra.mxu0 0.0
    %2482 = vmatprep.subr.mxu0 0.0
    %2483 = vmatpush2.msra.mxu0 0.0
    %2484 = vmatprep.subr.mxu0 0.0
    %2485 = vmatpush2.msra.mxu0 0.0
    %2486 = vmatprep.subr.mxu0 0.0
    %2487 = vmatpush2.msra.mxu0 0.0
    %2488 = vmatprep.subr.mxu0 0.0
    %2489 = vmatpush2.msra.mxu0 0.0
    %2490 = vmatprep.subr.mxu0 0.0
    %2491 = vmatpush2.msra.mxu0 0.0
    %2492 = vmatprep.subr.mxu0 0.0
    %2493 = vmatpush2.msra.mxu0 0.0
    %2494 = vmatprep.subr.mxu0 0.0
    %2495 = vmatpush2.msra.mxu0 0.0
    %2496 = vmatprep.subr.mxu0 0.0
    %2497 = vmatpush2.msra.mxu0 0.0
    %2498 = vmatprep.subr.mxu0 0.0
    %2499 = vmatpush2.msra.mxu0 0.0
    %2500 = vmatprep.subr.mxu0 0.0
    %2501 = vmatpush2.msra.mxu0 0.0
    %2502 = vmatprep.subr.mxu0 0.0
    %2503 = vmatpush2.msra.mxu0 0.0
    %2504 = vmatprep.mubr.f32.mxu0 0.0
    %2505 = vmatmul.mubr.f32.gmra.mxu0 %v2352
    %v2506 = vpop.f32.mrf.mxu0
    %v2507 = vadd.f32 %v2438, %v2506
    %v2508 = vpop.f32.mrf.mxu0
    %2509 = vdwg.mxu0
    %v2511 = vsel %vm1680, %v2424, 0
    %v2514 = vsel %vm1680, %v2507, 0
    %2516 = vmatprep.subr.mxu0 0.0
    %2517 = vmatpush1.xpose.msra.mxu0 0.0
    %2518 = vmatprep.subr.mxu0 0.0
    %2519 = vmatpush1.xpose.msra.mxu0 0.0
    %2520 = vmatprep.subr.mxu0 0.0
    %2521 = vmatpush1.xpose.msra.mxu0 0.0
    %2522 = vmatprep.subr.mxu0 0.0
    %2523 = vmatpush1.xpose.msra.mxu0 0.0
    %2524 = vmatprep.subr.mxu0 0.0
    %2525 = vmatpush1.xpose.msra.mxu0 0.0
    %2526 = vmatprep.subr.mxu0 0.0
    %2527 = vmatpush1.xpose.msra.mxu0 0.0
    %2528 = vmatprep.subr.mxu0 0.0
    %2529 = vmatpush1.xpose.msra.mxu0 0.0
    %2530 = vmatprep.subr.mxu0 0.0
    %2531 = vmatpush1.xpose.msra.mxu0 0.0
    %2532 = vmatprep.subr.mxu0 0.0
    %2533 = vmatpush1.xpose.msra.mxu0 0.0
    %2534 = vmatprep.subr.mxu0 0.0
    %2535 = vmatpush1.xpose.msra.mxu0 0.0
    %2536 = vmatprep.subr.mxu0 0.0
    %2537 = vmatpush1.xpose.msra.mxu0 0.0
    %2538 = vmatprep.subr.mxu0 0.0
    %2539 = vmatpush1.xpose.msra.mxu0 0.0
    %2540 = vmatprep.subr.mxu0 0.0
    %2541 = vmatpush1.xpose.msra.mxu0 0.0
    %2542 = vmatprep.subr.mxu0 0.0
    %2543 = vmatpush1.xpose.msra.mxu0 0.0
    %2544 = vmatprep.subr.mxu0 0.0
    %2545 = vmatpush1.xpose.msra.mxu0 0.0
    %2546 = vmatprep.subr.mxu0 0.0
    %2547 = vmatpush1.xpose.msra.mxu0 %v2514
    %2548 = vmatprep.subr.mxu0 0.0
    %2549 = vmatpush2.xpose.msra.mxu0 0.0
    %2550 = vmatprep.subr.mxu0 0.0
    %2551 = vmatpush2.xpose.msra.mxu0 0.0
    %2552 = vmatprep.subr.mxu0 0.0
    %2553 = vmatpush2.xpose.msra.mxu0 0.0
    %2554 = vmatprep.subr.mxu0 0.0
    %2555 = vmatpush2.xpose.msra.mxu0 0.0
    %2556 = vmatprep.subr.mxu0 0.0
    %2557 = vmatpush2.xpose.msra.mxu0 0.0
    %2558 = vmatprep.subr.mxu0 0.0
    %2559 = vmatpush2.xpose.msra.mxu0 0.0
    %2560 = vmatprep.subr.mxu0 0.0
    %2561 = vmatpush2.xpose.msra.mxu0 0.0
    %2562 = vmatprep.subr.mxu0 0.0
    %2563 = vmatpush2.xpose.msra.mxu0 0.0
    %2564 = vmatprep.subr.mxu0 0.0
    %2565 = vmatpush2.xpose.msra.mxu0 0.0
    %2566 = vmatprep.subr.mxu0 0.0
    %2567 = vmatpush2.xpose.msra.mxu0 0.0
    %2568 = vmatprep.subr.mxu0 0.0
    %2569 = vmatpush2.xpose.msra.mxu0 0.0
    %2570 = vmatprep.subr.mxu0 0.0
    %2571 = vmatpush2.xpose.msra.mxu0 0.0
    %2572 = vmatprep.subr.mxu0 0.0
    %2573 = vmatpush2.xpose.msra.mxu0 0.0
    %2574 = vmatprep.subr.mxu0 0.0
    %2575 = vmatpush2.xpose.msra.mxu0 0.0
    %2576 = vmatprep.subr.mxu0 0.0
    %2577 = vmatpush2.xpose.msra.mxu0 0.0
    %2578 = vmatprep.subr.mxu0 0.0
    %2579 = vmatpush2.xpose.msra.mxu0 0.0
    %2580 = vmatprep.mubr.f32.mxu0 0.0
    %2581 = vmatmul.mubr.f32.gmra.mxu0 %v2511
    %v2582 = vpop.f32.mrf.mxu0
    %v2583 = vadd.f32 %v2335, %v2582
    %v2584 = vpop.f32.mrf.mxu0
    %2585 = vdwg.mxu0
    %v2586 = vsel %vm1023, %v2583, -inf
    %2587 = vmax.xlane.f32.xlu0 %v2586
    %v2588 = vpop.xlane.xlu0 %2587
    %v2589 = vsub.f32 %v2583, %v2588
    %v2590 = vmul.f32 %v2589, 1.442695
    %v2591 = vpow.pop %v2590
    %v2592 = vsel %vm1023, %v2591, 0.0
    %2593 = vadd.xlane.f32.xlu0 %v2592
    %v2594 = vpop.xlane.xlu0 %2593
    %v2595 = vrcp.pop %v2594
    %v2596 = vmul.f32 %v2591, %v2595
    %2597 = vrot.lane.b32.xlu0 %v2507, 64
    %v2598 = vpop.permute.xlu0 %2597
    %v2601 = vsel %vm1023, %v2596, 0
    %2603 = vmatprep.subr.mxu0 0.0
    %2604 = vmatpush1.msra.mxu0 0.0
    %2605 = vmatprep.subr.mxu0 0.0
    %2606 = vmatpush1.msra.mxu0 0.0
    %2607 = vmatprep.subr.mxu0 0.0
    %2608 = vmatpush1.msra.mxu0 0.0
    %2609 = vmatprep.subr.mxu0 0.0
    %2610 = vmatpush1.msra.mxu0 0.0
    %2611 = vmatprep.subr.mxu0 0.0
    %2612 = vmatpush1.msra.mxu0 0.0
    %2613 = vmatprep.subr.mxu0 0.0
    %2614 = vmatpush1.msra.mxu0 0.0
    %2615 = vmatprep.subr.mxu0 0.0
    %2616 = vmatpush1.msra.mxu0 0.0
    %2617 = vmatprep.subr.mxu0 0.0
    %2618 = vmatpush1.msra.mxu0 0.0
    %2619 = vmatprep.subr.mxu0 0.0
    %2620 = vmatpush1.msra.mxu0 0.0
    %2621 = vmatprep.subr.mxu0 0.0
    %2622 = vmatpush1.msra.mxu0 0.0
    %2623 = vmatprep.subr.mxu0 0.0
    %2624 = vmatpush1.msra.mxu0 0.0
    %2625 = vmatprep.subr.mxu0 0.0
    %2626 = vmatpush1.msra.mxu0 0.0
    %2627 = vmatprep.subr.mxu0 0.0
    %2628 = vmatpush1.msra.mxu0 0.0
    %2629 = vmatprep.subr.mxu0 0.0
    %2630 = vmatpush1.msra.mxu0 0.0
    %2631 = vmatprep.subr.mxu0 0.0
    %2632 = vmatpush1.msra.mxu0 0.0
    %2633 = vmatprep.subr.mxu0 0.0
    %2634 = vmatpush1.msra.mxu0 %v2598
    %2635 = vmatprep.subr.mxu0 0.0
    %2636 = vmatpush2.msra.mxu0 0.0
    %2637 = vmatprep.subr.mxu0 0.0
    %2638 = vmatpush2.msra.mxu0 0.0
    %2639 = vmatprep.subr.mxu0 0.0
    %2640 = vmatpush2.msra.mxu0 0.0
    %2641 = vmatprep.subr.mxu0 0.0
    %2642 = vmatpush2.msra.mxu0 0.0
    %2643 = vmatprep.subr.mxu0 0.0
    %2644 = vmatpush2.msra.mxu0 0.0
    %2645 = vmatprep.subr.mxu0 0.0
    %2646 = vmatpush2.msra.mxu0 0.0
    %2647 = vmatprep.subr.mxu0 0.0
    %2648 = vmatpush2.msra.mxu0 0.0
    %2649 = vmatprep.subr.mxu0 0.0
    %2650 = vmatpush2.msra.mxu0 0.0
    %2651 = vmatprep.subr.mxu0 0.0
    %2652 = vmatpush2.msra.mxu0 0.0
    %2653 = vmatprep.subr.mxu0 0.0
    %2654 = vmatpush2.msra.mxu0 0.0
    %2655 = vmatprep.subr.mxu0 0.0
    %2656 = vmatpush2.msra.mxu0 0.0
    %2657 = vmatprep.subr.mxu0 0.0
    %2658 = vmatpush2.msra.mxu0 0.0
    %2659 = vmatprep.subr.mxu0 0.0
    %2660 = vmatpush2.msra.mxu0 0.0
    %2661 = vmatprep.subr.mxu0 0.0
    %2662 = vmatpush2.msra.mxu0 0.0
    %2663 = vmatprep.subr.mxu0 0.0
    %2664 = vmatpush2.msra.mxu0 0.0
    %2665 = vmatprep.subr.mxu0 0.0
    %2666 = vmatpush2.msra.mxu0 0.0
    %2667 = vmatprep.mubr.f32.mxu0 0.0
    %2668 = vmatmul.mubr.f32.gmra.mxu0 %v2601
    %v2669 = vpop.f32.mrf.mxu0
    %v2670 = vadd.f32 0.0, %v2669
    %v2671 = vpop.f32.mrf.mxu0
    %2672 = vdwg.mxu0
    %2673 = vrot.lane.b32.xlu0 %v2424, 112
    %v2674 = vpop.permute.xlu0 %2673
    %2675 = vrot.lane.b32.xlu0 %v2507, 112
    %v2676 = vpop.permute.xlu0 %2675
    %v2677 = vsel %vm1680, %v2674, 0
    %v2679 = vsel %vm1680, %v2676, 0
    %2681 = vmatprep.subr.mxu0 0.0
    %2682 = vmatpush1.xpose.msra.mxu0 0.0
    %2683 = vmatprep.subr.mxu0 0.0
    %2684 = vmatpush1.xpose.msra.mxu0 0.0
    %2685 = vmatprep.subr.mxu0 0.0
    %2686 = vmatpush1.xpose.msra.mxu0 0.0
    %2687 = vmatprep.subr.mxu0 0.0
    %2688 = vmatpush1.xpose.msra.mxu0 0.0
    %2689 = vmatprep.subr.mxu0 0.0
    %2690 = vmatpush1.xpose.msra.mxu0 0.0
    %2691 = vmatprep.subr.mxu0 0.0
    %2692 = vmatpush1.xpose.msra.mxu0 0.0
    %2693 = vmatprep.subr.mxu0 0.0
    %2694 = vmatpush1.xpose.msra.mxu0 0.0
    %2695 = vmatprep.subr.mxu0 0.0
    %2696 = vmatpush1.xpose.msra.mxu0 0.0
    %2697 = vmatprep.subr.mxu0 0.0
    %2698 = vmatpush1.xpose.msra.mxu0 0.0
    %2699 = vmatprep.subr.mxu0 0.0
    %2700 = vmatpush1.xpose.msra.mxu0 0.0
    %2701 = vmatprep.subr.mxu0 0.0
    %2702 = vmatpush1.xpose.msra.mxu0 0.0
    %2703 = vmatprep.subr.mxu0 0.0
    %2704 = vmatpush1.xpose.msra.mxu0 0.0
    %2705 = vmatprep.subr.mxu0 0.0
    %2706 = vmatpush1.xpose.msra.mxu0 0.0
    %2707 = vmatprep.subr.mxu0 0.0
    %2708 = vmatpush1.xpose.msra.mxu0 0.0
    %2709 = vmatprep.subr.mxu0 0.0
    %2710 = vmatpush1.xpose.msra.mxu0 0.0
    %2711 = vmatprep.subr.mxu0 0.0
    %2712 = vmatpush1.xpose.msra.mxu0 %v2679
    %2713 = vmatprep.subr.mxu0 0.0
    %2714 = vmatpush2.xpose.msra.mxu0 0.0
    %2715 = vmatprep.subr.mxu0 0.0
    %2716 = vmatpush2.xpose.msra.mxu0 0.0
    %2717 = vmatprep.subr.mxu0 0.0
    %2718 = vmatpush2.xpose.msra.mxu0 0.0
    %2719 = vmatprep.subr.mxu0 0.0
    %2720 = vmatpush2.xpose.msra.mxu0 0.0
    %2721 = vmatprep.subr.mxu0 0.0
    %2722 = vmatpush2.xpose.msra.mxu0 0.0
    %2723 = vmatprep.subr.mxu0 0.0
    %2724 = vmatpush2.xpose.msra.mxu0 0.0
    %2725 = vmatprep.subr.mxu0 0.0
    %2726 = vmatpush2.xpose.msra.mxu0 0.0
    %2727 = vmatprep.subr.mxu0 0.0
    %2728 = vmatpush2.xpose.msra.mxu0 0.0
    %2729 = vmatprep.subr.mxu0 0.0
    %2730 = vmatpush2.xpose.msra.mxu0 0.0
    %2731 = vmatprep.subr.mxu0 0.0
    %2732 = vmatpush2.xpose.msra.mxu0 0.0
    %2733 = vmatprep.subr.mxu0 0.0
    %2734 = vmatpush2.xpose.msra.mxu0 0.0
    %2735 = vmatprep.subr.mxu0 0.0
    %2736 = vmatpush2.xpose.msra.mxu0 0.0
    %2737 = vmatprep.subr.mxu0 0.0
    %2738 = vmatpush2.xpose.msra.mxu0 0.0
    %2739 = vmatprep.subr.mxu0 0.0
    %2740 = vmatpush2.xpose.msra.mxu0 0.0
    %2741 = vmatprep.subr.mxu0 0.0
    %2742 = vmatpush2.xpose.msra.mxu0 0.0
    %2743 = vmatprep.subr.mxu0 0.0
    %2744 = vmatpush2.xpose.msra.mxu0 0.0
    %2745 = vmatprep.mubr.f32.mxu0 0.0
    %2746 = vmatmul.mubr.f32.gmra.mxu0 %v2677
    %v2747 = vpop.f32.mrf.mxu0
    %v2748 = vadd.f32 %v2335, %v2747
    %v2749 = vpop.f32.mrf.mxu0
    %2750 = vdwg.mxu0
    %v2751 = vsel %vm1023, %v2748, -inf
    %2752 = vmax.xlane.f32.xlu0 %v2751
    %v2753 = vpop.xlane.xlu0 %2752
    %v2754 = vsub.f32 %v2748, %v2753
    %v2755 = vmul.f32 %v2754, 1.442695
    %v2756 = vpow.pop %v2755
    %v2757 = vsel %vm1023, %v2756, 0.0
    %2758 = vadd.xlane.f32.xlu0 %v2757
    %v2759 = vpop.xlane.xlu0 %2758
    %v2760 = vrcp.pop %v2759
    %v2761 = vmul.f32 %v2756, %v2760
    %2762 = vrot.lane.b32.xlu0 %v2507, 48
    %v2763 = vpop.permute.xlu0 %2762
    %v2766 = vsel %vm1023, %v2761, 0
    %2768 = vmatprep.subr.mxu0 0.0
    %2769 = vmatpush1.msra.mxu0 0.0
    %2770 = vmatprep.subr.mxu0 0.0
    %2771 = vmatpush1.msra.mxu0 0.0
    %2772 = vmatprep.subr.mxu0 0.0
    %2773 = vmatpush1.msra.mxu0 0.0
    %2774 = vmatprep.subr.mxu0 0.0
    %2775 = vmatpush1.msra.mxu0 0.0
    %2776 = vmatprep.subr.mxu0 0.0
    %2777 = vmatpush1.msra.mxu0 0.0
    %2778 = vmatprep.subr.mxu0 0.0
    %2779 = vmatpush1.msra.mxu0 0.0
    %2780 = vmatprep.subr.mxu0 0.0
    %2781 = vmatpush1.msra.mxu0 0.0
    %2782 = vmatprep.subr.mxu0 0.0
    %2783 = vmatpush1.msra.mxu0 0.0
    %2784 = vmatprep.subr.mxu0 0.0
    %2785 = vmatpush1.msra.mxu0 0.0
    %2786 = vmatprep.subr.mxu0 0.0
    %2787 = vmatpush1.msra.mxu0 0.0
    %2788 = vmatprep.subr.mxu0 0.0
    %2789 = vmatpush1.msra.mxu0 0.0
    %2790 = vmatprep.subr.mxu0 0.0
    %2791 = vmatpush1.msra.mxu0 0.0
    %2792 = vmatprep.subr.mxu0 0.0
    %2793 = vmatpush1.msra.mxu0 0.0
    %2794 = vmatprep.subr.mxu0 0.0
    %2795 = vmatpush1.msra.mxu0 0.0
    %2796 = vmatprep.subr.mxu0 0.0
    %2797 = vmatpush1.msra.mxu0 0.0
    %2798 = vmatprep.subr.mxu0 0.0
    %2799 = vmatpush1.msra.mxu0 %v2763
    %2800 = vmatprep.subr.mxu0 0.0
    %2801 = vmatpush2.msra.mxu0 0.0
    %2802 = vmatprep.subr.mxu0 0.0
    %2803 = vmatpush2.msra.mxu0 0.0
    %2804 = vmatprep.subr.mxu0 0.0
    %2805 = vmatpush2.msra.mxu0 0.0
    %2806 = vmatprep.subr.mxu0 0.0
    %2807 = vmatpush2.msra.mxu0 0.0
    %2808 = vmatprep.subr.mxu0 0.0
    %2809 = vmatpush2.msra.mxu0 0.0
    %2810 = vmatprep.subr.mxu0 0.0
    %2811 = vmatpush2.msra.mxu0 0.0
    %2812 = vmatprep.subr.mxu0 0.0
    %2813 = vmatpush2.msra.mxu0 0.0
    %2814 = vmatprep.subr.mxu0 0.0
    %2815 = vmatpush2.msra.mxu0 0.0
    %2816 = vmatprep.subr.mxu0 0.0
    %2817 = vmatpush2.msra.mxu0 0.0
    %2818 = vmatprep.subr.mxu0 0.0
    %2819 = vmatpush2.msra.mxu0 0.0
    %2820 = vmatprep.subr.mxu0 0.0
    %2821 = vmatpush2.msra.mxu0 0.0
    %2822 = vmatprep.subr.mxu0 0.0
    %2823 = vmatpush2.msra.mxu0 0.0
    %2824 = vmatprep.subr.mxu0 0.0
    %2825 = vmatpush2.msra.mxu0 0.0
    %2826 = vmatprep.subr.mxu0 0.0
    %2827 = vmatpush2.msra.mxu0 0.0
    %2828 = vmatprep.subr.mxu0 0.0
    %2829 = vmatpush2.msra.mxu0 0.0
    %2830 = vmatprep.subr.mxu0 0.0
    %2831 = vmatpush2.msra.mxu0 0.0
    %2832 = vmatprep.mubr.f32.mxu0 0.0
    %2833 = vmatmul.mubr.f32.gmra.mxu0 %v2766
    %v2834 = vpop.f32.mrf.mxu0
    %v2835 = vadd.f32 0.0, %v2834
    %v2836 = vpop.f32.mrf.mxu0
    %2837 = vdwg.mxu0
    %2838 = vrot.lane.b32.xlu0 %v2424, 96
    %v2839 = vpop.permute.xlu0 %2838
    %2840 = vrot.lane.b32.xlu0 %v2507, 96
    %v2841 = vpop.permute.xlu0 %2840
    %v2842 = vsel %vm1680, %v2839, 0
    %v2844 = vsel %vm1680, %v2841, 0
    %2846 = vmatprep.subr.mxu0 0.0
    %2847 = vmatpush1.xpose.msra.mxu0 0.0
    %2848 = vmatprep.subr.mxu0 0.0
    %2849 = vmatpush1.xpose.msra.mxu0 0.0
    %2850 = vmatprep.subr.mxu0 0.0
    %2851 = vmatpush1.xpose.msra.mxu0 0.0
    %2852 = vmatprep.subr.mxu0 0.0
    %2853 = vmatpush1.xpose.msra.mxu0 0.0
    %2854 = vmatprep.subr.mxu0 0.0
    %2855 = vmatpush1.xpose.msra.mxu0 0.0
    %2856 = vmatprep.subr.mxu0 0.0
    %2857 = vmatpush1.xpose.msra.mxu0 0.0
    %2858 = vmatprep.subr.mxu0 0.0
    %2859 = vmatpush1.xpose.msra.mxu0 0.0
    %2860 = vmatprep.subr.mxu0 0.0
    %2861 = vmatpush1.xpose.msra.mxu0 0.0
    %2862 = vmatprep.subr.mxu0 0.0
    %2863 = vmatpush1.xpose.msra.mxu0 0.0
    %2864 = vmatprep.subr.mxu0 0.0
    %2865 = vmatpush1.xpose.msra.mxu0 0.0
    %2866 = vmatprep.subr.mxu0 0.0
    %2867 = vmatpush1.xpose.msra.mxu0 0.0
    %2868 = vmatprep.subr.mxu0 0.0
    %2869 = vmatpush1.xpose.msra.mxu0 0.0
    %2870 = vmatprep.subr.mxu0 0.0
    %2871 = vmatpush1.xpose.msra.mxu0 0.0
    %2872 = vmatprep.subr.mxu0 0.0
    %2873 = vmatpush1.xpose.msra.mxu0 0.0
    %2874 = vmatprep.subr.mxu0 0.0
    %2875 = vmatpush1.xpose.msra.mxu0 0.0
    %2876 = vmatprep.subr.mxu0 0.0
    %2877 = vmatpush1.xpose.msra.mxu0 %v2844
    %2878 = vmatprep.subr.mxu0 0.0
    %2879 = vmatpush2.xpose.msra.mxu0 0.0
    %2880 = vmatprep.subr.mxu0 0.0
    %2881 = vmatpush2.xpose.msra.mxu0 0.0
    %2882 = vmatprep.subr.mxu0 0.0
    %2883 = vmatpush2.xpose.msra.mxu0 0.0
    %2884 = vmatprep.subr.mxu0 0.0
    %2885 = vmatpush2.xpose.msra.mxu0 0.0
    %2886 = vmatprep.subr.mxu0 0.0
    %2887 = vmatpush2.xpose.msra.mxu0 0.0
    %2888 = vmatprep.subr.mxu0 0.0
    %2889 = vmatpush2.xpose.msra.mxu0 0.0
    %2890 = vmatprep.subr.mxu0 0.0
    %2891 = vmatpush2.xpose.msra.mxu0 0.0
    %2892 = vmatprep.subr.mxu0 0.0
    %2893 = vmatpush2.xpose.msra.mxu0 0.0
    %2894 = vmatprep.subr.mxu0 0.0
    %2895 = vmatpush2.xpose.msra.mxu0 0.0
    %2896 = vmatprep.subr.mxu0 0.0
    %2897 = vmatpush2.xpose.msra.mxu0 0.0
    %2898 = vmatprep.subr.mxu0 0.0
    %2899 = vmatpush2.xpose.msra.mxu0 0.0
    %2900 = vmatprep.subr.mxu0 0.0
    %2901 = vmatpush2.xpose.msra.mxu0 0.0
    %2902 = vmatprep.subr.mxu0 0.0
    %2903 = vmatpush2.xpose.msra.mxu0 0.0
    %2904 = vmatprep.subr.mxu0 0.0
    %2905 = vmatpush2.xpose.msra.mxu0 0.0
    %2906 = vmatprep.subr.mxu0 0.0
    %2907 = vmatpush2.xpose.msra.mxu0 0.0
    %2908 = vmatprep.subr.mxu0 0.0
    %2909 = vmatpush2.xpose.msra.mxu0 0.0
    %2910 = vmatprep.mubr.f32.mxu0 0.0
    %2911 = vmatmul.mubr.f32.gmra.mxu0 %v2842
    %v2912 = vpop.f32.mrf.mxu0
    %v2913 = vadd.f32 %v2335, %v2912
    %v2914 = vpop.f32.mrf.mxu0
    %2915 = vdwg.mxu0
    %v2916 = vsel %vm1023, %v2913, -inf
    %2917 = vmax.xlane.f32.xlu0 %v2916
    %v2918 = vpop.xlane.xlu0 %2917
    %v2919 = vsub.f32 %v2913, %v2918
    %v2920 = vmul.f32 %v2919, 1.442695
    %v2921 = vpow.pop %v2920
    %v2922 = vsel %vm1023, %v2921, 0.0
    %2923 = vadd.xlane.f32.xlu0 %v2922
    %v2924 = vpop.xlane.xlu0 %2923
    %v2925 = vrcp.pop %v2924
    %v2926 = vmul.f32 %v2921, %v2925
    %2927 = vrot.lane.b32.xlu0 %v2507, 32
    %v2928 = vpop.permute.xlu0 %2927
    %v2931 = vsel %vm1023, %v2926, 0
    %2933 = vmatprep.subr.mxu0 0.0
    %2934 = vmatpush1.msra.mxu0 0.0
    %2935 = vmatprep.subr.mxu0 0.0
    %2936 = vmatpush1.msra.mxu0 0.0
    %2937 = vmatprep.subr.mxu0 0.0
    %2938 = vmatpush1.msra.mxu0 0.0
    %2939 = vmatprep.subr.mxu0 0.0
    %2940 = vmatpush1.msra.mxu0 0.0
    %2941 = vmatprep.subr.mxu0 0.0
    %2942 = vmatpush1.msra.mxu0 0.0
    %2943 = vmatprep.subr.mxu0 0.0
    %2944 = vmatpush1.msra.mxu0 0.0
    %2945 = vmatprep.subr.mxu0 0.0
    %2946 = vmatpush1.msra.mxu0 0.0
    %2947 = vmatprep.subr.mxu0 0.0
    %2948 = vmatpush1.msra.mxu0 0.0
    %2949 = vmatprep.subr.mxu0 0.0
    %2950 = vmatpush1.msra.mxu0 0.0
    %2951 = vmatprep.subr.mxu0 0.0
    %2952 = vmatpush1.msra.mxu0 0.0
    %2953 = vmatprep.subr.mxu0 0.0
    %2954 = vmatpush1.msra.mxu0 0.0
    %2955 = vmatprep.subr.mxu0 0.0
    %2956 = vmatpush1.msra.mxu0 0.0
    %2957 = vmatprep.subr.mxu0 0.0
    %2958 = vmatpush1.msra.mxu0 0.0
    %2959 = vmatprep.subr.mxu0 0.0
    %2960 = vmatpush1.msra.mxu0 0.0
    %2961 = vmatprep.subr.mxu0 0.0
    %2962 = vmatpush1.msra.mxu0 0.0
    %2963 = vmatprep.subr.mxu0 0.0
    %2964 = vmatpush1.msra.mxu0 %v2928
    %2965 = vmatprep.subr.mxu0 0.0
    %2966 = vmatpush2.msra.mxu0 0.0
    %2967 = vmatprep.subr.mxu0 0.0
    %2968 = vmatpush2.msra.mxu0 0.0
    %2969 = vmatprep.subr.mxu0 0.0
    %2970 = vmatpush2.msra.mxu0 0.0
    %2971 = vmatprep.subr.mxu0 0.0
    %2972 = vmatpush2.msra.mxu0 0.0
    %2973 = vmatprep.subr.mxu0 0.0
    %2974 = vmatpush2.msra.mxu0 0.0
    %2975 = vmatprep.subr.mxu0 0.0
    %2976 = vmatpush2.msra.mxu0 0.0
    %2977 = vmatprep.subr.mxu0 0.0
    %2978 = vmatpush2.msra.mxu0 0.0
    %2979 = vmatprep.subr.mxu0 0.0
    %2980 = vmatpush2.msra.mxu0 0.0
    %2981 = vmatprep.subr.mxu0 0.0
    %2982 = vmatpush2.msra.mxu0 0.0
    %2983 = vmatprep.subr.mxu0 0.0
    %2984 = vmatpush2.msra.mxu0 0.0
    %2985 = vmatprep.subr.mxu0 0.0
    %2986 = vmatpush2.msra.mxu0 0.0
    %2987 = vmatprep.subr.mxu0 0.0
    %2988 = vmatpush2.msra.mxu0 0.0
    %2989 = vmatprep.subr.mxu0 0.0
    %2990 = vmatpush2.msra.mxu0 0.0
    %2991 = vmatprep.subr.mxu0 0.0
    %2992 = vmatpush2.msra.mxu0 0.0
    %2993 = vmatprep.subr.mxu0 0.0
    %2994 = vmatpush2.msra.mxu0 0.0
    %2995 = vmatprep.subr.mxu0 0.0
    %2996 = vmatpush2.msra.mxu0 0.0
    %2997 = vmatprep.mubr.f32.mxu0 0.0
    %2998 = vmatmul.mubr.f32.gmra.mxu0 %v2931
    %v2999 = vpop.f32.mrf.mxu0
    %v3000 = vadd.f32 0.0, %v2999
    %v3001 = vpop.f32.mrf.mxu0
    %3002 = vdwg.mxu0
    %3003 = vrot.lane.b32.xlu0 %v2424, 80
    %v3004 = vpop.permute.xlu0 %3003
    %3005 = vrot.lane.b32.xlu0 %v2507, 80
    %v3006 = vpop.permute.xlu0 %3005
    %v3007 = vsel %vm1680, %v3004, 0
    %v3009 = vsel %vm1680, %v3006, 0
    %3011 = vmatprep.subr.mxu0 0.0
    %3012 = vmatpush1.xpose.msra.mxu0 0.0
    %3013 = vmatprep.subr.mxu0 0.0
    %3014 = vmatpush1.xpose.msra.mxu0 0.0
    %3015 = vmatprep.subr.mxu0 0.0
    %3016 = vmatpush1.xpose.msra.mxu0 0.0
    %3017 = vmatprep.subr.mxu0 0.0
    %3018 = vmatpush1.xpose.msra.mxu0 0.0
    %3019 = vmatprep.subr.mxu0 0.0
    %3020 = vmatpush1.xpose.msra.mxu0 0.0
    %3021 = vmatprep.subr.mxu0 0.0
    %3022 = vmatpush1.xpose.msra.mxu0 0.0
    %3023 = vmatprep.subr.mxu0 0.0
    %3024 = vmatpush1.xpose.msra.mxu0 0.0
    %3025 = vmatprep.subr.mxu0 0.0
    %3026 = vmatpush1.xpose.msra.mxu0 0.0
    %3027 = vmatprep.subr.mxu0 0.0
    %3028 = vmatpush1.xpose.msra.mxu0 0.0
    %3029 = vmatprep.subr.mxu0 0.0
    %3030 = vmatpush1.xpose.msra.mxu0 0.0
    %3031 = vmatprep.subr.mxu0 0.0
    %3032 = vmatpush1.xpose.msra.mxu0 0.0
    %3033 = vmatprep.subr.mxu0 0.0
    %3034 = vmatpush1.xpose.msra.mxu0 0.0
    %3035 = vmatprep.subr.mxu0 0.0
    %3036 = vmatpush1.xpose.msra.mxu0 0.0
    %3037 = vmatprep.subr.mxu0 0.0
    %3038 = vmatpush1.xpose.msra.mxu0 0.0
    %3039 = vmatprep.subr.mxu0 0.0
    %3040 = vmatpush1.xpose.msra.mxu0 0.0
    %3041 = vmatprep.subr.mxu0 0.0
    %3042 = vmatpush1.xpose.msra.mxu0 %v3009
    %3043 = vmatprep.subr.mxu0 0.0
    %3044 = vmatpush2.xpose.msra.mxu0 0.0
    %3045 = vmatprep.subr.mxu0 0.0
    %3046 = vmatpush2.xpose.msra.mxu0 0.0
    %3047 = vmatprep.subr.mxu0 0.0
    %3048 = vmatpush2.xpose.msra.mxu0 0.0
    %3049 = vmatprep.subr.mxu0 0.0
    %3050 = vmatpush2.xpose.msra.mxu0 0.0
    %3051 = vmatprep.subr.mxu0 0.0
    %3052 = vmatpush2.xpose.msra.mxu0 0.0
    %3053 = vmatprep.subr.mxu0 0.0
    %3054 = vmatpush2.xpose.msra.mxu0 0.0
    %3055 = vmatprep.subr.mxu0 0.0
    %3056 = vmatpush2.xpose.msra.mxu0 0.0
    %3057 = vmatprep.subr.mxu0 0.0
    %3058 = vmatpush2.xpose.msra.mxu0 0.0
    %3059 = vmatprep.subr.mxu0 0.0
    %3060 = vmatpush2.xpose.msra.mxu0 0.0
    %3061 = vmatprep.subr.mxu0 0.0
    %3062 = vmatpush2.xpose.msra.mxu0 0.0
    %3063 = vmatprep.subr.mxu0 0.0
    %3064 = vmatpush2.xpose.msra.mxu0 0.0
    %3065 = vmatprep.subr.mxu0 0.0
    %3066 = vmatpush2.xpose.msra.mxu0 0.0
    %3067 = vmatprep.subr.mxu0 0.0
    %3068 = vmatpush2.xpose.msra.mxu0 0.0
    %3069 = vmatprep.subr.mxu0 0.0
    %3070 = vmatpush2.xpose.msra.mxu0 0.0
    %3071 = vmatprep.subr.mxu0 0.0
    %3072 = vmatpush2.xpose.msra.mxu0 0.0
    %3073 = vmatprep.subr.mxu0 0.0
    %3074 = vmatpush2.xpose.msra.mxu0 0.0
    %3075 = vmatprep.mubr.f32.mxu0 0.0
    %3076 = vmatmul.mubr.f32.gmra.mxu0 %v3007
    %v3077 = vpop.f32.mrf.mxu0
    %v3078 = vadd.f32 %v2335, %v3077
    %v3079 = vpop.f32.mrf.mxu0
    %3080 = vdwg.mxu0
    %v3081 = vsel %vm1023, %v3078, -inf
    %3082 = vmax.xlane.f32.xlu0 %v3081
    %v3083 = vpop.xlane.xlu0 %3082
    %v3084 = vsub.f32 %v3078, %v3083
    %v3085 = vmul.f32 %v3084, 1.442695
    %v3086 = vpow.pop %v3085
    %v3087 = vsel %vm1023, %v3086, 0.0
    %3088 = vadd.xlane.f32.xlu0 %v3087
    %v3089 = vpop.xlane.xlu0 %3088
    %v3090 = vrcp.pop %v3089
    %v3091 = vmul.f32 %v3086, %v3090
    %3092 = vrot.lane.b32.xlu0 %v2507, 16
    %v3093 = vpop.permute.xlu0 %3092
    %v3096 = vsel %vm1023, %v3091, 0
    %3098 = vmatprep.subr.mxu0 0.0
    %3099 = vmatpush1.msra.mxu0 0.0
    %3100 = vmatprep.subr.mxu0 0.0
    %3101 = vmatpush1.msra.mxu0 0.0
    %3102 = vmatprep.subr.mxu0 0.0
    %3103 = vmatpush1.msra.mxu0 0.0
    %3104 = vmatprep.subr.mxu0 0.0
    %3105 = vmatpush1.msra.mxu0 0.0
    %3106 = vmatprep.subr.mxu0 0.0
    %3107 = vmatpush1.msra.mxu0 0.0
    %3108 = vmatprep.subr.mxu0 0.0
    %3109 = vmatpush1.msra.mxu0 0.0
    %3110 = vmatprep.subr.mxu0 0.0
    %3111 = vmatpush1.msra.mxu0 0.0
    %3112 = vmatprep.subr.mxu0 0.0
    %3113 = vmatpush1.msra.mxu0 0.0
    %3114 = vmatprep.subr.mxu0 0.0
    %3115 = vmatpush1.msra.mxu0 0.0
    %3116 = vmatprep.subr.mxu0 0.0
    %3117 = vmatpush1.msra.mxu0 0.0
    %3118 = vmatprep.subr.mxu0 0.0
    %3119 = vmatpush1.msra.mxu0 0.0
    %3120 = vmatprep.subr.mxu0 0.0
    %3121 = vmatpush1.msra.mxu0 0.0
    %3122 = vmatprep.subr.mxu0 0.0
    %3123 = vmatpush1.msra.mxu0 0.0
    %3124 = vmatprep.subr.mxu0 0.0
    %3125 = vmatpush1.msra.mxu0 0.0
    %3126 = vmatprep.subr.mxu0 0.0
    %3127 = vmatpush1.msra.mxu0 0.0
    %3128 = vmatprep.subr.mxu0 0.0
    %3129 = vmatpush1.msra.mxu0 %v3093
    %3130 = vmatprep.subr.mxu0 0.0
    %3131 = vmatpush2.msra.mxu0 0.0
    %3132 = vmatprep.subr.mxu0 0.0
    %3133 = vmatpush2.msra.mxu0 0.0
    %3134 = vmatprep.subr.mxu0 0.0
    %3135 = vmatpush2.msra.mxu0 0.0
    %3136 = vmatprep.subr.mxu0 0.0
    %3137 = vmatpush2.msra.mxu0 0.0
    %3138 = vmatprep.subr.mxu0 0.0
    %3139 = vmatpush2.msra.mxu0 0.0
    %3140 = vmatprep.subr.mxu0 0.0
    %3141 = vmatpush2.msra.mxu0 0.0
    %3142 = vmatprep.subr.mxu0 0.0
    %3143 = vmatpush2.msra.mxu0 0.0
    %3144 = vmatprep.subr.mxu0 0.0
    %3145 = vmatpush2.msra.mxu0 0.0
    %3146 = vmatprep.subr.mxu0 0.0
    %3147 = vmatpush2.msra.mxu0 0.0
    %3148 = vmatprep.subr.mxu0 0.0
    %3149 = vmatpush2.msra.mxu0 0.0
    %3150 = vmatprep.subr.mxu0 0.0
    %3151 = vmatpush2.msra.mxu0 0.0
    %3152 = vmatprep.subr.mxu0 0.0
    %3153 = vmatpush2.msra.mxu0 0.0
    %3154 = vmatprep.subr.mxu0 0.0
    %3155 = vmatpush2.msra.mxu0 0.0
    %3156 = vmatprep.subr.mxu0 0.0
    %3157 = vmatpush2.msra.mxu0 0.0
    %3158 = vmatprep.subr.mxu0 0.0
    %3159 = vmatpush2.msra.mxu0 0.0
    %3160 = vmatprep.subr.mxu0 0.0
    %3161 = vmatpush2.msra.mxu0 0.0
    %3162 = vmatprep.mubr.f32.mxu0 0.0
    %3163 = vmatmul.mubr.f32.gmra.mxu0 %v3096
    %v3164 = vpop.f32.mrf.mxu0
    %v3165 = vadd.f32 0.0, %v3164
    %v3166 = vpop.f32.mrf.mxu0
    %3167 = vdwg.mxu0
    %3169 = vrot.lane.b32.xlu0 %v2835, 16
    %v3170 = vpop.permute.xlu0 %3169
    %3173 = vrot.lane.b32.xlu0 %v3000, 32
    %v3174 = vpop.permute.xlu0 %3173
    %3177 = vrot.lane.b32.xlu0 %v3165, 48
    %v3178 = vpop.permute.xlu0 %3177
    %v3180 = vsel %vm1680, %v2670, %v3170
    %v3181 = vsel %vm1689, %v3180, %v3174
    %v3182 = vsel %vm1711, %v3181, %v3178
    %v3183 = vld [vmem:[%s43] sm:$0xff]
    %v3184 = vld [vmem:[%s43 + $0x8] sm:$0xff]
    %v3185 = vld [vmem:[%s43 + $0x10] sm:$0xff]
    %v3186 = vld [vmem:[%s43 + $0x18] sm:$0xff]
    %v3187 = vld [vmem:[%s43 + $0x20] sm:$0xff]
    %v3188 = vld [vmem:[%s43 + $0x28] sm:$0xff]
    %v3189 = vld [vmem:[%s43 + $0x30] sm:$0xff]
    %v3190 = vld [vmem:[%s43 + $0x38] sm:$0xff]
    %v3191 = vld [vmem:[%s45] sm:$0x1]
    %v3193 = vlaneseq
    %v3194 = vshrl.u32 %v3193, 7
    %v3195 = vsub.s32 0, %v3194
    %v3196 = vrot.slane %v3191, %v3195
    %v3199 = vsel %vm1893, %v3182, 0
    %3201 = vmatprep.subr.mxu0 0.0
    %3202 = vmatpush1.msra.mxu0 0.0
    %3203 = vmatprep.subr.mxu0 0.0
    %3204 = vmatpush1.msra.mxu0 0.0
    %3205 = vmatprep.subr.mxu0 0.0
    %3206 = vmatpush1.msra.mxu0 0.0
    %3207 = vmatprep.subr.mxu0 0.0
    %3208 = vmatpush1.msra.mxu0 0.0
    %3209 = vmatprep.subr.mxu0 0.0
    %3210 = vmatpush1.msra.mxu0 0.0
    %3211 = vmatprep.subr.mxu0 0.0
    %3212 = vmatpush1.msra.mxu0 0.0
    %3213 = vmatprep.subr.mxu0 0.0
    %3214 = vmatpush1.msra.mxu0 0.0
    %3215 = vmatprep.subr.mxu0 0.0
    %3216 = vmatpush1.msra.mxu0 0.0
    %3217 = vmatprep.subr.mxu0 0.0
    %3218 = vmatpush1.msra.mxu0 %v3190
    %3219 = vmatprep.subr.mxu0 0.0
    %3220 = vmatpush1.msra.mxu0 %v3189
    %3221 = vmatprep.subr.mxu0 0.0
    %3222 = vmatpush1.msra.mxu0 %v3188
    %3223 = vmatprep.subr.mxu0 0.0
    %3224 = vmatpush1.msra.mxu0 %v3187
    %3225 = vmatprep.subr.mxu0 0.0
    %3226 = vmatpush1.msra.mxu0 %v3186
    %3227 = vmatprep.subr.mxu0 0.0
    %3228 = vmatpush1.msra.mxu0 %v3185
    %3229 = vmatprep.subr.mxu0 0.0
    %3230 = vmatpush1.msra.mxu0 %v3184
    %3231 = vmatprep.subr.mxu0 0.0
    %3232 = vmatpush1.msra.mxu0 %v3183
    %3233 = vmatprep.subr.mxu0 0.0
    %3234 = vmatpush2.msra.mxu0 0.0
    %3235 = vmatprep.subr.mxu0 0.0
    %3236 = vmatpush2.msra.mxu0 0.0
    %3237 = vmatprep.subr.mxu0 0.0
    %3238 = vmatpush2.msra.mxu0 0.0
    %3239 = vmatprep.subr.mxu0 0.0
    %3240 = vmatpush2.msra.mxu0 0.0
    %3241 = vmatprep.subr.mxu0 0.0
    %3242 = vmatpush2.msra.mxu0 0.0
    %3243 = vmatprep.subr.mxu0 0.0
    %3244 = vmatpush2.msra.mxu0 0.0
    %3245 = vmatprep.subr.mxu0 0.0
    %3246 = vmatpush2.msra.mxu0 0.0
    %3247 = vmatprep.subr.mxu0 0.0
    %3248 = vmatpush2.msra.mxu0 0.0
    %3249 = vmatprep.subr.mxu0 0.0
    %3250 = vmatpush2.msra.mxu0 0.0
    %3251 = vmatprep.subr.mxu0 0.0
    %3252 = vmatpush2.msra.mxu0 0.0
    %3253 = vmatprep.subr.mxu0 0.0
    %3254 = vmatpush2.msra.mxu0 0.0
    %3255 = vmatprep.subr.mxu0 0.0
    %3256 = vmatpush2.msra.mxu0 0.0
    %3257 = vmatprep.subr.mxu0 0.0
    %3258 = vmatpush2.msra.mxu0 0.0
    %3259 = vmatprep.subr.mxu0 0.0
    %3260 = vmatpush2.msra.mxu0 0.0
    %3261 = vmatprep.subr.mxu0 0.0
    %3262 = vmatpush2.msra.mxu0 0.0
    %3263 = vmatprep.subr.mxu0 0.0
    %3264 = vmatpush2.msra.mxu0 0.0
    %3265 = vmatprep.mubr.f32.mxu0 0.0
    %3266 = vmatmul.mubr.f32.gmra.mxu0 %v3199
    %v3267 = vpop.f32.mrf.mxu0
    %v3268 = vadd.f32 %v3196, %v3267
    %v3269 = vpop.f32.mrf.mxu0
    %3270 = vdwg.mxu0
    %v3271 = vadd.f32 %v2327, %v3268
    %v3272 = vld [vmem:[%s47] sm:$0x1]
    %v3273 = vld [vmem:[%s49] sm:$0x1]
    %v3274 = vsel %vm1893, %v3271, 0.0
    %3275 = vadd.xlane.f32.xlu0 %v3274
    %v3276 = vpop.xlane.xlu0 %3275
    %v3277 = vrcp.pop 64.0
    %v3278 = vmul.f32 %v3276, %v3277
    %v3279 = vsub.f32 %v3271, %v3278
    %v3280 = vmul.f32 %v3279, %v3279
    %v3281 = vsel %vm1893, %v3280, 0.0
    %3282 = vadd.xlane.f32.xlu0 %v3281
    %v3283 = vpop.xlane.xlu0 %3282
    %v3284 = vmul.f32 %v3283, %v3277
    %v3285 = vadd.f32 %v3284, 1e-05
    %v3286 = vrsqrt.pop %v3285
    %v3287 = vmul.f32 %v3279, %v3286
    %v3289 = vlaneseq
    %v3290 = vshrl.u32 %v3289, 7
    %v3291 = vsub.s32 0, %v3290
    %v3292 = vrot.slane %v3272, %v3291
    %v3294 = vmul.f32 %v3287, %v3292
    %v3296 = vlaneseq
    %v3297 = vshrl.u32 %v3296, 7
    %v3298 = vsub.s32 0, %v3297
    %v3299 = vrot.slane %v3273, %v3298
    %v3301 = vadd.f32 %v3294, %v3299
    %v3302 = vld [vmem:[%s51] sm:$0xff]
    %v3303 = vld [vmem:[%s51 + $0x8] sm:$0xff]
    %v3304 = vld [vmem:[%s51 + $0x10] sm:$0xff]
    %v3305 = vld [vmem:[%s51 + $0x18] sm:$0xff]
    %v3306 = vld [vmem:[%s51 + $0x20] sm:$0xff]
    %v3307 = vld [vmem:[%s51 + $0x28] sm:$0xff]
    %v3308 = vld [vmem:[%s51 + $0x30] sm:$0xff]
    %v3309 = vld [vmem:[%s51 + $0x38] sm:$0xff]
    %v3310 = vld [vmem:[%s53] sm:$0x1]
    %v3312 = vlaneseq
    %v3313 = vshrl.u32 %v3312, 7
    %v3314 = vsub.s32 0, %v3313
    %v3315 = vrot.slane %v3310, %v3314
    %v3318 = vsel %vm1893, %v3301, 0
    %3320 = vmatprep.subr.mxu0 0.0
    %3321 = vmatpush1.msra.mxu0 0.0
    %3322 = vmatprep.subr.mxu0 0.0
    %3323 = vmatpush1.msra.mxu0 0.0
    %3324 = vmatprep.subr.mxu0 0.0
    %3325 = vmatpush1.msra.mxu0 0.0
    %3326 = vmatprep.subr.mxu0 0.0
    %3327 = vmatpush1.msra.mxu0 0.0
    %3328 = vmatprep.subr.mxu0 0.0
    %3329 = vmatpush1.msra.mxu0 0.0
    %3330 = vmatprep.subr.mxu0 0.0
    %3331 = vmatpush1.msra.mxu0 0.0
    %3332 = vmatprep.subr.mxu0 0.0
    %3333 = vmatpush1.msra.mxu0 0.0
    %3334 = vmatprep.subr.mxu0 0.0
    %3335 = vmatpush1.msra.mxu0 0.0
    %3336 = vmatprep.subr.mxu0 0.0
    %3337 = vmatpush1.msra.mxu0 %v3309
    %3338 = vmatprep.subr.mxu0 0.0
    %3339 = vmatpush1.msra.mxu0 %v3308
    %3340 = vmatprep.subr.mxu0 0.0
    %3341 = vmatpush1.msra.mxu0 %v3307
    %3342 = vmatprep.subr.mxu0 0.0
    %3343 = vmatpush1.msra.mxu0 %v3306
    %3344 = vmatprep.subr.mxu0 0.0
    %3345 = vmatpush1.msra.mxu0 %v3305
    %3346 = vmatprep.subr.mxu0 0.0
    %3347 = vmatpush1.msra.mxu0 %v3304
    %3348 = vmatprep.subr.mxu0 0.0
    %3349 = vmatpush1.msra.mxu0 %v3303
    %3350 = vmatprep.subr.mxu0 0.0
    %3351 = vmatpush1.msra.mxu0 %v3302
    %3352 = vmatprep.subr.mxu0 0.0
    %3353 = vmatpush2.msra.mxu0 0.0
    %3354 = vmatprep.subr.mxu0 0.0
    %3355 = vmatpush2.msra.mxu0 0.0
    %3356 = vmatprep.subr.mxu0 0.0
    %3357 = vmatpush2.msra.mxu0 0.0
    %3358 = vmatprep.subr.mxu0 0.0
    %3359 = vmatpush2.msra.mxu0 0.0
    %3360 = vmatprep.subr.mxu0 0.0
    %3361 = vmatpush2.msra.mxu0 0.0
    %3362 = vmatprep.subr.mxu0 0.0
    %3363 = vmatpush2.msra.mxu0 0.0
    %3364 = vmatprep.subr.mxu0 0.0
    %3365 = vmatpush2.msra.mxu0 0.0
    %3366 = vmatprep.subr.mxu0 0.0
    %3367 = vmatpush2.msra.mxu0 0.0
    %3368 = vmatprep.subr.mxu0 0.0
    %3369 = vmatpush2.msra.mxu0 0.0
    %3370 = vmatprep.subr.mxu0 0.0
    %3371 = vmatpush2.msra.mxu0 0.0
    %3372 = vmatprep.subr.mxu0 0.0
    %3373 = vmatpush2.msra.mxu0 0.0
    %3374 = vmatprep.subr.mxu0 0.0
    %3375 = vmatpush2.msra.mxu0 0.0
    %3376 = vmatprep.subr.mxu0 0.0
    %3377 = vmatpush2.msra.mxu0 0.0
    %3378 = vmatprep.subr.mxu0 0.0
    %3379 = vmatpush2.msra.mxu0 0.0
    %3380 = vmatprep.subr.mxu0 0.0
    %3381 = vmatpush2.msra.mxu0 0.0
    %3382 = vmatprep.subr.mxu0 0.0
    %3383 = vmatpush2.msra.mxu0 0.0
    %3384 = vmatprep.mubr.f32.mxu0 0.0
    %3385 = vmatmul.mubr.f32.gmra.mxu0 %v3318
    %v3386 = vpop.f32.mrf.mxu0
    %v3387 = vadd.f32 %v3315, %v3386
    %v3388 = vpop.f32.mrf.mxu0
    %3389 = vdwg.mxu0
    %v3390 = vmax.f32 %v3387, 0.0
    %v3391 = vld [vmem:[%s55] sm:$0xff]
    %v3392 = vld [vmem:[%s55 + $0x8] sm:$0xff]
    %v3393 = vld [vmem:[%s55 + $0x10] sm:$0xff]
    %v3394 = vld [vmem:[%s55 + $0x18] sm:$0xff]
    %v3395 = vld [vmem:[%s57] sm:$0x1]
    %v3397 = vlaneseq
    %v3398 = vshrl.u32 %v3397, 7
    %v3399 = vsub.s32 0, %v3398
    %v3400 = vrot.slane %v3395, %v3399
    %v3403 = vsel %vm1689, %v3390, 0
    %3405 = vmatprep.subr.mxu0 0.0
    %3406 = vmatpush1.msra.mxu0 0.0
    %3407 = vmatprep.subr.mxu0 0.0
    %3408 = vmatpush1.msra.mxu0 0.0
    %3409 = vmatprep.subr.mxu0 0.0
    %3410 = vmatpush1.msra.mxu0 0.0
    %3411 = vmatprep.subr.mxu0 0.0
    %3412 = vmatpush1.msra.mxu0 0.0
    %3413 = vmatprep.subr.mxu0 0.0
    %3414 = vmatpush1.msra.mxu0 0.0
    %3415 = vmatprep.subr.mxu0 0.0
    %3416 = vmatpush1.msra.mxu0 0.0
    %3417 = vmatprep.subr.mxu0 0.0
    %3418 = vmatpush1.msra.mxu0 0.0
    %3419 = vmatprep.subr.mxu0 0.0
    %3420 = vmatpush1.msra.mxu0 0.0
    %3421 = vmatprep.subr.mxu0 0.0
    %3422 = vmatpush1.msra.mxu0 0.0
    %3423 = vmatprep.subr.mxu0 0.0
    %3424 = vmatpush1.msra.mxu0 0.0
    %3425 = vmatprep.subr.mxu0 0.0
    %3426 = vmatpush1.msra.mxu0 0.0
    %3427 = vmatprep.subr.mxu0 0.0
    %3428 = vmatpush1.msra.mxu0 0.0
    %3429 = vmatprep.subr.mxu0 0.0
    %3430 = vmatpush1.msra.mxu0 %v3394
    %3431 = vmatprep.subr.mxu0 0.0
    %3432 = vmatpush1.msra.mxu0 %v3393
    %3433 = vmatprep.subr.mxu0 0.0
    %3434 = vmatpush1.msra.mxu0 %v3392
    %3435 = vmatprep.subr.mxu0 0.0
    %3436 = vmatpush1.msra.mxu0 %v3391
    %3437 = vmatprep.subr.mxu0 0.0
    %3438 = vmatpush2.msra.mxu0 0.0
    %3439 = vmatprep.subr.mxu0 0.0
    %3440 = vmatpush2.msra.mxu0 0.0
    %3441 = vmatprep.subr.mxu0 0.0
    %3442 = vmatpush2.msra.mxu0 0.0
    %3443 = vmatprep.subr.mxu0 0.0
    %3444 = vmatpush2.msra.mxu0 0.0
    %3445 = vmatprep.subr.mxu0 0.0
    %3446 = vmatpush2.msra.mxu0 0.0
    %3447 = vmatprep.subr.mxu0 0.0
    %3448 = vmatpush2.msra.mxu0 0.0
    %3449 = vmatprep.subr.mxu0 0.0
    %3450 = vmatpush2.msra.mxu0 0.0
    %3451 = vmatprep.subr.mxu0 0.0
    %3452 = vmatpush2.msra.mxu0 0.0
    %3453 = vmatprep.subr.mxu0 0.0
    %3454 = vmatpush2.msra.mxu0 0.0
    %3455 = vmatprep.subr.mxu0 0.0
    %3456 = vmatpush2.msra.mxu0 0.0
    %3457 = vmatprep.subr.mxu0 0.0
    %3458 = vmatpush2.msra.mxu0 0.0
    %3459 = vmatprep.subr.mxu0 0.0
    %3460 = vmatpush2.msra.mxu0 0.0
    %3461 = vmatprep.subr.mxu0 0.0
    %3462 = vmatpush2.msra.mxu0 0.0
    %3463 = vmatprep.subr.mxu0 0.0
    %3464 = vmatpush2.msra.mxu0 0.0
    %3465 = vmatprep.subr.mxu0 0.0
    %3466 = vmatpush2.msra.mxu0 0.0
    %3467 = vmatprep.subr.mxu0 0.0
    %3468 = vmatpush2.msra.mxu0 0.0
    %3469 = vmatprep.mubr.f32.mxu0 0.0
    %3470 = vmatmul.mubr.f32.gmra.mxu0 %v3403
    %v3471 = vpop.f32.mrf.mxu0
    %v3472 = vadd.f32 %v3400, %v3471
    %v3473 = vpop.f32.mrf.mxu0
    %3474 = vdwg.mxu0
    %v3475 = vadd.f32 %v3301, %v3472
    %v3476 = vld [vmem:[%s59] sm:$0x1]
    %v3477 = vld [vmem:[%s61] sm:$0x1]
    %v3478 = vsel %vm1893, %v3475, 0.0
    %3479 = vadd.xlane.f32.xlu0 %v3478
    %v3480 = vpop.xlane.xlu0 %3479
    %v3481 = vmul.f32 %v3480, %v3277
    %v3482 = vsub.f32 %v3475, %v3481
    %v3483 = vmul.f32 %v3482, %v3482
    %v3484 = vsel %vm1893, %v3483, 0.0
    %3485 = vadd.xlane.f32.xlu0 %v3484
    %v3486 = vpop.xlane.xlu0 %3485
    %v3487 = vmul.f32 %v3486, %v3277
    %v3488 = vadd.f32 %v3487, 1e-05
    %v3489 = vrsqrt.pop %v3488
    %v3490 = vmul.f32 %v3482, %v3489
    %v3492 = vlaneseq
    %v3493 = vshrl.u32 %v3492, 7
    %v3494 = vsub.s32 0, %v3493
    %v3495 = vrot.slane %v3476, %v3494
    %v3497 = vmul.f32 %v3490, %v3495
    %v3499 = vlaneseq
    %v3500 = vshrl.u32 %v3499, 7
    %v3501 = vsub.s32 0, %v3500
    %v3502 = vrot.slane %v3477, %v3501
    %v3504 = vadd.f32 %v3497, %v3502
    %v3505 = vld [vmem:[%s63] sm:$0xff]
    %v3506 = vld [vmem:[%s63 + $0x8] sm:$0xff]
    %v3507 = vld [vmem:[%s63 + $0x10] sm:$0xff]
    %v3508 = vld [vmem:[%s63 + $0x18] sm:$0xff]
    %v3509 = vld [vmem:[%s63 + $0x20] sm:$0xff]
    %v3510 = vld [vmem:[%s63 + $0x28] sm:$0xff]
    %v3511 = vld [vmem:[%s63 + $0x30] sm:$0xff]
    %v3512 = vld [vmem:[%s63 + $0x38] sm:$0xff]
    %v3513 = vld [vmem:[%s65] sm:$0x1]
    %v3515 = vlaneseq
    %v3516 = vshrl.u32 %v3515, 7
    %v3517 = vsub.s32 0, %v3516
    %v3518 = vrot.slane %v3513, %v3517
    %v3521 = vsel %vm1893, %v2332, 0
    %3523 = vmatprep.subr.mxu0 0.0
    %3524 = vmatpush1.msra.mxu0 0.0
    %3525 = vmatprep.subr.mxu0 0.0
    %3526 = vmatpush1.msra.mxu0 0.0
    %3527 = vmatprep.subr.mxu0 0.0
    %3528 = vmatpush1.msra.mxu0 0.0
    %3529 = vmatprep.subr.mxu0 0.0
    %3530 = vmatpush1.msra.mxu0 0.0
    %3531 = vmatprep.subr.mxu0 0.0
    %3532 = vmatpush1.msra.mxu0 0.0
    %3533 = vmatprep.subr.mxu0 0.0
    %3534 = vmatpush1.msra.mxu0 0.0
    %3535 = vmatprep.subr.mxu0 0.0
    %3536 = vmatpush1.msra.mxu0 0.0
    %3537 = vmatprep.subr.mxu0 0.0
    %3538 = vmatpush1.msra.mxu0 0.0
    %3539 = vmatprep.subr.mxu0 0.0
    %3540 = vmatpush1.msra.mxu0 %v3512
    %3541 = vmatprep.subr.mxu0 0.0
    %3542 = vmatpush1.msra.mxu0 %v3511
    %3543 = vmatprep.subr.mxu0 0.0
    %3544 = vmatpush1.msra.mxu0 %v3510
    %3545 = vmatprep.subr.mxu0 0.0
    %3546 = vmatpush1.msra.mxu0 %v3509
    %3547 = vmatprep.subr.mxu0 0.0
    %3548 = vmatpush1.msra.mxu0 %v3508
    %3549 = vmatprep.subr.mxu0 0.0
    %3550 = vmatpush1.msra.mxu0 %v3507
    %3551 = vmatprep.subr.mxu0 0.0
    %3552 = vmatpush1.msra.mxu0 %v3506
    %3553 = vmatprep.subr.mxu0 0.0
    %3554 = vmatpush1.msra.mxu0 %v3505
    %3555 = vmatprep.subr.mxu0 0.0
    %3556 = vmatpush2.msra.mxu0 0.0
    %3557 = vmatprep.subr.mxu0 0.0
    %3558 = vmatpush2.msra.mxu0 0.0
    %3559 = vmatprep.subr.mxu0 0.0
    %3560 = vmatpush2.msra.mxu0 0.0
    %3561 = vmatprep.subr.mxu0 0.0
    %3562 = vmatpush2.msra.mxu0 0.0
    %3563 = vmatprep.subr.mxu0 0.0
    %3564 = vmatpush2.msra.mxu0 0.0
    %3565 = vmatprep.subr.mxu0 0.0
    %3566 = vmatpush2.msra.mxu0 0.0
    %3567 = vmatprep.subr.mxu0 0.0
    %3568 = vmatpush2.msra.mxu0 0.0
    %3569 = vmatprep.subr.mxu0 0.0
    %3570 = vmatpush2.msra.mxu0 0.0
    %3571 = vmatprep.subr.mxu0 0.0
    %3572 = vmatpush2.msra.mxu0 0.0
    %3573 = vmatprep.subr.mxu0 0.0
    %3574 = vmatpush2.msra.mxu0 0.0
    %3575 = vmatprep.subr.mxu0 0.0
    %3576 = vmatpush2.msra.mxu0 0.0
    %3577 = vmatprep.subr.mxu0 0.0
    %3578 = vmatpush2.msra.mxu0 0.0
    %3579 = vmatprep.subr.mxu0 0.0
    %3580 = vmatpush2.msra.mxu0 0.0
    %3581 = vmatprep.subr.mxu0 0.0
    %3582 = vmatpush2.msra.mxu0 0.0
    %3583 = vmatprep.subr.mxu0 0.0
    %3584 = vmatpush2.msra.mxu0 0.0
    %3585 = vmatprep.subr.mxu0 0.0
    %3586 = vmatpush2.msra.mxu0 0.0
    %3587 = vmatprep.mubr.f32.mxu0 0.0
    %3588 = vmatmul.mubr.f32.gmra.mxu0 %v3521
    %v3589 = vpop.f32.mrf.mxu0
    %v3590 = vadd.f32 %v3518, %v3589
    %v3591 = vpop.f32.mrf.mxu0
    %3592 = vdwg.mxu0
    %v3593 = vmul.f32 %v3590, 0.25
    %v3594 = vld [vmem:[%s67] sm:$0xff]
    %v3595 = vld [vmem:[%s67 + $0x8] sm:$0xff]
    %v3596 = vld [vmem:[%s67 + $0x10] sm:$0xff]
    %v3597 = vld [vmem:[%s67 + $0x18] sm:$0xff]
    %v3598 = vld [vmem:[%s67 + $0x20] sm:$0xff]
    %v3599 = vld [vmem:[%s67 + $0x28] sm:$0xff]
    %v3600 = vld [vmem:[%s67 + $0x30] sm:$0xff]
    %v3601 = vld [vmem:[%s67 + $0x38] sm:$0xff]
    %v3602 = vld [vmem:[%s69] sm:$0x1]
    %v3604 = vlaneseq
    %v3605 = vshrl.u32 %v3604, 7
    %v3606 = vsub.s32 0, %v3605
    %v3607 = vrot.slane %v3602, %v3606
    %3609 = vmatprep.subr.mxu0 0.0
    %3610 = vmatpush1.msra.mxu0 0.0
    %3611 = vmatprep.subr.mxu0 0.0
    %3612 = vmatpush1.msra.mxu0 0.0
    %3613 = vmatprep.subr.mxu0 0.0
    %3614 = vmatpush1.msra.mxu0 0.0
    %3615 = vmatprep.subr.mxu0 0.0
    %3616 = vmatpush1.msra.mxu0 0.0
    %3617 = vmatprep.subr.mxu0 0.0
    %3618 = vmatpush1.msra.mxu0 0.0
    %3619 = vmatprep.subr.mxu0 0.0
    %3620 = vmatpush1.msra.mxu0 0.0
    %3621 = vmatprep.subr.mxu0 0.0
    %3622 = vmatpush1.msra.mxu0 0.0
    %3623 = vmatprep.subr.mxu0 0.0
    %3624 = vmatpush1.msra.mxu0 0.0
    %3625 = vmatprep.subr.mxu0 0.0
    %3626 = vmatpush1.msra.mxu0 %v3601
    %3627 = vmatprep.subr.mxu0 0.0
    %3628 = vmatpush1.msra.mxu0 %v3600
    %3629 = vmatprep.subr.mxu0 0.0
    %3630 = vmatpush1.msra.mxu0 %v3599
    %3631 = vmatprep.subr.mxu0 0.0
    %3632 = vmatpush1.msra.mxu0 %v3598
    %3633 = vmatprep.subr.mxu0 0.0
    %3634 = vmatpush1.msra.mxu0 %v3597
    %3635 = vmatprep.subr.mxu0 0.0
    %3636 = vmatpush1.msra.mxu0 %v3596
    %3637 = vmatprep.subr.mxu0 0.0
    %3638 = vmatpush1.msra.mxu0 %v3595
    %3639 = vmatprep.subr.mxu0 0.0
    %3640 = vmatpush1.msra.mxu0 %v3594
    %3641 = vmatprep.subr.mxu0 0.0
    %3642 = vmatpush2.msra.mxu0 0.0
    %3643 = vmatprep.subr.mxu0 0.0
    %3644 = vmatpush2.msra.mxu0 0.0
    %3645 = vmatprep.subr.mxu0 0.0
    %3646 = vmatpush2.msra.mxu0 0.0
    %3647 = vmatprep.subr.mxu0 0.0
    %3648 = vmatpush2.msra.mxu0 0.0
    %3649 = vmatprep.subr.mxu0 0.0
    %3650 = vmatpush2.msra.mxu0 0.0
    %3651 = vmatprep.subr.mxu0 0.0
    %3652 = vmatpush2.msra.mxu0 0.0
    %3653 = vmatprep.subr.mxu0 0.0
    %3654 = vmatpush2.msra.mxu0 0.0
    %3655 = vmatprep.subr.mxu0 0.0
    %3656 = vmatpush2.msra.mxu0 0.0
    %3657 = vmatprep.subr.mxu0 0.0
    %3658 = vmatpush2.msra.mxu0 0.0
    %3659 = vmatprep.subr.mxu0 0.0
    %3660 = vmatpush2.msra.mxu0 0.0
    %3661 = vmatprep.subr.mxu0 0.0
    %3662 = vmatpush2.msra.mxu0 0.0
    %3663 = vmatprep.subr.mxu0 0.0
    %3664 = vmatpush2.msra.mxu0 0.0
    %3665 = vmatprep.subr.mxu0 0.0
    %3666 = vmatpush2.msra.mxu0 0.0
    %3667 = vmatprep.subr.mxu0 0.0
    %3668 = vmatpush2.msra.mxu0 0.0
    %3669 = vmatprep.subr.mxu0 0.0
    %3670 = vmatpush2.msra.mxu0 0.0
    %3671 = vmatprep.subr.mxu0 0.0
    %3672 = vmatpush2.msra.mxu0 0.0
    %3673 = vmatprep.mubr.f32.mxu0 0.0
    %3674 = vmatmul.mubr.f32.gmra.mxu0 %v3521
    %v3675 = vpop.f32.mrf.mxu0
    %v3676 = vadd.f32 %v3607, %v3675
    %v3677 = vpop.f32.mrf.mxu0
    %3678 = vdwg.mxu0
    %v3680 = vsel %vm1680, %v3593, 0
    %v3683 = vsel %vm1680, %v3676, 0
    %3685 = vmatprep.subr.mxu0 0.0
    %3686 = vmatpush1.xpose.msra.mxu0 0.0
    %3687 = vmatprep.subr.mxu0 0.0
    %3688 = vmatpush1.xpose.msra.mxu0 0.0
    %3689 = vmatprep.subr.mxu0 0.0
    %3690 = vmatpush1.xpose.msra.mxu0 0.0
    %3691 = vmatprep.subr.mxu0 0.0
    %3692 = vmatpush1.xpose.msra.mxu0 0.0
    %3693 = vmatprep.subr.mxu0 0.0
    %3694 = vmatpush1.xpose.msra.mxu0 0.0
    %3695 = vmatprep.subr.mxu0 0.0
    %3696 = vmatpush1.xpose.msra.mxu0 0.0
    %3697 = vmatprep.subr.mxu0 0.0
    %3698 = vmatpush1.xpose.msra.mxu0 0.0
    %3699 = vmatprep.subr.mxu0 0.0
    %3700 = vmatpush1.xpose.msra.mxu0 0.0
    %3701 = vmatprep.subr.mxu0 0.0
    %3702 = vmatpush1.xpose.msra.mxu0 0.0
    %3703 = vmatprep.subr.mxu0 0.0
    %3704 = vmatpush1.xpose.msra.mxu0 0.0
    %3705 = vmatprep.subr.mxu0 0.0
    %3706 = vmatpush1.xpose.msra.mxu0 0.0
    %3707 = vmatprep.subr.mxu0 0.0
    %3708 = vmatpush1.xpose.msra.mxu0 0.0
    %3709 = vmatprep.subr.mxu0 0.0
    %3710 = vmatpush1.xpose.msra.mxu0 0.0
    %3711 = vmatprep.subr.mxu0 0.0
    %3712 = vmatpush1.xpose.msra.mxu0 0.0
    %3713 = vmatprep.subr.mxu0 0.0
    %3714 = vmatpush1.xpose.msra.mxu0 0.0
    %3715 = vmatprep.subr.mxu0 0.0
    %3716 = vmatpush1.xpose.msra.mxu0 %v3683
    %3717 = vmatprep.subr.mxu0 0.0
    %3718 = vmatpush2.xpose.msra.mxu0 0.0
    %3719 = vmatprep.subr.mxu0 0.0
    %3720 = vmatpush2.xpose.msra.mxu0 0.0
    %3721 = vmatprep.subr.mxu0 0.0
    %3722 = vmatpush2.xpose.msra.mxu0 0.0
    %3723 = vmatprep.subr.mxu0 0.0
    %3724 = vmatpush2.xpose.msra.mxu0 0.0
    %3725 = vmatprep.subr.mxu0 0.0
    %3726 = vmatpush2.xpose.msra.mxu0 0.0
    %3727 = vmatprep.subr.mxu0 0.0
    %3728 = vmatpush2.xpose.msra.mxu0 0.0
    %3729 = vmatprep.subr.mxu0 0.0
    %3730 = vmatpush2.xpose.msra.mxu0 0.0
    %3731 = vmatprep.subr.mxu0 0.0
    %3732 = vmatpush2.xpose.msra.mxu0 0.0
    %3733 = vmatprep.subr.mxu0 0.0
    %3734 = vmatpush2.xpose.msra.mxu0 0.0
    %3735 = vmatprep.subr.mxu0 0.0
    %3736 = vmatpush2.xpose.msra.mxu0 0.0
    %3737 = vmatprep.subr.mxu0 0.0
    %3738 = vmatpush2.xpose.msra.mxu0 0.0
    %3739 = vmatprep.subr.mxu0 0.0
    %3740 = vmatpush2.xpose.msra.mxu0 0.0
    %3741 = vmatprep.subr.mxu0 0.0
    %3742 = vmatpush2.xpose.msra.mxu0 0.0
    %3743 = vmatprep.subr.mxu0 0.0
    %3744 = vmatpush2.xpose.msra.mxu0 0.0
    %3745 = vmatprep.subr.mxu0 0.0
    %3746 = vmatpush2.xpose.msra.mxu0 0.0
    %3747 = vmatprep.subr.mxu0 0.0
    %3748 = vmatpush2.xpose.msra.mxu0 0.0
    %3749 = vmatprep.mubr.f32.mxu0 0.0
    %3750 = vmatmul.mubr.f32.gmra.mxu0 %v3680
    %v3751 = vpop.f32.mrf.mxu0
    %v3752 = vadd.f32 %v2335, %v3751
    %v3753 = vpop.f32.mrf.mxu0
    %3754 = vdwg.mxu0
    %v3755 = vsel %vm1023, %v3752, -inf
    %3756 = vmax.xlane.f32.xlu0 %v3755
    %v3757 = vpop.xlane.xlu0 %3756
    %v3758 = vsub.f32 %v3752, %v3757
    %v3759 = vmul.f32 %v3758, 1.442695
    %v3760 = vpow.pop %v3759
    %v3761 = vsel %vm1023, %v3760, 0.0
    %3762 = vadd.xlane.f32.xlu0 %v3761
    %v3763 = vpop.xlane.xlu0 %3762
    %v3764 = vrcp.pop %v3763
    %v3765 = vmul.f32 %v3760, %v3764
    %3766 = vrot.lane.b32.xlu0 %v3676, 64
    %v3767 = vpop.permute.xlu0 %3766
    %v3770 = vsel %vm1023, %v3765, 0
    %3772 = vmatprep.subr.mxu0 0.0
    %3773 = vmatpush1.msra.mxu0 0.0
    %3774 = vmatprep.subr.mxu0 0.0
    %3775 = vmatpush1.msra.mxu0 0.0
    %3776 = vmatprep.subr.mxu0 0.0
    %3777 = vmatpush1.msra.mxu0 0.0
    %3778 = vmatprep.subr.mxu0 0.0
    %3779 = vmatpush1.msra.mxu0 0.0
    %3780 = vmatprep.subr.mxu0 0.0
    %3781 = vmatpush1.msra.mxu0 0.0
    %3782 = vmatprep.subr.mxu0 0.0
    %3783 = vmatpush1.msra.mxu0 0.0
    %3784 = vmatprep.subr.mxu0 0.0
    %3785 = vmatpush1.msra.mxu0 0.0
    %3786 = vmatprep.subr.mxu0 0.0
    %3787 = vmatpush1.msra.mxu0 0.0
    %3788 = vmatprep.subr.mxu0 0.0
    %3789 = vmatpush1.msra.mxu0 0.0
    %3790 = vmatprep.subr.mxu0 0.0
    %3791 = vmatpush1.msra.mxu0 0.0
    %3792 = vmatprep.subr.mxu0 0.0
    %3793 = vmatpush1.msra.mxu0 0.0
    %3794 = vmatprep.subr.mxu0 0.0
    %3795 = vmatpush1.msra.mxu0 0.0
    %3796 = vmatprep.subr.mxu0 0.0
    %3797 = vmatpush1.msra.mxu0 0.0
    %3798 = vmatprep.subr.mxu0 0.0
    %3799 = vmatpush1.msra.mxu0 0.0
    %3800 = vmatprep.subr.mxu0 0.0
    %3801 = vmatpush1.msra.mxu0 0.0
    %3802 = vmatprep.subr.mxu0 0.0
    %3803 = vmatpush1.msra.mxu0 %v3767
    %3804 = vmatprep.subr.mxu0 0.0
    %3805 = vmatpush2.msra.mxu0 0.0
    %3806 = vmatprep.subr.mxu0 0.0
    %3807 = vmatpush2.msra.mxu0 0.0
    %3808 = vmatprep.subr.mxu0 0.0
    %3809 = vmatpush2.msra.mxu0 0.0
    %3810 = vmatprep.subr.mxu0 0.0
    %3811 = vmatpush2.msra.mxu0 0.0
    %3812 = vmatprep.subr.mxu0 0.0
    %3813 = vmatpush2.msra.mxu0 0.0
    %3814 = vmatprep.subr.mxu0 0.0
    %3815 = vmatpush2.msra.mxu0 0.0
    %3816 = vmatprep.subr.mxu0 0.0
    %3817 = vmatpush2.msra.mxu0 0.0
    %3818 = vmatprep.subr.mxu0 0.0
    %3819 = vmatpush2.msra.mxu0 0.0
    %3820 = vmatprep.subr.mxu0 0.0
    %3821 = vmatpush2.msra.mxu0 0.0
    %3822 = vmatprep.subr.mxu0 0.0
    %3823 = vmatpush2.msra.mxu0 0.0
    %3824 = vmatprep.subr.mxu0 0.0
    %3825 = vmatpush2.msra.mxu0 0.0
    %3826 = vmatprep.subr.mxu0 0.0
    %3827 = vmatpush2.msra.mxu0 0.0
    %3828 = vmatprep.subr.mxu0 0.0
    %3829 = vmatpush2.msra.mxu0 0.0
    %3830 = vmatprep.subr.mxu0 0.0
    %3831 = vmatpush2.msra.mxu0 0.0
    %3832 = vmatprep.subr.mxu0 0.0
    %3833 = vmatpush2.msra.mxu0 0.0
    %3834 = vmatprep.subr.mxu0 0.0
    %3835 = vmatpush2.msra.mxu0 0.0
    %3836 = vmatprep.mubr.f32.mxu0 0.0
    %3837 = vmatmul.mubr.f32.gmra.mxu0 %v3770
    %v3838 = vpop.f32.mrf.mxu0
    %v3839 = vadd.f32 0.0, %v3838
    %v3840 = vpop.f32.mrf.mxu0
    %3841 = vdwg.mxu0
    %3842 = vrot.lane.b32.xlu0 %v3593, 112
    %v3843 = vpop.permute.xlu0 %3842
    %3844 = vrot.lane.b32.xlu0 %v3676, 112
    %v3845 = vpop.permute.xlu0 %3844
    %v3846 = vsel %vm1680, %v3843, 0
    %v3848 = vsel %vm1680, %v3845, 0
    %3850 = vmatprep.subr.mxu0 0.0
    %3851 = vmatpush1.xpose.msra.mxu0 0.0
    %3852 = vmatprep.subr.mxu0 0.0
    %3853 = vmatpush1.xpose.msra.mxu0 0.0
    %3854 = vmatprep.subr.mxu0 0.0
    %3855 = vmatpush1.xpose.msra.mxu0 0.0
    %3856 = vmatprep.subr.mxu0 0.0
    %3857 = vmatpush1.xpose.msra.mxu0 0.0
    %3858 = vmatprep.subr.mxu0 0.0
    %3859 = vmatpush1.xpose.msra.mxu0 0.0
    %3860 = vmatprep.subr.mxu0 0.0
    %3861 = vmatpush1.xpose.msra.mxu0 0.0
    %3862 = vmatprep.subr.mxu0 0.0
    %3863 = vmatpush1.xpose.msra.mxu0 0.0
    %3864 = vmatprep.subr.mxu0 0.0
    %3865 = vmatpush1.xpose.msra.mxu0 0.0
    %3866 = vmatprep.subr.mxu0 0.0
    %3867 = vmatpush1.xpose.msra.mxu0 0.0
    %3868 = vmatprep.subr.mxu0 0.0
    %3869 = vmatpush1.xpose.msra.mxu0 0.0
    %3870 = vmatprep.subr.mxu0 0.0
    %3871 = vmatpush1.xpose.msra.mxu0 0.0
    %3872 = vmatprep.subr.mxu0 0.0
    %3873 = vmatpush1.xpose.msra.mxu0 0.0
    %3874 = vmatprep.subr.mxu0 0.0
    %3875 = vmatpush1.xpose.msra.mxu0 0.0
    %3876 = vmatprep.subr.mxu0 0.0
    %3877 = vmatpush1.xpose.msra.mxu0 0.0
    %3878 = vmatprep.subr.mxu0 0.0
    %3879 = vmatpush1.xpose.msra.mxu0 0.0
    %3880 = vmatprep.subr.mxu0 0.0
    %3881 = vmatpush1.xpose.msra.mxu0 %v3848
    %3882 = vmatprep.subr.mxu0 0.0
    %3883 = vmatpush2.xpose.msra.mxu0 0.0
    %3884 = vmatprep.subr.mxu0 0.0
    %3885 = vmatpush2.xpose.msra.mxu0 0.0
    %3886 = vmatprep.subr.mxu0 0.0
    %3887 = vmatpush2.xpose.msra.mxu0 0.0
    %3888 = vmatprep.subr.mxu0 0.0
    %3889 = vmatpush2.xpose.msra.mxu0 0.0
    %3890 = vmatprep.subr.mxu0 0.0
    %3891 = vmatpush2.xpose.msra.mxu0 0.0
    %3892 = vmatprep.subr.mxu0 0.0
    %3893 = vmatpush2.xpose.msra.mxu0 0.0
    %3894 = vmatprep.subr.mxu0 0.0
    %3895 = vmatpush2.xpose.msra.mxu0 0.0
    %3896 = vmatprep.subr.mxu0 0.0
    %3897 = vmatpush2.xpose.msra.mxu0 0.0
    %3898 = vmatprep.subr.mxu0 0.0
    %3899 = vmatpush2.xpose.msra.mxu0 0.0
    %3900 = vmatprep.subr.mxu0 0.0
    %3901 = vmatpush2.xpose.msra.mxu0 0.0
    %3902 = vmatprep.subr.mxu0 0.0
    %3903 = vmatpush2.xpose.msra.mxu0 0.0
    %3904 = vmatprep.subr.mxu0 0.0
    %3905 = vmatpush2.xpose.msra.mxu0 0.0
    %3906 = vmatprep.subr.mxu0 0.0
    %3907 = vmatpush2.xpose.msra.mxu0 0.0
    %3908 = vmatprep.subr.mxu0 0.0
    %3909 = vmatpush2.xpose.msra.mxu0 0.0
    %3910 = vmatprep.subr.mxu0 0.0
    %3911 = vmatpush2.xpose.msra.mxu0 0.0
    %3912 = vmatprep.subr.mxu0 0.0
    %3913 = vmatpush2.xpose.msra.mxu0 0.0
    %3914 = vmatprep.mubr.f32.mxu0 0.0
    %3915 = vmatmul.mubr.f32.gmra.mxu0 %v3846
    %v3916 = vpop.f32.mrf.mxu0
    %v3917 = vadd.f32 %v2335, %v3916
    %v3918 = vpop.f32.mrf.mxu0
    %3919 = vdwg.mxu0
    %v3920 = vsel %vm1023, %v3917, -inf
    %3921 = vmax.xlane.f32.xlu0 %v3920
    %v3922 = vpop.xlane.xlu0 %3921
    %v3923 = vsub.f32 %v3917, %v3922
    %v3924 = vmul.f32 %v3923, 1.442695
    %v3925 = vpow.pop %v3924
    %v3926 = vsel %vm1023, %v3925, 0.0
    %3927 = vadd.xlane.f32.xlu0 %v3926
    %v3928 = vpop.xlane.xlu0 %3927
    %v3929 = vrcp.pop %v3928
    %v3930 = vmul.f32 %v3925, %v3929
    %3931 = vrot.lane.b32.xlu0 %v3676, 48
    %v3932 = vpop.permute.xlu0 %3931
    %v3935 = vsel %vm1023, %v3930, 0
    %3937 = vmatprep.subr.mxu0 0.0
    %3938 = vmatpush1.msra.mxu0 0.0
    %3939 = vmatprep.subr.mxu0 0.0
    %3940 = vmatpush1.msra.mxu0 0.0
    %3941 = vmatprep.subr.mxu0 0.0
    %3942 = vmatpush1.msra.mxu0 0.0
    %3943 = vmatprep.subr.mxu0 0.0
    %3944 = vmatpush1.msra.mxu0 0.0
    %3945 = vmatprep.subr.mxu0 0.0
    %3946 = vmatpush1.msra.mxu0 0.0
    %3947 = vmatprep.subr.mxu0 0.0
    %3948 = vmatpush1.msra.mxu0 0.0
    %3949 = vmatprep.subr.mxu0 0.0
    %3950 = vmatpush1.msra.mxu0 0.0
    %3951 = vmatprep.subr.mxu0 0.0
    %3952 = vmatpush1.msra.mxu0 0.0
    %3953 = vmatprep.subr.mxu0 0.0
    %3954 = vmatpush1.msra.mxu0 0.0
    %3955 = vmatprep.subr.mxu0 0.0
    %3956 = vmatpush1.msra.mxu0 0.0
    %3957 = vmatprep.subr.mxu0 0.0
    %3958 = vmatpush1.msra.mxu0 0.0
    %3959 = vmatprep.subr.mxu0 0.0
    %3960 = vmatpush1.msra.mxu0 0.0
    %3961 = vmatprep.subr.mxu0 0.0
    %3962 = vmatpush1.msra.mxu0 0.0
    %3963 = vmatprep.subr.mxu0 0.0
    %3964 = vmatpush1.msra.mxu0 0.0
    %3965 = vmatprep.subr.mxu0 0.0
    %3966 = vmatpush1.msra.mxu0 0.0
    %3967 = vmatprep.subr.mxu0 0.0
    %3968 = vmatpush1.msra.mxu0 %v3932
    %3969 = vmatprep.subr.mxu0 0.0
    %3970 = vmatpush2.msra.mxu0 0.0
    %3971 = vmatprep.subr.mxu0 0.0
    %3972 = vmatpush2.msra.mxu0 0.0
    %3973 = vmatprep.subr.mxu0 0.0
    %3974 = vmatpush2.msra.mxu0 0.0
    %3975 = vmatprep.subr.mxu0 0.0
    %3976 = vmatpush2.msra.mxu0 0.0
    %3977 = vmatprep.subr.mxu0 0.0
    %3978 = vmatpush2.msra.mxu0 0.0
    %3979 = vmatprep.subr.mxu0 0.0
    %3980 = vmatpush2.msra.mxu0 0.0
    %3981 = vmatprep.subr.mxu0 0.0
    %3982 = vmatpush2.msra.mxu0 0.0
    %3983 = vmatprep.subr.mxu0 0.0
    %3984 = vmatpush2.msra.mxu0 0.0
    %3985 = vmatprep.subr.mxu0 0.0
    %3986 = vmatpush2.msra.mxu0 0.0
    %3987 = vmatprep.subr.mxu0 0.0
    %3988 = vmatpush2.msra.mxu0 0.0
    %3989 = vmatprep.subr.mxu0 0.0
    %3990 = vmatpush2.msra.mxu0 0.0
    %3991 = vmatprep.subr.mxu0 0.0
    %3992 = vmatpush2.msra.mxu0 0.0
    %3993 = vmatprep.subr.mxu0 0.0
    %3994 = vmatpush2.msra.mxu0 0.0
    %3995 = vmatprep.subr.mxu0 0.0
    %3996 = vmatpush2.msra.mxu0 0.0
    %3997 = vmatprep.subr.mxu0 0.0
    %3998 = vmatpush2.msra.mxu0 0.0
    %3999 = vmatprep.subr.mxu0 0.0
    %4000 = vmatpush2.msra.mxu0 0.0
    %4001 = vmatprep.mubr.f32.mxu0 0.0
    %4002 = vmatmul.mubr.f32.gmra.mxu0 %v3935
    %v4003 = vpop.f32.mrf.mxu0
    %v4004 = vadd.f32 0.0, %v4003
    %v4005 = vpop.f32.mrf.mxu0
    %4006 = vdwg.mxu0
    %4007 = vrot.lane.b32.xlu0 %v3593, 96
    %v4008 = vpop.permute.xlu0 %4007
    %4009 = vrot.lane.b32.xlu0 %v3676, 96
    %v4010 = vpop.permute.xlu0 %4009
    %v4011 = vsel %vm1680, %v4008, 0
    %v4013 = vsel %vm1680, %v4010, 0
    %4015 = vmatprep.subr.mxu0 0.0
    %4016 = vmatpush1.xpose.msra.mxu0 0.0
    %4017 = vmatprep.subr.mxu0 0.0
    %4018 = vmatpush1.xpose.msra.mxu0 0.0
    %4019 = vmatprep.subr.mxu0 0.0
    %4020 = vmatpush1.xpose.msra.mxu0 0.0
    %4021 = vmatprep.subr.mxu0 0.0
    %4022 = vmatpush1.xpose.msra.mxu0 0.0
    %4023 = vmatprep.subr.mxu0 0.0
    %4024 = vmatpush1.xpose.msra.mxu0 0.0
    %4025 = vmatprep.subr.mxu0 0.0
    %4026 = vmatpush1.xpose.msra.mxu0 0.0
    %4027 = vmatprep.subr.mxu0 0.0
    %4028 = vmatpush1.xpose.msra.mxu0 0.0
    %4029 = vmatprep.subr.mxu0 0.0
    %4030 = vmatpush1.xpose.msra.mxu0 0.0
    %4031 = vmatprep.subr.mxu0 0.0
    %4032 = vmatpush1.xpose.msra.mxu0 0.0
    %4033 = vmatprep.subr.mxu0 0.0
    %4034 = vmatpush1.xpose.msra.mxu0 0.0
    %4035 = vmatprep.subr.mxu0 0.0
    %4036 = vmatpush1.xpose.msra.mxu0 0.0
    %4037 = vmatprep.subr.mxu0 0.0
    %4038 = vmatpush1.xpose.msra.mxu0 0.0
    %4039 = vmatprep.subr.mxu0 0.0
    %4040 = vmatpush1.xpose.msra.mxu0 0.0
    %4041 = vmatprep.subr.mxu0 0.0
    %4042 = vmatpush1.xpose.msra.mxu0 0.0
    %4043 = vmatprep.subr.mxu0 0.0
    %4044 = vmatpush1.xpose.msra.mxu0 0.0
    %4045 = vmatprep.subr.mxu0 0.0
    %4046 = vmatpush1.xpose.msra.mxu0 %v4013
    %4047 = vmatprep.subr.mxu0 0.0
    %4048 = vmatpush2.xpose.msra.mxu0 0.0
    %4049 = vmatprep.subr.mxu0 0.0
    %4050 = vmatpush2.xpose.msra.mxu0 0.0
    %4051 = vmatprep.subr.mxu0 0.0
    %4052 = vmatpush2.xpose.msra.mxu0 0.0
    %4053 = vmatprep.subr.mxu0 0.0
    %4054 = vmatpush2.xpose.msra.mxu0 0.0
    %4055 = vmatprep.subr.mxu0 0.0
    %4056 = vmatpush2.xpose.msra.mxu0 0.0
    %4057 = vmatprep.subr.mxu0 0.0
    %4058 = vmatpush2.xpose.msra.mxu0 0.0
    %4059 = vmatprep.subr.mxu0 0.0
    %4060 = vmatpush2.xpose.msra.mxu0 0.0
    %4061 = vmatprep.subr.mxu0 0.0
    %4062 = vmatpush2.xpose.msra.mxu0 0.0
    %4063 = vmatprep.subr.mxu0 0.0
    %4064 = vmatpush2.xpose.msra.mxu0 0.0
    %4065 = vmatprep.subr.mxu0 0.0
    %4066 = vmatpush2.xpose.msra.mxu0 0.0
    %4067 = vmatprep.subr.mxu0 0.0
    %4068 = vmatpush2.xpose.msra.mxu0 0.0
    %4069 = vmatprep.subr.mxu0 0.0
    %4070 = vmatpush2.xpose.msra.mxu0 0.0
    %4071 = vmatprep.subr.mxu0 0.0
    %4072 = vmatpush2.xpose.msra.mxu0 0.0
    %4073 = vmatprep.subr.mxu0 0.0
    %4074 = vmatpush2.xpose.msra.mxu0 0.0
    %4075 = vmatprep.subr.mxu0 0.0
    %4076 = vmatpush2.xpose.msra.mxu0 0.0
    %4077 = vmatprep.subr.mxu0 0.0
    %4078 = vmatpush2.xpose.msra.mxu0 0.0
    %4079 = vmatprep.mubr.f32.mxu0 0.0
    %4080 = vmatmul.mubr.f32.gmra.mxu0 %v4011
    %v4081 = vpop.f32.mrf.mxu0
    %v4082 = vadd.f32 %v2335, %v4081
    %v4083 = vpop.f32.mrf.mxu0
    %4084 = vdwg.mxu0
    %v4085 = vsel %vm1023, %v4082, -inf
    %4086 = vmax.xlane.f32.xlu0 %v4085
    %v4087 = vpop.xlane.xlu0 %4086
    %v4088 = vsub.f32 %v4082, %v4087
    %v4089 = vmul.f32 %v4088, 1.442695
    %v4090 = vpow.pop %v4089
    %v4091 = vsel %vm1023, %v4090, 0.0
    %4092 = vadd.xlane.f32.xlu0 %v4091
    %v4093 = vpop.xlane.xlu0 %4092
    %v4094 = vrcp.pop %v4093
    %v4095 = vmul.f32 %v4090, %v4094
    %4096 = vrot.lane.b32.xlu0 %v3676, 32
    %v4097 = vpop.permute.xlu0 %4096
    %v4100 = vsel %vm1023, %v4095, 0
    %4102 = vmatprep.subr.mxu0 0.0
    %4103 = vmatpush1.msra.mxu0 0.0
    %4104 = vmatprep.subr.mxu0 0.0
    %4105 = vmatpush1.msra.mxu0 0.0
    %4106 = vmatprep.subr.mxu0 0.0
    %4107 = vmatpush1.msra.mxu0 0.0
    %4108 = vmatprep.subr.mxu0 0.0
    %4109 = vmatpush1.msra.mxu0 0.0
    %4110 = vmatprep.subr.mxu0 0.0
    %4111 = vmatpush1.msra.mxu0 0.0
    %4112 = vmatprep.subr.mxu0 0.0
    %4113 = vmatpush1.msra.mxu0 0.0
    %4114 = vmatprep.subr.mxu0 0.0
    %4115 = vmatpush1.msra.mxu0 0.0
    %4116 = vmatprep.subr.mxu0 0.0
    %4117 = vmatpush1.msra.mxu0 0.0
    %4118 = vmatprep.subr.mxu0 0.0
    %4119 = vmatpush1.msra.mxu0 0.0
    %4120 = vmatprep.subr.mxu0 0.0
    %4121 = vmatpush1.msra.mxu0 0.0
    %4122 = vmatprep.subr.mxu0 0.0
    %4123 = vmatpush1.msra.mxu0 0.0
    %4124 = vmatprep.subr.mxu0 0.0
    %4125 = vmatpush1.msra.mxu0 0.0
    %4126 = vmatprep.subr.mxu0 0.0
    %4127 = vmatpush1.msra.mxu0 0.0
    %4128 = vmatprep.subr.mxu0 0.0
    %4129 = vmatpush1.msra.mxu0 0.0
    %4130 = vmatprep.subr.mxu0 0.0
    %4131 = vmatpush1.msra.mxu0 0.0
    %4132 = vmatprep.subr.mxu0 0.0
    %4133 = vmatpush1.msra.mxu0 %v4097
    %4134 = vmatprep.subr.mxu0 0.0
    %4135 = vmatpush2.msra.mxu0 0.0
    %4136 = vmatprep.subr.mxu0 0.0
    %4137 = vmatpush2.msra.mxu0 0.0
    %4138 = vmatprep.subr.mxu0 0.0
    %4139 = vmatpush2.msra.mxu0 0.0
    %4140 = vmatprep.subr.mxu0 0.0
    %4141 = vmatpush2.msra.mxu0 0.0
    %4142 = vmatprep.subr.mxu0 0.0
    %4143 = vmatpush2.msra.mxu0 0.0
    %4144 = vmatprep.subr.mxu0 0.0
    %4145 = vmatpush2.msra.mxu0 0.0
    %4146 = vmatprep.subr.mxu0 0.0
    %4147 = vmatpush2.msra.mxu0 0.0
    %4148 = vmatprep.subr.mxu0 0.0
    %4149 = vmatpush2.msra.mxu0 0.0
    %4150 = vmatprep.subr.mxu0 0.0
    %4151 = vmatpush2.msra.mxu0 0.0
    %4152 = vmatprep.subr.mxu0 0.0
    %4153 = vmatpush2.msra.mxu0 0.0
    %4154 = vmatprep.subr.mxu0 0.0
    %4155 = vmatpush2.msra.mxu0 0.0
    %4156 = vmatprep.subr.mxu0 0.0
    %4157 = vmatpush2.msra.mxu0 0.0
    %4158 = vmatprep.subr.mxu0 0.0
    %4159 = vmatpush2.msra.mxu0 0.0
    %4160 = vmatprep.subr.mxu0 0.0
    %4161 = vmatpush2.msra.mxu0 0.0
    %4162 = vmatprep.subr.mxu0 0.0
    %4163 = vmatpush2.msra.mxu0 0.0
    %4164 = vmatprep.subr.mxu0 0.0
    %4165 = vmatpush2.msra.mxu0 0.0
    %4166 = vmatprep.mubr.f32.mxu0 0.0
    %4167 = vmatmul.mubr.f32.gmra.mxu0 %v4100
    %v4168 = vpop.f32.mrf.mxu0
    %v4169 = vadd.f32 0.0, %v4168
    %v4170 = vpop.f32.mrf.mxu0
    %4171 = vdwg.mxu0
    %4172 = vrot.lane.b32.xlu0 %v3593, 80
    %v4173 = vpop.permute.xlu0 %4172
    %4174 = vrot.lane.b32.xlu0 %v3676, 80
    %v4175 = vpop.permute.xlu0 %4174
    %v4176 = vsel %vm1680, %v4173, 0
    %v4178 = vsel %vm1680, %v4175, 0
    %4180 = vmatprep.subr.mxu0 0.0
    %4181 = vmatpush1.xpose.msra.mxu0 0.0
    %4182 = vmatprep.subr.mxu0 0.0
    %4183 = vmatpush1.xpose.msra.mxu0 0.0
    %4184 = vmatprep.subr.mxu0 0.0
    %4185 = vmatpush1.xpose.msra.mxu0 0.0
    %4186 = vmatprep.subr.mxu0 0.0
    %4187 = vmatpush1.xpose.msra.mxu0 0.0
    %4188 = vmatprep.subr.mxu0 0.0
    %4189 = vmatpush1.xpose.msra.mxu0 0.0
    %4190 = vmatprep.subr.mxu0 0.0
    %4191 = vmatpush1.xpose.msra.mxu0 0.0
    %4192 = vmatprep.subr.mxu0 0.0
    %4193 = vmatpush1.xpose.msra.mxu0 0.0
    %4194 = vmatprep.subr.mxu0 0.0
    %4195 = vmatpush1.xpose.msra.mxu0 0.0
    %4196 = vmatprep.subr.mxu0 0.0
    %4197 = vmatpush1.xpose.msra.mxu0 0.0
    %4198 = vmatprep.subr.mxu0 0.0
    %4199 = vmatpush1.xpose.msra.mxu0 0.0
    %4200 = vmatprep.subr.mxu0 0.0
    %4201 = vmatpush1.xpose.msra.mxu0 0.0
    %4202 = vmatprep.subr.mxu0 0.0
    %4203 = vmatpush1.xpose.msra.mxu0 0.0
    %4204 = vmatprep.subr.mxu0 0.0
    %4205 = vmatpush1.xpose.msra.mxu0 0.0
    %4206 = vmatprep.subr.mxu0 0.0
    %4207 = vmatpush1.xpose.msra.mxu0 0.0
    %4208 = vmatprep.subr.mxu0 0.0
    %4209 = vmatpush1.xpose.msra.mxu0 0.0
    %4210 = vmatprep.subr.mxu0 0.0
    %4211 = vmatpush1.xpose.msra.mxu0 %v4178
    %4212 = vmatprep.subr.mxu0 0.0
    %4213 = vmatpush2.xpose.msra.mxu0 0.0
    %4214 = vmatprep.subr.mxu0 0.0
    %4215 = vmatpush2.xpose.msra.mxu0 0.0
    %4216 = vmatprep.subr.mxu0 0.0
    %4217 = vmatpush2.xpose.msra.mxu0 0.0
    %4218 = vmatprep.subr.mxu0 0.0
    %4219 = vmatpush2.xpose.msra.mxu0 0.0
    %4220 = vmatprep.subr.mxu0 0.0
    %4221 = vmatpush2.xpose.msra.mxu0 0.0
    %4222 = vmatprep.subr.mxu0 0.0
    %4223 = vmatpush2.xpose.msra.mxu0 0.0
    %4224 = vmatprep.subr.mxu0 0.0
    %4225 = vmatpush2.xpose.msra.mxu0 0.0
    %4226 = vmatprep.subr.mxu0 0.0
    %4227 = vmatpush2.xpose.msra.mxu0 0.0
    %4228 = vmatprep.subr.mxu0 0.0
    %4229 = vmatpush2.xpose.msra.mxu0 0.0
    %4230 = vmatprep.subr.mxu0 0.0
    %4231 = vmatpush2.xpose.msra.mxu0 0.0
    %4232 = vmatprep.subr.mxu0 0.0
    %4233 = vmatpush2.xpose.msra.mxu0 0.0
    %4234 = vmatprep.subr.mxu0 0.0
    %4235 = vmatpush2.xpose.msra.mxu0 0.0
    %4236 = vmatprep.subr.mxu0 0.0
    %4237 = vmatpush2.xpose.msra.mxu0 0.0
    %4238 = vmatprep.subr.mxu0 0.0
    %4239 = vmatpush2.xpose.msra.mxu0 0.0
    %4240 = vmatprep.subr.mxu0 0.0
    %4241 = vmatpush2.xpose.msra.mxu0 0.0
    %4242 = vmatprep.subr.mxu0 0.0
    %4243 = vmatpush2.xpose.msra.mxu0 0.0
    %4244 = vmatprep.mubr.f32.mxu0 0.0
    %4245 = vmatmul.mubr.f32.gmra.mxu0 %v4176
    %v4246 = vpop.f32.mrf.mxu0
    %v4247 = vadd.f32 %v2335, %v4246
    %v4248 = vpop.f32.mrf.mxu0
    %4249 = vdwg.mxu0
    %v4250 = vsel %vm1023, %v4247, -inf
    %4251 = vmax.xlane.f32.xlu0 %v4250
    %v4252 = vpop.xlane.xlu0 %4251
    %v4253 = vsub.f32 %v4247, %v4252
    %v4254 = vmul.f32 %v4253, 1.442695
    %v4255 = vpow.pop %v4254
    %v4256 = vsel %vm1023, %v4255, 0.0
    %4257 = vadd.xlane.f32.xlu0 %v4256
    %v4258 = vpop.xlane.xlu0 %4257
    %v4259 = vrcp.pop %v4258
    %v4260 = vmul.f32 %v4255, %v4259
    %4261 = vrot.lane.b32.xlu0 %v3676, 16
    %v4262 = vpop.permute.xlu0 %4261
    %v4265 = vsel %vm1023, %v4260, 0
    %4267 = vmatprep.subr.mxu0 0.0
    %4268 = vmatpush1.msra.mxu0 0.0
    %4269 = vmatprep.subr.mxu0 0.0
    %4270 = vmatpush1.msra.mxu0 0.0
    %4271 = vmatprep.subr.mxu0 0.0
    %4272 = vmatpush1.msra.mxu0 0.0
    %4273 = vmatprep.subr.mxu0 0.0
    %4274 = vmatpush1.msra.mxu0 0.0
    %4275 = vmatprep.subr.mxu0 0.0
    %4276 = vmatpush1.msra.mxu0 0.0
    %4277 = vmatprep.subr.mxu0 0.0
    %4278 = vmatpush1.msra.mxu0 0.0
    %4279 = vmatprep.subr.mxu0 0.0
    %4280 = vmatpush1.msra.mxu0 0.0
    %4281 = vmatprep.subr.mxu0 0.0
    %4282 = vmatpush1.msra.mxu0 0.0
    %4283 = vmatprep.subr.mxu0 0.0
    %4284 = vmatpush1.msra.mxu0 0.0
    %4285 = vmatprep.subr.mxu0 0.0
    %4286 = vmatpush1.msra.mxu0 0.0
    %4287 = vmatprep.subr.mxu0 0.0
    %4288 = vmatpush1.msra.mxu0 0.0
    %4289 = vmatprep.subr.mxu0 0.0
    %4290 = vmatpush1.msra.mxu0 0.0
    %4291 = vmatprep.subr.mxu0 0.0
    %4292 = vmatpush1.msra.mxu0 0.0
    %4293 = vmatprep.subr.mxu0 0.0
    %4294 = vmatpush1.msra.mxu0 0.0
    %4295 = vmatprep.subr.mxu0 0.0
    %4296 = vmatpush1.msra.mxu0 0.0
    %4297 = vmatprep.subr.mxu0 0.0
    %4298 = vmatpush1.msra.mxu0 %v4262
    %4299 = vmatprep.subr.mxu0 0.0
    %4300 = vmatpush2.msra.mxu0 0.0
    %4301 = vmatprep.subr.mxu0 0.0
    %4302 = vmatpush2.msra.mxu0 0.0
    %4303 = vmatprep.subr.mxu0 0.0
    %4304 = vmatpush2.msra.mxu0 0.0
    %4305 = vmatprep.subr.mxu0 0.0
    %4306 = vmatpush2.msra.mxu0 0.0
    %4307 = vmatprep.subr.mxu0 0.0
    %4308 = vmatpush2.msra.mxu0 0.0
    %4309 = vmatprep.subr.mxu0 0.0
    %4310 = vmatpush2.msra.mxu0 0.0
    %4311 = vmatprep.subr.mxu0 0.0
    %4312 = vmatpush2.msra.mxu0 0.0
    %4313 = vmatprep.subr.mxu0 0.0
    %4314 = vmatpush2.msra.mxu0 0.0
    %4315 = vmatprep.subr.mxu0 0.0
    %4316 = vmatpush2.msra.mxu0 0.0
    %4317 = vmatprep.subr.mxu0 0.0
    %4318 = vmatpush2.msra.mxu0 0.0
    %4319 = vmatprep.subr.mxu0 0.0
    %4320 = vmatpush2.msra.mxu0 0.0
    %4321 = vmatprep.subr.mxu0 0.0
    %4322 = vmatpush2.msra.mxu0 0.0
    %4323 = vmatprep.subr.mxu0 0.0
    %4324 = vmatpush2.msra.mxu0 0.0
    %4325 = vmatprep.subr.mxu0 0.0
    %4326 = vmatpush2.msra.mxu0 0.0
    %4327 = vmatprep.subr.mxu0 0.0
    %4328 = vmatpush2.msra.mxu0 0.0
    %4329 = vmatprep.subr.mxu0 0.0
    %4330 = vmatpush2.msra.mxu0 0.0
    %4331 = vmatprep.mubr.f32.mxu0 0.0
    %4332 = vmatmul.mubr.f32.gmra.mxu0 %v4265
    %v4333 = vpop.f32.mrf.mxu0
    %v4334 = vadd.f32 0.0, %v4333
    %v4335 = vpop.f32.mrf.mxu0
    %4336 = vdwg.mxu0
    %4338 = vrot.lane.b32.xlu0 %v4004, 16
    %v4339 = vpop.permute.xlu0 %4338
    %4342 = vrot.lane.b32.xlu0 %v4169, 32
    %v4343 = vpop.permute.xlu0 %4342
    %4346 = vrot.lane.b32.xlu0 %v4334, 48
    %v4347 = vpop.permute.xlu0 %4346
    %v4349 = vsel %vm1680, %v3839, %v4339
    %v4350 = vsel %vm1689, %v4349, %v4343
    %v4351 = vsel %vm1711, %v4350, %v4347
    %v4352 = vld [vmem:[%s71] sm:$0xff]
    %v4353 = vld [vmem:[%s71 + $0x8] sm:$0xff]
    %v4354 = vld [vmem:[%s71 + $0x10] sm:$0xff]
    %v4355 = vld [vmem:[%s71 + $0x18] sm:$0xff]
    %v4356 = vld [vmem:[%s71 + $0x20] sm:$0xff]
    %v4357 = vld [vmem:[%s71 + $0x28] sm:$0xff]
    %v4358 = vld [vmem:[%s71 + $0x30] sm:$0xff]
    %v4359 = vld [vmem:[%s71 + $0x38] sm:$0xff]
    %v4360 = vld [vmem:[%s73] sm:$0x1]
    %v4362 = vlaneseq
    %v4363 = vshrl.u32 %v4362, 7
    %v4364 = vsub.s32 0, %v4363
    %v4365 = vrot.slane %v4360, %v4364
    %v4368 = vsel %vm1893, %v4351, 0
    %4370 = vmatprep.subr.mxu0 0.0
    %4371 = vmatpush1.msra.mxu0 0.0
    %4372 = vmatprep.subr.mxu0 0.0
    %4373 = vmatpush1.msra.mxu0 0.0
    %4374 = vmatprep.subr.mxu0 0.0
    %4375 = vmatpush1.msra.mxu0 0.0
    %4376 = vmatprep.subr.mxu0 0.0
    %4377 = vmatpush1.msra.mxu0 0.0
    %4378 = vmatprep.subr.mxu0 0.0
    %4379 = vmatpush1.msra.mxu0 0.0
    %4380 = vmatprep.subr.mxu0 0.0
    %4381 = vmatpush1.msra.mxu0 0.0
    %4382 = vmatprep.subr.mxu0 0.0
    %4383 = vmatpush1.msra.mxu0 0.0
    %4384 = vmatprep.subr.mxu0 0.0
    %4385 = vmatpush1.msra.mxu0 0.0
    %4386 = vmatprep.subr.mxu0 0.0
    %4387 = vmatpush1.msra.mxu0 %v4359
    %4388 = vmatprep.subr.mxu0 0.0
    %4389 = vmatpush1.msra.mxu0 %v4358
    %4390 = vmatprep.subr.mxu0 0.0
    %4391 = vmatpush1.msra.mxu0 %v4357
    %4392 = vmatprep.subr.mxu0 0.0
    %4393 = vmatpush1.msra.mxu0 %v4356
    %4394 = vmatprep.subr.mxu0 0.0
    %4395 = vmatpush1.msra.mxu0 %v4355
    %4396 = vmatprep.subr.mxu0 0.0
    %4397 = vmatpush1.msra.mxu0 %v4354
    %4398 = vmatprep.subr.mxu0 0.0
    %4399 = vmatpush1.msra.mxu0 %v4353
    %4400 = vmatprep.subr.mxu0 0.0
    %4401 = vmatpush1.msra.mxu0 %v4352
    %4402 = vmatprep.subr.mxu0 0.0
    %4403 = vmatpush2.msra.mxu0 0.0
    %4404 = vmatprep.subr.mxu0 0.0
    %4405 = vmatpush2.msra.mxu0 0.0
    %4406 = vmatprep.subr.mxu0 0.0
    %4407 = vmatpush2.msra.mxu0 0.0
    %4408 = vmatprep.subr.mxu0 0.0
    %4409 = vmatpush2.msra.mxu0 0.0
    %4410 = vmatprep.subr.mxu0 0.0
    %4411 = vmatpush2.msra.mxu0 0.0
    %4412 = vmatprep.subr.mxu0 0.0
    %4413 = vmatpush2.msra.mxu0 0.0
    %4414 = vmatprep.subr.mxu0 0.0
    %4415 = vmatpush2.msra.mxu0 0.0
    %4416 = vmatprep.subr.mxu0 0.0
    %4417 = vmatpush2.msra.mxu0 0.0
    %4418 = vmatprep.subr.mxu0 0.0
    %4419 = vmatpush2.msra.mxu0 0.0
    %4420 = vmatprep.subr.mxu0 0.0
    %4421 = vmatpush2.msra.mxu0 0.0
    %4422 = vmatprep.subr.mxu0 0.0
    %4423 = vmatpush2.msra.mxu0 0.0
    %4424 = vmatprep.subr.mxu0 0.0
    %4425 = vmatpush2.msra.mxu0 0.0
    %4426 = vmatprep.subr.mxu0 0.0
    %4427 = vmatpush2.msra.mxu0 0.0
    %4428 = vmatprep.subr.mxu0 0.0
    %4429 = vmatpush2.msra.mxu0 0.0
    %4430 = vmatprep.subr.mxu0 0.0
    %4431 = vmatpush2.msra.mxu0 0.0
    %4432 = vmatprep.subr.mxu0 0.0
    %4433 = vmatpush2.msra.mxu0 0.0
    %4434 = vmatprep.mubr.f32.mxu0 0.0
    %4435 = vmatmul.mubr.f32.gmra.mxu0 %v4368
    %v4436 = vpop.f32.mrf.mxu0
    %v4437 = vadd.f32 %v4365, %v4436
    %v4438 = vpop.f32.mrf.mxu0
    %4439 = vdwg.mxu0
    %v4440 = vadd.f32 %v2332, %v4437
    %v4441 = vld [vmem:[%s75] sm:$0x1]
    %v4442 = vld [vmem:[%s77] sm:$0x1]
    %v4443 = vsel %vm1893, %v4440, 0.0
    %4444 = vadd.xlane.f32.xlu0 %v4443
    %v4445 = vpop.xlane.xlu0 %4444
    %v4446 = vmul.f32 %v4445, %v3277
    %v4447 = vsub.f32 %v4440, %v4446
    %v4448 = vmul.f32 %v4447, %v4447
    %v4449 = vsel %vm1893, %v4448, 0.0
    %4450 = vadd.xlane.f32.xlu0 %v4449
    %v4451 = vpop.xlane.xlu0 %4450
    %v4452 = vmul.f32 %v4451, %v3277
    %v4453 = vadd.f32 %v4452, 1e-05
    %v4454 = vrsqrt.pop %v4453
    %v4455 = vmul.f32 %v4447, %v4454
    %v4457 = vlaneseq
    %v4458 = vshrl.u32 %v4457, 7
    %v4459 = vsub.s32 0, %v4458
    %v4460 = vrot.slane %v4441, %v4459
    %v4462 = vmul.f32 %v4455, %v4460
    %v4464 = vlaneseq
    %v4465 = vshrl.u32 %v4464, 7
    %v4466 = vsub.s32 0, %v4465
    %v4467 = vrot.slane %v4442, %v4466
    %v4469 = vadd.f32 %v4462, %v4467
    %v4470 = vld [vmem:[%s79] sm:$0xff]
    %v4471 = vld [vmem:[%s79 + $0x8] sm:$0xff]
    %v4472 = vld [vmem:[%s79 + $0x10] sm:$0xff]
    %v4473 = vld [vmem:[%s79 + $0x18] sm:$0xff]
    %v4474 = vld [vmem:[%s79 + $0x20] sm:$0xff]
    %v4475 = vld [vmem:[%s79 + $0x28] sm:$0xff]
    %v4476 = vld [vmem:[%s79 + $0x30] sm:$0xff]
    %v4477 = vld [vmem:[%s79 + $0x38] sm:$0xff]
    %v4478 = vld [vmem:[%s81] sm:$0x1]
    %v4480 = vlaneseq
    %v4481 = vshrl.u32 %v4480, 7
    %v4482 = vsub.s32 0, %v4481
    %v4483 = vrot.slane %v4478, %v4482
    %v4486 = vsel %vm1893, %v4469, 0
    %4488 = vmatprep.subr.mxu0 0.0
    %4489 = vmatpush1.msra.mxu0 0.0
    %4490 = vmatprep.subr.mxu0 0.0
    %4491 = vmatpush1.msra.mxu0 0.0
    %4492 = vmatprep.subr.mxu0 0.0
    %4493 = vmatpush1.msra.mxu0 0.0
    %4494 = vmatprep.subr.mxu0 0.0
    %4495 = vmatpush1.msra.mxu0 0.0
    %4496 = vmatprep.subr.mxu0 0.0
    %4497 = vmatpush1.msra.mxu0 0.0
    %4498 = vmatprep.subr.mxu0 0.0
    %4499 = vmatpush1.msra.mxu0 0.0
    %4500 = vmatprep.subr.mxu0 0.0
    %4501 = vmatpush1.msra.mxu0 0.0
    %4502 = vmatprep.subr.mxu0 0.0
    %4503 = vmatpush1.msra.mxu0 0.0
    %4504 = vmatprep.subr.mxu0 0.0
    %4505 = vmatpush1.msra.mxu0 %v4477
    %4506 = vmatprep.subr.mxu0 0.0
    %4507 = vmatpush1.msra.mxu0 %v4476
    %4508 = vmatprep.subr.mxu0 0.0
    %4509 = vmatpush1.msra.mxu0 %v4475
    %4510 = vmatprep.subr.mxu0 0.0
    %4511 = vmatpush1.msra.mxu0 %v4474
    %4512 = vmatprep.subr.mxu0 0.0
    %4513 = vmatpush1.msra.mxu0 %v4473
    %4514 = vmatprep.subr.mxu0 0.0
    %4515 = vmatpush1.msra.mxu0 %v4472
    %4516 = vmatprep.subr.mxu0 0.0
    %4517 = vmatpush1.msra.mxu0 %v4471
    %4518 = vmatprep.subr.mxu0 0.0
    %4519 = vmatpush1.msra.mxu0 %v4470
    %4520 = vmatprep.subr.mxu0 0.0
    %4521 = vmatpush2.msra.mxu0 0.0
    %4522 = vmatprep.subr.mxu0 0.0
    %4523 = vmatpush2.msra.mxu0 0.0
    %4524 = vmatprep.subr.mxu0 0.0
    %4525 = vmatpush2.msra.mxu0 0.0
    %4526 = vmatprep.subr.mxu0 0.0
    %4527 = vmatpush2.msra.mxu0 0.0
    %4528 = vmatprep.subr.mxu0 0.0
    %4529 = vmatpush2.msra.mxu0 0.0
    %4530 = vmatprep.subr.mxu0 0.0
    %4531 = vmatpush2.msra.mxu0 0.0
    %4532 = vmatprep.subr.mxu0 0.0
    %4533 = vmatpush2.msra.mxu0 0.0
    %4534 = vmatprep.subr.mxu0 0.0
    %4535 = vmatpush2.msra.mxu0 0.0
    %4536 = vmatprep.subr.mxu0 0.0
    %4537 = vmatpush2.msra.mxu0 0.0
    %4538 = vmatprep.subr.mxu0 0.0
    %4539 = vmatpush2.msra.mxu0 0.0
    %4540 = vmatprep.subr.mxu0 0.0
    %4541 = vmatpush2.msra.mxu0 0.0
    %4542 = vmatprep.subr.mxu0 0.0
    %4543 = vmatpush2.msra.mxu0 0.0
    %4544 = vmatprep.subr.mxu0 0.0
    %4545 = vmatpush2.msra.mxu0 0.0
    %4546 = vmatprep.subr.mxu0 0.0
    %4547 = vmatpush2.msra.mxu0 0.0
    %4548 = vmatprep.subr.mxu0 0.0
    %4549 = vmatpush2.msra.mxu0 0.0
    %4550 = vmatprep.subr.mxu0 0.0
    %4551 = vmatpush2.msra.mxu0 0.0
    %4552 = vmatprep.mubr.f32.mxu0 0.0
    %4553 = vmatmul.mubr.f32.gmra.mxu0 %v4486
    %v4554 = vpop.f32.mrf.mxu0
    %v4555 = vadd.f32 %v4483, %v4554
    %v4556 = vpop.f32.mrf.mxu0
    %4557 = vdwg.mxu0
    %v4558 = vmax.f32 %v4555, 0.0
    %v4559 = vld [vmem:[%s83] sm:$0xff]
    %v4560 = vld [vmem:[%s83 + $0x8] sm:$0xff]
    %v4561 = vld [vmem:[%s83 + $0x10] sm:$0xff]
    %v4562 = vld [vmem:[%s83 + $0x18] sm:$0xff]
    %v4563 = vld [vmem:[#allocation2] sm:$0x1]
    %v4565 = vlaneseq
    %v4566 = vshrl.u32 %v4565, 7
    %v4567 = vsub.s32 0, %v4566
    %v4568 = vrot.slane %v4563, %v4567
    %v4571 = vsel %vm1689, %v4558, 0
    %4573 = vmatprep.subr.mxu0 0.0
    %4574 = vmatpush1.msra.mxu0 0.0
    %4575 = vmatprep.subr.mxu0 0.0
    %4576 = vmatpush1.msra.mxu0 0.0
    %4577 = vmatprep.subr.mxu0 0.0
    %4578 = vmatpush1.msra.mxu0 0.0
    %4579 = vmatprep.subr.mxu0 0.0
    %4580 = vmatpush1.msra.mxu0 0.0
    %4581 = vmatprep.subr.mxu0 0.0
    %4582 = vmatpush1.msra.mxu0 0.0
    %4583 = vmatprep.subr.mxu0 0.0
    %4584 = vmatpush1.msra.mxu0 0.0
    %4585 = vmatprep.subr.mxu0 0.0
    %4586 = vmatpush1.msra.mxu0 0.0
    %4587 = vmatprep.subr.mxu0 0.0
    %4588 = vmatpush1.msra.mxu0 0.0
    %4589 = vmatprep.subr.mxu0 0.0
    %4590 = vmatpush1.msra.mxu0 0.0
    %4591 = vmatprep.subr.mxu0 0.0
    %4592 = vmatpush1.msra.mxu0 0.0
    %4593 = vmatprep.subr.mxu0 0.0
    %4594 = vmatpush1.msra.mxu0 0.0
    %4595 = vmatprep.subr.mxu0 0.0
    %4596 = vmatpush1.msra.mxu0 0.0
    %4597 = vmatprep.subr.mxu0 0.0
    %4598 = vmatpush1.msra.mxu0 %v4562
    %4599 = vmatprep.subr.mxu0 0.0
    %4600 = vmatpush1.msra.mxu0 %v4561
    %4601 = vmatprep.subr.mxu0 0.0
    %4602 = vmatpush1.msra.mxu0 %v4560
    %4603 = vmatprep.subr.mxu0 0.0
    %4604 = vmatpush1.msra.mxu0 %v4559
    %4605 = vmatprep.subr.mxu0 0.0
    %4606 = vmatpush2.msra.mxu0 0.0
    %4607 = vmatprep.subr.mxu0 0.0
    %4608 = vmatpush2.msra.mxu0 0.0
    %4609 = vmatprep.subr.mxu0 0.0
    %4610 = vmatpush2.msra.mxu0 0.0
    %4611 = vmatprep.subr.mxu0 0.0
    %4612 = vmatpush2.msra.mxu0 0.0
    %4613 = vmatprep.subr.mxu0 0.0
    %4614 = vmatpush2.msra.mxu0 0.0
    %4615 = vmatprep.subr.mxu0 0.0
    %4616 = vmatpush2.msra.mxu0 0.0
    %4617 = vmatprep.subr.mxu0 0.0
    %4618 = vmatpush2.msra.mxu0 0.0
    %4619 = vmatprep.subr.mxu0 0.0
    %4620 = vmatpush2.msra.mxu0 0.0
    %4621 = vmatprep.subr.mxu0 0.0
    %4622 = vmatpush2.msra.mxu0 0.0
    %4623 = vmatprep.subr.mxu0 0.0
    %4624 = vmatpush2.msra.mxu0 0.0
    %4625 = vmatprep.subr.mxu0 0.0
    %4626 = vmatpush2.msra.mxu0 0.0
    %4627 = vmatprep.subr.mxu0 0.0
    %4628 = vmatpush2.msra.mxu0 0.0
    %4629 = vmatprep.subr.mxu0 0.0
    %4630 = vmatpush2.msra.mxu0 0.0
    %4631 = vmatprep.subr.mxu0 0.0
    %4632 = vmatpush2.msra.mxu0 0.0
    %4633 = vmatprep.subr.mxu0 0.0
    %4634 = vmatpush2.msra.mxu0 0.0
    %4635 = vmatprep.subr.mxu0 0.0
    %4636 = vmatpush2.msra.mxu0 0.0
    %4637 = vmatprep.mubr.f32.mxu0 0.0
    %4638 = vmatmul.mubr.f32.gmra.mxu0 %v4571
    %v4639 = vpop.f32.mrf.mxu0
    %v4640 = vadd.f32 %v4568, %v4639
    %v4641 = vpop.f32.mrf.mxu0
    %4642 = vdwg.mxu0
    %v4643 = vadd.f32 %v4469, %v4640
    %v4644 = vld [vmem:[#allocation4] sm:$0x1]
    %v4645 = vld [vmem:[#allocation6] sm:$0x1]
    %v4646 = vsel %vm1893, %v4643, 0.0
    %4647 = vadd.xlane.f32.xlu0 %v4646
    %v4648 = vpop.xlane.xlu0 %4647
    %v4649 = vmul.f32 %v4648, %v3277
    %v4650 = vsub.f32 %v4643, %v4649
    %v4651 = vmul.f32 %v4650, %v4650
    %v4652 = vsel %vm1893, %v4651, 0.0
    %4653 = vadd.xlane.f32.xlu0 %v4652
    %v4654 = vpop.xlane.xlu0 %4653
    %v4655 = vmul.f32 %v4654, %v3277
    %v4656 = vadd.f32 %v4655, 1e-05
    %v4657 = vrsqrt.pop %v4656
    %v4658 = vmul.f32 %v4650, %v4657
    %v4660 = vlaneseq
    %v4661 = vshrl.u32 %v4660, 7
    %v4662 = vsub.s32 0, %v4661
    %v4663 = vrot.slane %v4644, %v4662
    %v4665 = vmul.f32 %v4658, %v4663
    %v4667 = vlaneseq
    %v4668 = vshrl.u32 %v4667, 7
    %v4669 = vsub.s32 0, %v4668
    %v4670 = vrot.slane %v4645, %v4669
    %v4672 = vadd.f32 %v4665, %v4670
    %v4673 = vld [vmem:[%s91] sm:$0xff]
    %v4674 = vld [vmem:[%s91 + $0x8] sm:$0xff]
    %v4675 = vld [vmem:[%s91 + $0x10] sm:$0xff]
    %v4676 = vld [vmem:[%s91 + $0x18] sm:$0xff]
    %v4677 = vld [vmem:[%s91 + $0x20] sm:$0xff]
    %v4678 = vld [vmem:[%s91 + $0x28] sm:$0xff]
    %v4679 = vld [vmem:[%s91 + $0x30] sm:$0xff]
    %v4680 = vld [vmem:[%s91 + $0x38] sm:$0xff]
    %v4681 = vld [vmem:[#allocation7] sm:$0x1]
    %v4683 = vlaneseq
    %v4684 = vshrl.u32 %v4683, 7
    %v4685 = vsub.s32 0, %v4684
    %v4686 = vrot.slane %v4681, %v4685
    %v4689 = vsel %vm1893, %v3504, 0
    %4691 = vmatprep.subr.mxu0 0.0
    %4692 = vmatpush1.msra.mxu0 0.0
    %4693 = vmatprep.subr.mxu0 0.0
    %4694 = vmatpush1.msra.mxu0 0.0
    %4695 = vmatprep.subr.mxu0 0.0
    %4696 = vmatpush1.msra.mxu0 0.0
    %4697 = vmatprep.subr.mxu0 0.0
    %4698 = vmatpush1.msra.mxu0 0.0
    %4699 = vmatprep.subr.mxu0 0.0
    %4700 = vmatpush1.msra.mxu0 0.0
    %4701 = vmatprep.subr.mxu0 0.0
    %4702 = vmatpush1.msra.mxu0 0.0
    %4703 = vmatprep.subr.mxu0 0.0
    %4704 = vmatpush1.msra.mxu0 0.0
    %4705 = vmatprep.subr.mxu0 0.0
    %4706 = vmatpush1.msra.mxu0 0.0
    %4707 = vmatprep.subr.mxu0 0.0
    %4708 = vmatpush1.msra.mxu0 %v4680
    %4709 = vmatprep.subr.mxu0 0.0
    %4710 = vmatpush1.msra.mxu0 %v4679
    %4711 = vmatprep.subr.mxu0 0.0
    %4712 = vmatpush1.msra.mxu0 %v4678
    %4713 = vmatprep.subr.mxu0 0.0
    %4714 = vmatpush1.msra.mxu0 %v4677
    %4715 = vmatprep.subr.mxu0 0.0
    %4716 = vmatpush1.msra.mxu0 %v4676
    %4717 = vmatprep.subr.mxu0 0.0
    %4718 = vmatpush1.msra.mxu0 %v4675
    %4719 = vmatprep.subr.mxu0 0.0
    %4720 = vmatpush1.msra.mxu0 %v4674
    %4721 = vmatprep.subr.mxu0 0.0
    %4722 = vmatpush1.msra.mxu0 %v4673
    %4723 = vmatprep.subr.mxu0 0.0
    %4724 = vmatpush2.msra.mxu0 0.0
    %4725 = vmatprep.subr.mxu0 0.0
    %4726 = vmatpush2.msra.mxu0 0.0
    %4727 = vmatprep.subr.mxu0 0.0
    %4728 = vmatpush2.msra.mxu0 0.0
    %4729 = vmatprep.subr.mxu0 0.0
    %4730 = vmatpush2.msra.mxu0 0.0
    %4731 = vmatprep.subr.mxu0 0.0
    %4732 = vmatpush2.msra.mxu0 0.0
    %4733 = vmatprep.subr.mxu0 0.0
    %4734 = vmatpush2.msra.mxu0 0.0
    %4735 = vmatprep.subr.mxu0 0.0
    %4736 = vmatpush2.msra.mxu0 0.0
    %4737 = vmatprep.subr.mxu0 0.0
    %4738 = vmatpush2.msra.mxu0 0.0
    %4739 = vmatprep.subr.mxu0 0.0
    %4740 = vmatpush2.msra.mxu0 0.0
    %4741 = vmatprep.subr.mxu0 0.0
    %4742 = vmatpush2.msra.mxu0 0.0
    %4743 = vmatprep.subr.mxu0 0.0
    %4744 = vmatpush2.msra.mxu0 0.0
    %4745 = vmatprep.subr.mxu0 0.0
    %4746 = vmatpush2.msra.mxu0 0.0
    %4747 = vmatprep.subr.mxu0 0.0
    %4748 = vmatpush2.msra.mxu0 0.0
    %4749 = vmatprep.subr.mxu0 0.0
    %4750 = vmatpush2.msra.mxu0 0.0
    %4751 = vmatprep.subr.mxu0 0.0
    %4752 = vmatpush2.msra.mxu0 0.0
    %4753 = vmatprep.subr.mxu0 0.0
    %4754 = vmatpush2.msra.mxu0 0.0
    %4755 = vmatprep.mubr.f32.mxu0 0.0
    %4756 = vmatmul.mubr.f32.gmra.mxu0 %v4689
    %v4757 = vpop.f32.mrf.mxu0
    %v4758 = vadd.f32 %v4686, %v4757
    %v4759 = vpop.f32.mrf.mxu0
    %4760 = vdwg.mxu0
    %v4761 = vmul.f32 %v4758, 0.25
    %v4762 = vld [vmem:[%s95] sm:$0xff]
    %v4763 = vld [vmem:[%s95 + $0x8] sm:$0xff]
    %v4764 = vld [vmem:[%s95 + $0x10] sm:$0xff]
    %v4765 = vld [vmem:[%s95 + $0x18] sm:$0xff]
    %v4766 = vld [vmem:[%s95 + $0x20] sm:$0xff]
    %v4767 = vld [vmem:[%s95 + $0x28] sm:$0xff]
    %v4768 = vld [vmem:[%s95 + $0x30] sm:$0xff]
    %v4769 = vld [vmem:[%s95 + $0x38] sm:$0xff]
    %v4770 = vld [vmem:[#allocation9] sm:$0x1]
    %v4772 = vlaneseq
    %v4773 = vshrl.u32 %v4772, 7
    %v4774 = vsub.s32 0, %v4773
    %v4775 = vrot.slane %v4770, %v4774
    %v4778 = vsel %vm1893, %v4672, 0
    %4780 = vmatprep.subr.mxu0 0.0
    %4781 = vmatpush1.msra.mxu0 0.0
    %4782 = vmatprep.subr.mxu0 0.0
    %4783 = vmatpush1.msra.mxu0 0.0
    %4784 = vmatprep.subr.mxu0 0.0
    %4785 = vmatpush1.msra.mxu0 0.0
    %4786 = vmatprep.subr.mxu0 0.0
    %4787 = vmatpush1.msra.mxu0 0.0
    %4788 = vmatprep.subr.mxu0 0.0
    %4789 = vmatpush1.msra.mxu0 0.0
    %4790 = vmatprep.subr.mxu0 0.0
    %4791 = vmatpush1.msra.mxu0 0.0
    %4792 = vmatprep.subr.mxu0 0.0
    %4793 = vmatpush1.msra.mxu0 0.0
    %4794 = vmatprep.subr.mxu0 0.0
    %4795 = vmatpush1.msra.mxu0 0.0
    %4796 = vmatprep.subr.mxu0 0.0
    %4797 = vmatpush1.msra.mxu0 %v4769
    %4798 = vmatprep.subr.mxu0 0.0
    %4799 = vmatpush1.msra.mxu0 %v4768
    %4800 = vmatprep.subr.mxu0 0.0
    %4801 = vmatpush1.msra.mxu0 %v4767
    %4802 = vmatprep.subr.mxu0 0.0
    %4803 = vmatpush1.msra.mxu0 %v4766
    %4804 = vmatprep.subr.mxu0 0.0
    %4805 = vmatpush1.msra.mxu0 %v4765
    %4806 = vmatprep.subr.mxu0 0.0
    %4807 = vmatpush1.msra.mxu0 %v4764
    %4808 = vmatprep.subr.mxu0 0.0
    %4809 = vmatpush1.msra.mxu0 %v4763
    %4810 = vmatprep.subr.mxu0 0.0
    %4811 = vmatpush1.msra.mxu0 %v4762
    %4812 = vmatprep.subr.mxu0 0.0
    %4813 = vmatpush2.msra.mxu0 0.0
    %4814 = vmatprep.subr.mxu0 0.0
    %4815 = vmatpush2.msra.mxu0 0.0
    %4816 = vmatprep.subr.mxu0 0.0
    %4817 = vmatpush2.msra.mxu0 0.0
    %4818 = vmatprep.subr.mxu0 0.0
    %4819 = vmatpush2.msra.mxu0 0.0
    %4820 = vmatprep.subr.mxu0 0.0
    %4821 = vmatpush2.msra.mxu0 0.0
    %4822 = vmatprep.subr.mxu0 0.0
    %4823 = vmatpush2.msra.mxu0 0.0
    %4824 = vmatprep.subr.mxu0 0.0
    %4825 = vmatpush2.msra.mxu0 0.0
    %4826 = vmatprep.subr.mxu0 0.0
    %4827 = vmatpush2.msra.mxu0 0.0
    %4828 = vmatprep.subr.mxu0 0.0
    %4829 = vmatpush2.msra.mxu0 0.0
    %4830 = vmatprep.subr.mxu0 0.0
    %4831 = vmatpush2.msra.mxu0 0.0
    %4832 = vmatprep.subr.mxu0 0.0
    %4833 = vmatpush2.msra.mxu0 0.0
    %4834 = vmatprep.subr.mxu0 0.0
    %4835 = vmatpush2.msra.mxu0 0.0
    %4836 = vmatprep.subr.mxu0 0.0
    %4837 = vmatpush2.msra.mxu0 0.0
    %4838 = vmatprep.subr.mxu0 0.0
    %4839 = vmatpush2.msra.mxu0 0.0
    %4840 = vmatprep.subr.mxu0 0.0
    %4841 = vmatpush2.msra.mxu0 0.0
    %4842 = vmatprep.subr.mxu0 0.0
    %4843 = vmatpush2.msra.mxu0 0.0
    %4844 = vmatprep.mubr.f32.mxu0 0.0
    %4845 = vmatmul.mubr.f32.gmra.mxu0 %v4778
    %v4846 = vpop.f32.mrf.mxu0
    %v4847 = vadd.f32 %v4775, %v4846
    %v4848 = vpop.f32.mrf.mxu0
    %4849 = vdwg.mxu0
    %v4851 = vsel %vm1680, %v4761, 0
    %v4854 = vsel %vm1680, %v4847, 0
    %4856 = vmatprep.subr.mxu0 0.0
    %4857 = vmatpush1.xpose.msra.mxu0 0.0
    %4858 = vmatprep.subr.mxu0 0.0
    %4859 = vmatpush1.xpose.msra.mxu0 0.0
    %4860 = vmatprep.subr.mxu0 0.0
    %4861 = vmatpush1.xpose.msra.mxu0 0.0
    %4862 = vmatprep.subr.mxu0 0.0
    %4863 = vmatpush1.xpose.msra.mxu0 0.0
    %4864 = vmatprep.subr.mxu0 0.0
    %4865 = vmatpush1.xpose.msra.mxu0 0.0
    %4866 = vmatprep.subr.mxu0 0.0
    %4867 = vmatpush1.xpose.msra.mxu0 0.0
    %4868 = vmatprep.subr.mxu0 0.0
    %4869 = vmatpush1.xpose.msra.mxu0 0.0
    %4870 = vmatprep.subr.mxu0 0.0
    %4871 = vmatpush1.xpose.msra.mxu0 0.0
    %4872 = vmatprep.subr.mxu0 0.0
    %4873 = vmatpush1.xpose.msra.mxu0 0.0
    %4874 = vmatprep.subr.mxu0 0.0
    %4875 = vmatpush1.xpose.msra.mxu0 0.0
    %4876 = vmatprep.subr.mxu0 0.0
    %4877 = vmatpush1.xpose.msra.mxu0 0.0
    %4878 = vmatprep.subr.mxu0 0.0
    %4879 = vmatpush1.xpose.msra.mxu0 0.0
    %4880 = vmatprep.subr.mxu0 0.0
    %4881 = vmatpush1.xpose.msra.mxu0 0.0
    %4882 = vmatprep.subr.mxu0 0.0
    %4883 = vmatpush1.xpose.msra.mxu0 0.0
    %4884 = vmatprep.subr.mxu0 0.0
    %4885 = vmatpush1.xpose.msra.mxu0 0.0
    %4886 = vmatprep.subr.mxu0 0.0
    %4887 = vmatpush1.xpose.msra.mxu0 %v4854
    %4888 = vmatprep.subr.mxu0 0.0
    %4889 = vmatpush2.xpose.msra.mxu0 0.0
    %4890 = vmatprep.subr.mxu0 0.0
    %4891 = vmatpush2.xpose.msra.mxu0 0.0
    %4892 = vmatprep.subr.mxu0 0.0
    %4893 = vmatpush2.xpose.msra.mxu0 0.0
    %4894 = vmatprep.subr.mxu0 0.0
    %4895 = vmatpush2.xpose.msra.mxu0 0.0
    %4896 = vmatprep.subr.mxu0 0.0
    %4897 = vmatpush2.xpose.msra.mxu0 0.0
    %4898 = vmatprep.subr.mxu0 0.0
    %4899 = vmatpush2.xpose.msra.mxu0 0.0
    %4900 = vmatprep.subr.mxu0 0.0
    %4901 = vmatpush2.xpose.msra.mxu0 0.0
    %4902 = vmatprep.subr.mxu0 0.0
    %4903 = vmatpush2.xpose.msra.mxu0 0.0
    %4904 = vmatprep.subr.mxu0 0.0
    %4905 = vmatpush2.xpose.msra.mxu0 0.0
    %4906 = vmatprep.subr.mxu0 0.0
    %4907 = vmatpush2.xpose.msra.mxu0 0.0
    %4908 = vmatprep.subr.mxu0 0.0
    %4909 = vmatpush2.xpose.msra.mxu0 0.0
    %4910 = vmatprep.subr.mxu0 0.0
    %4911 = vmatpush2.xpose.msra.mxu0 0.0
    %4912 = vmatprep.subr.mxu0 0.0
    %4913 = vmatpush2.xpose.msra.mxu0 0.0
    %4914 = vmatprep.subr.mxu0 0.0
    %4915 = vmatpush2.xpose.msra.mxu0 0.0
    %4916 = vmatprep.subr.mxu0 0.0
    %4917 = vmatpush2.xpose.msra.mxu0 0.0
    %4918 = vmatprep.subr.mxu0 0.0
    %4919 = vmatpush2.xpose.msra.mxu0 0.0
    %4920 = vmatprep.mubr.f32.mxu0 0.0
    %4921 = vmatmul.mubr.f32.gmra.mxu0 %v4851
    %v4922 = vpop.f32.mrf.mxu0
    %v4923 = vadd.f32 %v2335, %v4922
    %v4924 = vpop.f32.mrf.mxu0
    %4925 = vdwg.mxu0
    %v4926 = vsel %vm1023, %v4923, -inf
    %4927 = vmax.xlane.f32.xlu0 %v4926
    %v4928 = vpop.xlane.xlu0 %4927
    %v4929 = vsub.f32 %v4923, %v4928
    %v4930 = vmul.f32 %v4929, 1.442695
    %v4931 = vpow.pop %v4930
    %v4932 = vsel %vm1023, %v4931, 0.0
    %4933 = vadd.xlane.f32.xlu0 %v4932
    %v4934 = vpop.xlane.xlu0 %4933
    %v4935 = vrcp.pop %v4934
    %v4936 = vmul.f32 %v4931, %v4935
    %4937 = vrot.lane.b32.xlu0 %v4847, 64
    %v4938 = vpop.permute.xlu0 %4937
    %v4941 = vsel %vm1023, %v4936, 0
    %4943 = vmatprep.subr.mxu0 0.0
    %4944 = vmatpush1.msra.mxu0 0.0
    %4945 = vmatprep.subr.mxu0 0.0
    %4946 = vmatpush1.msra.mxu0 0.0
    %4947 = vmatprep.subr.mxu0 0.0
    %4948 = vmatpush1.msra.mxu0 0.0
    %4949 = vmatprep.subr.mxu0 0.0
    %4950 = vmatpush1.msra.mxu0 0.0
    %4951 = vmatprep.subr.mxu0 0.0
    %4952 = vmatpush1.msra.mxu0 0.0
    %4953 = vmatprep.subr.mxu0 0.0
    %4954 = vmatpush1.msra.mxu0 0.0
    %4955 = vmatprep.subr.mxu0 0.0
    %4956 = vmatpush1.msra.mxu0 0.0
    %4957 = vmatprep.subr.mxu0 0.0
    %4958 = vmatpush1.msra.mxu0 0.0
    %4959 = vmatprep.subr.mxu0 0.0
    %4960 = vmatpush1.msra.mxu0 0.0
    %4961 = vmatprep.subr.mxu0 0.0
    %4962 = vmatpush1.msra.mxu0 0.0
    %4963 = vmatprep.subr.mxu0 0.0
    %4964 = vmatpush1.msra.mxu0 0.0
    %4965 = vmatprep.subr.mxu0 0.0
    %4966 = vmatpush1.msra.mxu0 0.0
    %4967 = vmatprep.subr.mxu0 0.0
    %4968 = vmatpush1.msra.mxu0 0.0
    %4969 = vmatprep.subr.mxu0 0.0
    %4970 = vmatpush1.msra.mxu0 0.0
    %4971 = vmatprep.subr.mxu0 0.0
    %4972 = vmatpush1.msra.mxu0 0.0
    %4973 = vmatprep.subr.mxu0 0.0
    %4974 = vmatpush1.msra.mxu0 %v4938
    %4975 = vmatprep.subr.mxu0 0.0
    %4976 = vmatpush2.msra.mxu0 0.0
    %4977 = vmatprep.subr.mxu0 0.0
    %4978 = vmatpush2.msra.mxu0 0.0
    %4979 = vmatprep.subr.mxu0 0.0
    %4980 = vmatpush2.msra.mxu0 0.0
    %4981 = vmatprep.subr.mxu0 0.0
    %4982 = vmatpush2.msra.mxu0 0.0
    %4983 = vmatprep.subr.mxu0 0.0
    %4984 = vmatpush2.msra.mxu0 0.0
    %4985 = vmatprep.subr.mxu0 0.0
    %4986 = vmatpush2.msra.mxu0 0.0
    %4987 = vmatprep.subr.mxu0 0.0
    %4988 = vmatpush2.msra.mxu0 0.0
    %4989 = vmatprep.subr.mxu0 0.0
    %4990 = vmatpush2.msra.mxu0 0.0
    %4991 = vmatprep.subr.mxu0 0.0
    %4992 = vmatpush2.msra.mxu0 0.0
    %4993 = vmatprep.subr.mxu0 0.0
    %4994 = vmatpush2.msra.mxu0 0.0
    %4995 = vmatprep.subr.mxu0 0.0
    %4996 = vmatpush2.msra.mxu0 0.0
    %4997 = vmatprep.subr.mxu0 0.0
    %4998 = vmatpush2.msra.mxu0 0.0
    %4999 = vmatprep.subr.mxu0 0.0
    %5000 = vmatpush2.msra.mxu0 0.0
    %5001 = vmatprep.subr.mxu0 0.0
    %5002 = vmatpush2.msra.mxu0 0.0
    %5003 = vmatprep.subr.mxu0 0.0
    %5004 = vmatpush2.msra.mxu0 0.0
    %5005 = vmatprep.subr.mxu0 0.0
    %5006 = vmatpush2.msra.mxu0 0.0
    %5007 = vmatprep.mubr.f32.mxu0 0.0
    %5008 = vmatmul.mubr.f32.gmra.mxu0 %v4941
    %v5009 = vpop.f32.mrf.mxu0
    %v5010 = vadd.f32 0.0, %v5009
    %v5011 = vpop.f32.mrf.mxu0
    %5012 = vdwg.mxu0
    %5013 = vrot.lane.b32.xlu0 %v4761, 112
    %v5014 = vpop.permute.xlu0 %5013
    %5015 = vrot.lane.b32.xlu0 %v4847, 112
    %v5016 = vpop.permute.xlu0 %5015
    %v5017 = vsel %vm1680, %v5014, 0
    %v5019 = vsel %vm1680, %v5016, 0
    %5021 = vmatprep.subr.mxu0 0.0
    %5022 = vmatpush1.xpose.msra.mxu0 0.0
    %5023 = vmatprep.subr.mxu0 0.0
    %5024 = vmatpush1.xpose.msra.mxu0 0.0
    %5025 = vmatprep.subr.mxu0 0.0
    %5026 = vmatpush1.xpose.msra.mxu0 0.0
    %5027 = vmatprep.subr.mxu0 0.0
    %5028 = vmatpush1.xpose.msra.mxu0 0.0
    %5029 = vmatprep.subr.mxu0 0.0
    %5030 = vmatpush1.xpose.msra.mxu0 0.0
    %5031 = vmatprep.subr.mxu0 0.0
    %5032 = vmatpush1.xpose.msra.mxu0 0.0
    %5033 = vmatprep.subr.mxu0 0.0
    %5034 = vmatpush1.xpose.msra.mxu0 0.0
    %5035 = vmatprep.subr.mxu0 0.0
    %5036 = vmatpush1.xpose.msra.mxu0 0.0
    %5037 = vmatprep.subr.mxu0 0.0
    %5038 = vmatpush1.xpose.msra.mxu0 0.0
    %5039 = vmatprep.subr.mxu0 0.0
    %5040 = vmatpush1.xpose.msra.mxu0 0.0
    %5041 = vmatprep.subr.mxu0 0.0
    %5042 = vmatpush1.xpose.msra.mxu0 0.0
    %5043 = vmatprep.subr.mxu0 0.0
    %5044 = vmatpush1.xpose.msra.mxu0 0.0
    %5045 = vmatprep.subr.mxu0 0.0
    %5046 = vmatpush1.xpose.msra.mxu0 0.0
    %5047 = vmatprep.subr.mxu0 0.0
    %5048 = vmatpush1.xpose.msra.mxu0 0.0
    %5049 = vmatprep.subr.mxu0 0.0
    %5050 = vmatpush1.xpose.msra.mxu0 0.0
    %5051 = vmatprep.subr.mxu0 0.0
    %5052 = vmatpush1.xpose.msra.mxu0 %v5019
    %5053 = vmatprep.subr.mxu0 0.0
    %5054 = vmatpush2.xpose.msra.mxu0 0.0
    %5055 = vmatprep.subr.mxu0 0.0
    %5056 = vmatpush2.xpose.msra.mxu0 0.0
    %5057 = vmatprep.subr.mxu0 0.0
    %5058 = vmatpush2.xpose.msra.mxu0 0.0
    %5059 = vmatprep.subr.mxu0 0.0
    %5060 = vmatpush2.xpose.msra.mxu0 0.0
    %5061 = vmatprep.subr.mxu0 0.0
    %5062 = vmatpush2.xpose.msra.mxu0 0.0
    %5063 = vmatprep.subr.mxu0 0.0
    %5064 = vmatpush2.xpose.msra.mxu0 0.0
    %5065 = vmatprep.subr.mxu0 0.0
    %5066 = vmatpush2.xpose.msra.mxu0 0.0
    %5067 = vmatprep.subr.mxu0 0.0
    %5068 = vmatpush2.xpose.msra.mxu0 0.0
    %5069 = vmatprep.subr.mxu0 0.0
    %5070 = vmatpush2.xpose.msra.mxu0 0.0
    %5071 = vmatprep.subr.mxu0 0.0
    %5072 = vmatpush2.xpose.msra.mxu0 0.0
    %5073 = vmatprep.subr.mxu0 0.0
    %5074 = vmatpush2.xpose.msra.mxu0 0.0
    %5075 = vmatprep.subr.mxu0 0.0
    %5076 = vmatpush2.xpose.msra.mxu0 0.0
    %5077 = vmatprep.subr.mxu0 0.0
    %5078 = vmatpush2.xpose.msra.mxu0 0.0
    %5079 = vmatprep.subr.mxu0 0.0
    %5080 = vmatpush2.xpose.msra.mxu0 0.0
    %5081 = vmatprep.subr.mxu0 0.0
    %5082 = vmatpush2.xpose.msra.mxu0 0.0
    %5083 = vmatprep.subr.mxu0 0.0
    %5084 = vmatpush2.xpose.msra.mxu0 0.0
    %5085 = vmatprep.mubr.f32.mxu0 0.0
    %5086 = vmatmul.mubr.f32.gmra.mxu0 %v5017
    %v5087 = vpop.f32.mrf.mxu0
    %v5088 = vadd.f32 %v2335, %v5087
    %v5089 = vpop.f32.mrf.mxu0
    %5090 = vdwg.mxu0
    %v5091 = vsel %vm1023, %v5088, -inf
    %5092 = vmax.xlane.f32.xlu0 %v5091
    %v5093 = vpop.xlane.xlu0 %5092
    %v5094 = vsub.f32 %v5088, %v5093
    %v5095 = vmul.f32 %v5094, 1.442695
    %v5096 = vpow.pop %v5095
    %v5097 = vsel %vm1023, %v5096, 0.0
    %5098 = vadd.xlane.f32.xlu0 %v5097
    %v5099 = vpop.xlane.xlu0 %5098
    %v5100 = vrcp.pop %v5099
    %v5101 = vmul.f32 %v5096, %v5100
    %5102 = vrot.lane.b32.xlu0 %v4847, 48
    %v5103 = vpop.permute.xlu0 %5102
    %v5106 = vsel %vm1023, %v5101, 0
    %5108 = vmatprep.subr.mxu0 0.0
    %5109 = vmatpush1.msra.mxu0 0.0
    %5110 = vmatprep.subr.mxu0 0.0
    %5111 = vmatpush1.msra.mxu0 0.0
    %5112 = vmatprep.subr.mxu0 0.0
    %5113 = vmatpush1.msra.mxu0 0.0
    %5114 = vmatprep.subr.mxu0 0.0
    %5115 = vmatpush1.msra.mxu0 0.0
    %5116 = vmatprep.subr.mxu0 0.0
    %5117 = vmatpush1.msra.mxu0 0.0
    %5118 = vmatprep.subr.mxu0 0.0
    %5119 = vmatpush1.msra.mxu0 0.0
    %5120 = vmatprep.subr.mxu0 0.0
    %5121 = vmatpush1.msra.mxu0 0.0
    %5122 = vmatprep.subr.mxu0 0.0
    %5123 = vmatpush1.msra.mxu0 0.0
    %5124 = vmatprep.subr.mxu0 0.0
    %5125 = vmatpush1.msra.mxu0 0.0
    %5126 = vmatprep.subr.mxu0 0.0
    %5127 = vmatpush1.msra.mxu0 0.0
    %5128 = vmatprep.subr.mxu0 0.0
    %5129 = vmatpush1.msra.mxu0 0.0
    %5130 = vmatprep.subr.mxu0 0.0
    %5131 = vmatpush1.msra.mxu0 0.0
    %5132 = vmatprep.subr.mxu0 0.0
    %5133 = vmatpush1.msra.mxu0 0.0
    %5134 = vmatprep.subr.mxu0 0.0
    %5135 = vmatpush1.msra.mxu0 0.0
    %5136 = vmatprep.subr.mxu0 0.0
    %5137 = vmatpush1.msra.mxu0 0.0
    %5138 = vmatprep.subr.mxu0 0.0
    %5139 = vmatpush1.msra.mxu0 %v5103
    %5140 = vmatprep.subr.mxu0 0.0
    %5141 = vmatpush2.msra.mxu0 0.0
    %5142 = vmatprep.subr.mxu0 0.0
    %5143 = vmatpush2.msra.mxu0 0.0
    %5144 = vmatprep.subr.mxu0 0.0
    %5145 = vmatpush2.msra.mxu0 0.0
    %5146 = vmatprep.subr.mxu0 0.0
    %5147 = vmatpush2.msra.mxu0 0.0
    %5148 = vmatprep.subr.mxu0 0.0
    %5149 = vmatpush2.msra.mxu0 0.0
    %5150 = vmatprep.subr.mxu0 0.0
    %5151 = vmatpush2.msra.mxu0 0.0
    %5152 = vmatprep.subr.mxu0 0.0
    %5153 = vmatpush2.msra.mxu0 0.0
    %5154 = vmatprep.subr.mxu0 0.0
    %5155 = vmatpush2.msra.mxu0 0.0
    %5156 = vmatprep.subr.mxu0 0.0
    %5157 = vmatpush2.msra.mxu0 0.0
    %5158 = vmatprep.subr.mxu0 0.0
    %5159 = vmatpush2.msra.mxu0 0.0
    %5160 = vmatprep.subr.mxu0 0.0
    %5161 = vmatpush2.msra.mxu0 0.0
    %5162 = vmatprep.subr.mxu0 0.0
    %5163 = vmatpush2.msra.mxu0 0.0
    %5164 = vmatprep.subr.mxu0 0.0
    %5165 = vmatpush2.msra.mxu0 0.0
    %5166 = vmatprep.subr.mxu0 0.0
    %5167 = vmatpush2.msra.mxu0 0.0
    %5168 = vmatprep.subr.mxu0 0.0
    %5169 = vmatpush2.msra.mxu0 0.0
    %5170 = vmatprep.subr.mxu0 0.0
    %5171 = vmatpush2.msra.mxu0 0.0
    %5172 = vmatprep.mubr.f32.mxu0 0.0
    %5173 = vmatmul.mubr.f32.gmra.mxu0 %v5106
    %v5174 = vpop.f32.mrf.mxu0
    %v5175 = vadd.f32 0.0, %v5174
    %v5176 = vpop.f32.mrf.mxu0
    %5177 = vdwg.mxu0
    %5178 = vrot.lane.b32.xlu0 %v4761, 96
    %v5179 = vpop.permute.xlu0 %5178
    %5180 = vrot.lane.b32.xlu0 %v4847, 96
    %v5181 = vpop.permute.xlu0 %5180
    %v5182 = vsel %vm1680, %v5179, 0
    %v5184 = vsel %vm1680, %v5181, 0
    %5186 = vmatprep.subr.mxu0 0.0
    %5187 = vmatpush1.xpose.msra.mxu0 0.0
    %5188 = vmatprep.subr.mxu0 0.0
    %5189 = vmatpush1.xpose.msra.mxu0 0.0
    %5190 = vmatprep.subr.mxu0 0.0
    %5191 = vmatpush1.xpose.msra.mxu0 0.0
    %5192 = vmatprep.subr.mxu0 0.0
    %5193 = vmatpush1.xpose.msra.mxu0 0.0
    %5194 = vmatprep.subr.mxu0 0.0
    %5195 = vmatpush1.xpose.msra.mxu0 0.0
    %5196 = vmatprep.subr.mxu0 0.0
    %5197 = vmatpush1.xpose.msra.mxu0 0.0
    %5198 = vmatprep.subr.mxu0 0.0
    %5199 = vmatpush1.xpose.msra.mxu0 0.0
    %5200 = vmatprep.subr.mxu0 0.0
    %5201 = vmatpush1.xpose.msra.mxu0 0.0
    %5202 = vmatprep.subr.mxu0 0.0
    %5203 = vmatpush1.xpose.msra.mxu0 0.0
    %5204 = vmatprep.subr.mxu0 0.0
    %5205 = vmatpush1.xpose.msra.mxu0 0.0
    %5206 = vmatprep.subr.mxu0 0.0
    %5207 = vmatpush1.xpose.msra.mxu0 0.0
    %5208 = vmatprep.subr.mxu0 0.0
    %5209 = vmatpush1.xpose.msra.mxu0 0.0
    %5210 = vmatprep.subr.mxu0 0.0
    %5211 = vmatpush1.xpose.msra.mxu0 0.0
    %5212 = vmatprep.subr.mxu0 0.0
    %5213 = vmatpush1.xpose.msra.mxu0 0.0
    %5214 = vmatprep.subr.mxu0 0.0
    %5215 = vmatpush1.xpose.msra.mxu0 0.0
    %5216 = vmatprep.subr.mxu0 0.0
    %5217 = vmatpush1.xpose.msra.mxu0 %v5184
    %5218 = vmatprep.subr.mxu0 0.0
    %5219 = vmatpush2.xpose.msra.mxu0 0.0
    %5220 = vmatprep.subr.mxu0 0.0
    %5221 = vmatpush2.xpose.msra.mxu0 0.0
    %5222 = vmatprep.subr.mxu0 0.0
    %5223 = vmatpush2.xpose.msra.mxu0 0.0
    %5224 = vmatprep.subr.mxu0 0.0
    %5225 = vmatpush2.xpose.msra.mxu0 0.0
    %5226 = vmatprep.subr.mxu0 0.0
    %5227 = vmatpush2.xpose.msra.mxu0 0.0
    %5228 = vmatprep.subr.mxu0 0.0
    %5229 = vmatpush2.xpose.msra.mxu0 0.0
    %5230 = vmatprep.subr.mxu0 0.0
    %5231 = vmatpush2.xpose.msra.mxu0 0.0
    %5232 = vmatprep.subr.mxu0 0.0
    %5233 = vmatpush2.xpose.msra.mxu0 0.0
    %5234 = vmatprep.subr.mxu0 0.0
    %5235 = vmatpush2.xpose.msra.mxu0 0.0
    %5236 = vmatprep.subr.mxu0 0.0
    %5237 = vmatpush2.xpose.msra.mxu0 0.0
    %5238 = vmatprep.subr.mxu0 0.0
    %5239 = vmatpush2.xpose.msra.mxu0 0.0
    %5240 = vmatprep.subr.mxu0 0.0
    %5241 = vmatpush2.xpose.msra.mxu0 0.0
    %5242 = vmatprep.subr.mxu0 0.0
    %5243 = vmatpush2.xpose.msra.mxu0 0.0
    %5244 = vmatprep.subr.mxu0 0.0
    %5245 = vmatpush2.xpose.msra.mxu0 0.0
    %5246 = vmatprep.subr.mxu0 0.0
    %5247 = vmatpush2.xpose.msra.mxu0 0.0
    %5248 = vmatprep.subr.mxu0 0.0
    %5249 = vmatpush2.xpose.msra.mxu0 0.0
    %5250 = vmatprep.mubr.f32.mxu0 0.0
    %5251 = vmatmul.mubr.f32.gmra.mxu0 %v5182
    %v5252 = vpop.f32.mrf.mxu0
    %v5253 = vadd.f32 %v2335, %v5252
    %v5254 = vpop.f32.mrf.mxu0
    %5255 = vdwg.mxu0
    %v5256 = vsel %vm1023, %v5253, -inf
    %5257 = vmax.xlane.f32.xlu0 %v5256
    %v5258 = vpop.xlane.xlu0 %5257
    %v5259 = vsub.f32 %v5253, %v5258
    %v5260 = vmul.f32 %v5259, 1.442695
    %v5261 = vpow.pop %v5260
    %v5262 = vsel %vm1023, %v5261, 0.0
    %5263 = vadd.xlane.f32.xlu0 %v5262
    %v5264 = vpop.xlane.xlu0 %5263
    %v5265 = vrcp.pop %v5264
    %v5266 = vmul.f32 %v5261, %v5265
    %5267 = vrot.lane.b32.xlu0 %v4847, 32
    %v5268 = vpop.permute.xlu0 %5267
    %v5271 = vsel %vm1023, %v5266, 0
    %5273 = vmatprep.subr.mxu0 0.0
    %5274 = vmatpush1.msra.mxu0 0.0
    %5275 = vmatprep.subr.mxu0 0.0
    %5276 = vmatpush1.msra.mxu0 0.0
    %5277 = vmatprep.subr.mxu0 0.0
    %5278 = vmatpush1.msra.mxu0 0.0
    %5279 = vmatprep.subr.mxu0 0.0
    %5280 = vmatpush1.msra.mxu0 0.0
    %5281 = vmatprep.subr.mxu0 0.0
    %5282 = vmatpush1.msra.mxu0 0.0
    %5283 = vmatprep.subr.mxu0 0.0
    %5284 = vmatpush1.msra.mxu0 0.0
    %5285 = vmatprep.subr.mxu0 0.0
    %5286 = vmatpush1.msra.mxu0 0.0
    %5287 = vmatprep.subr.mxu0 0.0
    %5288 = vmatpush1.msra.mxu0 0.0
    %5289 = vmatprep.subr.mxu0 0.0
    %5290 = vmatpush1.msra.mxu0 0.0
    %5291 = vmatprep.subr.mxu0 0.0
    %5292 = vmatpush1.msra.mxu0 0.0
    %5293 = vmatprep.subr.mxu0 0.0
    %5294 = vmatpush1.msra.mxu0 0.0
    %5295 = vmatprep.subr.mxu0 0.0
    %5296 = vmatpush1.msra.mxu0 0.0
    %5297 = vmatprep.subr.mxu0 0.0
    %5298 = vmatpush1.msra.mxu0 0.0
    %5299 = vmatprep.subr.mxu0 0.0
    %5300 = vmatpush1.msra.mxu0 0.0
    %5301 = vmatprep.subr.mxu0 0.0
    %5302 = vmatpush1.msra.mxu0 0.0
    %5303 = vmatprep.subr.mxu0 0.0
    %5304 = vmatpush1.msra.mxu0 %v5268
    %5305 = vmatprep.subr.mxu0 0.0
    %5306 = vmatpush2.msra.mxu0 0.0
    %5307 = vmatprep.subr.mxu0 0.0
    %5308 = vmatpush2.msra.mxu0 0.0
    %5309 = vmatprep.subr.mxu0 0.0
    %5310 = vmatpush2.msra.mxu0 0.0
    %5311 = vmatprep.subr.mxu0 0.0
    %5312 = vmatpush2.msra.mxu0 0.0
    %5313 = vmatprep.subr.mxu0 0.0
    %5314 = vmatpush2.msra.mxu0 0.0
    %5315 = vmatprep.subr.mxu0 0.0
    %5316 = vmatpush2.msra.mxu0 0.0
    %5317 = vmatprep.subr.mxu0 0.0
    %5318 = vmatpush2.msra.mxu0 0.0
    %5319 = vmatprep.subr.mxu0 0.0
    %5320 = vmatpush2.msra.mxu0 0.0
    %5321 = vmatprep.subr.mxu0 0.0
    %5322 = vmatpush2.msra.mxu0 0.0
    %5323 = vmatprep.subr.mxu0 0.0
    %5324 = vmatpush2.msra.mxu0 0.0
    %5325 = vmatprep.subr.mxu0 0.0
    %5326 = vmatpush2.msra.mxu0 0.0
    %5327 = vmatprep.subr.mxu0 0.0
    %5328 = vmatpush2.msra.mxu0 0.0
    %5329 = vmatprep.subr.mxu0 0.0
    %5330 = vmatpush2.msra.mxu0 0.0
    %5331 = vmatprep.subr.mxu0 0.0
    %5332 = vmatpush2.msra.mxu0 0.0
    %5333 = vmatprep.subr.mxu0 0.0
    %5334 = vmatpush2.msra.mxu0 0.0
    %5335 = vmatprep.subr.mxu0 0.0
    %5336 = vmatpush2.msra.mxu0 0.0
    %5337 = vmatprep.mubr.f32.mxu0 0.0
    %5338 = vmatmul.mubr.f32.gmra.mxu0 %v5271
    %v5339 = vpop.f32.mrf.mxu0
    %v5340 = vadd.f32 0.0, %v5339
    %v5341 = vpop.f32.mrf.mxu0
    %5342 = vdwg.mxu0
    %5343 = vrot.lane.b32.xlu0 %v4761, 80
    %v5344 = vpop.permute.xlu0 %5343
    %5345 = vrot.lane.b32.xlu0 %v4847, 80
    %v5346 = vpop.permute.xlu0 %5345
    %v5347 = vsel %vm1680, %v5344, 0
    %v5349 = vsel %vm1680, %v5346, 0
    %5351 = vmatprep.subr.mxu0 0.0
    %5352 = vmatpush1.xpose.msra.mxu0 0.0
    %5353 = vmatprep.subr.mxu0 0.0
    %5354 = vmatpush1.xpose.msra.mxu0 0.0
    %5355 = vmatprep.subr.mxu0 0.0
    %5356 = vmatpush1.xpose.msra.mxu0 0.0
    %5357 = vmatprep.subr.mxu0 0.0
    %5358 = vmatpush1.xpose.msra.mxu0 0.0
    %5359 = vmatprep.subr.mxu0 0.0
    %5360 = vmatpush1.xpose.msra.mxu0 0.0
    %5361 = vmatprep.subr.mxu0 0.0
    %5362 = vmatpush1.xpose.msra.mxu0 0.0
    %5363 = vmatprep.subr.mxu0 0.0
    %5364 = vmatpush1.xpose.msra.mxu0 0.0
    %5365 = vmatprep.subr.mxu0 0.0
    %5366 = vmatpush1.xpose.msra.mxu0 0.0
    %5367 = vmatprep.subr.mxu0 0.0
    %5368 = vmatpush1.xpose.msra.mxu0 0.0
    %5369 = vmatprep.subr.mxu0 0.0
    %5370 = vmatpush1.xpose.msra.mxu0 0.0
    %5371 = vmatprep.subr.mxu0 0.0
    %5372 = vmatpush1.xpose.msra.mxu0 0.0
    %5373 = vmatprep.subr.mxu0 0.0
    %5374 = vmatpush1.xpose.msra.mxu0 0.0
    %5375 = vmatprep.subr.mxu0 0.0
    %5376 = vmatpush1.xpose.msra.mxu0 0.0
    %5377 = vmatprep.subr.mxu0 0.0
    %5378 = vmatpush1.xpose.msra.mxu0 0.0
    %5379 = vmatprep.subr.mxu0 0.0
    %5380 = vmatpush1.xpose.msra.mxu0 0.0
    %5381 = vmatprep.subr.mxu0 0.0
    %5382 = vmatpush1.xpose.msra.mxu0 %v5349
    %5383 = vmatprep.subr.mxu0 0.0
    %5384 = vmatpush2.xpose.msra.mxu0 0.0
    %5385 = vmatprep.subr.mxu0 0.0
    %5386 = vmatpush2.xpose.msra.mxu0 0.0
    %5387 = vmatprep.subr.mxu0 0.0
    %5388 = vmatpush2.xpose.msra.mxu0 0.0
    %5389 = vmatprep.subr.mxu0 0.0
    %5390 = vmatpush2.xpose.msra.mxu0 0.0
    %5391 = vmatprep.subr.mxu0 0.0
    %5392 = vmatpush2.xpose.msra.mxu0 0.0
    %5393 = vmatprep.subr.mxu0 0.0
    %5394 = vmatpush2.xpose.msra.mxu0 0.0
    %5395 = vmatprep.subr.mxu0 0.0
    %5396 = vmatpush2.xpose.msra.mxu0 0.0
    %5397 = vmatprep.subr.mxu0 0.0
    %5398 = vmatpush2.xpose.msra.mxu0 0.0
    %5399 = vmatprep.subr.mxu0 0.0
    %5400 = vmatpush2.xpose.msra.mxu0 0.0
    %5401 = vmatprep.subr.mxu0 0.0
    %5402 = vmatpush2.xpose.msra.mxu0 0.0
    %5403 = vmatprep.subr.mxu0 0.0
    %5404 = vmatpush2.xpose.msra.mxu0 0.0
    %5405 = vmatprep.subr.mxu0 0.0
    %5406 = vmatpush2.xpose.msra.mxu0 0.0
    %5407 = vmatprep.subr.mxu0 0.0
    %5408 = vmatpush2.xpose.msra.mxu0 0.0
    %5409 = vmatprep.subr.mxu0 0.0
    %5410 = vmatpush2.xpose.msra.mxu0 0.0
    %5411 = vmatprep.subr.mxu0 0.0
    %5412 = vmatpush2.xpose.msra.mxu0 0.0
    %5413 = vmatprep.subr.mxu0 0.0
    %5414 = vmatpush2.xpose.msra.mxu0 0.0
    %5415 = vmatprep.mubr.f32.mxu0 0.0
    %5416 = vmatmul.mubr.f32.gmra.mxu0 %v5347
    %v5417 = vpop.f32.mrf.mxu0
    %v5418 = vadd.f32 %v2335, %v5417
    %v5419 = vpop.f32.mrf.mxu0
    %5420 = vdwg.mxu0
    %v5421 = vsel %vm1023, %v5418, -inf
    %5422 = vmax.xlane.f32.xlu0 %v5421
    %v5423 = vpop.xlane.xlu0 %5422
    %v5424 = vsub.f32 %v5418, %v5423
    %v5425 = vmul.f32 %v5424, 1.442695
    %v5426 = vpow.pop %v5425
    %v5427 = vsel %vm1023, %v5426, 0.0
    %5428 = vadd.xlane.f32.xlu0 %v5427
    %v5429 = vpop.xlane.xlu0 %5428
    %v5430 = vrcp.pop %v5429
    %v5431 = vmul.f32 %v5426, %v5430
    %5432 = vrot.lane.b32.xlu0 %v4847, 16
    %v5433 = vpop.permute.xlu0 %5432
    %v5436 = vsel %vm1023, %v5431, 0
    %5438 = vmatprep.subr.mxu0 0.0
    %5439 = vmatpush1.msra.mxu0 0.0
    %5440 = vmatprep.subr.mxu0 0.0
    %5441 = vmatpush1.msra.mxu0 0.0
    %5442 = vmatprep.subr.mxu0 0.0
    %5443 = vmatpush1.msra.mxu0 0.0
    %5444 = vmatprep.subr.mxu0 0.0
    %5445 = vmatpush1.msra.mxu0 0.0
    %5446 = vmatprep.subr.mxu0 0.0
    %5447 = vmatpush1.msra.mxu0 0.0
    %5448 = vmatprep.subr.mxu0 0.0
    %5449 = vmatpush1.msra.mxu0 0.0
    %5450 = vmatprep.subr.mxu0 0.0
    %5451 = vmatpush1.msra.mxu0 0.0
    %5452 = vmatprep.subr.mxu0 0.0
    %5453 = vmatpush1.msra.mxu0 0.0
    %5454 = vmatprep.subr.mxu0 0.0
    %5455 = vmatpush1.msra.mxu0 0.0
    %5456 = vmatprep.subr.mxu0 0.0
    %5457 = vmatpush1.msra.mxu0 0.0
    %5458 = vmatprep.subr.mxu0 0.0
    %5459 = vmatpush1.msra.mxu0 0.0
    %5460 = vmatprep.subr.mxu0 0.0
    %5461 = vmatpush1.msra.mxu0 0.0
    %5462 = vmatprep.subr.mxu0 0.0
    %5463 = vmatpush1.msra.mxu0 0.0
    %5464 = vmatprep.subr.mxu0 0.0
    %5465 = vmatpush1.msra.mxu0 0.0
    %5466 = vmatprep.subr.mxu0 0.0
    %5467 = vmatpush1.msra.mxu0 0.0
    %5468 = vmatprep.subr.mxu0 0.0
    %5469 = vmatpush1.msra.mxu0 %v5433
    %5470 = vmatprep.subr.mxu0 0.0
    %5471 = vmatpush2.msra.mxu0 0.0
    %5472 = vmatprep.subr.mxu0 0.0
    %5473 = vmatpush2.msra.mxu0 0.0
    %5474 = vmatprep.subr.mxu0 0.0
    %5475 = vmatpush2.msra.mxu0 0.0
    %5476 = vmatprep.subr.mxu0 0.0
    %5477 = vmatpush2.msra.mxu0 0.0
    %5478 = vmatprep.subr.mxu0 0.0
    %5479 = vmatpush2.msra.mxu0 0.0
    %5480 = vmatprep.subr.mxu0 0.0
    %5481 = vmatpush2.msra.mxu0 0.0
    %5482 = vmatprep.subr.mxu0 0.0
    %5483 = vmatpush2.msra.mxu0 0.0
    %5484 = vmatprep.subr.mxu0 0.0
    %5485 = vmatpush2.msra.mxu0 0.0
    %5486 = vmatprep.subr.mxu0 0.0
    %5487 = vmatpush2.msra.mxu0 0.0
    %5488 = vmatprep.subr.mxu0 0.0
    %5489 = vmatpush2.msra.mxu0 0.0
    %5490 = vmatprep.subr.mxu0 0.0
    %5491 = vmatpush2.msra.mxu0 0.0
    %5492 = vmatprep.subr.mxu0 0.0
    %5493 = vmatpush2.msra.mxu0 0.0
    %5494 = vmatprep.subr.mxu0 0.0
    %5495 = vmatpush2.msra.mxu0 0.0
    %5496 = vmatprep.subr.mxu0 0.0
    %5497 = vmatpush2.msra.mxu0 0.0
    %5498 = vmatprep.subr.mxu0 0.0
    %5499 = vmatpush2.msra.mxu0 0.0
    %5500 = vmatprep.subr.mxu0 0.0
    %5501 = vmatpush2.msra.mxu0 0.0
    %5502 = vmatprep.mubr.f32.mxu0 0.0
    %5503 = vmatmul.mubr.f32.gmra.mxu0 %v5436
    %v5504 = vpop.f32.mrf.mxu0
    %v5505 = vadd.f32 0.0, %v5504
    %v5506 = vpop.f32.mrf.mxu0
    %5507 = vdwg.mxu0
    %5509 = vrot.lane.b32.xlu0 %v5175, 16
    %v5510 = vpop.permute.xlu0 %5509
    %5513 = vrot.lane.b32.xlu0 %v5340, 32
    %v5514 = vpop.permute.xlu0 %5513
    %5517 = vrot.lane.b32.xlu0 %v5505, 48
    %v5518 = vpop.permute.xlu0 %5517
    %v5520 = vsel %vm1680, %v5010, %v5510
    %v5521 = vsel %vm1689, %v5520, %v5514
    %v5522 = vsel %vm1711, %v5521, %v5518
    %v5523 = vld [vmem:[%s99] sm:$0xff]
    %v5524 = vld [vmem:[%s99 + $0x8] sm:$0xff]
    %v5525 = vld [vmem:[%s99 + $0x10] sm:$0xff]
    %v5526 = vld [vmem:[%s99 + $0x18] sm:$0xff]
    %v5527 = vld [vmem:[%s99 + $0x20] sm:$0xff]
    %v5528 = vld [vmem:[%s99 + $0x28] sm:$0xff]
    %v5529 = vld [vmem:[%s99 + $0x30] sm:$0xff]
    %v5530 = vld [vmem:[%s99 + $0x38] sm:$0xff]
    %v5531 = vld [vmem:[#allocation10] sm:$0x1]
    %v5533 = vlaneseq
    %v5534 = vshrl.u32 %v5533, 7
    %v5535 = vsub.s32 0, %v5534
    %v5536 = vrot.slane %v5531, %v5535
    %v5539 = vsel %vm1893, %v5522, 0
    %5541 = vmatprep.subr.mxu0 0.0
    %5542 = vmatpush1.msra.mxu0 0.0
    %5543 = vmatprep.subr.mxu0 0.0
    %5544 = vmatpush1.msra.mxu0 0.0
    %5545 = vmatprep.subr.mxu0 0.0
    %5546 = vmatpush1.msra.mxu0 0.0
    %5547 = vmatprep.subr.mxu0 0.0
    %5548 = vmatpush1.msra.mxu0 0.0
    %5549 = vmatprep.subr.mxu0 0.0
    %5550 = vmatpush1.msra.mxu0 0.0
    %5551 = vmatprep.subr.mxu0 0.0
    %5552 = vmatpush1.msra.mxu0 0.0
    %5553 = vmatprep.subr.mxu0 0.0
    %5554 = vmatpush1.msra.mxu0 0.0
    %5555 = vmatprep.subr.mxu0 0.0
    %5556 = vmatpush1.msra.mxu0 0.0
    %5557 = vmatprep.subr.mxu0 0.0
    %5558 = vmatpush1.msra.mxu0 %v5530
    %5559 = vmatprep.subr.mxu0 0.0
    %5560 = vmatpush1.msra.mxu0 %v5529
    %5561 = vmatprep.subr.mxu0 0.0
    %5562 = vmatpush1.msra.mxu0 %v5528
    %5563 = vmatprep.subr.mxu0 0.0
    %5564 = vmatpush1.msra.mxu0 %v5527
    %5565 = vmatprep.subr.mxu0 0.0
    %5566 = vmatpush1.msra.mxu0 %v5526
    %5567 = vmatprep.subr.mxu0 0.0
    %5568 = vmatpush1.msra.mxu0 %v5525
    %5569 = vmatprep.subr.mxu0 0.0
    %5570 = vmatpush1.msra.mxu0 %v5524
    %5571 = vmatprep.subr.mxu0 0.0
    %5572 = vmatpush1.msra.mxu0 %v5523
    %5573 = vmatprep.subr.mxu0 0.0
    %5574 = vmatpush2.msra.mxu0 0.0
    %5575 = vmatprep.subr.mxu0 0.0
    %5576 = vmatpush2.msra.mxu0 0.0
    %5577 = vmatprep.subr.mxu0 0.0
    %5578 = vmatpush2.msra.mxu0 0.0
    %5579 = vmatprep.subr.mxu0 0.0
    %5580 = vmatpush2.msra.mxu0 0.0
    %5581 = vmatprep.subr.mxu0 0.0
    %5582 = vmatpush2.msra.mxu0 0.0
    %5583 = vmatprep.subr.mxu0 0.0
    %5584 = vmatpush2.msra.mxu0 0.0
    %5585 = vmatprep.subr.mxu0 0.0
    %5586 = vmatpush2.msra.mxu0 0.0
    %5587 = vmatprep.subr.mxu0 0.0
    %5588 = vmatpush2.msra.mxu0 0.0
    %5589 = vmatprep.subr.mxu0 0.0
    %5590 = vmatpush2.msra.mxu0 0.0
    %5591 = vmatprep.subr.mxu0 0.0
    %5592 = vmatpush2.msra.mxu0 0.0
    %5593 = vmatprep.subr.mxu0 0.0
    %5594 = vmatpush2.msra.mxu0 0.0
    %5595 = vmatprep.subr.mxu0 0.0
    %5596 = vmatpush2.msra.mxu0 0.0
    %5597 = vmatprep.subr.mxu0 0.0
    %5598 = vmatpush2.msra.mxu0 0.0
    %5599 = vmatprep.subr.mxu0 0.0
    %5600 = vmatpush2.msra.mxu0 0.0
    %5601 = vmatprep.subr.mxu0 0.0
    %5602 = vmatpush2.msra.mxu0 0.0
    %5603 = vmatprep.subr.mxu0 0.0
    %5604 = vmatpush2.msra.mxu0 0.0
    %5605 = vmatprep.mubr.f32.mxu0 0.0
    %5606 = vmatmul.mubr.f32.gmra.mxu0 %v5539
    %v5607 = vpop.f32.mrf.mxu0
    %v5608 = vadd.f32 %v5536, %v5607
    %v5609 = vpop.f32.mrf.mxu0
    %5610 = vdwg.mxu0
    %v5611 = vadd.f32 %v3504, %v5608
    %v5612 = vld [vmem:[#allocation12] sm:$0x1]
    %v5613 = vld [vmem:[#allocation13] sm:$0x1]
    %v5614 = vsel %vm1893, %v5611, 0.0
    %5615 = vadd.xlane.f32.xlu0 %v5614
    %v5616 = vpop.xlane.xlu0 %5615
    %v5617 = vmul.f32 %v5616, %v3277
    %v5618 = vsub.f32 %v5611, %v5617
    %v5619 = vmul.f32 %v5618, %v5618
    %v5620 = vsel %vm1893, %v5619, 0.0
    %5621 = vadd.xlane.f32.xlu0 %v5620
    %v5622 = vpop.xlane.xlu0 %5621
    %v5623 = vmul.f32 %v5622, %v3277
    %v5624 = vadd.f32 %v5623, 1e-05
    %v5625 = vrsqrt.pop %v5624
    %v5626 = vmul.f32 %v5618, %v5625
    %v5628 = vlaneseq
    %v5629 = vshrl.u32 %v5628, 7
    %v5630 = vsub.s32 0, %v5629
    %v5631 = vrot.slane %v5612, %v5630
    %v5633 = vmul.f32 %v5626, %v5631
    %v5635 = vlaneseq
    %v5636 = vshrl.u32 %v5635, 7
    %v5637 = vsub.s32 0, %v5636
    %v5638 = vrot.slane %v5613, %v5637
    %v5640 = vadd.f32 %v5633, %v5638
    %v5641 = vld [vmem:[%s107] sm:$0xff]
    %v5642 = vld [vmem:[%s107 + $0x8] sm:$0xff]
    %v5643 = vld [vmem:[%s107 + $0x10] sm:$0xff]
    %v5644 = vld [vmem:[%s107 + $0x18] sm:$0xff]
    %v5645 = vld [vmem:[%s107 + $0x20] sm:$0xff]
    %v5646 = vld [vmem:[%s107 + $0x28] sm:$0xff]
    %v5647 = vld [vmem:[%s107 + $0x30] sm:$0xff]
    %v5648 = vld [vmem:[%s107 + $0x38] sm:$0xff]
    %v5649 = vld [vmem:[#allocation15] sm:$0x1]
    %v5651 = vlaneseq
    %v5652 = vshrl.u32 %v5651, 7
    %v5653 = vsub.s32 0, %v5652
    %v5654 = vrot.slane %v5649, %v5653
    %v5657 = vsel %vm1893, %v5640, 0
    %5659 = vmatprep.subr.mxu0 0.0
    %5660 = vmatpush1.msra.mxu0 0.0
    %5661 = vmatprep.subr.mxu0 0.0
    %5662 = vmatpush1.msra.mxu0 0.0
    %5663 = vmatprep.subr.mxu0 0.0
    %5664 = vmatpush1.msra.mxu0 0.0
    %5665 = vmatprep.subr.mxu0 0.0
    %5666 = vmatpush1.msra.mxu0 0.0
    %5667 = vmatprep.subr.mxu0 0.0
    %5668 = vmatpush1.msra.mxu0 0.0
    %5669 = vmatprep.subr.mxu0 0.0
    %5670 = vmatpush1.msra.mxu0 0.0
    %5671 = vmatprep.subr.mxu0 0.0
    %5672 = vmatpush1.msra.mxu0 0.0
    %5673 = vmatprep.subr.mxu0 0.0
    %5674 = vmatpush1.msra.mxu0 0.0
    %5675 = vmatprep.subr.mxu0 0.0
    %5676 = vmatpush1.msra.mxu0 %v5648
    %5677 = vmatprep.subr.mxu0 0.0
    %5678 = vmatpush1.msra.mxu0 %v5647
    %5679 = vmatprep.subr.mxu0 0.0
    %5680 = vmatpush1.msra.mxu0 %v5646
    %5681 = vmatprep.subr.mxu0 0.0
    %5682 = vmatpush1.msra.mxu0 %v5645
    %5683 = vmatprep.subr.mxu0 0.0
    %5684 = vmatpush1.msra.mxu0 %v5644
    %5685 = vmatprep.subr.mxu0 0.0
    %5686 = vmatpush1.msra.mxu0 %v5643
    %5687 = vmatprep.subr.mxu0 0.0
    %5688 = vmatpush1.msra.mxu0 %v5642
    %5689 = vmatprep.subr.mxu0 0.0
    %5690 = vmatpush1.msra.mxu0 %v5641
    %5691 = vmatprep.subr.mxu0 0.0
    %5692 = vmatpush2.msra.mxu0 0.0
    %5693 = vmatprep.subr.mxu0 0.0
    %5694 = vmatpush2.msra.mxu0 0.0
    %5695 = vmatprep.subr.mxu0 0.0
    %5696 = vmatpush2.msra.mxu0 0.0
    %5697 = vmatprep.subr.mxu0 0.0
    %5698 = vmatpush2.msra.mxu0 0.0
    %5699 = vmatprep.subr.mxu0 0.0
    %5700 = vmatpush2.msra.mxu0 0.0
    %5701 = vmatprep.subr.mxu0 0.0
    %5702 = vmatpush2.msra.mxu0 0.0
    %5703 = vmatprep.subr.mxu0 0.0
    %5704 = vmatpush2.msra.mxu0 0.0
    %5705 = vmatprep.subr.mxu0 0.0
    %5706 = vmatpush2.msra.mxu0 0.0
    %5707 = vmatprep.subr.mxu0 0.0
    %5708 = vmatpush2.msra.mxu0 0.0
    %5709 = vmatprep.subr.mxu0 0.0
    %5710 = vmatpush2.msra.mxu0 0.0
    %5711 = vmatprep.subr.mxu0 0.0
    %5712 = vmatpush2.msra.mxu0 0.0
    %5713 = vmatprep.subr.mxu0 0.0
    %5714 = vmatpush2.msra.mxu0 0.0
    %5715 = vmatprep.subr.mxu0 0.0
    %5716 = vmatpush2.msra.mxu0 0.0
    %5717 = vmatprep.subr.mxu0 0.0
    %5718 = vmatpush2.msra.mxu0 0.0
    %5719 = vmatprep.subr.mxu0 0.0
    %5720 = vmatpush2.msra.mxu0 0.0
    %5721 = vmatprep.subr.mxu0 0.0
    %5722 = vmatpush2.msra.mxu0 0.0
    %5723 = vmatprep.mubr.f32.mxu0 0.0
    %5724 = vmatmul.mubr.f32.gmra.mxu0 %v5657
    %v5725 = vpop.f32.mrf.mxu0
    %v5726 = vadd.f32 %v5654, %v5725
    %v5727 = vpop.f32.mrf.mxu0
    %5728 = vdwg.mxu0
    %v5729 = vmax.f32 %v5726, 0.0
    %v5730 = vld [vmem:[%s111] sm:$0xff]
    %v5731 = vld [vmem:[%s111 + $0x8] sm:$0xff]
    %v5732 = vld [vmem:[%s111 + $0x10] sm:$0xff]
    %v5733 = vld [vmem:[%s111 + $0x18] sm:$0xff]
    %v5734 = vld [vmem:[#allocation16] sm:$0x1]
    %v5736 = vlaneseq
    %v5737 = vshrl.u32 %v5736, 7
    %v5738 = vsub.s32 0, %v5737
    %v5739 = vrot.slane %v5734, %v5738
    %v5742 = vsel %vm1689, %v5729, 0
    %5744 = vmatprep.subr.mxu0 0.0
    %5745 = vmatpush1.msra.mxu0 0.0
    %5746 = vmatprep.subr.mxu0 0.0
    %5747 = vmatpush1.msra.mxu0 0.0
    %5748 = vmatprep.subr.mxu0 0.0
    %5749 = vmatpush1.msra.mxu0 0.0
    %5750 = vmatprep.subr.mxu0 0.0
    %5751 = vmatpush1.msra.mxu0 0.0
    %5752 = vmatprep.subr.mxu0 0.0
    %5753 = vmatpush1.msra.mxu0 0.0
    %5754 = vmatprep.subr.mxu0 0.0
    %5755 = vmatpush1.msra.mxu0 0.0
    %5756 = vmatprep.subr.mxu0 0.0
    %5757 = vmatpush1.msra.mxu0 0.0
    %5758 = vmatprep.subr.mxu0 0.0
    %5759 = vmatpush1.msra.mxu0 0.0
    %5760 = vmatprep.subr.mxu0 0.0
    %5761 = vmatpush1.msra.mxu0 0.0
    %5762 = vmatprep.subr.mxu0 0.0
    %5763 = vmatpush1.msra.mxu0 0.0
    %5764 = vmatprep.subr.mxu0 0.0
    %5765 = vmatpush1.msra.mxu0 0.0
    %5766 = vmatprep.subr.mxu0 0.0
    %5767 = vmatpush1.msra.mxu0 0.0
    %5768 = vmatprep.subr.mxu0 0.0
    %5769 = vmatpush1.msra.mxu0 %v5733
    %5770 = vmatprep.subr.mxu0 0.0
    %5771 = vmatpush1.msra.mxu0 %v5732
    %5772 = vmatprep.subr.mxu0 0.0
    %5773 = vmatpush1.msra.mxu0 %v5731
    %5774 = vmatprep.subr.mxu0 0.0
    %5775 = vmatpush1.msra.mxu0 %v5730
    %5776 = vmatprep.subr.mxu0 0.0
    %5777 = vmatpush2.msra.mxu0 0.0
    %5778 = vmatprep.subr.mxu0 0.0
    %5779 = vmatpush2.msra.mxu0 0.0
    %5780 = vmatprep.subr.mxu0 0.0
    %5781 = vmatpush2.msra.mxu0 0.0
    %5782 = vmatprep.subr.mxu0 0.0
    %5783 = vmatpush2.msra.mxu0 0.0
    %5784 = vmatprep.subr.mxu0 0.0
    %5785 = vmatpush2.msra.mxu0 0.0
    %5786 = vmatprep.subr.mxu0 0.0
    %5787 = vmatpush2.msra.mxu0 0.0
    %5788 = vmatprep.subr.mxu0 0.0
    %5789 = vmatpush2.msra.mxu0 0.0
    %5790 = vmatprep.subr.mxu0 0.0
    %5791 = vmatpush2.msra.mxu0 0.0
    %5792 = vmatprep.subr.mxu0 0.0
    %5793 = vmatpush2.msra.mxu0 0.0
    %5794 = vmatprep.subr.mxu0 0.0
    %5795 = vmatpush2.msra.mxu0 0.0
    %5796 = vmatprep.subr.mxu0 0.0
    %5797 = vmatpush2.msra.mxu0 0.0
    %5798 = vmatprep.subr.mxu0 0.0
    %5799 = vmatpush2.msra.mxu0 0.0
    %5800 = vmatprep.subr.mxu0 0.0
    %5801 = vmatpush2.msra.mxu0 0.0
    %5802 = vmatprep.subr.mxu0 0.0
    %5803 = vmatpush2.msra.mxu0 0.0
    %5804 = vmatprep.subr.mxu0 0.0
    %5805 = vmatpush2.msra.mxu0 0.0
    %5806 = vmatprep.subr.mxu0 0.0
    %5807 = vmatpush2.msra.mxu0 0.0
    %5808 = vmatprep.mubr.f32.mxu0 0.0
    %5809 = vmatmul.mubr.f32.gmra.mxu0 %v5742
    %v5810 = vpop.f32.mrf.mxu0
    %v5811 = vadd.f32 %v5739, %v5810
    %v5812 = vpop.f32.mrf.mxu0
    %5813 = vdwg.mxu0
    %v5814 = vadd.f32 %v5640, %v5811
    %v5815 = vld [vmem:[#allocation18] sm:$0x1]
    %v5816 = vld [vmem:[#allocation19] sm:$0x1]
    %v5817 = vsel %vm1893, %v5814, 0.0
    %5818 = vadd.xlane.f32.xlu0 %v5817
    %v5819 = vpop.xlane.xlu0 %5818
    %v5820 = vmul.f32 %v5819, %v3277
    %v5821 = vsub.f32 %v5814, %v5820
    %v5822 = vmul.f32 %v5821, %v5821
    %v5823 = vsel %vm1893, %v5822, 0.0
    %5824 = vadd.xlane.f32.xlu0 %v5823
    %v5825 = vpop.xlane.xlu0 %5824
    %v5826 = vmul.f32 %v5825, %v3277
    %v5827 = vadd.f32 %v5826, 1e-05
    %v5828 = vrsqrt.pop %v5827
    %v5829 = vmul.f32 %v5821, %v5828
    %v5831 = vlaneseq
    %v5832 = vshrl.u32 %v5831, 7
    %v5833 = vsub.s32 0, %v5832
    %v5834 = vrot.slane %v5815, %v5833
    %v5836 = vmul.f32 %v5829, %v5834
    %v5838 = vlaneseq
    %v5839 = vshrl.u32 %v5838, 7
    %v5840 = vsub.s32 0, %v5839
    %v5841 = vrot.slane %v5816, %v5840
    %v5843 = vadd.f32 %v5836, %v5841
    %v5844 = vld [vmem:[%s119] sm:$0xff]
    %v5845 = vld [vmem:[%s119 + $0x8] sm:$0xff]
    %v5846 = vld [vmem:[%s119 + $0x10] sm:$0xff]
    %v5847 = vld [vmem:[%s119 + $0x18] sm:$0xff]
    %v5848 = vld [vmem:[%s119 + $0x20] sm:$0xff]
    %v5849 = vld [vmem:[%s119 + $0x28] sm:$0xff]
    %v5850 = vld [vmem:[%s119 + $0x30] sm:$0xff]
    %v5851 = vld [vmem:[%s119 + $0x38] sm:$0xff]
    %v5852 = vld [vmem:[#allocation21] sm:$0x1]
    %v5854 = vlaneseq
    %v5855 = vshrl.u32 %v5854, 7
    %v5856 = vsub.s32 0, %v5855
    %v5857 = vrot.slane %v5852, %v5856
    %5859 = vmatprep.subr.mxu0 0.0
    %5860 = vmatpush1.msra.mxu0 0.0
    %5861 = vmatprep.subr.mxu0 0.0
    %5862 = vmatpush1.msra.mxu0 0.0
    %5863 = vmatprep.subr.mxu0 0.0
    %5864 = vmatpush1.msra.mxu0 0.0
    %5865 = vmatprep.subr.mxu0 0.0
    %5866 = vmatpush1.msra.mxu0 0.0
    %5867 = vmatprep.subr.mxu0 0.0
    %5868 = vmatpush1.msra.mxu0 0.0
    %5869 = vmatprep.subr.mxu0 0.0
    %5870 = vmatpush1.msra.mxu0 0.0
    %5871 = vmatprep.subr.mxu0 0.0
    %5872 = vmatpush1.msra.mxu0 0.0
    %5873 = vmatprep.subr.mxu0 0.0
    %5874 = vmatpush1.msra.mxu0 0.0
    %5875 = vmatprep.subr.mxu0 0.0
    %5876 = vmatpush1.msra.mxu0 %v5851
    %5877 = vmatprep.subr.mxu0 0.0
    %5878 = vmatpush1.msra.mxu0 %v5850
    %5879 = vmatprep.subr.mxu0 0.0
    %5880 = vmatpush1.msra.mxu0 %v5849
    %5881 = vmatprep.subr.mxu0 0.0
    %5882 = vmatpush1.msra.mxu0 %v5848
    %5883 = vmatprep.subr.mxu0 0.0
    %5884 = vmatpush1.msra.mxu0 %v5847
    %5885 = vmatprep.subr.mxu0 0.0
    %5886 = vmatpush1.msra.mxu0 %v5846
    %5887 = vmatprep.subr.mxu0 0.0
    %5888 = vmatpush1.msra.mxu0 %v5845
    %5889 = vmatprep.subr.mxu0 0.0
    %5890 = vmatpush1.msra.mxu0 %v5844
    %5891 = vmatprep.subr.mxu0 0.0
    %5892 = vmatpush2.msra.mxu0 0.0
    %5893 = vmatprep.subr.mxu0 0.0
    %5894 = vmatpush2.msra.mxu0 0.0
    %5895 = vmatprep.subr.mxu0 0.0
    %5896 = vmatpush2.msra.mxu0 0.0
    %5897 = vmatprep.subr.mxu0 0.0
    %5898 = vmatpush2.msra.mxu0 0.0
    %5899 = vmatprep.subr.mxu0 0.0
    %5900 = vmatpush2.msra.mxu0 0.0
    %5901 = vmatprep.subr.mxu0 0.0
    %5902 = vmatpush2.msra.mxu0 0.0
    %5903 = vmatprep.subr.mxu0 0.0
    %5904 = vmatpush2.msra.mxu0 0.0
    %5905 = vmatprep.subr.mxu0 0.0
    %5906 = vmatpush2.msra.mxu0 0.0
    %5907 = vmatprep.subr.mxu0 0.0
    %5908 = vmatpush2.msra.mxu0 0.0
    %5909 = vmatprep.subr.mxu0 0.0
    %5910 = vmatpush2.msra.mxu0 0.0
    %5911 = vmatprep.subr.mxu0 0.0
    %5912 = vmatpush2.msra.mxu0 0.0
    %5913 = vmatprep.subr.mxu0 0.0
    %5914 = vmatpush2.msra.mxu0 0.0
    %5915 = vmatprep.subr.mxu0 0.0
    %5916 = vmatpush2.msra.mxu0 0.0
    %5917 = vmatprep.subr.mxu0 0.0
    %5918 = vmatpush2.msra.mxu0 0.0
    %5919 = vmatprep.subr.mxu0 0.0
    %5920 = vmatpush2.msra.mxu0 0.0
    %5921 = vmatprep.subr.mxu0 0.0
    %5922 = vmatpush2.msra.mxu0 0.0
    %5923 = vmatprep.mubr.f32.mxu0 0.0
    %5924 = vmatmul.mubr.f32.gmra.mxu0 %v4778
    %v5925 = vpop.f32.mrf.mxu0
    %v5926 = vadd.f32 %v5857, %v5925
    %v5927 = vpop.f32.mrf.mxu0
    %5928 = vdwg.mxu0
    %v5929 = vmul.f32 %v5926, 0.25
    %v5930 = vld [vmem:[%s123] sm:$0xff]
    %v5931 = vld [vmem:[%s123 + $0x8] sm:$0xff]
    %v5932 = vld [vmem:[%s123 + $0x10] sm:$0xff]
    %v5933 = vld [vmem:[%s123 + $0x18] sm:$0xff]
    %v5934 = vld [vmem:[%s123 + $0x20] sm:$0xff]
    %v5935 = vld [vmem:[%s123 + $0x28] sm:$0xff]
    %v5936 = vld [vmem:[%s123 + $0x30] sm:$0xff]
    %v5937 = vld [vmem:[%s123 + $0x38] sm:$0xff]
    %v5938 = vld [vmem:[#allocation22] sm:$0x1]
    %v5940 = vlaneseq
    %v5941 = vshrl.u32 %v5940, 7
    %v5942 = vsub.s32 0, %v5941
    %v5943 = vrot.slane %v5938, %v5942
    %5945 = vmatprep.subr.mxu0 0.0
    %5946 = vmatpush1.msra.mxu0 0.0
    %5947 = vmatprep.subr.mxu0 0.0
    %5948 = vmatpush1.msra.mxu0 0.0
    %5949 = vmatprep.subr.mxu0 0.0
    %5950 = vmatpush1.msra.mxu0 0.0
    %5951 = vmatprep.subr.mxu0 0.0
    %5952 = vmatpush1.msra.mxu0 0.0
    %5953 = vmatprep.subr.mxu0 0.0
    %5954 = vmatpush1.msra.mxu0 0.0
    %5955 = vmatprep.subr.mxu0 0.0
    %5956 = vmatpush1.msra.mxu0 0.0
    %5957 = vmatprep.subr.mxu0 0.0
    %5958 = vmatpush1.msra.mxu0 0.0
    %5959 = vmatprep.subr.mxu0 0.0
    %5960 = vmatpush1.msra.mxu0 0.0
    %5961 = vmatprep.subr.mxu0 0.0
    %5962 = vmatpush1.msra.mxu0 %v5937
    %5963 = vmatprep.subr.mxu0 0.0
    %5964 = vmatpush1.msra.mxu0 %v5936
    %5965 = vmatprep.subr.mxu0 0.0
    %5966 = vmatpush1.msra.mxu0 %v5935
    %5967 = vmatprep.subr.mxu0 0.0
    %5968 = vmatpush1.msra.mxu0 %v5934
    %5969 = vmatprep.subr.mxu0 0.0
    %5970 = vmatpush1.msra.mxu0 %v5933
    %5971 = vmatprep.subr.mxu0 0.0
    %5972 = vmatpush1.msra.mxu0 %v5932
    %5973 = vmatprep.subr.mxu0 0.0
    %5974 = vmatpush1.msra.mxu0 %v5931
    %5975 = vmatprep.subr.mxu0 0.0
    %5976 = vmatpush1.msra.mxu0 %v5930
    %5977 = vmatprep.subr.mxu0 0.0
    %5978 = vmatpush2.msra.mxu0 0.0
    %5979 = vmatprep.subr.mxu0 0.0
    %5980 = vmatpush2.msra.mxu0 0.0
    %5981 = vmatprep.subr.mxu0 0.0
    %5982 = vmatpush2.msra.mxu0 0.0
    %5983 = vmatprep.subr.mxu0 0.0
    %5984 = vmatpush2.msra.mxu0 0.0
    %5985 = vmatprep.subr.mxu0 0.0
    %5986 = vmatpush2.msra.mxu0 0.0
    %5987 = vmatprep.subr.mxu0 0.0
    %5988 = vmatpush2.msra.mxu0 0.0
    %5989 = vmatprep.subr.mxu0 0.0
    %5990 = vmatpush2.msra.mxu0 0.0
    %5991 = vmatprep.subr.mxu0 0.0
    %5992 = vmatpush2.msra.mxu0 0.0
    %5993 = vmatprep.subr.mxu0 0.0
    %5994 = vmatpush2.msra.mxu0 0.0
    %5995 = vmatprep.subr.mxu0 0.0
    %5996 = vmatpush2.msra.mxu0 0.0
    %5997 = vmatprep.subr.mxu0 0.0
    %5998 = vmatpush2.msra.mxu0 0.0
    %5999 = vmatprep.subr.mxu0 0.0
    %6000 = vmatpush2.msra.mxu0 0.0
    %6001 = vmatprep.subr.mxu0 0.0
    %6002 = vmatpush2.msra.mxu0 0.0
    %6003 = vmatprep.subr.mxu0 0.0
    %6004 = vmatpush2.msra.mxu0 0.0
    %6005 = vmatprep.subr.mxu0 0.0
    %6006 = vmatpush2.msra.mxu0 0.0
    %6007 = vmatprep.subr.mxu0 0.0
    %6008 = vmatpush2.msra.mxu0 0.0
    %6009 = vmatprep.mubr.f32.mxu0 0.0
    %6010 = vmatmul.mubr.f32.gmra.mxu0 %v4689
    %v6011 = vpop.f32.mrf.mxu0
    %v6012 = vadd.f32 %v5943, %v6011
    %v6013 = vpop.f32.mrf.mxu0
    %6014 = vdwg.mxu0
    %v6016 = vsel %vm1680, %v5929, 0
    %v6019 = vsel %vm1680, %v6012, 0
    %6021 = vmatprep.subr.mxu0 0.0
    %6022 = vmatpush1.xpose.msra.mxu0 0.0
    %6023 = vmatprep.subr.mxu0 0.0
    %6024 = vmatpush1.xpose.msra.mxu0 0.0
    %6025 = vmatprep.subr.mxu0 0.0
    %6026 = vmatpush1.xpose.msra.mxu0 0.0
    %6027 = vmatprep.subr.mxu0 0.0
    %6028 = vmatpush1.xpose.msra.mxu0 0.0
    %6029 = vmatprep.subr.mxu0 0.0
    %6030 = vmatpush1.xpose.msra.mxu0 0.0
    %6031 = vmatprep.subr.mxu0 0.0
    %6032 = vmatpush1.xpose.msra.mxu0 0.0
    %6033 = vmatprep.subr.mxu0 0.0
    %6034 = vmatpush1.xpose.msra.mxu0 0.0
    %6035 = vmatprep.subr.mxu0 0.0
    %6036 = vmatpush1.xpose.msra.mxu0 0.0
    %6037 = vmatprep.subr.mxu0 0.0
    %6038 = vmatpush1.xpose.msra.mxu0 0.0
    %6039 = vmatprep.subr.mxu0 0.0
    %6040 = vmatpush1.xpose.msra.mxu0 0.0
    %6041 = vmatprep.subr.mxu0 0.0
    %6042 = vmatpush1.xpose.msra.mxu0 0.0
    %6043 = vmatprep.subr.mxu0 0.0
    %6044 = vmatpush1.xpose.msra.mxu0 0.0
    %6045 = vmatprep.subr.mxu0 0.0
    %6046 = vmatpush1.xpose.msra.mxu0 0.0
    %6047 = vmatprep.subr.mxu0 0.0
    %6048 = vmatpush1.xpose.msra.mxu0 0.0
    %6049 = vmatprep.subr.mxu0 0.0
    %6050 = vmatpush1.xpose.msra.mxu0 0.0
    %6051 = vmatprep.subr.mxu0 0.0
    %6052 = vmatpush1.xpose.msra.mxu0 %v6019
    %6053 = vmatprep.subr.mxu0 0.0
    %6054 = vmatpush2.xpose.msra.mxu0 0.0
    %6055 = vmatprep.subr.mxu0 0.0
    %6056 = vmatpush2.xpose.msra.mxu0 0.0
    %6057 = vmatprep.subr.mxu0 0.0
    %6058 = vmatpush2.xpose.msra.mxu0 0.0
    %6059 = vmatprep.subr.mxu0 0.0
    %6060 = vmatpush2.xpose.msra.mxu0 0.0
    %6061 = vmatprep.subr.mxu0 0.0
    %6062 = vmatpush2.xpose.msra.mxu0 0.0
    %6063 = vmatprep.subr.mxu0 0.0
    %6064 = vmatpush2.xpose.msra.mxu0 0.0
    %6065 = vmatprep.subr.mxu0 0.0
    %6066 = vmatpush2.xpose.msra.mxu0 0.0
    %6067 = vmatprep.subr.mxu0 0.0
    %6068 = vmatpush2.xpose.msra.mxu0 0.0
    %6069 = vmatprep.subr.mxu0 0.0
    %6070 = vmatpush2.xpose.msra.mxu0 0.0
    %6071 = vmatprep.subr.mxu0 0.0
    %6072 = vmatpush2.xpose.msra.mxu0 0.0
    %6073 = vmatprep.subr.mxu0 0.0
    %6074 = vmatpush2.xpose.msra.mxu0 0.0
    %6075 = vmatprep.subr.mxu0 0.0
    %6076 = vmatpush2.xpose.msra.mxu0 0.0
    %6077 = vmatprep.subr.mxu0 0.0
    %6078 = vmatpush2.xpose.msra.mxu0 0.0
    %6079 = vmatprep.subr.mxu0 0.0
    %6080 = vmatpush2.xpose.msra.mxu0 0.0
    %6081 = vmatprep.subr.mxu0 0.0
    %6082 = vmatpush2.xpose.msra.mxu0 0.0
    %6083 = vmatprep.subr.mxu0 0.0
    %6084 = vmatpush2.xpose.msra.mxu0 0.0
    %6085 = vmatprep.mubr.f32.mxu0 0.0
    %6086 = vmatmul.mubr.f32.gmra.mxu0 %v6016
    %v6087 = vpop.f32.mrf.mxu0
    %v6088 = vadd.f32 %v2335, %v6087
    %v6089 = vpop.f32.mrf.mxu0
    %6090 = vdwg.mxu0
    %v6091 = vsel %vm1023, %v6088, -inf
    %6092 = vmax.xlane.f32.xlu0 %v6091
    %v6093 = vpop.xlane.xlu0 %6092
    %v6094 = vsub.f32 %v6088, %v6093
    %v6095 = vmul.f32 %v6094, 1.442695
    %v6096 = vpow.pop %v6095
    %v6097 = vsel %vm1023, %v6096, 0.0
    %6098 = vadd.xlane.f32.xlu0 %v6097
    %v6099 = vpop.xlane.xlu0 %6098
    %v6100 = vrcp.pop %v6099
    %v6101 = vmul.f32 %v6096, %v6100
    %6102 = vrot.lane.b32.xlu0 %v6012, 64
    %v6103 = vpop.permute.xlu0 %6102
    %v6106 = vsel %vm1023, %v6101, 0
    %6108 = vmatprep.subr.mxu0 0.0
    %6109 = vmatpush1.msra.mxu0 0.0
    %6110 = vmatprep.subr.mxu0 0.0
    %6111 = vmatpush1.msra.mxu0 0.0
    %6112 = vmatprep.subr.mxu0 0.0
    %6113 = vmatpush1.msra.mxu0 0.0
    %6114 = vmatprep.subr.mxu0 0.0
    %6115 = vmatpush1.msra.mxu0 0.0
    %6116 = vmatprep.subr.mxu0 0.0
    %6117 = vmatpush1.msra.mxu0 0.0
    %6118 = vmatprep.subr.mxu0 0.0
    %6119 = vmatpush1.msra.mxu0 0.0
    %6120 = vmatprep.subr.mxu0 0.0
    %6121 = vmatpush1.msra.mxu0 0.0
    %6122 = vmatprep.subr.mxu0 0.0
    %6123 = vmatpush1.msra.mxu0 0.0
    %6124 = vmatprep.subr.mxu0 0.0
    %6125 = vmatpush1.msra.mxu0 0.0
    %6126 = vmatprep.subr.mxu0 0.0
    %6127 = vmatpush1.msra.mxu0 0.0
    %6128 = vmatprep.subr.mxu0 0.0
    %6129 = vmatpush1.msra.mxu0 0.0
    %6130 = vmatprep.subr.mxu0 0.0
    %6131 = vmatpush1.msra.mxu0 0.0
    %6132 = vmatprep.subr.mxu0 0.0
    %6133 = vmatpush1.msra.mxu0 0.0
    %6134 = vmatprep.subr.mxu0 0.0
    %6135 = vmatpush1.msra.mxu0 0.0
    %6136 = vmatprep.subr.mxu0 0.0
    %6137 = vmatpush1.msra.mxu0 0.0
    %6138 = vmatprep.subr.mxu0 0.0
    %6139 = vmatpush1.msra.mxu0 %v6103
    %6140 = vmatprep.subr.mxu0 0.0
    %6141 = vmatpush2.msra.mxu0 0.0
    %6142 = vmatprep.subr.mxu0 0.0
    %6143 = vmatpush2.msra.mxu0 0.0
    %6144 = vmatprep.subr.mxu0 0.0
    %6145 = vmatpush2.msra.mxu0 0.0
    %6146 = vmatprep.subr.mxu0 0.0
    %6147 = vmatpush2.msra.mxu0 0.0
    %6148 = vmatprep.subr.mxu0 0.0
    %6149 = vmatpush2.msra.mxu0 0.0
    %6150 = vmatprep.subr.mxu0 0.0
    %6151 = vmatpush2.msra.mxu0 0.0
    %6152 = vmatprep.subr.mxu0 0.0
    %6153 = vmatpush2.msra.mxu0 0.0
    %6154 = vmatprep.subr.mxu0 0.0
    %6155 = vmatpush2.msra.mxu0 0.0
    %6156 = vmatprep.subr.mxu0 0.0
    %6157 = vmatpush2.msra.mxu0 0.0
    %6158 = vmatprep.subr.mxu0 0.0
    %6159 = vmatpush2.msra.mxu0 0.0
    %6160 = vmatprep.subr.mxu0 0.0
    %6161 = vmatpush2.msra.mxu0 0.0
    %6162 = vmatprep.subr.mxu0 0.0
    %6163 = vmatpush2.msra.mxu0 0.0
    %6164 = vmatprep.subr.mxu0 0.0
    %6165 = vmatpush2.msra.mxu0 0.0
    %6166 = vmatprep.subr.mxu0 0.0
    %6167 = vmatpush2.msra.mxu0 0.0
    %6168 = vmatprep.subr.mxu0 0.0
    %6169 = vmatpush2.msra.mxu0 0.0
    %6170 = vmatprep.subr.mxu0 0.0
    %6171 = vmatpush2.msra.mxu0 0.0
    %6172 = vmatprep.mubr.f32.mxu0 0.0
    %6173 = vmatmul.mubr.f32.gmra.mxu0 %v6106
    %v6174 = vpop.f32.mrf.mxu0
    %v6175 = vadd.f32 0.0, %v6174
    %v6176 = vpop.f32.mrf.mxu0
    %6177 = vdwg.mxu0
    %6178 = vrot.lane.b32.xlu0 %v5929, 112
    %v6179 = vpop.permute.xlu0 %6178
    %6180 = vrot.lane.b32.xlu0 %v6012, 112
    %v6181 = vpop.permute.xlu0 %6180
    %v6182 = vsel %vm1680, %v6179, 0
    %v6184 = vsel %vm1680, %v6181, 0
    %6186 = vmatprep.subr.mxu0 0.0
    %6187 = vmatpush1.xpose.msra.mxu0 0.0
    %6188 = vmatprep.subr.mxu0 0.0
    %6189 = vmatpush1.xpose.msra.mxu0 0.0
    %6190 = vmatprep.subr.mxu0 0.0
    %6191 = vmatpush1.xpose.msra.mxu0 0.0
    %6192 = vmatprep.subr.mxu0 0.0
    %6193 = vmatpush1.xpose.msra.mxu0 0.0
    %6194 = vmatprep.subr.mxu0 0.0
    %6195 = vmatpush1.xpose.msra.mxu0 0.0
    %6196 = vmatprep.subr.mxu0 0.0
    %6197 = vmatpush1.xpose.msra.mxu0 0.0
    %6198 = vmatprep.subr.mxu0 0.0
    %6199 = vmatpush1.xpose.msra.mxu0 0.0
    %6200 = vmatprep.subr.mxu0 0.0
    %6201 = vmatpush1.xpose.msra.mxu0 0.0
    %6202 = vmatprep.subr.mxu0 0.0
    %6203 = vmatpush1.xpose.msra.mxu0 0.0
    %6204 = vmatprep.subr.mxu0 0.0
    %6205 = vmatpush1.xpose.msra.mxu0 0.0
    %6206 = vmatprep.subr.mxu0 0.0
    %6207 = vmatpush1.xpose.msra.mxu0 0.0
    %6208 = vmatprep.subr.mxu0 0.0
    %6209 = vmatpush1.xpose.msra.mxu0 0.0
    %6210 = vmatprep.subr.mxu0 0.0
    %6211 = vmatpush1.xpose.msra.mxu0 0.0
    %6212 = vmatprep.subr.mxu0 0.0
    %6213 = vmatpush1.xpose.msra.mxu0 0.0
    %6214 = vmatprep.subr.mxu0 0.0
    %6215 = vmatpush1.xpose.msra.mxu0 0.0
    %6216 = vmatprep.subr.mxu0 0.0
    %6217 = vmatpush1.xpose.msra.mxu0 %v6184
    %6218 = vmatprep.subr.mxu0 0.0
    %6219 = vmatpush2.xpose.msra.mxu0 0.0
    %6220 = vmatprep.subr.mxu0 0.0
    %6221 = vmatpush2.xpose.msra.mxu0 0.0
    %6222 = vmatprep.subr.mxu0 0.0
    %6223 = vmatpush2.xpose.msra.mxu0 0.0
    %6224 = vmatprep.subr.mxu0 0.0
    %6225 = vmatpush2.xpose.msra.mxu0 0.0
    %6226 = vmatprep.subr.mxu0 0.0
    %6227 = vmatpush2.xpose.msra.mxu0 0.0
    %6228 = vmatprep.subr.mxu0 0.0
    %6229 = vmatpush2.xpose.msra.mxu0 0.0
    %6230 = vmatprep.subr.mxu0 0.0
    %6231 = vmatpush2.xpose.msra.mxu0 0.0
    %6232 = vmatprep.subr.mxu0 0.0
    %6233 = vmatpush2.xpose.msra.mxu0 0.0
    %6234 = vmatprep.subr.mxu0 0.0
    %6235 = vmatpush2.xpose.msra.mxu0 0.0
    %6236 = vmatprep.subr.mxu0 0.0
    %6237 = vmatpush2.xpose.msra.mxu0 0.0
    %6238 = vmatprep.subr.mxu0 0.0
    %6239 = vmatpush2.xpose.msra.mxu0 0.0
    %6240 = vmatprep.subr.mxu0 0.0
    %6241 = vmatpush2.xpose.msra.mxu0 0.0
    %6242 = vmatprep.subr.mxu0 0.0
    %6243 = vmatpush2.xpose.msra.mxu0 0.0
    %6244 = vmatprep.subr.mxu0 0.0
    %6245 = vmatpush2.xpose.msra.mxu0 0.0
    %6246 = vmatprep.subr.mxu0 0.0
    %6247 = vmatpush2.xpose.msra.mxu0 0.0
    %6248 = vmatprep.subr.mxu0 0.0
    %6249 = vmatpush2.xpose.msra.mxu0 0.0
    %6250 = vmatprep.mubr.f32.mxu0 0.0
    %6251 = vmatmul.mubr.f32.gmra.mxu0 %v6182
    %v6252 = vpop.f32.mrf.mxu0
    %v6253 = vadd.f32 %v2335, %v6252
    %v6254 = vpop.f32.mrf.mxu0
    %6255 = vdwg.mxu0
    %v6256 = vsel %vm1023, %v6253, -inf
    %6257 = vmax.xlane.f32.xlu0 %v6256
    %v6258 = vpop.xlane.xlu0 %6257
    %v6259 = vsub.f32 %v6253, %v6258
    %v6260 = vmul.f32 %v6259, 1.442695
    %v6261 = vpow.pop %v6260
    %v6262 = vsel %vm1023, %v6261, 0.0
    %6263 = vadd.xlane.f32.xlu0 %v6262
    %v6264 = vpop.xlane.xlu0 %6263
    %v6265 = vrcp.pop %v6264
    %v6266 = vmul.f32 %v6261, %v6265
    %6267 = vrot.lane.b32.xlu0 %v6012, 48
    %v6268 = vpop.permute.xlu0 %6267
    %v6271 = vsel %vm1023, %v6266, 0
    %6273 = vmatprep.subr.mxu0 0.0
    %6274 = vmatpush1.msra.mxu0 0.0
    %6275 = vmatprep.subr.mxu0 0.0
    %6276 = vmatpush1.msra.mxu0 0.0
    %6277 = vmatprep.subr.mxu0 0.0
    %6278 = vmatpush1.msra.mxu0 0.0
    %6279 = vmatprep.subr.mxu0 0.0
    %6280 = vmatpush1.msra.mxu0 0.0
    %6281 = vmatprep.subr.mxu0 0.0
    %6282 = vmatpush1.msra.mxu0 0.0
    %6283 = vmatprep.subr.mxu0 0.0
    %6284 = vmatpush1.msra.mxu0 0.0
    %6285 = vmatprep.subr.mxu0 0.0
    %6286 = vmatpush1.msra.mxu0 0.0
    %6287 = vmatprep.subr.mxu0 0.0
    %6288 = vmatpush1.msra.mxu0 0.0
    %6289 = vmatprep.subr.mxu0 0.0
    %6290 = vmatpush1.msra.mxu0 0.0
    %6291 = vmatprep.subr.mxu0 0.0
    %6292 = vmatpush1.msra.mxu0 0.0
    %6293 = vmatprep.subr.mxu0 0.0
    %6294 = vmatpush1.msra.mxu0 0.0
    %6295 = vmatprep.subr.mxu0 0.0
    %6296 = vmatpush1.msra.mxu0 0.0
    %6297 = vmatprep.subr.mxu0 0.0
    %6298 = vmatpush1.msra.mxu0 0.0
    %6299 = vmatprep.subr.mxu0 0.0
    %6300 = vmatpush1.msra.mxu0 0.0
    %6301 = vmatprep.subr.mxu0 0.0
    %6302 = vmatpush1.msra.mxu0 0.0
    %6303 = vmatprep.subr.mxu0 0.0
    %6304 = vmatpush1.msra.mxu0 %v6268
    %6305 = vmatprep.subr.mxu0 0.0
    %6306 = vmatpush2.msra.mxu0 0.0
    %6307 = vmatprep.subr.mxu0 0.0
    %6308 = vmatpush2.msra.mxu0 0.0
    %6309 = vmatprep.subr.mxu0 0.0
    %6310 = vmatpush2.msra.mxu0 0.0
    %6311 = vmatprep.subr.mxu0 0.0
    %6312 = vmatpush2.msra.mxu0 0.0
    %6313 = vmatprep.subr.mxu0 0.0
    %6314 = vmatpush2.msra.mxu0 0.0
    %6315 = vmatprep.subr.mxu0 0.0
    %6316 = vmatpush2.msra.mxu0 0.0
    %6317 = vmatprep.subr.mxu0 0.0
    %6318 = vmatpush2.msra.mxu0 0.0
    %6319 = vmatprep.subr.mxu0 0.0
    %6320 = vmatpush2.msra.mxu0 0.0
    %6321 = vmatprep.subr.mxu0 0.0
    %6322 = vmatpush2.msra.mxu0 0.0
    %6323 = vmatprep.subr.mxu0 0.0
    %6324 = vmatpush2.msra.mxu0 0.0
    %6325 = vmatprep.subr.mxu0 0.0
    %6326 = vmatpush2.msra.mxu0 0.0
    %6327 = vmatprep.subr.mxu0 0.0
    %6328 = vmatpush2.msra.mxu0 0.0
    %6329 = vmatprep.subr.mxu0 0.0
    %6330 = vmatpush2.msra.mxu0 0.0
    %6331 = vmatprep.subr.mxu0 0.0
    %6332 = vmatpush2.msra.mxu0 0.0
    %6333 = vmatprep.subr.mxu0 0.0
    %6334 = vmatpush2.msra.mxu0 0.0
    %6335 = vmatprep.subr.mxu0 0.0
    %6336 = vmatpush2.msra.mxu0 0.0
    %6337 = vmatprep.mubr.f32.mxu0 0.0
    %6338 = vmatmul.mubr.f32.gmra.mxu0 %v6271
    %v6339 = vpop.f32.mrf.mxu0
    %v6340 = vadd.f32 0.0, %v6339
    %v6341 = vpop.f32.mrf.mxu0
    %6342 = vdwg.mxu0
    %6343 = vrot.lane.b32.xlu0 %v5929, 96
    %v6344 = vpop.permute.xlu0 %6343
    %6345 = vrot.lane.b32.xlu0 %v6012, 96
    %v6346 = vpop.permute.xlu0 %6345
    %v6347 = vsel %vm1680, %v6344, 0
    %v6349 = vsel %vm1680, %v6346, 0
    %6351 = vmatprep.subr.mxu0 0.0
    %6352 = vmatpush1.xpose.msra.mxu0 0.0
    %6353 = vmatprep.subr.mxu0 0.0
    %6354 = vmatpush1.xpose.msra.mxu0 0.0
    %6355 = vmatprep.subr.mxu0 0.0
    %6356 = vmatpush1.xpose.msra.mxu0 0.0
    %6357 = vmatprep.subr.mxu0 0.0
    %6358 = vmatpush1.xpose.msra.mxu0 0.0
    %6359 = vmatprep.subr.mxu0 0.0
    %6360 = vmatpush1.xpose.msra.mxu0 0.0
    %6361 = vmatprep.subr.mxu0 0.0
    %6362 = vmatpush1.xpose.msra.mxu0 0.0
    %6363 = vmatprep.subr.mxu0 0.0
    %6364 = vmatpush1.xpose.msra.mxu0 0.0
    %6365 = vmatprep.subr.mxu0 0.0
    %6366 = vmatpush1.xpose.msra.mxu0 0.0
    %6367 = vmatprep.subr.mxu0 0.0
    %6368 = vmatpush1.xpose.msra.mxu0 0.0
    %6369 = vmatprep.subr.mxu0 0.0
    %6370 = vmatpush1.xpose.msra.mxu0 0.0
    %6371 = vmatprep.subr.mxu0 0.0
    %6372 = vmatpush1.xpose.msra.mxu0 0.0
    %6373 = vmatprep.subr.mxu0 0.0
    %6374 = vmatpush1.xpose.msra.mxu0 0.0
    %6375 = vmatprep.subr.mxu0 0.0
    %6376 = vmatpush1.xpose.msra.mxu0 0.0
    %6377 = vmatprep.subr.mxu0 0.0
    %6378 = vmatpush1.xpose.msra.mxu0 0.0
    %6379 = vmatprep.subr.mxu0 0.0
    %6380 = vmatpush1.xpose.msra.mxu0 0.0
    %6381 = vmatprep.subr.mxu0 0.0
    %6382 = vmatpush1.xpose.msra.mxu0 %v6349
    %6383 = vmatprep.subr.mxu0 0.0
    %6384 = vmatpush2.xpose.msra.mxu0 0.0
    %6385 = vmatprep.subr.mxu0 0.0
    %6386 = vmatpush2.xpose.msra.mxu0 0.0
    %6387 = vmatprep.subr.mxu0 0.0
    %6388 = vmatpush2.xpose.msra.mxu0 0.0
    %6389 = vmatprep.subr.mxu0 0.0
    %6390 = vmatpush2.xpose.msra.mxu0 0.0
    %6391 = vmatprep.subr.mxu0 0.0
    %6392 = vmatpush2.xpose.msra.mxu0 0.0
    %6393 = vmatprep.subr.mxu0 0.0
    %6394 = vmatpush2.xpose.msra.mxu0 0.0
    %6395 = vmatprep.subr.mxu0 0.0
    %6396 = vmatpush2.xpose.msra.mxu0 0.0
    %6397 = vmatprep.subr.mxu0 0.0
    %6398 = vmatpush2.xpose.msra.mxu0 0.0
    %6399 = vmatprep.subr.mxu0 0.0
    %6400 = vmatpush2.xpose.msra.mxu0 0.0
    %6401 = vmatprep.subr.mxu0 0.0
    %6402 = vmatpush2.xpose.msra.mxu0 0.0
    %6403 = vmatprep.subr.mxu0 0.0
    %6404 = vmatpush2.xpose.msra.mxu0 0.0
    %6405 = vmatprep.subr.mxu0 0.0
    %6406 = vmatpush2.xpose.msra.mxu0 0.0
    %6407 = vmatprep.subr.mxu0 0.0
    %6408 = vmatpush2.xpose.msra.mxu0 0.0
    %6409 = vmatprep.subr.mxu0 0.0
    %6410 = vmatpush2.xpose.msra.mxu0 0.0
    %6411 = vmatprep.subr.mxu0 0.0
    %6412 = vmatpush2.xpose.msra.mxu0 0.0
    %6413 = vmatprep.subr.mxu0 0.0
    %6414 = vmatpush2.xpose.msra.mxu0 0.0
    %6415 = vmatprep.mubr.f32.mxu0 0.0
    %6416 = vmatmul.mubr.f32.gmra.mxu0 %v6347
    %v6417 = vpop.f32.mrf.mxu0
    %v6418 = vadd.f32 %v2335, %v6417
    %v6419 = vpop.f32.mrf.mxu0
    %6420 = vdwg.mxu0
    %v6421 = vsel %vm1023, %v6418, -inf
    %6422 = vmax.xlane.f32.xlu0 %v6421
    %v6423 = vpop.xlane.xlu0 %6422
    %v6424 = vsub.f32 %v6418, %v6423
    %v6425 = vmul.f32 %v6424, 1.442695
    %v6426 = vpow.pop %v6425
    %v6427 = vsel %vm1023, %v6426, 0.0
    %6428 = vadd.xlane.f32.xlu0 %v6427
    %v6429 = vpop.xlane.xlu0 %6428
    %v6430 = vrcp.pop %v6429
    %v6431 = vmul.f32 %v6426, %v6430
    %6432 = vrot.lane.b32.xlu0 %v6012, 32
    %v6433 = vpop.permute.xlu0 %6432
    %v6436 = vsel %vm1023, %v6431, 0
    %6438 = vmatprep.subr.mxu0 0.0
    %6439 = vmatpush1.msra.mxu0 0.0
    %6440 = vmatprep.subr.mxu0 0.0
    %6441 = vmatpush1.msra.mxu0 0.0
    %6442 = vmatprep.subr.mxu0 0.0
    %6443 = vmatpush1.msra.mxu0 0.0
    %6444 = vmatprep.subr.mxu0 0.0
    %6445 = vmatpush1.msra.mxu0 0.0
    %6446 = vmatprep.subr.mxu0 0.0
    %6447 = vmatpush1.msra.mxu0 0.0
    %6448 = vmatprep.subr.mxu0 0.0
    %6449 = vmatpush1.msra.mxu0 0.0
    %6450 = vmatprep.subr.mxu0 0.0
    %6451 = vmatpush1.msra.mxu0 0.0
    %6452 = vmatprep.subr.mxu0 0.0
    %6453 = vmatpush1.msra.mxu0 0.0
    %6454 = vmatprep.subr.mxu0 0.0
    %6455 = vmatpush1.msra.mxu0 0.0
    %6456 = vmatprep.subr.mxu0 0.0
    %6457 = vmatpush1.msra.mxu0 0.0
    %6458 = vmatprep.subr.mxu0 0.0
    %6459 = vmatpush1.msra.mxu0 0.0
    %6460 = vmatprep.subr.mxu0 0.0
    %6461 = vmatpush1.msra.mxu0 0.0
    %6462 = vmatprep.subr.mxu0 0.0
    %6463 = vmatpush1.msra.mxu0 0.0
    %6464 = vmatprep.subr.mxu0 0.0
    %6465 = vmatpush1.msra.mxu0 0.0
    %6466 = vmatprep.subr.mxu0 0.0
    %6467 = vmatpush1.msra.mxu0 0.0
    %6468 = vmatprep.subr.mxu0 0.0
    %6469 = vmatpush1.msra.mxu0 %v6433
    %6470 = vmatprep.subr.mxu0 0.0
    %6471 = vmatpush2.msra.mxu0 0.0
    %6472 = vmatprep.subr.mxu0 0.0
    %6473 = vmatpush2.msra.mxu0 0.0
    %6474 = vmatprep.subr.mxu0 0.0
    %6475 = vmatpush2.msra.mxu0 0.0
    %6476 = vmatprep.subr.mxu0 0.0
    %6477 = vmatpush2.msra.mxu0 0.0
    %6478 = vmatprep.subr.mxu0 0.0
    %6479 = vmatpush2.msra.mxu0 0.0
    %6480 = vmatprep.subr.mxu0 0.0
    %6481 = vmatpush2.msra.mxu0 0.0
    %6482 = vmatprep.subr.mxu0 0.0
    %6483 = vmatpush2.msra.mxu0 0.0
    %6484 = vmatprep.subr.mxu0 0.0
    %6485 = vmatpush2.msra.mxu0 0.0
    %6486 = vmatprep.subr.mxu0 0.0
    %6487 = vmatpush2.msra.mxu0 0.0
    %6488 = vmatprep.subr.mxu0 0.0
    %6489 = vmatpush2.msra.mxu0 0.0
    %6490 = vmatprep.subr.mxu0 0.0
    %6491 = vmatpush2.msra.mxu0 0.0
    %6492 = vmatprep.subr.mxu0 0.0
    %6493 = vmatpush2.msra.mxu0 0.0
    %6494 = vmatprep.subr.mxu0 0.0
    %6495 = vmatpush2.msra.mxu0 0.0
    %6496 = vmatprep.subr.mxu0 0.0
    %6497 = vmatpush2.msra.mxu0 0.0
    %6498 = vmatprep.subr.mxu0 0.0
    %6499 = vmatpush2.msra.mxu0 0.0
    %6500 = vmatprep.subr.mxu0 0.0
    %6501 = vmatpush2.msra.mxu0 0.0
    %6502 = vmatprep.mubr.f32.mxu0 0.0
    %6503 = vmatmul.mubr.f32.gmra.mxu0 %v6436
    %v6504 = vpop.f32.mrf.mxu0
    %v6505 = vadd.f32 0.0, %v6504
    %v6506 = vpop.f32.mrf.mxu0
    %6507 = vdwg.mxu0
    %6508 = vrot.lane.b32.xlu0 %v5929, 80
    %v6509 = vpop.permute.xlu0 %6508
    %6510 = vrot.lane.b32.xlu0 %v6012, 80
    %v6511 = vpop.permute.xlu0 %6510
    %v6512 = vsel %vm1680, %v6509, 0
    %v6514 = vsel %vm1680, %v6511, 0
    %6516 = vmatprep.subr.mxu0 0.0
    %6517 = vmatpush1.xpose.msra.mxu0 0.0
    %6518 = vmatprep.subr.mxu0 0.0
    %6519 = vmatpush1.xpose.msra.mxu0 0.0
    %6520 = vmatprep.subr.mxu0 0.0
    %6521 = vmatpush1.xpose.msra.mxu0 0.0
    %6522 = vmatprep.subr.mxu0 0.0
    %6523 = vmatpush1.xpose.msra.mxu0 0.0
    %6524 = vmatprep.subr.mxu0 0.0
    %6525 = vmatpush1.xpose.msra.mxu0 0.0
    %6526 = vmatprep.subr.mxu0 0.0
    %6527 = vmatpush1.xpose.msra.mxu0 0.0
    %6528 = vmatprep.subr.mxu0 0.0
    %6529 = vmatpush1.xpose.msra.mxu0 0.0
    %6530 = vmatprep.subr.mxu0 0.0
    %6531 = vmatpush1.xpose.msra.mxu0 0.0
    %6532 = vmatprep.subr.mxu0 0.0
    %6533 = vmatpush1.xpose.msra.mxu0 0.0
    %6534 = vmatprep.subr.mxu0 0.0
    %6535 = vmatpush1.xpose.msra.mxu0 0.0
    %6536 = vmatprep.subr.mxu0 0.0
    %6537 = vmatpush1.xpose.msra.mxu0 0.0
    %6538 = vmatprep.subr.mxu0 0.0
    %6539 = vmatpush1.xpose.msra.mxu0 0.0
    %6540 = vmatprep.subr.mxu0 0.0
    %6541 = vmatpush1.xpose.msra.mxu0 0.0
    %6542 = vmatprep.subr.mxu0 0.0
    %6543 = vmatpush1.xpose.msra.mxu0 0.0
    %6544 = vmatprep.subr.mxu0 0.0
    %6545 = vmatpush1.xpose.msra.mxu0 0.0
    %6546 = vmatprep.subr.mxu0 0.0
    %6547 = vmatpush1.xpose.msra.mxu0 %v6514
    %6548 = vmatprep.subr.mxu0 0.0
    %6549 = vmatpush2.xpose.msra.mxu0 0.0
    %6550 = vmatprep.subr.mxu0 0.0
    %6551 = vmatpush2.xpose.msra.mxu0 0.0
    %6552 = vmatprep.subr.mxu0 0.0
    %6553 = vmatpush2.xpose.msra.mxu0 0.0
    %6554 = vmatprep.subr.mxu0 0.0
    %6555 = vmatpush2.xpose.msra.mxu0 0.0
    %6556 = vmatprep.subr.mxu0 0.0
    %6557 = vmatpush2.xpose.msra.mxu0 0.0
    %6558 = vmatprep.subr.mxu0 0.0
    %6559 = vmatpush2.xpose.msra.mxu0 0.0
    %6560 = vmatprep.subr.mxu0 0.0
    %6561 = vmatpush2.xpose.msra.mxu0 0.0
    %6562 = vmatprep.subr.mxu0 0.0
    %6563 = vmatpush2.xpose.msra.mxu0 0.0
    %6564 = vmatprep.subr.mxu0 0.0
    %6565 = vmatpush2.xpose.msra.mxu0 0.0
    %6566 = vmatprep.subr.mxu0 0.0
    %6567 = vmatpush2.xpose.msra.mxu0 0.0
    %6568 = vmatprep.subr.mxu0 0.0
    %6569 = vmatpush2.xpose.msra.mxu0 0.0
    %6570 = vmatprep.subr.mxu0 0.0
    %6571 = vmatpush2.xpose.msra.mxu0 0.0
    %6572 = vmatprep.subr.mxu0 0.0
    %6573 = vmatpush2.xpose.msra.mxu0 0.0
    %6574 = vmatprep.subr.mxu0 0.0
    %6575 = vmatpush2.xpose.msra.mxu0 0.0
    %6576 = vmatprep.subr.mxu0 0.0
    %6577 = vmatpush2.xpose.msra.mxu0 0.0
    %6578 = vmatprep.subr.mxu0 0.0
    %6579 = vmatpush2.xpose.msra.mxu0 0.0
    %6580 = vmatprep.mubr.f32.mxu0 0.0
    %6581 = vmatmul.mubr.f32.gmra.mxu0 %v6512
    %v6582 = vpop.f32.mrf.mxu0
    %v6583 = vadd.f32 %v2335, %v6582
    %v6584 = vpop.f32.mrf.mxu0
    %6585 = vdwg.mxu0
    %v6586 = vsel %vm1023, %v6583, -inf
    %6587 = vmax.xlane.f32.xlu0 %v6586
    %v6588 = vpop.xlane.xlu0 %6587
    %v6589 = vsub.f32 %v6583, %v6588
    %v6590 = vmul.f32 %v6589, 1.442695
    %v6591 = vpow.pop %v6590
    %v6592 = vsel %vm1023, %v6591, 0.0
    %6593 = vadd.xlane.f32.xlu0 %v6592
    %v6594 = vpop.xlane.xlu0 %6593
    %v6595 = vrcp.pop %v6594
    %v6596 = vmul.f32 %v6591, %v6595
    %6597 = vrot.lane.b32.xlu0 %v6012, 16
    %v6598 = vpop.permute.xlu0 %6597
    %v6601 = vsel %vm1023, %v6596, 0
    %6603 = vmatprep.subr.mxu0 0.0
    %6604 = vmatpush1.msra.mxu0 0.0
    %6605 = vmatprep.subr.mxu0 0.0
    %6606 = vmatpush1.msra.mxu0 0.0
    %6607 = vmatprep.subr.mxu0 0.0
    %6608 = vmatpush1.msra.mxu0 0.0
    %6609 = vmatprep.subr.mxu0 0.0
    %6610 = vmatpush1.msra.mxu0 0.0
    %6611 = vmatprep.subr.mxu0 0.0
    %6612 = vmatpush1.msra.mxu0 0.0
    %6613 = vmatprep.subr.mxu0 0.0
    %6614 = vmatpush1.msra.mxu0 0.0
    %6615 = vmatprep.subr.mxu0 0.0
    %6616 = vmatpush1.msra.mxu0 0.0
    %6617 = vmatprep.subr.mxu0 0.0
    %6618 = vmatpush1.msra.mxu0 0.0
    %6619 = vmatprep.subr.mxu0 0.0
    %6620 = vmatpush1.msra.mxu0 0.0
    %6621 = vmatprep.subr.mxu0 0.0
    %6622 = vmatpush1.msra.mxu0 0.0
    %6623 = vmatprep.subr.mxu0 0.0
    %6624 = vmatpush1.msra.mxu0 0.0
    %6625 = vmatprep.subr.mxu0 0.0
    %6626 = vmatpush1.msra.mxu0 0.0
    %6627 = vmatprep.subr.mxu0 0.0
    %6628 = vmatpush1.msra.mxu0 0.0
    %6629 = vmatprep.subr.mxu0 0.0
    %6630 = vmatpush1.msra.mxu0 0.0
    %6631 = vmatprep.subr.mxu0 0.0
    %6632 = vmatpush1.msra.mxu0 0.0
    %6633 = vmatprep.subr.mxu0 0.0
    %6634 = vmatpush1.msra.mxu0 %v6598
    %6635 = vmatprep.subr.mxu0 0.0
    %6636 = vmatpush2.msra.mxu0 0.0
    %6637 = vmatprep.subr.mxu0 0.0
    %6638 = vmatpush2.msra.mxu0 0.0
    %6639 = vmatprep.subr.mxu0 0.0
    %6640 = vmatpush2.msra.mxu0 0.0
    %6641 = vmatprep.subr.mxu0 0.0
    %6642 = vmatpush2.msra.mxu0 0.0
    %6643 = vmatprep.subr.mxu0 0.0
    %6644 = vmatpush2.msra.mxu0 0.0
    %6645 = vmatprep.subr.mxu0 0.0
    %6646 = vmatpush2.msra.mxu0 0.0
    %6647 = vmatprep.subr.mxu0 0.0
    %6648 = vmatpush2.msra.mxu0 0.0
    %6649 = vmatprep.subr.mxu0 0.0
    %6650 = vmatpush2.msra.mxu0 0.0
    %6651 = vmatprep.subr.mxu0 0.0
    %6652 = vmatpush2.msra.mxu0 0.0
    %6653 = vmatprep.subr.mxu0 0.0
    %6654 = vmatpush2.msra.mxu0 0.0
    %6655 = vmatprep.subr.mxu0 0.0
    %6656 = vmatpush2.msra.mxu0 0.0
    %6657 = vmatprep.subr.mxu0 0.0
    %6658 = vmatpush2.msra.mxu0 0.0
    %6659 = vmatprep.subr.mxu0 0.0
    %6660 = vmatpush2.msra.mxu0 0.0
    %6661 = vmatprep.subr.mxu0 0.0
    %6662 = vmatpush2.msra.mxu0 0.0
    %6663 = vmatprep.subr.mxu0 0.0
    %6664 = vmatpush2.msra.mxu0 0.0
    %6665 = vmatprep.subr.mxu0 0.0
    %6666 = vmatpush2.msra.mxu0 0.0
    %6667 = vmatprep.mubr.f32.mxu0 0.0
    %6668 = vmatmul.mubr.f32.gmra.mxu0 %v6601
    %v6669 = vpop.f32.mrf.mxu0
    %v6670 = vadd.f32 0.0, %v6669
    %v6671 = vpop.f32.mrf.mxu0
    %6672 = vdwg.mxu0
    %6674 = vrot.lane.b32.xlu0 %v6340, 16
    %v6675 = vpop.permute.xlu0 %6674
    %6678 = vrot.lane.b32.xlu0 %v6505, 32
    %v6679 = vpop.permute.xlu0 %6678
    %6682 = vrot.lane.b32.xlu0 %v6670, 48
    %v6683 = vpop.permute.xlu0 %6682
    %v6685 = vsel %vm1680, %v6175, %v6675
    %v6686 = vsel %vm1689, %v6685, %v6679
    %v6687 = vsel %vm1711, %v6686, %v6683
    %v6688 = vld [vmem:[%s127] sm:$0xff]
    %v6689 = vld [vmem:[%s127 + $0x8] sm:$0xff]
    %v6690 = vld [vmem:[%s127 + $0x10] sm:$0xff]
    %v6691 = vld [vmem:[%s127 + $0x18] sm:$0xff]
    %v6692 = vld [vmem:[%s127 + $0x20] sm:$0xff]
    %v6693 = vld [vmem:[%s127 + $0x28] sm:$0xff]
    %v6694 = vld [vmem:[%s127 + $0x30] sm:$0xff]
    %v6695 = vld [vmem:[%s127 + $0x38] sm:$0xff]
    %v6696 = vld [vmem:[#allocation24] sm:$0x1]
    %v6698 = vlaneseq
    %v6699 = vshrl.u32 %v6698, 7
    %v6700 = vsub.s32 0, %v6699
    %v6701 = vrot.slane %v6696, %v6700
    %v6704 = vsel %vm1893, %v6687, 0
    %6706 = vmatprep.subr.mxu0 0.0
    %6707 = vmatpush1.msra.mxu0 0.0
    %6708 = vmatprep.subr.mxu0 0.0
    %6709 = vmatpush1.msra.mxu0 0.0
    %6710 = vmatprep.subr.mxu0 0.0
    %6711 = vmatpush1.msra.mxu0 0.0
    %6712 = vmatprep.subr.mxu0 0.0
    %6713 = vmatpush1.msra.mxu0 0.0
    %6714 = vmatprep.subr.mxu0 0.0
    %6715 = vmatpush1.msra.mxu0 0.0
    %6716 = vmatprep.subr.mxu0 0.0
    %6717 = vmatpush1.msra.mxu0 0.0
    %6718 = vmatprep.subr.mxu0 0.0
    %6719 = vmatpush1.msra.mxu0 0.0
    %6720 = vmatprep.subr.mxu0 0.0
    %6721 = vmatpush1.msra.mxu0 0.0
    %6722 = vmatprep.subr.mxu0 0.0
    %6723 = vmatpush1.msra.mxu0 %v6695
    %6724 = vmatprep.subr.mxu0 0.0
    %6725 = vmatpush1.msra.mxu0 %v6694
    %6726 = vmatprep.subr.mxu0 0.0
    %6727 = vmatpush1.msra.mxu0 %v6693
    %6728 = vmatprep.subr.mxu0 0.0
    %6729 = vmatpush1.msra.mxu0 %v6692
    %6730 = vmatprep.subr.mxu0 0.0
    %6731 = vmatpush1.msra.mxu0 %v6691
    %6732 = vmatprep.subr.mxu0 0.0
    %6733 = vmatpush1.msra.mxu0 %v6690
    %6734 = vmatprep.subr.mxu0 0.0
    %6735 = vmatpush1.msra.mxu0 %v6689
    %6736 = vmatprep.subr.mxu0 0.0
    %6737 = vmatpush1.msra.mxu0 %v6688
    %6738 = vmatprep.subr.mxu0 0.0
    %6739 = vmatpush2.msra.mxu0 0.0
    %6740 = vmatprep.subr.mxu0 0.0
    %6741 = vmatpush2.msra.mxu0 0.0
    %6742 = vmatprep.subr.mxu0 0.0
    %6743 = vmatpush2.msra.mxu0 0.0
    %6744 = vmatprep.subr.mxu0 0.0
    %6745 = vmatpush2.msra.mxu0 0.0
    %6746 = vmatprep.subr.mxu0 0.0
    %6747 = vmatpush2.msra.mxu0 0.0
    %6748 = vmatprep.subr.mxu0 0.0
    %6749 = vmatpush2.msra.mxu0 0.0
    %6750 = vmatprep.subr.mxu0 0.0
    %6751 = vmatpush2.msra.mxu0 0.0
    %6752 = vmatprep.subr.mxu0 0.0
    %6753 = vmatpush2.msra.mxu0 0.0
    %6754 = vmatprep.subr.mxu0 0.0
    %6755 = vmatpush2.msra.mxu0 0.0
    %6756 = vmatprep.subr.mxu0 0.0
    %6757 = vmatpush2.msra.mxu0 0.0
    %6758 = vmatprep.subr.mxu0 0.0
    %6759 = vmatpush2.msra.mxu0 0.0
    %6760 = vmatprep.subr.mxu0 0.0
    %6761 = vmatpush2.msra.mxu0 0.0
    %6762 = vmatprep.subr.mxu0 0.0
    %6763 = vmatpush2.msra.mxu0 0.0
    %6764 = vmatprep.subr.mxu0 0.0
    %6765 = vmatpush2.msra.mxu0 0.0
    %6766 = vmatprep.subr.mxu0 0.0
    %6767 = vmatpush2.msra.mxu0 0.0
    %6768 = vmatprep.subr.mxu0 0.0
    %6769 = vmatpush2.msra.mxu0 0.0
    %6770 = vmatprep.mubr.f32.mxu0 0.0
    %6771 = vmatmul.mubr.f32.gmra.mxu0 %v6704
    %v6772 = vpop.f32.mrf.mxu0
    %v6773 = vadd.f32 %v6701, %v6772
    %v6774 = vpop.f32.mrf.mxu0
    %6775 = vdwg.mxu0
    %v6776 = vadd.f32 %v4672, %v6773
    %v6777 = vld [vmem:[#allocation25] sm:$0x1]
    %v6778 = vld [vmem:[#allocation27] sm:$0x1]
    %v6779 = vsel %vm1893, %v6776, 0.0
    %6780 = vadd.xlane.f32.xlu0 %v6779
    %v6781 = vpop.xlane.xlu0 %6780
    %v6782 = vmul.f32 %v6781, %v3277
    %v6783 = vsub.f32 %v6776, %v6782
    %v6784 = vmul.f32 %v6783, %v6783
    %v6785 = vsel %vm1893, %v6784, 0.0
    %6786 = vadd.xlane.f32.xlu0 %v6785
    %v6787 = vpop.xlane.xlu0 %6786
    %v6788 = vmul.f32 %v6787, %v3277
    %v6789 = vadd.f32 %v6788, 1e-05
    %v6790 = vrsqrt.pop %v6789
    %v6791 = vmul.f32 %v6783, %v6790
    %v6793 = vlaneseq
    %v6794 = vshrl.u32 %v6793, 7
    %v6795 = vsub.s32 0, %v6794
    %v6796 = vrot.slane %v6777, %v6795
    %v6798 = vmul.f32 %v6791, %v6796
    %v6800 = vlaneseq
    %v6801 = vshrl.u32 %v6800, 7
    %v6802 = vsub.s32 0, %v6801
    %v6803 = vrot.slane %v6778, %v6802
    %v6805 = vadd.f32 %v6798, %v6803
    %v6806 = vld [vmem:[%s135] sm:$0xff]
    %v6807 = vld [vmem:[%s135 + $0x8] sm:$0xff]
    %v6808 = vld [vmem:[%s135 + $0x10] sm:$0xff]
    %v6809 = vld [vmem:[%s135 + $0x18] sm:$0xff]
    %v6810 = vld [vmem:[%s135 + $0x20] sm:$0xff]
    %v6811 = vld [vmem:[%s135 + $0x28] sm:$0xff]
    %v6812 = vld [vmem:[%s135 + $0x30] sm:$0xff]
    %v6813 = vld [vmem:[%s135 + $0x38] sm:$0xff]
    %v6814 = vld [vmem:[#allocation28] sm:$0x1]
    %v6816 = vlaneseq
    %v6817 = vshrl.u32 %v6816, 7
    %v6818 = vsub.s32 0, %v6817
    %v6819 = vrot.slane %v6814, %v6818
    %v6822 = vsel %vm1893, %v6805, 0
    %6824 = vmatprep.subr.mxu0 0.0
    %6825 = vmatpush1.msra.mxu0 0.0
    %6826 = vmatprep.subr.mxu0 0.0
    %6827 = vmatpush1.msra.mxu0 0.0
    %6828 = vmatprep.subr.mxu0 0.0
    %6829 = vmatpush1.msra.mxu0 0.0
    %6830 = vmatprep.subr.mxu0 0.0
    %6831 = vmatpush1.msra.mxu0 0.0
    %6832 = vmatprep.subr.mxu0 0.0
    %6833 = vmatpush1.msra.mxu0 0.0
    %6834 = vmatprep.subr.mxu0 0.0
    %6835 = vmatpush1.msra.mxu0 0.0
    %6836 = vmatprep.subr.mxu0 0.0
    %6837 = vmatpush1.msra.mxu0 0.0
    %6838 = vmatprep.subr.mxu0 0.0
    %6839 = vmatpush1.msra.mxu0 0.0
    %6840 = vmatprep.subr.mxu0 0.0
    %6841 = vmatpush1.msra.mxu0 %v6813
    %6842 = vmatprep.subr.mxu0 0.0
    %6843 = vmatpush1.msra.mxu0 %v6812
    %6844 = vmatprep.subr.mxu0 0.0
    %6845 = vmatpush1.msra.mxu0 %v6811
    %6846 = vmatprep.subr.mxu0 0.0
    %6847 = vmatpush1.msra.mxu0 %v6810
    %6848 = vmatprep.subr.mxu0 0.0
    %6849 = vmatpush1.msra.mxu0 %v6809
    %6850 = vmatprep.subr.mxu0 0.0
    %6851 = vmatpush1.msra.mxu0 %v6808
    %6852 = vmatprep.subr.mxu0 0.0
    %6853 = vmatpush1.msra.mxu0 %v6807
    %6854 = vmatprep.subr.mxu0 0.0
    %6855 = vmatpush1.msra.mxu0 %v6806
    %6856 = vmatprep.subr.mxu0 0.0
    %6857 = vmatpush2.msra.mxu0 0.0
    %6858 = vmatprep.subr.mxu0 0.0
    %6859 = vmatpush2.msra.mxu0 0.0
    %6860 = vmatprep.subr.mxu0 0.0
    %6861 = vmatpush2.msra.mxu0 0.0
    %6862 = vmatprep.subr.mxu0 0.0
    %6863 = vmatpush2.msra.mxu0 0.0
    %6864 = vmatprep.subr.mxu0 0.0
    %6865 = vmatpush2.msra.mxu0 0.0
    %6866 = vmatprep.subr.mxu0 0.0
    %6867 = vmatpush2.msra.mxu0 0.0
    %6868 = vmatprep.subr.mxu0 0.0
    %6869 = vmatpush2.msra.mxu0 0.0
    %6870 = vmatprep.subr.mxu0 0.0
    %6871 = vmatpush2.msra.mxu0 0.0
    %6872 = vmatprep.subr.mxu0 0.0
    %6873 = vmatpush2.msra.mxu0 0.0
    %6874 = vmatprep.subr.mxu0 0.0
    %6875 = vmatpush2.msra.mxu0 0.0
    %6876 = vmatprep.subr.mxu0 0.0
    %6877 = vmatpush2.msra.mxu0 0.0
    %6878 = vmatprep.subr.mxu0 0.0
    %6879 = vmatpush2.msra.mxu0 0.0
    %6880 = vmatprep.subr.mxu0 0.0
    %6881 = vmatpush2.msra.mxu0 0.0
    %6882 = vmatprep.subr.mxu0 0.0
    %6883 = vmatpush2.msra.mxu0 0.0
    %6884 = vmatprep.subr.mxu0 0.0
    %6885 = vmatpush2.msra.mxu0 0.0
    %6886 = vmatprep.subr.mxu0 0.0
    %6887 = vmatpush2.msra.mxu0 0.0
    %6888 = vmatprep.mubr.f32.mxu0 0.0
    %6889 = vmatmul.mubr.f32.gmra.mxu0 %v6822
    %v6890 = vpop.f32.mrf.mxu0
    %v6891 = vadd.f32 %v6819, %v6890
    %v6892 = vpop.f32.mrf.mxu0
    %6893 = vdwg.mxu0
    %v6894 = vmax.f32 %v6891, 0.0
    %v6895 = vld [vmem:[%s139] sm:$0xff]
    %v6896 = vld [vmem:[%s139 + $0x8] sm:$0xff]
    %v6897 = vld [vmem:[%s139 + $0x10] sm:$0xff]
    %v6898 = vld [vmem:[%s139 + $0x18] sm:$0xff]
    %v6899 = vld [vmem:[#allocation30] sm:$0x1]
    %v6901 = vlaneseq
    %v6902 = vshrl.u32 %v6901, 7
    %v6903 = vsub.s32 0, %v6902
    %v6904 = vrot.slane %v6899, %v6903
    %v6907 = vsel %vm1689, %v6894, 0
    %6909 = vmatprep.subr.mxu0 0.0
    %6910 = vmatpush1.msra.mxu0 0.0
    %6911 = vmatprep.subr.mxu0 0.0
    %6912 = vmatpush1.msra.mxu0 0.0
    %6913 = vmatprep.subr.mxu0 0.0
    %6914 = vmatpush1.msra.mxu0 0.0
    %6915 = vmatprep.subr.mxu0 0.0
    %6916 = vmatpush1.msra.mxu0 0.0
    %6917 = vmatprep.subr.mxu0 0.0
    %6918 = vmatpush1.msra.mxu0 0.0
    %6919 = vmatprep.subr.mxu0 0.0
    %6920 = vmatpush1.msra.mxu0 0.0
    %6921 = vmatprep.subr.mxu0 0.0
    %6922 = vmatpush1.msra.mxu0 0.0
    %6923 = vmatprep.subr.mxu0 0.0
    %6924 = vmatpush1.msra.mxu0 0.0
    %6925 = vmatprep.subr.mxu0 0.0
    %6926 = vmatpush1.msra.mxu0 0.0
    %6927 = vmatprep.subr.mxu0 0.0
    %6928 = vmatpush1.msra.mxu0 0.0
    %6929 = vmatprep.subr.mxu0 0.0
    %6930 = vmatpush1.msra.mxu0 0.0
    %6931 = vmatprep.subr.mxu0 0.0
    %6932 = vmatpush1.msra.mxu0 0.0
    %6933 = vmatprep.subr.mxu0 0.0
    %6934 = vmatpush1.msra.mxu0 %v6898
    %6935 = vmatprep.subr.mxu0 0.0
    %6936 = vmatpush1.msra.mxu0 %v6897
    %6937 = vmatprep.subr.mxu0 0.0
    %6938 = vmatpush1.msra.mxu0 %v6896
    %6939 = vmatprep.subr.mxu0 0.0
    %6940 = vmatpush1.msra.mxu0 %v6895
    %6941 = vmatprep.subr.mxu0 0.0
    %6942 = vmatpush2.msra.mxu0 0.0
    %6943 = vmatprep.subr.mxu0 0.0
    %6944 = vmatpush2.msra.mxu0 0.0
    %6945 = vmatprep.subr.mxu0 0.0
    %6946 = vmatpush2.msra.mxu0 0.0
    %6947 = vmatprep.subr.mxu0 0.0
    %6948 = vmatpush2.msra.mxu0 0.0
    %6949 = vmatprep.subr.mxu0 0.0
    %6950 = vmatpush2.msra.mxu0 0.0
    %6951 = vmatprep.subr.mxu0 0.0
    %6952 = vmatpush2.msra.mxu0 0.0
    %6953 = vmatprep.subr.mxu0 0.0
    %6954 = vmatpush2.msra.mxu0 0.0
    %6955 = vmatprep.subr.mxu0 0.0
    %6956 = vmatpush2.msra.mxu0 0.0
    %6957 = vmatprep.subr.mxu0 0.0
    %6958 = vmatpush2.msra.mxu0 0.0
    %6959 = vmatprep.subr.mxu0 0.0
    %6960 = vmatpush2.msra.mxu0 0.0
    %6961 = vmatprep.subr.mxu0 0.0
    %6962 = vmatpush2.msra.mxu0 0.0
    %6963 = vmatprep.subr.mxu0 0.0
    %6964 = vmatpush2.msra.mxu0 0.0
    %6965 = vmatprep.subr.mxu0 0.0
    %6966 = vmatpush2.msra.mxu0 0.0
    %6967 = vmatprep.subr.mxu0 0.0
    %6968 = vmatpush2.msra.mxu0 0.0
    %6969 = vmatprep.subr.mxu0 0.0
    %6970 = vmatpush2.msra.mxu0 0.0
    %6971 = vmatprep.subr.mxu0 0.0
    %6972 = vmatpush2.msra.mxu0 0.0
    %6973 = vmatprep.mubr.f32.mxu0 0.0
    %6974 = vmatmul.mubr.f32.gmra.mxu0 %v6907
    %v6975 = vpop.f32.mrf.mxu0
    %v6976 = vadd.f32 %v6904, %v6975
    %v6977 = vpop.f32.mrf.mxu0
    %6978 = vdwg.mxu0
    %v6979 = vadd.f32 %v6805, %v6976
    %v6980 = vld [vmem:[#allocation31] sm:$0x1]
    %v6981 = vld [vmem:[#allocation33] sm:$0x1]
    %v6982 = vsel %vm1893, %v6979, 0.0
    %6983 = vadd.xlane.f32.xlu0 %v6982
    %v6984 = vpop.xlane.xlu0 %6983
    %v6985 = vmul.f32 %v6984, %v3277
    %v6986 = vsub.f32 %v6979, %v6985
    %v6987 = vmul.f32 %v6986, %v6986
    %v6988 = vsel %vm1893, %v6987, 0.0
    %6989 = vadd.xlane.f32.xlu0 %v6988
    %v6990 = vpop.xlane.xlu0 %6989
    %v6991 = vmul.f32 %v6990, %v3277
    %v6992 = vadd.f32 %v6991, 1e-05
    %v6993 = vrsqrt.pop %v6992
    %v6994 = vmul.f32 %v6986, %v6993
    %v6996 = vlaneseq
    %v6997 = vshrl.u32 %v6996, 7
    %v6998 = vsub.s32 0, %v6997
    %v6999 = vrot.slane %v6980, %v6998
    %v7001 = vmul.f32 %v6994, %v6999
    %v7003 = vlaneseq
    %v7004 = vshrl.u32 %v7003, 7
    %v7005 = vsub.s32 0, %v7004
    %v7006 = vrot.slane %v6981, %v7005
    %v7008 = vadd.f32 %v7001, %v7006
    %7010 = vrot.lane.b32.xlu0 %v7008, 64
    %v7011 = vpop.permute.xlu0 %7010
    %v7013 = vsel %vm1893, %v5843, %v7011
    %7014 = vst [vmem:[%s147] sm:$0xff] %v7013
    // Predicated region
    $region378: #{cl_attention_conv_forward.1} parent=1 // pred_check
      _
    $region379: #{cl_attention_conv_forward.1} parent=1 // pred_check_branch
      %7016 = sbr.rel (0) target = $region381
    $region380: #{cl_attention_conv_forward.1} parent=1 // pred_region
      _
    $region381: #{cl_attention_conv_forward.1} parent=1 // pred_fallthru
      _
    // Predicated region
    $region382: #{cl_attention_conv_forward.1} parent=1 // pred_check
      _
    $region383: #{cl_attention_conv_forward.1} parent=1 // pred_check_branch
      %7018 = sbr.rel (0) target = $region385
    $region384: #{cl_attention_conv_forward.1} parent=1 // pred_region
      _
    $region385: #{cl_attention_conv_forward.1} parent=1 // pred_fallthru
      _
    %7019 = vsyncpa [#allocation3], 1
    %7020 = vsyncpa [#allocation5], 1
    %7021 = vsyncpa [#allocation8], 1
    %7022 = vsyncpa [#allocation11], 1
    %7023 = vsyncpa [#allocation14], 1
    %7024 = vsyncpa [#allocation17], 1
    %7025 = vsyncpa [#allocation20], 1
    %7026 = vsyncpa [#allocation23], 1
    %7027 = vsyncpa [#allocation26], 1
    %7028 = vsyncpa [#allocation29], 1
    %7029 = vsyncpa [#allocation32], 1

</llo_original>
